<compile_context>
chip_gen: v7x
topology: tpu7x:2x2x1
jax: 0.10.0
libtpu: 0.0.40
codegen_flags: <defaults>
</compile_context>

<pallas_src>
import math
from functools import partial

import numpy as np
import jax
import jax.numpy as jnp
from jax.experimental import pallas as pl
from jax.experimental.pallas import tpu as pltpu

# ---------------------------------------------------------------------------
# Small configuration (consistent with the module's forward semantics)
# ---------------------------------------------------------------------------
IMG_SIZE = 16
PATCH = 4
IN_CHANS = 3
EMBED_DIM = 32
DEPTH = 2
NUM_HEADS = 4
DEC_EMBED_DIM = 32
DEC_DEPTH = 1
DEC_NUM_HEADS = 4
MLP_RATIO = 4.0
NORM_PIX_LOSS = False
LN_EPS = 1e-5  # nn.LayerNorm default eps


# ---------------------------------------------------------------------------
# In-kernel math helpers (operate on VMEM values)
# ---------------------------------------------------------------------------
def _ln(x, g, b):
    """LayerNorm with biased variance (matches torch), g/b shaped (1, D)."""
    mean = jnp.mean(x, axis=-1, keepdims=True)
    xc = x - mean
    var = jnp.mean(xc * xc, axis=-1, keepdims=True)
    return xc * jax.lax.rsqrt(var + LN_EPS) * g + b


def _erf(x):
    # TODO(synk): lax.erf has no guaranteed Mosaic lowering; exact GELU uses the
    # Abramowitz & Stegun 7.1.26 rational erf approximation (|err| < 1.5e-7).
    p = 0.3275911
    a1, a2, a3, a4, a5 = (0.254829592, -0.284496736, 1.421413741,
                          -1.453152027, 1.061405429)
    sgn = jnp.where(x >= 0.0, 1.0, -1.0)
    ax = jnp.abs(x)
    t = 1.0 / (1.0 + p * ax)
    poly = ((((a5 * t + a4) * t + a3) * t + a2) * t + a1) * t
    return sgn * (1.0 - poly * jnp.exp(-ax * ax))


def _gelu_exact(x):
    return 0.5 * x * (1.0 + _erf(x * 0.7071067811865476))


# ---------------------------------------------------------------------------
# Fused transformer stack kernel:
#   depth x (LN1 -> QKV -> MHA -> proj -> +res -> LN2 -> fc1 -> GELU -> fc2 -> +res)
#   -> final LN -> head linear
# One grid step = one batch element; all weights stay VMEM-resident.
# ---------------------------------------------------------------------------
def _stack_kernel(x_ref, n1g, n1b, qkv_w, qkv_b, proj_w, proj_b,
                  n2g, n2b, fc1_w, fc1_b, fc2_w, fc2_b,
                  fng, fnb, head_w, head_b, o_ref, *, depth, num_heads):
    x = x_ref[0]                      # (S, E)
    E = x.shape[-1]
    Dh = E // num_heads
    scale = Dh ** -0.5

    for d in range(depth):
        # ---- attention ----
        h = _ln(x, n1g[d], n1b[d])
        qkv = jnp.dot(h, qkv_w[d], preferred_element_type=jnp.float32) + qkv_b[d]
        att = None
        for hh in range(num_heads):
            lo = hh * Dh
            qh = qkv[:, lo:lo + Dh] * scale          # scale folded into q
            kh = qkv[:, E + lo:E + lo + Dh]
            vh = qkv[:, 2 * E + lo:2 * E + lo + Dh]
            s = jax.lax.dot_general(qh, kh, (((1,), (1,)), ((), ())),
                                    preferred_element_type=jnp.float32)  # (S, S)
            s = s - jnp.max(s, axis=-1, keepdims=True)
            e = jnp.exp(s)
            p = e * pl.reciprocal(jnp.sum(e, axis=-1, keepdims=True), approx=True)
            oh = jnp.dot(p, vh, preferred_element_type=jnp.float32)      # (S, Dh)
            contrib = jnp.dot(oh, proj_w[d, lo:lo + Dh, :],
                              preferred_element_type=jnp.float32)        # (S, E)
            att = contrib if att is None else att + contrib
        x = x + att + proj_b[d]

        # ---- MLP ----
        h = _ln(x, n2g[d], n2b[d])
        f = jnp.dot(h, fc1_w[d], preferred_element_type=jnp.float32) + fc1_b[d]
        f = _gelu_exact(f)
        x = x + jnp.dot(f, fc2_w[d], preferred_element_type=jnp.float32) + fc2_b[d]

    # ---- final LN + head linear (decoder_embed or decoder_pred) ----
    x = _ln(x, fng[...], fnb[...])
    o_ref[0] = jnp.dot(x, head_w[...], preferred_element_type=jnp.float32) + head_b[...]


def _full_spec(shape):
    n = len(shape)
    return pl.BlockSpec(shape, lambda b, n=n: (0,) * n)


def transformer_stack(x, blocks, final_g, final_b, head_w, head_b, num_heads):
    """x: (B, S, E) -> (B, S, OUT); applies all blocks + final LN + head linear."""
    B, S, E = x.shape
    depth = blocks["qkv_w"].shape[0]
    hidden = blocks["fc1_w"].shape[-1]
    OUT = head_w.shape[-1]

    in_specs = [
        pl.BlockSpec((1, S, E), lambda b: (b, 0, 0)),
        _full_spec((depth, 1, E)),          # n1g
        _full_spec((depth, 1, E)),          # n1b
        _full_spec((depth, E, 3 * E)),      # qkv_w
        _full_spec((depth, 1, 3 * E)),      # qkv_b
        _full_spec((depth, E, E)),          # proj_w
        _full_spec((depth, 1, E)),          # proj_b
        _full_spec((depth, 1, E)),          # n2g
        _full_spec((depth, 1, E)),          # n2b
        _full_spec((depth, E, hidden)),     # fc1_w
        _full_spec((depth, 1, hidden)),     # fc1_b
        _full_spec((depth, hidden, E)),     # fc2_w
        _full_spec((depth, 1, E)),          # fc2_b
        _full_spec((1, E)),                 # final norm gamma
        _full_spec((1, E)),                 # final norm beta
        _full_spec((E, OUT)),               # head weight
        _full_spec((1, OUT)),               # head bias
    ]
    return pl.pallas_call(
        partial(_stack_kernel, depth=depth, num_heads=num_heads),
        grid=(B,),
        in_specs=in_specs,
        out_specs=pl.BlockSpec((1, S, OUT), lambda b: (b, 0, 0)),
        out_shape=jax.ShapeDtypeStruct((B, S, OUT), jnp.float32),
        compiler_params=pltpu.CompilerParams(dimension_semantics=("parallel",)),
    )(x, blocks["n1g"], blocks["n1b"], blocks["qkv_w"], blocks["qkv_b"],
      blocks["proj_w"], blocks["proj_b"], blocks["n2g"], blocks["n2b"],
      blocks["fc1_w"], blocks["fc1_b"], blocks["fc2_w"], blocks["fc2_b"],
      final_g.reshape(1, E), final_b.reshape(1, E),
      head_w, head_b.reshape(1, OUT))


# ---------------------------------------------------------------------------
# Patch embed kernel: patch linear + bias + positional embedding (fused)
# ---------------------------------------------------------------------------
def _patch_embed_kernel(x_ref, w_ref, b_ref, pos_ref, o_ref):
    o_ref[0] = (jnp.dot(x_ref[0], w_ref[...], preferred_element_type=jnp.float32)
                + b_ref[...] + pos_ref[0])


def patch_embed(xp, w, b, pos):
    B, L, Pin = xp.shape
    E = w.shape[1]
    return pl.pallas_call(
        _patch_embed_kernel,
        grid=(B,),
        in_specs=[
            pl.BlockSpec((1, L, Pin), lambda i: (i, 0, 0)),
            pl.BlockSpec((Pin, E), lambda i: (0, 0)),
            pl.BlockSpec((1, E), lambda i: (0, 0)),
            pl.BlockSpec((1, L, E), lambda i: (0, 0, 0)),
        ],
        out_specs=pl.BlockSpec((1, L, E), lambda i: (i, 0, 0)),
        out_shape=jax.ShapeDtypeStruct((B, L, E), jnp.float32),
        compiler_params=pltpu.CompilerParams(dimension_semantics=("parallel",)),
    )(xp, w, b.reshape(1, E), pos)


# ---------------------------------------------------------------------------
# Masked-MSE loss kernel: reduce to a single scalar, written to SMEM
# ---------------------------------------------------------------------------
def _masked_mse_kernel(p_ref, t_ref, m_ref, o_ref, *, inv_patch):
    d = p_ref[...] - t_ref[...]
    per = jnp.sum(d * d, axis=-1, keepdims=True) * inv_patch   # (M, 1) mean over pixels
    m = m_ref[...]
    num = jnp.sum(per * m)
    den = jnp.sum(m)
    o_ref[0, 0] = num / den


def masked_mse_loss(pred2d, target2d, mask2d):
    M, P = pred2d.shape
    out = pl.pallas_call(
        partial(_masked_mse_kernel, inv_patch=1.0 / P),
        grid=(1,),
        in_specs=[
            pl.BlockSpec((M, P), lambda i: (0, 0)),
            pl.BlockSpec((M, P), lambda i: (0, 0)),
            pl.BlockSpec((M, 1), lambda i: (0, 0)),
        ],
        out_specs=pl.BlockSpec((1, 1), lambda i: (0, 0),
                               memory_space=pltpu.MemorySpace.SMEM),
        out_shape=jax.ShapeDtypeStruct((1, 1), jnp.float32),
    )(pred2d, target2d, mask2d)
    return out[0, 0]


# ---------------------------------------------------------------------------
# 2D sin-cos positional embedding (matches reference get_2d_sincos_pos_embed)
# ---------------------------------------------------------------------------
def _sincos_1d(embed_dim, pos):
    omega = np.arange(embed_dim // 2, dtype=np.float64) / (embed_dim / 2.0)
    omega = 1.0 / 10000 ** omega
    out = np.einsum("m,d->md", pos.reshape(-1), omega)
    return np.concatenate([np.sin(out), np.cos(out)], axis=1)


def get_2d_sincos_pos_embed(embed_dim, grid_size, cls_token=False):
    grid_h = np.arange(grid_size, dtype=np.float64)
    grid_w = np.arange(grid_size, dtype=np.float64)
    grid = np.meshgrid(grid_w, grid_h)  # w goes first
    grid = np.stack(grid, axis=0).reshape([2, 1, grid_size, grid_size])
    emb_h = _sincos_1d(embed_dim // 2, grid[0])
    emb_w = _sincos_1d(embed_dim // 2, grid[1])
    emb = np.concatenate([emb_h, emb_w], axis=1)
    if cls_token:
        emb = np.concatenate([np.zeros([1, embed_dim]), emb], axis=0)
    return jnp.asarray(emb, jnp.float32)


# ---------------------------------------------------------------------------
# Deterministic parameter init (xavier_uniform linears, zero bias, LN 1/0,
# cls/mask tokens ~ N(0, 0.02), sincos pos embeds); block weights stored
# stacked along a leading depth axis for the fused stack kernel.
# ---------------------------------------------------------------------------
def init_params(key):
    kit = iter(jax.random.split(key, 512))

    def nk():
        return next(kit)

    def xavier(fan_in, fan_out):
        lim = math.sqrt(6.0 / (fan_in + fan_out))
        return jax.random.uniform(nk(), (fan_in, fan_out), jnp.float32, -lim, lim)

    def stacked_blocks(dim, mlp_ratio, depth):
        hidden = int(dim * mlp_ratio)

        def one():
            return dict(
                n1g=jnp.ones((1, dim), jnp.float32),
                n1b=jnp.zeros((1, dim), jnp.float32),
                qkv_w=xavier(dim, 3 * dim),
                qkv_b=jnp.zeros((1, 3 * dim), jnp.float32),
                proj_w=xavier(dim, dim),
                proj_b=jnp.zeros((1, dim), jnp.float32),
                n2g=jnp.ones((1, dim), jnp.float32),
                n2b=jnp.zeros((1, dim), jnp.float32),
                fc1_w=xavier(dim, hidden),
                fc1_b=jnp.zeros((1, hidden), jnp.float32),
                fc2_w=xavier(hidden, dim),
                fc2_b=jnp.zeros((1, dim), jnp.float32),
            )

        blocks = [one() for _ in range(depth)]
        return {k: jnp.stack([b[k] for b in blocks], axis=0) for k in blocks[0]}

    num_patches = (IMG_SIZE // PATCH) ** 2
    grid_size = int(num_patches ** 0.5)
    patch_in = IN_CHANS * PATCH * PATCH

    params = {}
    params["patch_w"] = xavier(patch_in, EMBED_DIM)
    bound = 1.0 / math.sqrt(patch_in)
    params["patch_b"] = jax.random.uniform(nk(), (EMBED_DIM,), jnp.float32, -bound, bound)
    params["cls_token"] = 0.02 * jax.random.normal(nk(), (1, 1, EMBED_DIM), jnp.float32)
    params["pos_embed"] = get_2d_sincos_pos_embed(EMBED_DIM, grid_size, cls_token=True)[None]
    params["enc_blocks"] = stacked_blocks(EMBED_DIM, MLP_RATIO, DEPTH)
    params["norm_g"] = jnp.ones((EMBED_DIM,), jnp.float32)
    params["norm_b"] = jnp.zeros((EMBED_DIM,), jnp.float32)

    params["dec_embed_w"] = xavier(EMBED_DIM, DEC_EMBED_DIM)
    params["dec_embed_b"] = jnp.zeros((DEC_EMBED_DIM,), jnp.float32)
    params["mask_token"] = 0.02 * jax.random.normal(nk(), (1, 1, DEC_EMBED_DIM), jnp.float32)
    params["dec_pos_embed"] = get_2d_sincos_pos_embed(DEC_EMBED_DIM, grid_size, cls_token=True)[None]
    params["dec_blocks"] = stacked_blocks(DEC_EMBED_DIM, MLP_RATIO, DEC_DEPTH)
    params["dec_norm_g"] = jnp.ones((DEC_EMBED_DIM,), jnp.float32)
    params["dec_norm_b"] = jnp.zeros((DEC_EMBED_DIM,), jnp.float32)
    params["dec_pred_w"] = xavier(DEC_EMBED_DIM, PATCH * PATCH * IN_CHANS)
    params["dec_pred_b"] = jnp.zeros((PATCH * PATCH * IN_CHANS,), jnp.float32)
    return params


# ---------------------------------------------------------------------------
# MAE forward pass
# ---------------------------------------------------------------------------
def forward_encoder(params, imgs, mask_ratio, noise_key):
    """Returns (decoder_embed(norm(encoder(x))), mask, ids_restore)."""
    N = imgs.shape[0]
    p = PATCH
    h = w = IMG_SIZE // p
    L = h * w

    # PatchEmbed: Conv2d(kernel=stride=p) == patch extraction (c, kh, kw order) + matmul
    x = imgs.reshape(N, IN_CHANS, h, p, w, p)
    x = jnp.transpose(x, (0, 2, 4, 1, 3, 5)).reshape(N, L, IN_CHANS * p * p)
    x = patch_embed(x, params["patch_w"], params["patch_b"],
                    params["pos_embed"][:, 1:, :])               # (N, L, E), pos added

    # random masking (argsort of uniform noise)
    # TODO(synk): argsort/gather have no Pallas TPU primitive; done in plain JAX.
    len_keep = int(L * (1 - mask_ratio))
    noise = jax.random.uniform(noise_key, (N, L), jnp.float32)
    ids_shuffle = jnp.argsort(noise, axis=1)
    ids_restore = jnp.argsort(ids_shuffle, axis=1)
    ids_keep = ids_shuffle[:, :len_keep]
    idx = jnp.broadcast_to(ids_keep[:, :, None], (N, len_keep, EMBED_DIM))
    x_masked = jnp.take_along_axis(x, idx, axis=1)
    mask = jnp.ones((N, L), jnp.float32).at[:, :len_keep].set(0.0)
    mask = jnp.take_along_axis(mask, ids_restore, axis=1)

    cls_tok = params["cls_token"] + params["pos_embed"][:, :1, :]
    cls_toks = jnp.broadcast_to(cls_tok, (N, 1, EMBED_DIM))
    x = jnp.concatenate([cls_toks, x_masked], axis=1)            # (N, 1+keep, E)

    # Fused: DEPTH blocks + final LayerNorm + decoder_embed linear.
    x = transformer_stack(x, params["enc_blocks"], params["norm_g"], params["norm_b"],
                          params["dec_embed_w"], params["dec_embed_b"], NUM_HEADS)
    return x, mask, ids_restore


def forward_decoder(params, x_emb, ids_restore):
    """x_emb: (N, S, DEC_E) — already passed through decoder_embed."""
    N, S, D = x_emb.shape
    L = ids_restore.shape[1]

    mask_tokens = jnp.broadcast_to(params["mask_token"], (N, L + 1 - S, D))
    x_ = jnp.concatenate([x_emb[:, 1:, :], mask_tokens], axis=1)
    idx = jnp.broadcast_to(ids_restore[:, :, None], (N, L, D))
    x_ = jnp.take_along_axis(x_, idx, axis=1)
    x = jnp.concatenate([x_emb[:, :1, :], x_], axis=1)
    x = x + params["dec_pos_embed"]

    # Fused: DEC_DEPTH blocks + decoder_norm + decoder_pred linear.
    pred = transformer_stack(x, params["dec_blocks"],
                             params["dec_norm_g"], params["dec_norm_b"],
                             params["dec_pred_w"], params["dec_pred_b"], DEC_NUM_HEADS)
    return pred[:, 1:, :]


def forward_loss(params, imgs, pred, mask):
    N = imgs.shape[0]
    p = PATCH
    h = w = IMG_SIZE // p
    L = h * w
    P = p * p * IN_CHANS

    # patchify: nchpwq -> nhwpqc  (kh, kw, c ordering)
    t = imgs.reshape(N, IN_CHANS, h, p, w, p)
    t = jnp.transpose(t, (0, 2, 4, 3, 5, 1)).reshape(N, L, P)
    if NORM_PIX_LOSS:
        mean = t.mean(-1, keepdims=True)
        var = t.var(-1, keepdims=True)
        t = (t - mean) / (var + 1e-6) ** 0.5

    return masked_mse_loss(pred.reshape(N * L, P), t.reshape(N * L, P),
                           mask.reshape(N * L, 1))


@partial(jax.jit, static_argnames=("mask_ratio",))
def mae_forward(params, imgs, noise_key, mask_ratio=0.75):
    latent_emb, mask, ids_restore = forward_encoder(params, imgs, mask_ratio, noise_key)
    pred = forward_decoder(params, latent_emb, ids_restore)
    loss = forward_loss(params, imgs, pred, mask)
    return loss, pred, mask


# ---------------------------------------------------------------------------
if __name__ == "__main__":
    key = jax.random.PRNGKey(0)
    pkey, ikey, nkey = jax.random.split(key, 3)
    params = init_params(pkey)
    imgs = jax.random.normal(ikey, (2, IN_CHANS, IMG_SIZE, IMG_SIZE), jnp.float32)

    loss, pred, mask = mae_forward(params, imgs, nkey, mask_ratio=0.75)
    jax.block_until_ready((loss, pred, mask))

    L = (IMG_SIZE // PATCH) ** 2
    assert pred.shape == (2, L, PATCH * PATCH * IN_CHANS), pred.shape
    assert mask.shape == (2, L), mask.shape
    assert bool(jnp.isfinite(loss)), loss
    print("KERNEL_OK")
</pallas_src>

<mosaic_0001>
module attributes {stable_mosaic.version = 11 : i64} {
  func.func @_patch_embed_kernel(%arg0: i32, %arg1: memref<1x16x48xf32, #tpu.memory_space<vmem>>, %arg2: memref<48x32xf32, #tpu.memory_space<vmem>>, %arg3: memref<1x32xf32, #tpu.memory_space<vmem>>, %arg4: memref<1x16x32xf32, #tpu.memory_space<vmem>>, %arg5: memref<1x16x32xf32, #tpu.memory_space<vmem>>) attributes {dimension_semantics = [#tpu.dimension_semantics<parallel>], iteration_bounds = array<i64: 2>, scalar_prefetch = 0 : i64, scratch_operands = 0 : i64, tpu.core_type = #tpu.core_type<tc>, window_params = [{transform_indices = @transform_0, window_bounds = array<i64: 1, 16, 48>}, {pipeline_mode = #tpu.pipeline_mode<synchronous>, transform_indices = @transform_1, window_bounds = array<i64: 48, 32>}, {pipeline_mode = #tpu.pipeline_mode<synchronous>, transform_indices = @transform_2, window_bounds = array<i64: 1, 32>}, {pipeline_mode = #tpu.pipeline_mode<synchronous>, transform_indices = @transform_3, window_bounds = array<i64: 1, 16, 32>}, {transform_indices = @transform_4, window_bounds = array<i64: 1, 16, 32>}]} {
    %c0 = arith.constant 0 : index
    %c0_0 = arith.constant 0 : index
    %c0_1 = arith.constant 0 : index
    %0 = vector.load %arg1[%c0, %c0_0, %c0_1] : memref<1x16x48xf32, #tpu.memory_space<vmem>>, vector<1x16x48xf32>
    %1 = vector.shape_cast %0 : vector<1x16x48xf32> to vector<16x48xf32>
    %c0_2 = arith.constant 0 : index
    %c0_3 = arith.constant 0 : index
    %2 = vector.load %arg2[%c0_2, %c0_3] : memref<48x32xf32, #tpu.memory_space<vmem>>, vector<48x32xf32>
    %cst = arith.constant dense<0.000000e+00> : vector<16x32xf32>
    %3 = tpu.matmul %1, %2, %cst {dimension_numbers = #tpu.dot_dimension_numbers<[1], [0], [0], [1], [0, 0, 1, 1], [], []>} : vector<16x48xf32>, vector<48x32xf32>, vector<16x32xf32> -> vector<16x32xf32>
    %c0_4 = arith.constant 0 : index
    %c0_5 = arith.constant 0 : index
    %4 = vector.load %arg3[%c0_4, %c0_5] : memref<1x32xf32, #tpu.memory_space<vmem>>, vector<1x32xf32>
    %5 = vector.broadcast %4 : vector<1x32xf32> to vector<16x32xf32>
    %6 = arith.addf %3, %5 : vector<16x32xf32>
    %c0_6 = arith.constant 0 : index
    %c0_7 = arith.constant 0 : index
    %c0_8 = arith.constant 0 : index
    %7 = vector.load %arg4[%c0_6, %c0_7, %c0_8] : memref<1x16x32xf32, #tpu.memory_space<vmem>>, vector<1x16x32xf32>
    %8 = vector.shape_cast %7 : vector<1x16x32xf32> to vector<16x32xf32>
    %9 = arith.addf %6, %8 : vector<16x32xf32>
    %c0_9 = arith.constant 0 : index
    %c0_10 = arith.constant 0 : index
    %c0_11 = arith.constant 0 : index
    %10 = vector.load %arg5[%c0_9, %c0_10, %c0_11] : memref<1x16x32xf32, #tpu.memory_space<vmem>>, vector<1x16x32xf32>
    %11 = vector.shape_cast %10 : vector<1x16x32xf32> to vector<16x32xf32>
    %12 = vector.shape_cast %9 : vector<16x32xf32> to vector<1x16x32xf32>
    tpu.vector_store %arg5[%c0_9, %c0_10, %c0_11], %12 {strides = array<i32>} : memref<1x16x32xf32, #tpu.memory_space<vmem>>, vector<1x16x32xf32>,
    return
  }
  func.func @transform_0(%arg0: i32) -> (i32, i32, i32) {
    %c0_i32 = arith.constant 0 : i32
    %c0_i32_0 = arith.constant 0 : i32
    %c0_i32_1 = arith.constant 0 : i32
    return %arg0, %c0_i32, %c0_i32_0 : i32, i32, i32
  }
  func.func @transform_1(%arg0: i32) -> (i32, i32) {
    %c0_i32 = arith.constant 0 : i32
    %c0_i32_0 = arith.constant 0 : i32
    %c0_i32_1 = arith.constant 0 : i32
    return %c0_i32, %c0_i32_0 : i32, i32
  }
  func.func @transform_2(%arg0: i32) -> (i32, i32) {
    %c0_i32 = arith.constant 0 : i32
    %c0_i32_0 = arith.constant 0 : i32
    %c0_i32_1 = arith.constant 0 : i32
    return %c0_i32, %c0_i32_0 : i32, i32
  }
  func.func @transform_3(%arg0: i32) -> (i32, i32, i32) {
    %c0_i32 = arith.constant 0 : i32
    %c0_i32_0 = arith.constant 0 : i32
    %c0_i32_1 = arith.constant 0 : i32
    %c0_i32_2 = arith.constant 0 : i32
    return %c0_i32, %c0_i32_0, %c0_i32_1 : i32, i32, i32
  }
  func.func @transform_4(%arg0: i32) -> (i32, i32, i32) {
    %c0_i32 = arith.constant 0 : i32
    %c0_i32_0 = arith.constant 0 : i32
    %c0_i32_1 = arith.constant 0 : i32
    return %arg0, %c0_i32, %c0_i32_0 : i32, i32, i32
  }
}

module attributes {stable_mosaic.version = 11 : i64} {
  func.func @_stack_kernel(%arg0: i32, %arg1: memref<1x5x32xf32, #tpu.memory_space<vmem>>, %arg2: memref<2x1x32xf32, #tpu.memory_space<vmem>>, %arg3: memref<2x1x32xf32, #tpu.memory_space<vmem>>, %arg4: memref<2x32x96xf32, #tpu.memory_space<vmem>>, %arg5: memref<2x1x96xf32, #tpu.memory_space<vmem>>, %arg6: memref<2x32x32xf32, #tpu.memory_space<vmem>>, %arg7: memref<2x1x32xf32, #tpu.memory_space<vmem>>, %arg8: memref<2x1x32xf32, #tpu.memory_space<vmem>>, %arg9: memref<2x1x32xf32, #tpu.memory_space<vmem>>, %arg10: memref<2x32x128xf32, #tpu.memory_space<vmem>>, %arg11: memref<2x1x128xf32, #tpu.memory_space<vmem>>, %arg12: memref<2x128x32xf32, #tpu.memory_space<vmem>>, %arg13: memref<2x1x32xf32, #tpu.memory_space<vmem>>, %arg14: memref<1x32xf32, #tpu.memory_space<vmem>>, %arg15: memref<1x32xf32, #tpu.memory_space<vmem>>, %arg16: memref<32x32xf32, #tpu.memory_space<vmem>>, %arg17: memref<1x32xf32, #tpu.memory_space<vmem>>, %arg18: memref<1x5x32xf32, #tpu.memory_space<vmem>>) attributes {dimension_semantics = [#tpu.dimension_semantics<parallel>], iteration_bounds = array<i64: 2>, scalar_prefetch = 0 : i64, scratch_operands = 0 : i64, tpu.core_type = #tpu.core_type<tc>, window_params = [{transform_indices = @transform_0, window_bounds = array<i64: 1, 5, 32>}, {pipeline_mode = #tpu.pipeline_mode<synchronous>, transform_indices = @transform_1, window_bounds = array<i64: 2, 1, 32>}, {pipeline_mode = #tpu.pipeline_mode<synchronous>, transform_indices = @transform_2, window_bounds = array<i64: 2, 1, 32>}, {pipeline_mode = #tpu.pipeline_mode<synchronous>, transform_indices = @transform_3, window_bounds = array<i64: 2, 32, 96>}, {pipeline_mode = #tpu.pipeline_mode<synchronous>, transform_indices = @transform_4, window_bounds = array<i64: 2, 1, 96>}, {pipeline_mode = #tpu.pipeline_mode<synchronous>, transform_indices = @transform_5, window_bounds = array<i64: 2, 32, 32>}, {pipeline_mode = #tpu.pipeline_mode<synchronous>, transform_indices = @transform_6, window_bounds = array<i64: 2, 1, 32>}, {pipeline_mode = #tpu.pipeline_mode<synchronous>, transform_indices = @transform_7, window_bounds = array<i64: 2, 1, 32>}, {pipeline_mode = #tpu.pipeline_mode<synchronous>, transform_indices = @transform_8, window_bounds = array<i64: 2, 1, 32>}, {pipeline_mode = #tpu.pipeline_mode<synchronous>, transform_indices = @transform_9, window_bounds = array<i64: 2, 32, 128>}, {pipeline_mode = #tpu.pipeline_mode<synchronous>, transform_indices = @transform_10, window_bounds = array<i64: 2, 1, 128>}, {pipeline_mode = #tpu.pipeline_mode<synchronous>, transform_indices = @transform_11, window_bounds = array<i64: 2, 128, 32>}, {pipeline_mode = #tpu.pipeline_mode<synchronous>, transform_indices = @transform_12, window_bounds = array<i64: 2, 1, 32>}, {pipeline_mode = #tpu.pipeline_mode<synchronous>, transform_indices = @transform_13, window_bounds = array<i64: 1, 32>}, {pipeline_mode = #tpu.pipeline_mode<synchronous>, transform_indices = @transform_14, window_bounds = array<i64: 1, 32>}, {pipeline_mode = #tpu.pipeline_mode<synchronous>, transform_indices = @transform_15, window_bounds = array<i64: 32, 32>}, {pipeline_mode = #tpu.pipeline_mode<synchronous>, transform_indices = @transform_16, window_bounds = array<i64: 1, 32>}, {transform_indices = @transform_17, window_bounds = array<i64: 1, 5, 32>}]} {
    %c0 = arith.constant 0 : index
    %c0_0 = arith.constant 0 : index
    %c0_1 = arith.constant 0 : index
    %0 = vector.load %arg1[%c0, %c0_0, %c0_1] : memref<1x5x32xf32, #tpu.memory_space<vmem>>, vector<1x5x32xf32>
    %1 = vector.shape_cast %0 : vector<1x5x32xf32> to vector<5x32xf32>
    %c0_2 = arith.constant 0 : index
    %c0_3 = arith.constant 0 : index
    %c0_4 = arith.constant 0 : index
    %2 = vector.load %arg2[%c0_2, %c0_3, %c0_4] : memref<2x1x32xf32, #tpu.memory_space<vmem>>, vector<1x1x32xf32>
    %3 = vector.shape_cast %2 : vector<1x1x32xf32> to vector<1x32xf32>
    %c0_5 = arith.constant 0 : index
    %c0_6 = arith.constant 0 : index
    %c0_7 = arith.constant 0 : index
    %4 = vector.load %arg3[%c0_5, %c0_6, %c0_7] : memref<2x1x32xf32, #tpu.memory_space<vmem>>, vector<1x1x32xf32>
    %5 = vector.shape_cast %4 : vector<1x1x32xf32> to vector<1x32xf32>
    %cst = arith.constant dense<0.000000e+00> : vector<5xf32>
    %6 = vector.multi_reduction <add>, %1, %cst [1] : vector<5x32xf32> to vector<5xf32>
    %7 = vector.shape_cast %6 : vector<5xf32> to vector<5x1xf32>
    %cst_8 = arith.constant 3.200000e+01 : f32
    %8 = vector.broadcast %cst_8 : f32 to vector<5x1xf32>
    %9 = arith.divf %7, %8 : vector<5x1xf32>
    %10 = vector.broadcast %9 : vector<5x1xf32> to vector<5x32xf32>
    %11 = arith.subf %1, %10 : vector<5x32xf32>
    %12 = arith.mulf %11, %11 : vector<5x32xf32>
    %cst_9 = arith.constant dense<0.000000e+00> : vector<5xf32>
    %13 = vector.multi_reduction <add>, %12, %cst_9 [1] : vector<5x32xf32> to vector<5xf32>
    %14 = vector.shape_cast %13 : vector<5xf32> to vector<5x1xf32>
    %cst_10 = arith.constant 3.200000e+01 : f32
    %15 = vector.broadcast %cst_10 : f32 to vector<5x1xf32>
    %16 = arith.divf %14, %15 : vector<5x1xf32>
    %cst_11 = arith.constant 9.99999974E-6 : f32
    %17 = vector.broadcast %cst_11 : f32 to vector<5x1xf32>
    %18 = arith.addf %16, %17 : vector<5x1xf32>
    %19 = math.rsqrt %18 : vector<5x1xf32>
    %20 = vector.broadcast %19 : vector<5x1xf32> to vector<5x32xf32>
    %21 = arith.mulf %11, %20 : vector<5x32xf32>
    %22 = vector.broadcast %3 : vector<1x32xf32> to vector<5x32xf32>
    %23 = arith.mulf %21, %22 : vector<5x32xf32>
    %24 = vector.broadcast %5 : vector<1x32xf32> to vector<5x32xf32>
    %25 = arith.addf %23, %24 : vector<5x32xf32>
    %c0_12 = arith.constant 0 : index
    %c0_13 = arith.constant 0 : index
    %c0_14 = arith.constant 0 : index
    %26 = vector.load %arg4[%c0_12, %c0_13, %c0_14] : memref<2x32x96xf32, #tpu.memory_space<vmem>>, vector<1x32x96xf32>
    %27 = vector.shape_cast %26 : vector<1x32x96xf32> to vector<32x96xf32>
    %cst_15 = arith.constant dense<0.000000e+00> : vector<5x96xf32>
    %28 = tpu.matmul %25, %27, %cst_15 {dimension_numbers = #tpu.dot_dimension_numbers<[1], [0], [0], [1], [0, 0, 1, 1], [], []>} : vector<5x32xf32>, vector<32x96xf32>, vector<5x96xf32> -> vector<5x96xf32>
    %c0_16 = arith.constant 0 : index
    %c0_17 = arith.constant 0 : index
    %c0_18 = arith.constant 0 : index
    %29 = vector.load %arg5[%c0_16, %c0_17, %c0_18] : memref<2x1x96xf32, #tpu.memory_space<vmem>>, vector<1x1x96xf32>
    %30 = vector.shape_cast %29 : vector<1x1x96xf32> to vector<1x96xf32>
    %31 = vector.broadcast %30 : vector<1x96xf32> to vector<5x96xf32>
    %32 = arith.addf %28, %31 : vector<5x96xf32>
    %33 = vector.extract_strided_slice %32 {offsets = [0, 0], sizes = [5, 8], strides = [1, 1]} : vector<5x96xf32> to vector<5x8xf32>
    %cst_19 = arith.constant 0.353553385 : f32
    %34 = vector.broadcast %cst_19 : f32 to vector<5x8xf32>
    %35 = arith.mulf %33, %34 : vector<5x8xf32>
    %36 = vector.extract_strided_slice %32 {offsets = [0, 32], sizes = [5, 8], strides = [1, 1]} : vector<5x96xf32> to vector<5x8xf32>
    %37 = vector.extract_strided_slice %32 {offsets = [0, 64], sizes = [5, 8], strides = [1, 1]} : vector<5x96xf32> to vector<5x8xf32>
    %cst_20 = arith.constant dense<0.000000e+00> : vector<5x5xf32>
    %38 = tpu.matmul %35, %36, %cst_20 {dimension_numbers = #tpu.dot_dimension_numbers<[1], [1], [0], [0], [0, 0, 1, 0], [], []>} : vector<5x8xf32>, vector<5x8xf32>, vector<5x5xf32> -> vector<5x5xf32>
    %cst_21 = arith.constant dense<0xFF800000> : vector<5xf32>
    %39 = vector.multi_reduction <maximumf>, %38, %cst_21 [1] : vector<5x5xf32> to vector<5xf32>
    %40 = vector.shape_cast %39 : vector<5xf32> to vector<5x1xf32>
    %41 = vector.broadcast %40 : vector<5x1xf32> to vector<5x5xf32>
    %42 = arith.subf %38, %41 : vector<5x5xf32>
    %43 = math.exp %42 : vector<5x5xf32>
    %cst_22 = arith.constant dense<0.000000e+00> : vector<5xf32>
    %44 = vector.multi_reduction <add>, %43, %cst_22 [1] : vector<5x5xf32> to vector<5xf32>
    %45 = vector.shape_cast %44 : vector<5xf32> to vector<5x1xf32>
    %46 = tpu.reciprocal %45 {approx = true} : vector<5x1xf32> -> vector<5x1xf32>
    %47 = vector.broadcast %46 : vector<5x1xf32> to vector<5x5xf32>
    %48 = arith.mulf %43, %47 : vector<5x5xf32>
    %cst_23 = arith.constant dense<0.000000e+00> : vector<5x8xf32>
    %49 = tpu.matmul %48, %37, %cst_23 {dimension_numbers = #tpu.dot_dimension_numbers<[1], [0], [0], [1], [0, 0, 1, 1], [], []>} : vector<5x5xf32>, vector<5x8xf32>, vector<5x8xf32> -> vector<5x8xf32>
    %c0_24 = arith.constant 0 : index
    %c0_25 = arith.constant 0 : index
    %c0_26 = arith.constant 0 : index
    %50 = vector.load %arg6[%c0_24, %c0_25, %c0_26] : memref<2x32x32xf32, #tpu.memory_space<vmem>>, vector<1x8x32xf32>
    %51 = vector.shape_cast %50 : vector<1x8x32xf32> to vector<8x32xf32>
    %cst_27 = arith.constant dense<0.000000e+00> : vector<5x32xf32>
    %52 = tpu.matmul %49, %51, %cst_27 {dimension_numbers = #tpu.dot_dimension_numbers<[1], [0], [0], [1], [0, 0, 1, 1], [], []>} : vector<5x8xf32>, vector<8x32xf32>, vector<5x32xf32> -> vector<5x32xf32>
    %53 = vector.extract_strided_slice %32 {offsets = [0, 8], sizes = [5, 8], strides = [1, 1]} : vector<5x96xf32> to vector<5x8xf32>
    %cst_28 = arith.constant 0.353553385 : f32
    %54 = vector.broadcast %cst_28 : f32 to vector<5x8xf32>
    %55 = arith.mulf %53, %54 : vector<5x8xf32>
    %56 = vector.extract_strided_slice %32 {offsets = [0, 40], sizes = [5, 8], strides = [1, 1]} : vector<5x96xf32> to vector<5x8xf32>
    %57 = vector.extract_strided_slice %32 {offsets = [0, 72], sizes = [5, 8], strides = [1, 1]} : vector<5x96xf32> to vector<5x8xf32>
    %cst_29 = arith.constant dense<0.000000e+00> : vector<5x5xf32>
    %58 = tpu.matmul %55, %56, %cst_29 {dimension_numbers = #tpu.dot_dimension_numbers<[1], [1], [0], [0], [0, 0, 1, 0], [], []>} : vector<5x8xf32>, vector<5x8xf32>, vector<5x5xf32> -> vector<5x5xf32>
    %cst_30 = arith.constant dense<0xFF800000> : vector<5xf32>
    %59 = vector.multi_reduction <maximumf>, %58, %cst_30 [1] : vector<5x5xf32> to vector<5xf32>
    %60 = vector.shape_cast %59 : vector<5xf32> to vector<5x1xf32>
    %61 = vector.broadcast %60 : vector<5x1xf32> to vector<5x5xf32>
    %62 = arith.subf %58, %61 : vector<5x5xf32>
    %63 = math.exp %62 : vector<5x5xf32>
    %cst_31 = arith.constant dense<0.000000e+00> : vector<5xf32>
    %64 = vector.multi_reduction <add>, %63, %cst_31 [1] : vector<5x5xf32> to vector<5xf32>
    %65 = vector.shape_cast %64 : vector<5xf32> to vector<5x1xf32>
    %66 = tpu.reciprocal %65 {approx = true} : vector<5x1xf32> -> vector<5x1xf32>
    %67 = vector.broadcast %66 : vector<5x1xf32> to vector<5x5xf32>
    %68 = arith.mulf %63, %67 : vector<5x5xf32>
    %cst_32 = arith.constant dense<0.000000e+00> : vector<5x8xf32>
    %69 = tpu.matmul %68, %57, %cst_32 {dimension_numbers = #tpu.dot_dimension_numbers<[1], [0], [0], [1], [0, 0, 1, 1], [], []>} : vector<5x5xf32>, vector<5x8xf32>, vector<5x8xf32> -> vector<5x8xf32>
    %c0_33 = arith.constant 0 : index
    %c8 = arith.constant 8 : index
    %c0_34 = arith.constant 0 : index
    %70 = vector.load %arg6[%c0_33, %c8, %c0_34] : memref<2x32x32xf32, #tpu.memory_space<vmem>>, vector<1x8x32xf32>
    %71 = vector.shape_cast %70 : vector<1x8x32xf32> to vector<8x32xf32>
    %cst_35 = arith.constant dense<0.000000e+00> : vector<5x32xf32>
    %72 = tpu.matmul %69, %71, %cst_35 {dimension_numbers = #tpu.dot_dimension_numbers<[1], [0], [0], [1], [0, 0, 1, 1], [], []>} : vector<5x8xf32>, vector<8x32xf32>, vector<5x32xf32> -> vector<5x32xf32>
    %73 = arith.addf %52, %72 : vector<5x32xf32>
    %74 = vector.extract_strided_slice %32 {offsets = [0, 16], sizes = [5, 8], strides = [1, 1]} : vector<5x96xf32> to vector<5x8xf32>
    %cst_36 = arith.constant 0.353553385 : f32
    %75 = vector.broadcast %cst_36 : f32 to vector<5x8xf32>
    %76 = arith.mulf %74, %75 : vector<5x8xf32>
    %77 = vector.extract_strided_slice %32 {offsets = [0, 48], sizes = [5, 8], strides = [1, 1]} : vector<5x96xf32> to vector<5x8xf32>
    %78 = vector.extract_strided_slice %32 {offsets = [0, 80], sizes = [5, 8], strides = [1, 1]} : vector<5x96xf32> to vector<5x8xf32>
    %cst_37 = arith.constant dense<0.000000e+00> : vector<5x5xf32>
    %79 = tpu.matmul %76, %77, %cst_37 {dimension_numbers = #tpu.dot_dimension_numbers<[1], [1], [0], [0], [0, 0, 1, 0], [], []>} : vector<5x8xf32>, vector<5x8xf32>, vector<5x5xf32> -> vector<5x5xf32>
    %cst_38 = arith.constant dense<0xFF800000> : vector<5xf32>
    %80 = vector.multi_reduction <maximumf>, %79, %cst_38 [1] : vector<5x5xf32> to vector<5xf32>
    %81 = vector.shape_cast %80 : vector<5xf32> to vector<5x1xf32>
    %82 = vector.broadcast %81 : vector<5x1xf32> to vector<5x5xf32>
    %83 = arith.subf %79, %82 : vector<5x5xf32>
    %84 = math.exp %83 : vector<5x5xf32>
    %cst_39 = arith.constant dense<0.000000e+00> : vector<5xf32>
    %85 = vector.multi_reduction <add>, %84, %cst_39 [1] : vector<5x5xf32> to vector<5xf32>
    %86 = vector.shape_cast %85 : vector<5xf32> to vector<5x1xf32>
    %87 = tpu.reciprocal %86 {approx = true} : vector<5x1xf32> -> vector<5x1xf32>
    %88 = vector.broadcast %87 : vector<5x1xf32> to vector<5x5xf32>
    %89 = arith.mulf %84, %88 : vector<5x5xf32>
    %cst_40 = arith.constant dense<0.000000e+00> : vector<5x8xf32>
    %90 = tpu.matmul %89, %78, %cst_40 {dimension_numbers = #tpu.dot_dimension_numbers<[1], [0], [0], [1], [0, 0, 1, 1], [], []>} : vector<5x5xf32>, vector<5x8xf32>, vector<5x8xf32> -> vector<5x8xf32>
    %c0_41 = arith.constant 0 : index
    %c16 = arith.constant 16 : index
    %c0_42 = arith.constant 0 : index
    %91 = vector.load %arg6[%c0_41, %c16, %c0_42] : memref<2x32x32xf32, #tpu.memory_space<vmem>>, vector<1x8x32xf32>
    %92 = vector.shape_cast %91 : vector<1x8x32xf32> to vector<8x32xf32>
    %cst_43 = arith.constant dense<0.000000e+00> : vector<5x32xf32>
    %93 = tpu.matmul %90, %92, %cst_43 {dimension_numbers = #tpu.dot_dimension_numbers<[1], [0], [0], [1], [0, 0, 1, 1], [], []>} : vector<5x8xf32>, vector<8x32xf32>, vector<5x32xf32> -> vector<5x32xf32>
    %94 = arith.addf %73, %93 : vector<5x32xf32>
    %95 = vector.extract_strided_slice %32 {offsets = [0, 24], sizes = [5, 8], strides = [1, 1]} : vector<5x96xf32> to vector<5x8xf32>
    %cst_44 = arith.constant 0.353553385 : f32
    %96 = vector.broadcast %cst_44 : f32 to vector<5x8xf32>
    %97 = arith.mulf %95, %96 : vector<5x8xf32>
    %98 = vector.extract_strided_slice %32 {offsets = [0, 56], sizes = [5, 8], strides = [1, 1]} : vector<5x96xf32> to vector<5x8xf32>
    %99 = vector.extract_strided_slice %32 {offsets = [0, 88], sizes = [5, 8], strides = [1, 1]} : vector<5x96xf32> to vector<5x8xf32>
    %cst_45 = arith.constant dense<0.000000e+00> : vector<5x5xf32>
    %100 = tpu.matmul %97, %98, %cst_45 {dimension_numbers = #tpu.dot_dimension_numbers<[1], [1], [0], [0], [0, 0, 1, 0], [], []>} : vector<5x8xf32>, vector<5x8xf32>, vector<5x5xf32> -> vector<5x5xf32>
    %cst_46 = arith.constant dense<0xFF800000> : vector<5xf32>
    %101 = vector.multi_reduction <maximumf>, %100, %cst_46 [1] : vector<5x5xf32> to vector<5xf32>
    %102 = vector.shape_cast %101 : vector<5xf32> to vector<5x1xf32>
    %103 = vector.broadcast %102 : vector<5x1xf32> to vector<5x5xf32>
    %104 = arith.subf %100, %103 : vector<5x5xf32>
    %105 = math.exp %104 : vector<5x5xf32>
    %cst_47 = arith.constant dense<0.000000e+00> : vector<5xf32>
    %106 = vector.multi_reduction <add>, %105, %cst_47 [1] : vector<5x5xf32> to vector<5xf32>
    %107 = vector.shape_cast %106 : vector<5xf32> to vector<5x1xf32>
    %108 = tpu.reciprocal %107 {approx = true} : vector<5x1xf32> -> vector<5x1xf32>
    %109 = vector.broadcast %108 : vector<5x1xf32> to vector<5x5xf32>
    %110 = arith.mulf %105, %109 : vector<5x5xf32>
    %cst_48 = arith.constant dense<0.000000e+00> : vector<5x8xf32>
    %111 = tpu.matmul %110, %99, %cst_48 {dimension_numbers = #tpu.dot_dimension_numbers<[1], [0], [0], [1], [0, 0, 1, 1], [], []>} : vector<5x5xf32>, vector<5x8xf32>, vector<5x8xf32> -> vector<5x8xf32>
    %c0_49 = arith.constant 0 : index
    %c24 = arith.constant 24 : index
    %c0_50 = arith.constant 0 : index
    %112 = vector.load %arg6[%c0_49, %c24, %c0_50] : memref<2x32x32xf32, #tpu.memory_space<vmem>>, vector<1x8x32xf32>
    %113 = vector.shape_cast %112 : vector<1x8x32xf32> to vector<8x32xf32>
    %cst_51 = arith.constant dense<0.000000e+00> : vector<5x32xf32>
    %114 = tpu.matmul %111, %113, %cst_51 {dimension_numbers = #tpu.dot_dimension_numbers<[1], [0], [0], [1], [0, 0, 1, 1], [], []>} : vector<5x8xf32>, vector<8x32xf32>, vector<5x32xf32> -> vector<5x32xf32>
    %115 = arith.addf %94, %114 : vector<5x32xf32>
    %116 = arith.addf %1, %115 : vector<5x32xf32>
    %c0_52 = arith.constant 0 : index
    %c0_53 = arith.constant 0 : index
    %c0_54 = arith.constant 0 : index
    %117 = vector.load %arg7[%c0_52, %c0_53, %c0_54] : memref<2x1x32xf32, #tpu.memory_space<vmem>>, vector<1x1x32xf32>
    %118 = vector.shape_cast %117 : vector<1x1x32xf32> to vector<1x32xf32>
    %119 = vector.broadcast %118 : vector<1x32xf32> to vector<5x32xf32>
    %120 = arith.addf %116, %119 : vector<5x32xf32>
    %c0_55 = arith.constant 0 : index
    %c0_56 = arith.constant 0 : index
    %c0_57 = arith.constant 0 : index
    %121 = vector.load %arg8[%c0_55, %c0_56, %c0_57] : memref<2x1x32xf32, #tpu.memory_space<vmem>>, vector<1x1x32xf32>
    %122 = vector.shape_cast %121 : vector<1x1x32xf32> to vector<1x32xf32>
    %c0_58 = arith.constant 0 : index
    %c0_59 = arith.constant 0 : index
    %c0_60 = arith.constant 0 : index
    %123 = vector.load %arg9[%c0_58, %c0_59, %c0_60] : memref<2x1x32xf32, #tpu.memory_space<vmem>>, vector<1x1x32xf32>
    %124 = vector.shape_cast %123 : vector<1x1x32xf32> to vector<1x32xf32>
    %cst_61 = arith.constant dense<0.000000e+00> : vector<5xf32>
    %125 = vector.multi_reduction <add>, %120, %cst_61 [1] : vector<5x32xf32> to vector<5xf32>
    %126 = vector.shape_cast %125 : vector<5xf32> to vector<5x1xf32>
    %cst_62 = arith.constant 3.200000e+01 : f32
    %127 = vector.broadcast %cst_62 : f32 to vector<5x1xf32>
    %128 = arith.divf %126, %127 : vector<5x1xf32>
    %129 = vector.broadcast %128 : vector<5x1xf32> to vector<5x32xf32>
    %130 = arith.subf %120, %129 : vector<5x32xf32>
    %131 = arith.mulf %130, %130 : vector<5x32xf32>
    %cst_63 = arith.constant dense<0.000000e+00> : vector<5xf32>
    %132 = vector.multi_reduction <add>, %131, %cst_63 [1] : vector<5x32xf32> to vector<5xf32>
    %133 = vector.shape_cast %132 : vector<5xf32> to vector<5x1xf32>
    %cst_64 = arith.constant 3.200000e+01 : f32
    %134 = vector.broadcast %cst_64 : f32 to vector<5x1xf32>
    %135 = arith.divf %133, %134 : vector<5x1xf32>
    %cst_65 = arith.constant 9.99999974E-6 : f32
    %136 = vector.broadcast %cst_65 : f32 to vector<5x1xf32>
    %137 = arith.addf %135, %136 : vector<5x1xf32>
    %138 = math.rsqrt %137 : vector<5x1xf32>
    %139 = vector.broadcast %138 : vector<5x1xf32> to vector<5x32xf32>
    %140 = arith.mulf %130, %139 : vector<5x32xf32>
    %141 = vector.broadcast %122 : vector<1x32xf32> to vector<5x32xf32>
    %142 = arith.mulf %140, %141 : vector<5x32xf32>
    %143 = vector.broadcast %124 : vector<1x32xf32> to vector<5x32xf32>
    %144 = arith.addf %142, %143 : vector<5x32xf32>
    %c0_66 = arith.constant 0 : index
    %c0_67 = arith.constant 0 : index
    %c0_68 = arith.constant 0 : index
    %145 = vector.load %arg10[%c0_66, %c0_67, %c0_68] : memref<2x32x128xf32, #tpu.memory_space<vmem>>, vector<1x32x128xf32>
    %146 = vector.shape_cast %145 : vector<1x32x128xf32> to vector<32x128xf32>
    %cst_69 = arith.constant dense<0.000000e+00> : vector<5x128xf32>
    %147 = tpu.matmul %144, %146, %cst_69 {dimension_numbers = #tpu.dot_dimension_numbers<[1], [0], [0], [1], [0, 0, 1, 1], [], []>} : vector<5x32xf32>, vector<32x128xf32>, vector<5x128xf32> -> vector<5x128xf32>
    %c0_70 = arith.constant 0 : index
    %c0_71 = arith.constant 0 : index
    %c0_72 = arith.constant 0 : index
    %148 = vector.load %arg11[%c0_70, %c0_71, %c0_72] : memref<2x1x128xf32, #tpu.memory_space<vmem>>, vector<1x1x128xf32>
    %149 = vector.shape_cast %148 : vector<1x1x128xf32> to vector<1x128xf32>
    %150 = vector.broadcast %149 : vector<1x128xf32> to vector<5x128xf32>
    %151 = arith.addf %147, %150 : vector<5x128xf32>
    %cst_73 = arith.constant 5.000000e-01 : f32
    %152 = vector.broadcast %cst_73 : f32 to vector<5x128xf32>
    %153 = arith.mulf %152, %151 : vector<5x128xf32>
    %cst_74 = arith.constant 0.707106769 : f32
    %154 = vector.broadcast %cst_74 : f32 to vector<5x128xf32>
    %155 = arith.mulf %151, %154 : vector<5x128xf32>
    %cst_75 = arith.constant 0.000000e+00 : f32
    %156 = vector.broadcast %cst_75 : f32 to vector<5x128xf32>
    %157 = arith.cmpf oge, %155, %156 : vector<5x128xf32>
    %cst_76 = arith.constant 1.000000e+00 : f32
    %cst_77 = arith.constant -1.000000e+00 : f32
    %158 = vector.broadcast %cst_76 : f32 to vector<5x128xf32>
    %159 = vector.broadcast %cst_77 : f32 to vector<5x128xf32>
    %160 = arith.select %157, %158, %159 : vector<5x128xi1>, vector<5x128xf32>
    %161 = math.absf %155 : vector<5x128xf32>
    %cst_78 = arith.constant 0.327591091 : f32
    %162 = vector.broadcast %cst_78 : f32 to vector<5x128xf32>
    %163 = arith.mulf %162, %161 : vector<5x128xf32>
    %cst_79 = arith.constant 1.000000e+00 : f32
    %164 = vector.broadcast %cst_79 : f32 to vector<5x128xf32>
    %165 = arith.addf %164, %163 : vector<5x128xf32>
    %cst_80 = arith.constant 1.000000e+00 : f32
    %166 = vector.broadcast %cst_80 : f32 to vector<5x128xf32>
    %167 = arith.divf %166, %165 : vector<5x128xf32>
    %cst_81 = arith.constant 1.06140542 : f32
    %168 = vector.broadcast %cst_81 : f32 to vector<5x128xf32>
    %169 = arith.mulf %168, %167 : vector<5x128xf32>
    %cst_82 = arith.constant -1.45315206 : f32
    %170 = vector.broadcast %cst_82 : f32 to vector<5x128xf32>
    %171 = arith.addf %169, %170 : vector<5x128xf32>
    %172 = arith.mulf %171, %167 : vector<5x128xf32>
    %cst_83 = arith.constant 1.42141378 : f32
    %173 = vector.broadcast %cst_83 : f32 to vector<5x128xf32>
    %174 = arith.addf %172, %173 : vector<5x128xf32>
    %175 = arith.mulf %174, %167 : vector<5x128xf32>
    %cst_84 = arith.constant -0.284496725 : f32
    %176 = vector.broadcast %cst_84 : f32 to vector<5x128xf32>
    %177 = arith.addf %175, %176 : vector<5x128xf32>
    %178 = arith.mulf %177, %167 : vector<5x128xf32>
    %cst_85 = arith.constant 0.254829586 : f32
    %179 = vector.broadcast %cst_85 : f32 to vector<5x128xf32>
    %180 = arith.addf %178, %179 : vector<5x128xf32>
    %181 = arith.mulf %180, %167 : vector<5x128xf32>
    %cst_86 = arith.constant 0.000000e+00 : f32
    %182 = vector.broadcast %cst_86 : f32 to vector<5x128xf32>
    %183 = arith.subf %182, %161 : vector<5x128xf32>
    %184 = arith.mulf %183, %161 : vector<5x128xf32>
    %185 = math.exp %184 : vector<5x128xf32>
    %186 = arith.mulf %181, %185 : vector<5x128xf32>
    %cst_87 = arith.constant 1.000000e+00 : f32
    %187 = vector.broadcast %cst_87 : f32 to vector<5x128xf32>
    %188 = arith.subf %187, %186 : vector<5x128xf32>
    %189 = arith.mulf %160, %188 : vector<5x128xf32>
    %cst_88 = arith.constant 1.000000e+00 : f32
    %190 = vector.broadcast %cst_88 : f32 to vector<5x128xf32>
    %191 = arith.addf %190, %189 : vector<5x128xf32>
    %192 = arith.mulf %153, %191 : vector<5x128xf32>
    %c0_89 = arith.constant 0 : index
    %c0_90 = arith.constant 0 : index
    %c0_91 = arith.constant 0 : index
    %193 = vector.load %arg12[%c0_89, %c0_90, %c0_91] : memref<2x128x32xf32, #tpu.memory_space<vmem>>, vector<1x128x32xf32>
    %194 = vector.shape_cast %193 : vector<1x128x32xf32> to vector<128x32xf32>
    %cst_92 = arith.constant dense<0.000000e+00> : vector<5x32xf32>
    %195 = tpu.matmul %192, %194, %cst_92 {dimension_numbers = #tpu.dot_dimension_numbers<[1], [0], [0], [1], [0, 0, 1, 1], [], []>} : vector<5x128xf32>, vector<128x32xf32>, vector<5x32xf32> -> vector<5x32xf32>
    %196 = arith.addf %120, %195 : vector<5x32xf32>
    %c0_93 = arith.constant 0 : index
    %c0_94 = arith.constant 0 : index
    %c0_95 = arith.constant 0 : index
    %197 = vector.load %arg13[%c0_93, %c0_94, %c0_95] : memref<2x1x32xf32, #tpu.memory_space<vmem>>, vector<1x1x32xf32>
    %198 = vector.shape_cast %197 : vector<1x1x32xf32> to vector<1x32xf32>
    %199 = vector.broadcast %198 : vector<1x32xf32> to vector<5x32xf32>
    %200 = arith.addf %196, %199 : vector<5x32xf32>
    %c1 = arith.constant 1 : index
    %c0_96 = arith.constant 0 : index
    %c0_97 = arith.constant 0 : index
    %201 = vector.load %arg2[%c1, %c0_96, %c0_97] : memref<2x1x32xf32, #tpu.memory_space<vmem>>, vector<1x1x32xf32>
    %202 = vector.shape_cast %201 : vector<1x1x32xf32> to vector<1x32xf32>
    %c1_98 = arith.constant 1 : index
    %c0_99 = arith.constant 0 : index
    %c0_100 = arith.constant 0 : index
    %203 = vector.load %arg3[%c1_98, %c0_99, %c0_100] : memref<2x1x32xf32, #tpu.memory_space<vmem>>, vector<1x1x32xf32>
    %204 = vector.shape_cast %203 : vector<1x1x32xf32> to vector<1x32xf32>
    %cst_101 = arith.constant dense<0.000000e+00> : vector<5xf32>
    %205 = vector.multi_reduction <add>, %200, %cst_101 [1] : vector<5x32xf32> to vector<5xf32>
    %206 = vector.shape_cast %205 : vector<5xf32> to vector<5x1xf32>
    %cst_102 = arith.constant 3.200000e+01 : f32
    %207 = vector.broadcast %cst_102 : f32 to vector<5x1xf32>
    %208 = arith.divf %206, %207 : vector<5x1xf32>
    %209 = vector.broadcast %208 : vector<5x1xf32> to vector<5x32xf32>
    %210 = arith.subf %200, %209 : vector<5x32xf32>
    %211 = arith.mulf %210, %210 : vector<5x32xf32>
    %cst_103 = arith.constant dense<0.000000e+00> : vector<5xf32>
    %212 = vector.multi_reduction <add>, %211, %cst_103 [1] : vector<5x32xf32> to vector<5xf32>
    %213 = vector.shape_cast %212 : vector<5xf32> to vector<5x1xf32>
    %cst_104 = arith.constant 3.200000e+01 : f32
    %214 = vector.broadcast %cst_104 : f32 to vector<5x1xf32>
    %215 = arith.divf %213, %214 : vector<5x1xf32>
    %cst_105 = arith.constant 9.99999974E-6 : f32
    %216 = vector.broadcast %cst_105 : f32 to vector<5x1xf32>
    %217 = arith.addf %215, %216 : vector<5x1xf32>
    %218 = math.rsqrt %217 : vector<5x1xf32>
    %219 = vector.broadcast %218 : vector<5x1xf32> to vector<5x32xf32>
    %220 = arith.mulf %210, %219 : vector<5x32xf32>
    %221 = vector.broadcast %202 : vector<1x32xf32> to vector<5x32xf32>
    %222 = arith.mulf %220, %221 : vector<5x32xf32>
    %223 = vector.broadcast %204 : vector<1x32xf32> to vector<5x32xf32>
    %224 = arith.addf %222, %223 : vector<5x32xf32>
    %c1_106 = arith.constant 1 : index
    %c0_107 = arith.constant 0 : index
    %c0_108 = arith.constant 0 : index
    %225 = vector.load %arg4[%c1_106, %c0_107, %c0_108] : memref<2x32x96xf32, #tpu.memory_space<vmem>>, vector<1x32x96xf32>
    %226 = vector.shape_cast %225 : vector<1x32x96xf32> to vector<32x96xf32>
    %cst_109 = arith.constant dense<0.000000e+00> : vector<5x96xf32>
    %227 = tpu.matmul %224, %226, %cst_109 {dimension_numbers = #tpu.dot_dimension_numbers<[1], [0], [0], [1], [0, 0, 1, 1], [], []>} : vector<5x32xf32>, vector<32x96xf32>, vector<5x96xf32> -> vector<5x96xf32>
    %c1_110 = arith.constant 1 : index
    %c0_111 = arith.constant 0 : index
    %c0_112 = arith.constant 0 : index
    %228 = vector.load %arg5[%c1_110, %c0_111, %c0_112] : memref<2x1x96xf32, #tpu.memory_space<vmem>>, vector<1x1x96xf32>
    %229 = vector.shape_cast %228 : vector<1x1x96xf32> to vector<1x96xf32>
    %230 = vector.broadcast %229 : vector<1x96xf32> to vector<5x96xf32>
    %231 = arith.addf %227, %230 : vector<5x96xf32>
    %232 = vector.extract_strided_slice %231 {offsets = [0, 0], sizes = [5, 8], strides = [1, 1]} : vector<5x96xf32> to vector<5x8xf32>
    %cst_113 = arith.constant 0.353553385 : f32
    %233 = vector.broadcast %cst_113 : f32 to vector<5x8xf32>
    %234 = arith.mulf %232, %233 : vector<5x8xf32>
    %235 = vector.extract_strided_slice %231 {offsets = [0, 32], sizes = [5, 8], strides = [1, 1]} : vector<5x96xf32> to vector<5x8xf32>
    %236 = vector.extract_strided_slice %231 {offsets = [0, 64], sizes = [5, 8], strides = [1, 1]} : vector<5x96xf32> to vector<5x8xf32>
    %cst_114 = arith.constant dense<0.000000e+00> : vector<5x5xf32>
    %237 = tpu.matmul %234, %235, %cst_114 {dimension_numbers = #tpu.dot_dimension_numbers<[1], [1], [0], [0], [0, 0, 1, 0], [], []>} : vector<5x8xf32>, vector<5x8xf32>, vector<5x5xf32> -> vector<5x5xf32>
    %cst_115 = arith.constant dense<0xFF800000> : vector<5xf32>
    %238 = vector.multi_reduction <maximumf>, %237, %cst_115 [1] : vector<5x5xf32> to vector<5xf32>
    %239 = vector.shape_cast %238 : vector<5xf32> to vector<5x1xf32>
    %240 = vector.broadcast %239 : vector<5x1xf32> to vector<5x5xf32>
    %241 = arith.subf %237, %240 : vector<5x5xf32>
    %242 = math.exp %241 : vector<5x5xf32>
    %cst_116 = arith.constant dense<0.000000e+00> : vector<5xf32>
    %243 = vector.multi_reduction <add>, %242, %cst_116 [1] : vector<5x5xf32> to vector<5xf32>
    %244 = vector.shape_cast %243 : vector<5xf32> to vector<5x1xf32>
    %245 = tpu.reciprocal %244 {approx = true} : vector<5x1xf32> -> vector<5x1xf32>
    %246 = vector.broadcast %245 : vector<5x1xf32> to vector<5x5xf32>
    %247 = arith.mulf %242, %246 : vector<5x5xf32>
    %cst_117 = arith.constant dense<0.000000e+00> : vector<5x8xf32>
    %248 = tpu.matmul %247, %236, %cst_117 {dimension_numbers = #tpu.dot_dimension_numbers<[1], [0], [0], [1], [0, 0, 1, 1], [], []>} : vector<5x5xf32>, vector<5x8xf32>, vector<5x8xf32> -> vector<5x8xf32>
    %c1_118 = arith.constant 1 : index
    %c0_119 = arith.constant 0 : index
    %c0_120 = arith.constant 0 : index
    %249 = vector.load %arg6[%c1_118, %c0_119, %c0_120] : memref<2x32x32xf32, #tpu.memory_space<vmem>>, vector<1x8x32xf32>
    %250 = vector.shape_cast %249 : vector<1x8x32xf32> to vector<8x32xf32>
    %cst_121 = arith.constant dense<0.000000e+00> : vector<5x32xf32>
    %251 = tpu.matmul %248, %250, %cst_121 {dimension_numbers = #tpu.dot_dimension_numbers<[1], [0], [0], [1], [0, 0, 1, 1], [], []>} : vector<5x8xf32>, vector<8x32xf32>, vector<5x32xf32> -> vector<5x32xf32>
    %252 = vector.extract_strided_slice %231 {offsets = [0, 8], sizes = [5, 8], strides = [1, 1]} : vector<5x96xf32> to vector<5x8xf32>
    %cst_122 = arith.constant 0.353553385 : f32
    %253 = vector.broadcast %cst_122 : f32 to vector<5x8xf32>
    %254 = arith.mulf %252, %253 : vector<5x8xf32>
    %255 = vector.extract_strided_slice %231 {offsets = [0, 40], sizes = [5, 8], strides = [1, 1]} : vector<5x96xf32> to vector<5x8xf32>
    %256 = vector.extract_strided_slice %231 {offsets = [0, 72], sizes = [5, 8], strides = [1, 1]} : vector<5x96xf32> to vector<5x8xf32>
    %cst_123 = arith.constant dense<0.000000e+00> : vector<5x5xf32>
    %257 = tpu.matmul %254, %255, %cst_123 {dimension_numbers = #tpu.dot_dimension_numbers<[1], [1], [0], [0], [0, 0, 1, 0], [], []>} : vector<5x8xf32>, vector<5x8xf32>, vector<5x5xf32> -> vector<5x5xf32>
    %cst_124 = arith.constant dense<0xFF800000> : vector<5xf32>
    %258 = vector.multi_reduction <maximumf>, %257, %cst_124 [1] : vector<5x5xf32> to vector<5xf32>
    %259 = vector.shape_cast %258 : vector<5xf32> to vector<5x1xf32>
    %260 = vector.broadcast %259 : vector<5x1xf32> to vector<5x5xf32>
    %261 = arith.subf %257, %260 : vector<5x5xf32>
    %262 = math.exp %261 : vector<5x5xf32>
    %cst_125 = arith.constant dense<0.000000e+00> : vector<5xf32>
    %263 = vector.multi_reduction <add>, %262, %cst_125 [1] : vector<5x5xf32> to vector<5xf32>
    %264 = vector.shape_cast %263 : vector<5xf32> to vector<5x1xf32>
    %265 = tpu.reciprocal %264 {approx = true} : vector<5x1xf32> -> vector<5x1xf32>
    %266 = vector.broadcast %265 : vector<5x1xf32> to vector<5x5xf32>
    %267 = arith.mulf %262, %266 : vector<5x5xf32>
    %cst_126 = arith.constant dense<0.000000e+00> : vector<5x8xf32>
    %268 = tpu.matmul %267, %256, %cst_126 {dimension_numbers = #tpu.dot_dimension_numbers<[1], [0], [0], [1], [0, 0, 1, 1], [], []>} : vector<5x5xf32>, vector<5x8xf32>, vector<5x8xf32> -> vector<5x8xf32>
    %c1_127 = arith.constant 1 : index
    %c8_128 = arith.constant 8 : index
    %c0_129 = arith.constant 0 : index
    %269 = vector.load %arg6[%c1_127, %c8_128, %c0_129] : memref<2x32x32xf32, #tpu.memory_space<vmem>>, vector<1x8x32xf32>
    %270 = vector.shape_cast %269 : vector<1x8x32xf32> to vector<8x32xf32>
    %cst_130 = arith.constant dense<0.000000e+00> : vector<5x32xf32>
    %271 = tpu.matmul %268, %270, %cst_130 {dimension_numbers = #tpu.dot_dimension_numbers<[1], [0], [0], [1], [0, 0, 1, 1], [], []>} : vector<5x8xf32>, vector<8x32xf32>, vector<5x32xf32> -> vector<5x32xf32>
    %272 = arith.addf %251, %271 : vector<5x32xf32>
    %273 = vector.extract_strided_slice %231 {offsets = [0, 16], sizes = [5, 8], strides = [1, 1]} : vector<5x96xf32> to vector<5x8xf32>
    %cst_131 = arith.constant 0.353553385 : f32
    %274 = vector.broadcast %cst_131 : f32 to vector<5x8xf32>
    %275 = arith.mulf %273, %274 : vector<5x8xf32>
    %276 = vector.extract_strided_slice %231 {offsets = [0, 48], sizes = [5, 8], strides = [1, 1]} : vector<5x96xf32> to vector<5x8xf32>
    %277 = vector.extract_strided_slice %231 {offsets = [0, 80], sizes = [5, 8], strides = [1, 1]} : vector<5x96xf32> to vector<5x8xf32>
    %cst_132 = arith.constant dense<0.000000e+00> : vector<5x5xf32>
    %278 = tpu.matmul %275, %276, %cst_132 {dimension_numbers = #tpu.dot_dimension_numbers<[1], [1], [0], [0], [0, 0, 1, 0], [], []>} : vector<5x8xf32>, vector<5x8xf32>, vector<5x5xf32> -> vector<5x5xf32>
    %cst_133 = arith.constant dense<0xFF800000> : vector<5xf32>
    %279 = vector.multi_reduction <maximumf>, %278, %cst_133 [1] : vector<5x5xf32> to vector<5xf32>
    %280 = vector.shape_cast %279 : vector<5xf32> to vector<5x1xf32>
    %281 = vector.broadcast %280 : vector<5x1xf32> to vector<5x5xf32>
    %282 = arith.subf %278, %281 : vector<5x5xf32>
    %283 = math.exp %282 : vector<5x5xf32>
    %cst_134 = arith.constant dense<0.000000e+00> : vector<5xf32>
    %284 = vector.multi_reduction <add>, %283, %cst_134 [1] : vector<5x5xf32> to vector<5xf32>
    %285 = vector.shape_cast %284 : vector<5xf32> to vector<5x1xf32>
    %286 = tpu.reciprocal %285 {approx = true} : vector<5x1xf32> -> vector<5x1xf32>
    %287 = vector.broadcast %286 : vector<5x1xf32> to vector<5x5xf32>
    %288 = arith.mulf %283, %287 : vector<5x5xf32>
    %cst_135 = arith.constant dense<0.000000e+00> : vector<5x8xf32>
    %289 = tpu.matmul %288, %277, %cst_135 {dimension_numbers = #tpu.dot_dimension_numbers<[1], [0], [0], [1], [0, 0, 1, 1], [], []>} : vector<5x5xf32>, vector<5x8xf32>, vector<5x8xf32> -> vector<5x8xf32>
    %c1_136 = arith.constant 1 : index
    %c16_137 = arith.constant 16 : index
    %c0_138 = arith.constant 0 : index
    %290 = vector.load %arg6[%c1_136, %c16_137, %c0_138] : memref<2x32x32xf32, #tpu.memory_space<vmem>>, vector<1x8x32xf32>
    %291 = vector.shape_cast %290 : vector<1x8x32xf32> to vector<8x32xf32>
    %cst_139 = arith.constant dense<0.000000e+00> : vector<5x32xf32>
    %292 = tpu.matmul %289, %291, %cst_139 {dimension_numbers = #tpu.dot_dimension_numbers<[1], [0], [0], [1], [0, 0, 1, 1], [], []>} : vector<5x8xf32>, vector<8x32xf32>, vector<5x32xf32> -> vector<5x32xf32>
    %293 = arith.addf %272, %292 : vector<5x32xf32>
    %294 = vector.extract_strided_slice %231 {offsets = [0, 24], sizes = [5, 8], strides = [1, 1]} : vector<5x96xf32> to vector<5x8xf32>
    %cst_140 = arith.constant 0.353553385 : f32
    %295 = vector.broadcast %cst_140 : f32 to vector<5x8xf32>
    %296 = arith.mulf %294, %295 : vector<5x8xf32>
    %297 = vector.extract_strided_slice %231 {offsets = [0, 56], sizes = [5, 8], strides = [1, 1]} : vector<5x96xf32> to vector<5x8xf32>
    %298 = vector.extract_strided_slice %231 {offsets = [0, 88], sizes = [5, 8], strides = [1, 1]} : vector<5x96xf32> to vector<5x8xf32>
    %cst_141 = arith.constant dense<0.000000e+00> : vector<5x5xf32>
    %299 = tpu.matmul %296, %297, %cst_141 {dimension_numbers = #tpu.dot_dimension_numbers<[1], [1], [0], [0], [0, 0, 1, 0], [], []>} : vector<5x8xf32>, vector<5x8xf32>, vector<5x5xf32> -> vector<5x5xf32>
    %cst_142 = arith.constant dense<0xFF800000> : vector<5xf32>
    %300 = vector.multi_reduction <maximumf>, %299, %cst_142 [1] : vector<5x5xf32> to vector<5xf32>
    %301 = vector.shape_cast %300 : vector<5xf32> to vector<5x1xf32>
    %302 = vector.broadcast %301 : vector<5x1xf32> to vector<5x5xf32>
    %303 = arith.subf %299, %302 : vector<5x5xf32>
    %304 = math.exp %303 : vector<5x5xf32>
    %cst_143 = arith.constant dense<0.000000e+00> : vector<5xf32>
    %305 = vector.multi_reduction <add>, %304, %cst_143 [1] : vector<5x5xf32> to vector<5xf32>
    %306 = vector.shape_cast %305 : vector<5xf32> to vector<5x1xf32>
    %307 = tpu.reciprocal %306 {approx = true} : vector<5x1xf32> -> vector<5x1xf32>
    %308 = vector.broadcast %307 : vector<5x1xf32> to vector<5x5xf32>
    %309 = arith.mulf %304, %308 : vector<5x5xf32>
    %cst_144 = arith.constant dense<0.000000e+00> : vector<5x8xf32>
    %310 = tpu.matmul %309, %298, %cst_144 {dimension_numbers = #tpu.dot_dimension_numbers<[1], [0], [0], [1], [0, 0, 1, 1], [], []>} : vector<5x5xf32>, vector<5x8xf32>, vector<5x8xf32> -> vector<5x8xf32>
    %c1_145 = arith.constant 1 : index
    %c24_146 = arith.constant 24 : index
    %c0_147 = arith.constant 0 : index
    %311 = vector.load %arg6[%c1_145, %c24_146, %c0_147] : memref<2x32x32xf32, #tpu.memory_space<vmem>>, vector<1x8x32xf32>
    %312 = vector.shape_cast %311 : vector<1x8x32xf32> to vector<8x32xf32>
    %cst_148 = arith.constant dense<0.000000e+00> : vector<5x32xf32>
    %313 = tpu.matmul %310, %312, %cst_148 {dimension_numbers = #tpu.dot_dimension_numbers<[1], [0], [0], [1], [0, 0, 1, 1], [], []>} : vector<5x8xf32>, vector<8x32xf32>, vector<5x32xf32> -> vector<5x32xf32>
    %314 = arith.addf %293, %313 : vector<5x32xf32>
    %315 = arith.addf %200, %314 : vector<5x32xf32>
    %c1_149 = arith.constant 1 : index
    %c0_150 = arith.constant 0 : index
    %c0_151 = arith.constant 0 : index
    %316 = vector.load %arg7[%c1_149, %c0_150, %c0_151] : memref<2x1x32xf32, #tpu.memory_space<vmem>>, vector<1x1x32xf32>
    %317 = vector.shape_cast %316 : vector<1x1x32xf32> to vector<1x32xf32>
    %318 = vector.broadcast %317 : vector<1x32xf32> to vector<5x32xf32>
    %319 = arith.addf %315, %318 : vector<5x32xf32>
    %c1_152 = arith.constant 1 : index
    %c0_153 = arith.constant 0 : index
    %c0_154 = arith.constant 0 : index
    %320 = vector.load %arg8[%c1_152, %c0_153, %c0_154] : memref<2x1x32xf32, #tpu.memory_space<vmem>>, vector<1x1x32xf32>
    %321 = vector.shape_cast %320 : vector<1x1x32xf32> to vector<1x32xf32>
    %c1_155 = arith.constant 1 : index
    %c0_156 = arith.constant 0 : index
    %c0_157 = arith.constant 0 : index
    %322 = vector.load %arg9[%c1_155, %c0_156, %c0_157] : memref<2x1x32xf32, #tpu.memory_space<vmem>>, vector<1x1x32xf32>
    %323 = vector.shape_cast %322 : vector<1x1x32xf32> to vector<1x32xf32>
    %cst_158 = arith.constant dense<0.000000e+00> : vector<5xf32>
    %324 = vector.multi_reduction <add>, %319, %cst_158 [1] : vector<5x32xf32> to vector<5xf32>
    %325 = vector.shape_cast %324 : vector<5xf32> to vector<5x1xf32>
    %cst_159 = arith.constant 3.200000e+01 : f32
    %326 = vector.broadcast %cst_159 : f32 to vector<5x1xf32>
    %327 = arith.divf %325, %326 : vector<5x1xf32>
    %328 = vector.broadcast %327 : vector<5x1xf32> to vector<5x32xf32>
    %329 = arith.subf %319, %328 : vector<5x32xf32>
    %330 = arith.mulf %329, %329 : vector<5x32xf32>
    %cst_160 = arith.constant dense<0.000000e+00> : vector<5xf32>
    %331 = vector.multi_reduction <add>, %330, %cst_160 [1] : vector<5x32xf32> to vector<5xf32>
    %332 = vector.shape_cast %331 : vector<5xf32> to vector<5x1xf32>
    %cst_161 = arith.constant 3.200000e+01 : f32
    %333 = vector.broadcast %cst_161 : f32 to vector<5x1xf32>
    %334 = arith.divf %332, %333 : vector<5x1xf32>
    %cst_162 = arith.constant 9.99999974E-6 : f32
    %335 = vector.broadcast %cst_162 : f32 to vector<5x1xf32>
    %336 = arith.addf %334, %335 : vector<5x1xf32>
    %337 = math.rsqrt %336 : vector<5x1xf32>
    %338 = vector.broadcast %337 : vector<5x1xf32> to vector<5x32xf32>
    %339 = arith.mulf %329, %338 : vector<5x32xf32>
    %340 = vector.broadcast %321 : vector<1x32xf32> to vector<5x32xf32>
    %341 = arith.mulf %339, %340 : vector<5x32xf32>
    %342 = vector.broadcast %323 : vector<1x32xf32> to vector<5x32xf32>
    %343 = arith.addf %341, %342 : vector<5x32xf32>
    %c1_163 = arith.constant 1 : index
    %c0_164 = arith.constant 0 : index
    %c0_165 = arith.constant 0 : index
    %344 = vector.load %arg10[%c1_163, %c0_164, %c0_165] : memref<2x32x128xf32, #tpu.memory_space<vmem>>, vector<1x32x128xf32>
    %345 = vector.shape_cast %344 : vector<1x32x128xf32> to vector<32x128xf32>
    %cst_166 = arith.constant dense<0.000000e+00> : vector<5x128xf32>
    %346 = tpu.matmul %343, %345, %cst_166 {dimension_numbers = #tpu.dot_dimension_numbers<[1], [0], [0], [1], [0, 0, 1, 1], [], []>} : vector<5x32xf32>, vector<32x128xf32>, vector<5x128xf32> -> vector<5x128xf32>
    %c1_167 = arith.constant 1 : index
    %c0_168 = arith.constant 0 : index
    %c0_169 = arith.constant 0 : index
    %347 = vector.load %arg11[%c1_167, %c0_168, %c0_169] : memref<2x1x128xf32, #tpu.memory_space<vmem>>, vector<1x1x128xf32>
    %348 = vector.shape_cast %347 : vector<1x1x128xf32> to vector<1x128xf32>
    %349 = vector.broadcast %348 : vector<1x128xf32> to vector<5x128xf32>
    %350 = arith.addf %346, %349 : vector<5x128xf32>
    %cst_170 = arith.constant 5.000000e-01 : f32
    %351 = vector.broadcast %cst_170 : f32 to vector<5x128xf32>
    %352 = arith.mulf %351, %350 : vector<5x128xf32>
    %cst_171 = arith.constant 0.707106769 : f32
    %353 = vector.broadcast %cst_171 : f32 to vector<5x128xf32>
    %354 = arith.mulf %350, %353 : vector<5x128xf32>
    %cst_172 = arith.constant 0.000000e+00 : f32
    %355 = vector.broadcast %cst_172 : f32 to vector<5x128xf32>
    %356 = arith.cmpf oge, %354, %355 : vector<5x128xf32>
    %cst_173 = arith.constant 1.000000e+00 : f32
    %cst_174 = arith.constant -1.000000e+00 : f32
    %357 = vector.broadcast %cst_173 : f32 to vector<5x128xf32>
    %358 = vector.broadcast %cst_174 : f32 to vector<5x128xf32>
    %359 = arith.select %356, %357, %358 : vector<5x128xi1>, vector<5x128xf32>
    %360 = math.absf %354 : vector<5x128xf32>
    %cst_175 = arith.constant 0.327591091 : f32
    %361 = vector.broadcast %cst_175 : f32 to vector<5x128xf32>
    %362 = arith.mulf %361, %360 : vector<5x128xf32>
    %cst_176 = arith.constant 1.000000e+00 : f32
    %363 = vector.broadcast %cst_176 : f32 to vector<5x128xf32>
    %364 = arith.addf %363, %362 : vector<5x128xf32>
    %cst_177 = arith.constant 1.000000e+00 : f32
    %365 = vector.broadcast %cst_177 : f32 to vector<5x128xf32>
    %366 = arith.divf %365, %364 : vector<5x128xf32>
    %cst_178 = arith.constant 1.06140542 : f32
    %367 = vector.broadcast %cst_178 : f32 to vector<5x128xf32>
    %368 = arith.mulf %367, %366 : vector<5x128xf32>
    %cst_179 = arith.constant -1.45315206 : f32
    %369 = vector.broadcast %cst_179 : f32 to vector<5x128xf32>
    %370 = arith.addf %368, %369 : vector<5x128xf32>
    %371 = arith.mulf %370, %366 : vector<5x128xf32>
    %cst_180 = arith.constant 1.42141378 : f32
    %372 = vector.broadcast %cst_180 : f32 to vector<5x128xf32>
    %373 = arith.addf %371, %372 : vector<5x128xf32>
    %374 = arith.mulf %373, %366 : vector<5x128xf32>
    %cst_181 = arith.constant -0.284496725 : f32
    %375 = vector.broadcast %cst_181 : f32 to vector<5x128xf32>
    %376 = arith.addf %374, %375 : vector<5x128xf32>
    %377 = arith.mulf %376, %366 : vector<5x128xf32>
    %cst_182 = arith.constant 0.254829586 : f32
    %378 = vector.broadcast %cst_182 : f32 to vector<5x128xf32>
    %379 = arith.addf %377, %378 : vector<5x128xf32>
    %380 = arith.mulf %379, %366 : vector<5x128xf32>
    %cst_183 = arith.constant 0.000000e+00 : f32
    %381 = vector.broadcast %cst_183 : f32 to vector<5x128xf32>
    %382 = arith.subf %381, %360 : vector<5x128xf32>
    %383 = arith.mulf %382, %360 : vector<5x128xf32>
    %384 = math.exp %383 : vector<5x128xf32>
    %385 = arith.mulf %380, %384 : vector<5x128xf32>
    %cst_184 = arith.constant 1.000000e+00 : f32
    %386 = vector.broadcast %cst_184 : f32 to vector<5x128xf32>
    %387 = arith.subf %386, %385 : vector<5x128xf32>
    %388 = arith.mulf %359, %387 : vector<5x128xf32>
    %cst_185 = arith.constant 1.000000e+00 : f32
    %389 = vector.broadcast %cst_185 : f32 to vector<5x128xf32>
    %390 = arith.addf %389, %388 : vector<5x128xf32>
    %391 = arith.mulf %352, %390 : vector<5x128xf32>
    %c1_186 = arith.constant 1 : index
    %c0_187 = arith.constant 0 : index
    %c0_188 = arith.constant 0 : index
    %392 = vector.load %arg12[%c1_186, %c0_187, %c0_188] : memref<2x128x32xf32, #tpu.memory_space<vmem>>, vector<1x128x32xf32>
    %393 = vector.shape_cast %392 : vector<1x128x32xf32> to vector<128x32xf32>
    %cst_189 = arith.constant dense<0.000000e+00> : vector<5x32xf32>
    %394 = tpu.matmul %391, %393, %cst_189 {dimension_numbers = #tpu.dot_dimension_numbers<[1], [0], [0], [1], [0, 0, 1, 1], [], []>} : vector<5x128xf32>, vector<128x32xf32>, vector<5x32xf32> -> vector<5x32xf32>
    %395 = arith.addf %319, %394 : vector<5x32xf32>
    %c1_190 = arith.constant 1 : index
    %c0_191 = arith.constant 0 : index
    %c0_192 = arith.constant 0 : index
    %396 = vector.load %arg13[%c1_190, %c0_191, %c0_192] : memref<2x1x32xf32, #tpu.memory_space<vmem>>, vector<1x1x32xf32>
    %397 = vector.shape_cast %396 : vector<1x1x32xf32> to vector<1x32xf32>
    %398 = vector.broadcast %397 : vector<1x32xf32> to vector<5x32xf32>
    %399 = arith.addf %395, %398 : vector<5x32xf32>
    %c0_193 = arith.constant 0 : index
    %c0_194 = arith.constant 0 : index
    %400 = vector.load %arg14[%c0_193, %c0_194] : memref<1x32xf32, #tpu.memory_space<vmem>>, vector<1x32xf32>
    %c0_195 = arith.constant 0 : index
    %c0_196 = arith.constant 0 : index
    %401 = vector.load %arg15[%c0_195, %c0_196] : memref<1x32xf32, #tpu.memory_space<vmem>>, vector<1x32xf32>
    %cst_197 = arith.constant dense<0.000000e+00> : vector<5xf32>
    %402 = vector.multi_reduction <add>, %399, %cst_197 [1] : vector<5x32xf32> to vector<5xf32>
    %403 = vector.shape_cast %402 : vector<5xf32> to vector<5x1xf32>
    %cst_198 = arith.constant 3.200000e+01 : f32
    %404 = vector.broadcast %cst_198 : f32 to vector<5x1xf32>
    %405 = arith.divf %403, %404 : vector<5x1xf32>
    %406 = vector.broadcast %405 : vector<5x1xf32> to vector<5x32xf32>
    %407 = arith.subf %399, %406 : vector<5x32xf32>
    %408 = arith.mulf %407, %407 : vector<5x32xf32>
    %cst_199 = arith.constant dense<0.000000e+00> : vector<5xf32>
    %409 = vector.multi_reduction <add>, %408, %cst_199 [1] : vector<5x32xf32> to vector<5xf32>
    %410 = vector.shape_cast %409 : vector<5xf32> to vector<5x1xf32>
    %cst_200 = arith.constant 3.200000e+01 : f32
    %411 = vector.broadcast %cst_200 : f32 to vector<5x1xf32>
    %412 = arith.divf %410, %411 : vector<5x1xf32>
    %cst_201 = arith.constant 9.99999974E-6 : f32
    %413 = vector.broadcast %cst_201 : f32 to vector<5x1xf32>
    %414 = arith.addf %412, %413 : vector<5x1xf32>
    %415 = math.rsqrt %414 : vector<5x1xf32>
    %416 = vector.broadcast %415 : vector<5x1xf32> to vector<5x32xf32>
    %417 = arith.mulf %407, %416 : vector<5x32xf32>
    %418 = vector.broadcast %400 : vector<1x32xf32> to vector<5x32xf32>
    %419 = arith.mulf %417, %418 : vector<5x32xf32>
    %420 = vector.broadcast %401 : vector<1x32xf32> to vector<5x32xf32>
    %421 = arith.addf %419, %420 : vector<5x32xf32>
    %c0_202 = arith.constant 0 : index
    %c0_203 = arith.constant 0 : index
    %422 = vector.load %arg16[%c0_202, %c0_203] : memref<32x32xf32, #tpu.memory_space<vmem>>, vector<32x32xf32>
    %cst_204 = arith.constant dense<0.000000e+00> : vector<5x32xf32>
    %423 = tpu.matmul %421, %422, %cst_204 {dimension_numbers = #tpu.dot_dimension_numbers<[1], [0], [0], [1], [0, 0, 1, 1], [], []>} : vector<5x32xf32>, vector<32x32xf32>, vector<5x32xf32> -> vector<5x32xf32>
    %c0_205 = arith.constant 0 : index
    %c0_206 = arith.constant 0 : index
    %424 = vector.load %arg17[%c0_205, %c0_206] : memref<1x32xf32, #tpu.memory_space<vmem>>, vector<1x32xf32>
    %425 = vector.broadcast %424 : vector<1x32xf32> to vector<5x32xf32>
    %426 = arith.addf %423, %425 : vector<5x32xf32>
    %c0_207 = arith.constant 0 : index
    %c0_208 = arith.constant 0 : index
    %c0_209 = arith.constant 0 : index
    %427 = vector.load %arg18[%c0_207, %c0_208, %c0_209] : memref<1x5x32xf32, #tpu.memory_space<vmem>>, vector<1x5x32xf32>
    %428 = vector.shape_cast %427 : vector<1x5x32xf32> to vector<5x32xf32>
    %429 = vector.shape_cast %426 : vector<5x32xf32> to vector<1x5x32xf32>
    tpu.vector_store %arg18[%c0_207, %c0_208, %c0_209], %429 {strides = array<i32>} : memref<1x5x32xf32, #tpu.memory_space<vmem>>, vector<1x5x32xf32>,
    return
  }
  func.func @transform_0(%arg0: i32) -> (i32, i32, i32) {
    %c0_i32 = arith.constant 0 : i32
    %c0_i32_0 = arith.constant 0 : i32
    %c0_i32_1 = arith.constant 0 : i32
    return %arg0, %c0_i32, %c0_i32_0 : i32, i32, i32
  }
  func.func @transform_1(%arg0: i32) -> (i32, i32, i32) {
    %c0_i32 = arith.constant 0 : i32
    %c0_i32_0 = arith.constant 0 : i32
    %c0_i32_1 = arith.constant 0 : i32
    %c0_i32_2 = arith.constant 0 : i32
    return %c0_i32, %c0_i32_0, %c0_i32_1 : i32, i32, i32
  }
  func.func @transform_2(%arg0: i32) -> (i32, i32, i32) {
    %c0_i32 = arith.constant 0 : i32
    %c0_i32_0 = arith.constant 0 : i32
    %c0_i32_1 = arith.constant 0 : i32
    %c0_i32_2 = arith.constant 0 : i32
    return %c0_i32, %c0_i32_0, %c0_i32_1 : i32, i32, i32
  }
  func.func @transform_3(%arg0: i32) -> (i32, i32, i32) {
    %c0_i32 = arith.constant 0 : i32
    %c0_i32_0 = arith.constant 0 : i32
    %c0_i32_1 = arith.constant 0 : i32
    %c0_i32_2 = arith.constant 0 : i32
    return %c0_i32, %c0_i32_0, %c0_i32_1 : i32, i32, i32
  }
  func.func @transform_4(%arg0: i32) -> (i32, i32, i32) {
    %c0_i32 = arith.constant 0 : i32
    %c0_i32_0 = arith.constant 0 : i32
    %c0_i32_1 = arith.constant 0 : i32
    %c0_i32_2 = arith.constant 0 : i32
    return %c0_i32, %c0_i32_0, %c0_i32_1 : i32, i32, i32
  }
  func.func @transform_5(%arg0: i32) -> (i32, i32, i32) {
    %c0_i32 = arith.constant 0 : i32
    %c0_i32_0 = arith.constant 0 : i32
    %c0_i32_1 = arith.constant 0 : i32
    %c0_i32_2 = arith.constant 0 : i32
    return %c0_i32, %c0_i32_0, %c0_i32_1 : i32, i32, i32
  }
  func.func @transform_6(%arg0: i32) -> (i32, i32, i32) {
    %c0_i32 = arith.constant 0 : i32
    %c0_i32_0 = arith.constant 0 : i32
    %c0_i32_1 = arith.constant 0 : i32
    %c0_i32_2 = arith.constant 0 : i32
    return %c0_i32, %c0_i32_0, %c0_i32_1 : i32, i32, i32
  }
  func.func @transform_7(%arg0: i32) -> (i32, i32, i32) {
    %c0_i32 = arith.constant 0 : i32
    %c0_i32_0 = arith.constant 0 : i32
    %c0_i32_1 = arith.constant 0 : i32
    %c0_i32_2 = arith.constant 0 : i32
    return %c0_i32, %c0_i32_0, %c0_i32_1 : i32, i32, i32
  }
  func.func @transform_8(%arg0: i32) -> (i32, i32, i32) {
    %c0_i32 = arith.constant 0 : i32
    %c0_i32_0 = arith.constant 0 : i32
    %c0_i32_1 = arith.constant 0 : i32
    %c0_i32_2 = arith.constant 0 : i32
    return %c0_i32, %c0_i32_0, %c0_i32_1 : i32, i32, i32
  }
  func.func @transform_9(%arg0: i32) -> (i32, i32, i32) {
    %c0_i32 = arith.constant 0 : i32
    %c0_i32_0 = arith.constant 0 : i32
    %c0_i32_1 = arith.constant 0 : i32
    %c0_i32_2 = arith.constant 0 : i32
    return %c0_i32, %c0_i32_0, %c0_i32_1 : i32, i32, i32
  }
  func.func @transform_10(%arg0: i32) -> (i32, i32, i32) {
    %c0_i32 = arith.constant 0 : i32
    %c0_i32_0 = arith.constant 0 : i32
    %c0_i32_1 = arith.constant 0 : i32
    %c0_i32_2 = arith.constant 0 : i32
    return %c0_i32, %c0_i32_0, %c0_i32_1 : i32, i32, i32
  }
  func.func @transform_11(%arg0: i32) -> (i32, i32, i32) {
    %c0_i32 = arith.constant 0 : i32
    %c0_i32_0 = arith.constant 0 : i32
    %c0_i32_1 = arith.constant 0 : i32
    %c0_i32_2 = arith.constant 0 : i32
    return %c0_i32, %c0_i32_0, %c0_i32_1 : i32, i32, i32
  }
  func.func @transform_12(%arg0: i32) -> (i32, i32, i32) {
    %c0_i32 = arith.constant 0 : i32
    %c0_i32_0 = arith.constant 0 : i32
    %c0_i32_1 = arith.constant 0 : i32
    %c0_i32_2 = arith.constant 0 : i32
    return %c0_i32, %c0_i32_0, %c0_i32_1 : i32, i32, i32
  }
  func.func @transform_13(%arg0: i32) -> (i32, i32) {
    %c0_i32 = arith.constant 0 : i32
    %c0_i32_0 = arith.constant 0 : i32
    %c0_i32_1 = arith.constant 0 : i32
    return %c0_i32, %c0_i32_0 : i32, i32
  }
  func.func @transform_14(%arg0: i32) -> (i32, i32) {
    %c0_i32 = arith.constant 0 : i32
    %c0_i32_0 = arith.constant 0 : i32
    %c0_i32_1 = arith.constant 0 : i32
    return %c0_i32, %c0_i32_0 : i32, i32
  }
  func.func @transform_15(%arg0: i32) -> (i32, i32) {
    %c0_i32 = arith.constant 0 : i32
    %c0_i32_0 = arith.constant 0 : i32
    %c0_i32_1 = arith.constant 0 : i32
    return %c0_i32, %c0_i32_0 : i32, i32
  }
  func.func @transform_16(%arg0: i32) -> (i32, i32) {
    %c0_i32 = arith.constant 0 : i32
    %c0_i32_0 = arith.constant 0 : i32
    %c0_i32_1 = arith.constant 0 : i32
    return %c0_i32, %c0_i32_0 : i32, i32
  }
  func.func @transform_17(%arg0: i32) -> (i32, i32, i32) {
    %c0_i32 = arith.constant 0 : i32
    %c0_i32_0 = arith.constant 0 : i32
    %c0_i32_1 = arith.constant 0 : i32
    return %arg0, %c0_i32, %c0_i32_0 : i32, i32, i32
  }
}

module attributes {stable_mosaic.version = 11 : i64} {
  func.func @_stack_kernel(%arg0: i32, %arg1: memref<1x17x32xf32, #tpu.memory_space<vmem>>, %arg2: memref<1x1x32xf32, #tpu.memory_space<vmem>>, %arg3: memref<1x1x32xf32, #tpu.memory_space<vmem>>, %arg4: memref<1x32x96xf32, #tpu.memory_space<vmem>>, %arg5: memref<1x1x96xf32, #tpu.memory_space<vmem>>, %arg6: memref<1x32x32xf32, #tpu.memory_space<vmem>>, %arg7: memref<1x1x32xf32, #tpu.memory_space<vmem>>, %arg8: memref<1x1x32xf32, #tpu.memory_space<vmem>>, %arg9: memref<1x1x32xf32, #tpu.memory_space<vmem>>, %arg10: memref<1x32x128xf32, #tpu.memory_space<vmem>>, %arg11: memref<1x1x128xf32, #tpu.memory_space<vmem>>, %arg12: memref<1x128x32xf32, #tpu.memory_space<vmem>>, %arg13: memref<1x1x32xf32, #tpu.memory_space<vmem>>, %arg14: memref<1x32xf32, #tpu.memory_space<vmem>>, %arg15: memref<1x32xf32, #tpu.memory_space<vmem>>, %arg16: memref<32x48xf32, #tpu.memory_space<vmem>>, %arg17: memref<1x48xf32, #tpu.memory_space<vmem>>, %arg18: memref<1x17x48xf32, #tpu.memory_space<vmem>>) attributes {dimension_semantics = [#tpu.dimension_semantics<parallel>], iteration_bounds = array<i64: 2>, scalar_prefetch = 0 : i64, scratch_operands = 0 : i64, tpu.core_type = #tpu.core_type<tc>, window_params = [{transform_indices = @transform_0, window_bounds = array<i64: 1, 17, 32>}, {pipeline_mode = #tpu.pipeline_mode<synchronous>, transform_indices = @transform_1, window_bounds = array<i64: 1, 1, 32>}, {pipeline_mode = #tpu.pipeline_mode<synchronous>, transform_indices = @transform_2, window_bounds = array<i64: 1, 1, 32>}, {pipeline_mode = #tpu.pipeline_mode<synchronous>, transform_indices = @transform_3, window_bounds = array<i64: 1, 32, 96>}, {pipeline_mode = #tpu.pipeline_mode<synchronous>, transform_indices = @transform_4, window_bounds = array<i64: 1, 1, 96>}, {pipeline_mode = #tpu.pipeline_mode<synchronous>, transform_indices = @transform_5, window_bounds = array<i64: 1, 32, 32>}, {pipeline_mode = #tpu.pipeline_mode<synchronous>, transform_indices = @transform_6, window_bounds = array<i64: 1, 1, 32>}, {pipeline_mode = #tpu.pipeline_mode<synchronous>, transform_indices = @transform_7, window_bounds = array<i64: 1, 1, 32>}, {pipeline_mode = #tpu.pipeline_mode<synchronous>, transform_indices = @transform_8, window_bounds = array<i64: 1, 1, 32>}, {pipeline_mode = #tpu.pipeline_mode<synchronous>, transform_indices = @transform_9, window_bounds = array<i64: 1, 32, 128>}, {pipeline_mode = #tpu.pipeline_mode<synchronous>, transform_indices = @transform_10, window_bounds = array<i64: 1, 1, 128>}, {pipeline_mode = #tpu.pipeline_mode<synchronous>, transform_indices = @transform_11, window_bounds = array<i64: 1, 128, 32>}, {pipeline_mode = #tpu.pipeline_mode<synchronous>, transform_indices = @transform_12, window_bounds = array<i64: 1, 1, 32>}, {pipeline_mode = #tpu.pipeline_mode<synchronous>, transform_indices = @transform_13, window_bounds = array<i64: 1, 32>}, {pipeline_mode = #tpu.pipeline_mode<synchronous>, transform_indices = @transform_14, window_bounds = array<i64: 1, 32>}, {pipeline_mode = #tpu.pipeline_mode<synchronous>, transform_indices = @transform_15, window_bounds = array<i64: 32, 48>}, {pipeline_mode = #tpu.pipeline_mode<synchronous>, transform_indices = @transform_16, window_bounds = array<i64: 1, 48>}, {transform_indices = @transform_17, window_bounds = array<i64: 1, 17, 48>}]} {
    %c0 = arith.constant 0 : index
    %c0_0 = arith.constant 0 : index
    %c0_1 = arith.constant 0 : index
    %0 = vector.load %arg1[%c0, %c0_0, %c0_1] : memref<1x17x32xf32, #tpu.memory_space<vmem>>, vector<1x17x32xf32>
    %1 = vector.shape_cast %0 : vector<1x17x32xf32> to vector<17x32xf32>
    %c0_2 = arith.constant 0 : index
    %c0_3 = arith.constant 0 : index
    %c0_4 = arith.constant 0 : index
    %2 = vector.load %arg2[%c0_2, %c0_3, %c0_4] : memref<1x1x32xf32, #tpu.memory_space<vmem>>, vector<1x1x32xf32>
    %3 = vector.shape_cast %2 : vector<1x1x32xf32> to vector<1x32xf32>
    %c0_5 = arith.constant 0 : index
    %c0_6 = arith.constant 0 : index
    %c0_7 = arith.constant 0 : index
    %4 = vector.load %arg3[%c0_5, %c0_6, %c0_7] : memref<1x1x32xf32, #tpu.memory_space<vmem>>, vector<1x1x32xf32>
    %5 = vector.shape_cast %4 : vector<1x1x32xf32> to vector<1x32xf32>
    %cst = arith.constant dense<0.000000e+00> : vector<17xf32>
    %6 = vector.multi_reduction <add>, %1, %cst [1] : vector<17x32xf32> to vector<17xf32>
    %7 = vector.shape_cast %6 : vector<17xf32> to vector<17x1xf32>
    %cst_8 = arith.constant 3.200000e+01 : f32
    %8 = vector.broadcast %cst_8 : f32 to vector<17x1xf32>
    %9 = arith.divf %7, %8 : vector<17x1xf32>
    %10 = vector.broadcast %9 : vector<17x1xf32> to vector<17x32xf32>
    %11 = arith.subf %1, %10 : vector<17x32xf32>
    %12 = arith.mulf %11, %11 : vector<17x32xf32>
    %cst_9 = arith.constant dense<0.000000e+00> : vector<17xf32>
    %13 = vector.multi_reduction <add>, %12, %cst_9 [1] : vector<17x32xf32> to vector<17xf32>
    %14 = vector.shape_cast %13 : vector<17xf32> to vector<17x1xf32>
    %cst_10 = arith.constant 3.200000e+01 : f32
    %15 = vector.broadcast %cst_10 : f32 to vector<17x1xf32>
    %16 = arith.divf %14, %15 : vector<17x1xf32>
    %cst_11 = arith.constant 9.99999974E-6 : f32
    %17 = vector.broadcast %cst_11 : f32 to vector<17x1xf32>
    %18 = arith.addf %16, %17 : vector<17x1xf32>
    %19 = math.rsqrt %18 : vector<17x1xf32>
    %20 = vector.broadcast %19 : vector<17x1xf32> to vector<17x32xf32>
    %21 = arith.mulf %11, %20 : vector<17x32xf32>
    %22 = vector.broadcast %3 : vector<1x32xf32> to vector<17x32xf32>
    %23 = arith.mulf %21, %22 : vector<17x32xf32>
    %24 = vector.broadcast %5 : vector<1x32xf32> to vector<17x32xf32>
    %25 = arith.addf %23, %24 : vector<17x32xf32>
    %c0_12 = arith.constant 0 : index
    %c0_13 = arith.constant 0 : index
    %c0_14 = arith.constant 0 : index
    %26 = vector.load %arg4[%c0_12, %c0_13, %c0_14] : memref<1x32x96xf32, #tpu.memory_space<vmem>>, vector<1x32x96xf32>
    %27 = vector.shape_cast %26 : vector<1x32x96xf32> to vector<32x96xf32>
    %cst_15 = arith.constant dense<0.000000e+00> : vector<17x96xf32>
    %28 = tpu.matmul %25, %27, %cst_15 {dimension_numbers = #tpu.dot_dimension_numbers<[1], [0], [0], [1], [0, 0, 1, 1], [], []>} : vector<17x32xf32>, vector<32x96xf32>, vector<17x96xf32> -> vector<17x96xf32>
    %c0_16 = arith.constant 0 : index
    %c0_17 = arith.constant 0 : index
    %c0_18 = arith.constant 0 : index
    %29 = vector.load %arg5[%c0_16, %c0_17, %c0_18] : memref<1x1x96xf32, #tpu.memory_space<vmem>>, vector<1x1x96xf32>
    %30 = vector.shape_cast %29 : vector<1x1x96xf32> to vector<1x96xf32>
    %31 = vector.broadcast %30 : vector<1x96xf32> to vector<17x96xf32>
    %32 = arith.addf %28, %31 : vector<17x96xf32>
    %33 = vector.extract_strided_slice %32 {offsets = [0, 0], sizes = [17, 8], strides = [1, 1]} : vector<17x96xf32> to vector<17x8xf32>
    %cst_19 = arith.constant 0.353553385 : f32
    %34 = vector.broadcast %cst_19 : f32 to vector<17x8xf32>
    %35 = arith.mulf %33, %34 : vector<17x8xf32>
    %36 = vector.extract_strided_slice %32 {offsets = [0, 32], sizes = [17, 8], strides = [1, 1]} : vector<17x96xf32> to vector<17x8xf32>
    %37 = vector.extract_strided_slice %32 {offsets = [0, 64], sizes = [17, 8], strides = [1, 1]} : vector<17x96xf32> to vector<17x8xf32>
    %cst_20 = arith.constant dense<0.000000e+00> : vector<17x17xf32>
    %38 = tpu.matmul %35, %36, %cst_20 {dimension_numbers = #tpu.dot_dimension_numbers<[1], [1], [0], [0], [0, 0, 1, 0], [], []>} : vector<17x8xf32>, vector<17x8xf32>, vector<17x17xf32> -> vector<17x17xf32>
    %cst_21 = arith.constant dense<0xFF800000> : vector<17xf32>
    %39 = vector.multi_reduction <maximumf>, %38, %cst_21 [1] : vector<17x17xf32> to vector<17xf32>
    %40 = vector.shape_cast %39 : vector<17xf32> to vector<17x1xf32>
    %41 = vector.broadcast %40 : vector<17x1xf32> to vector<17x17xf32>
    %42 = arith.subf %38, %41 : vector<17x17xf32>
    %43 = math.exp %42 : vector<17x17xf32>
    %cst_22 = arith.constant dense<0.000000e+00> : vector<17xf32>
    %44 = vector.multi_reduction <add>, %43, %cst_22 [1] : vector<17x17xf32> to vector<17xf32>
    %45 = vector.shape_cast %44 : vector<17xf32> to vector<17x1xf32>
    %46 = tpu.reciprocal %45 {approx = true} : vector<17x1xf32> -> vector<17x1xf32>
    %47 = vector.broadcast %46 : vector<17x1xf32> to vector<17x17xf32>
    %48 = arith.mulf %43, %47 : vector<17x17xf32>
    %cst_23 = arith.constant dense<0.000000e+00> : vector<17x8xf32>
    %49 = tpu.matmul %48, %37, %cst_23 {dimension_numbers = #tpu.dot_dimension_numbers<[1], [0], [0], [1], [0, 0, 1, 1], [], []>} : vector<17x17xf32>, vector<17x8xf32>, vector<17x8xf32> -> vector<17x8xf32>
    %c0_24 = arith.constant 0 : index
    %c0_25 = arith.constant 0 : index
    %c0_26 = arith.constant 0 : index
    %50 = vector.load %arg6[%c0_24, %c0_25, %c0_26] : memref<1x32x32xf32, #tpu.memory_space<vmem>>, vector<1x8x32xf32>
    %51 = vector.shape_cast %50 : vector<1x8x32xf32> to vector<8x32xf32>
    %cst_27 = arith.constant dense<0.000000e+00> : vector<17x32xf32>
    %52 = tpu.matmul %49, %51, %cst_27 {dimension_numbers = #tpu.dot_dimension_numbers<[1], [0], [0], [1], [0, 0, 1, 1], [], []>} : vector<17x8xf32>, vector<8x32xf32>, vector<17x32xf32> -> vector<17x32xf32>
    %53 = vector.extract_strided_slice %32 {offsets = [0, 8], sizes = [17, 8], strides = [1, 1]} : vector<17x96xf32> to vector<17x8xf32>
    %cst_28 = arith.constant 0.353553385 : f32
    %54 = vector.broadcast %cst_28 : f32 to vector<17x8xf32>
    %55 = arith.mulf %53, %54 : vector<17x8xf32>
    %56 = vector.extract_strided_slice %32 {offsets = [0, 40], sizes = [17, 8], strides = [1, 1]} : vector<17x96xf32> to vector<17x8xf32>
    %57 = vector.extract_strided_slice %32 {offsets = [0, 72], sizes = [17, 8], strides = [1, 1]} : vector<17x96xf32> to vector<17x8xf32>
    %cst_29 = arith.constant dense<0.000000e+00> : vector<17x17xf32>
    %58 = tpu.matmul %55, %56, %cst_29 {dimension_numbers = #tpu.dot_dimension_numbers<[1], [1], [0], [0], [0, 0, 1, 0], [], []>} : vector<17x8xf32>, vector<17x8xf32>, vector<17x17xf32> -> vector<17x17xf32>
    %cst_30 = arith.constant dense<0xFF800000> : vector<17xf32>
    %59 = vector.multi_reduction <maximumf>, %58, %cst_30 [1] : vector<17x17xf32> to vector<17xf32>
    %60 = vector.shape_cast %59 : vector<17xf32> to vector<17x1xf32>
    %61 = vector.broadcast %60 : vector<17x1xf32> to vector<17x17xf32>
    %62 = arith.subf %58, %61 : vector<17x17xf32>
    %63 = math.exp %62 : vector<17x17xf32>
    %cst_31 = arith.constant dense<0.000000e+00> : vector<17xf32>
    %64 = vector.multi_reduction <add>, %63, %cst_31 [1] : vector<17x17xf32> to vector<17xf32>
    %65 = vector.shape_cast %64 : vector<17xf32> to vector<17x1xf32>
    %66 = tpu.reciprocal %65 {approx = true} : vector<17x1xf32> -> vector<17x1xf32>
    %67 = vector.broadcast %66 : vector<17x1xf32> to vector<17x17xf32>
    %68 = arith.mulf %63, %67 : vector<17x17xf32>
    %cst_32 = arith.constant dense<0.000000e+00> : vector<17x8xf32>
    %69 = tpu.matmul %68, %57, %cst_32 {dimension_numbers = #tpu.dot_dimension_numbers<[1], [0], [0], [1], [0, 0, 1, 1], [], []>} : vector<17x17xf32>, vector<17x8xf32>, vector<17x8xf32> -> vector<17x8xf32>
    %c0_33 = arith.constant 0 : index
    %c8 = arith.constant 8 : index
    %c0_34 = arith.constant 0 : index
    %70 = vector.load %arg6[%c0_33, %c8, %c0_34] : memref<1x32x32xf32, #tpu.memory_space<vmem>>, vector<1x8x32xf32>
    %71 = vector.shape_cast %70 : vector<1x8x32xf32> to vector<8x32xf32>
    %cst_35 = arith.constant dense<0.000000e+00> : vector<17x32xf32>
    %72 = tpu.matmul %69, %71, %cst_35 {dimension_numbers = #tpu.dot_dimension_numbers<[1], [0], [0], [1], [0, 0, 1, 1], [], []>} : vector<17x8xf32>, vector<8x32xf32>, vector<17x32xf32> -> vector<17x32xf32>
    %73 = arith.addf %52, %72 : vector<17x32xf32>
    %74 = vector.extract_strided_slice %32 {offsets = [0, 16], sizes = [17, 8], strides = [1, 1]} : vector<17x96xf32> to vector<17x8xf32>
    %cst_36 = arith.constant 0.353553385 : f32
    %75 = vector.broadcast %cst_36 : f32 to vector<17x8xf32>
    %76 = arith.mulf %74, %75 : vector<17x8xf32>
    %77 = vector.extract_strided_slice %32 {offsets = [0, 48], sizes = [17, 8], strides = [1, 1]} : vector<17x96xf32> to vector<17x8xf32>
    %78 = vector.extract_strided_slice %32 {offsets = [0, 80], sizes = [17, 8], strides = [1, 1]} : vector<17x96xf32> to vector<17x8xf32>
    %cst_37 = arith.constant dense<0.000000e+00> : vector<17x17xf32>
    %79 = tpu.matmul %76, %77, %cst_37 {dimension_numbers = #tpu.dot_dimension_numbers<[1], [1], [0], [0], [0, 0, 1, 0], [], []>} : vector<17x8xf32>, vector<17x8xf32>, vector<17x17xf32> -> vector<17x17xf32>
    %cst_38 = arith.constant dense<0xFF800000> : vector<17xf32>
    %80 = vector.multi_reduction <maximumf>, %79, %cst_38 [1] : vector<17x17xf32> to vector<17xf32>
    %81 = vector.shape_cast %80 : vector<17xf32> to vector<17x1xf32>
    %82 = vector.broadcast %81 : vector<17x1xf32> to vector<17x17xf32>
    %83 = arith.subf %79, %82 : vector<17x17xf32>
    %84 = math.exp %83 : vector<17x17xf32>
    %cst_39 = arith.constant dense<0.000000e+00> : vector<17xf32>
    %85 = vector.multi_reduction <add>, %84, %cst_39 [1] : vector<17x17xf32> to vector<17xf32>
    %86 = vector.shape_cast %85 : vector<17xf32> to vector<17x1xf32>
    %87 = tpu.reciprocal %86 {approx = true} : vector<17x1xf32> -> vector<17x1xf32>
    %88 = vector.broadcast %87 : vector<17x1xf32> to vector<17x17xf32>
    %89 = arith.mulf %84, %88 : vector<17x17xf32>
    %cst_40 = arith.constant dense<0.000000e+00> : vector<17x8xf32>
    %90 = tpu.matmul %89, %78, %cst_40 {dimension_numbers = #tpu.dot_dimension_numbers<[1], [0], [0], [1], [0, 0, 1, 1], [], []>} : vector<17x17xf32>, vector<17x8xf32>, vector<17x8xf32> -> vector<17x8xf32>
    %c0_41 = arith.constant 0 : index
    %c16 = arith.constant 16 : index
    %c0_42 = arith.constant 0 : index
    %91 = vector.load %arg6[%c0_41, %c16, %c0_42] : memref<1x32x32xf32, #tpu.memory_space<vmem>>, vector<1x8x32xf32>
    %92 = vector.shape_cast %91 : vector<1x8x32xf32> to vector<8x32xf32>
    %cst_43 = arith.constant dense<0.000000e+00> : vector<17x32xf32>
    %93 = tpu.matmul %90, %92, %cst_43 {dimension_numbers = #tpu.dot_dimension_numbers<[1], [0], [0], [1], [0, 0, 1, 1], [], []>} : vector<17x8xf32>, vector<8x32xf32>, vector<17x32xf32> -> vector<17x32xf32>
    %94 = arith.addf %73, %93 : vector<17x32xf32>
    %95 = vector.extract_strided_slice %32 {offsets = [0, 24], sizes = [17, 8], strides = [1, 1]} : vector<17x96xf32> to vector<17x8xf32>
    %cst_44 = arith.constant 0.353553385 : f32
    %96 = vector.broadcast %cst_44 : f32 to vector<17x8xf32>
    %97 = arith.mulf %95, %96 : vector<17x8xf32>
    %98 = vector.extract_strided_slice %32 {offsets = [0, 56], sizes = [17, 8], strides = [1, 1]} : vector<17x96xf32> to vector<17x8xf32>
    %99 = vector.extract_strided_slice %32 {offsets = [0, 88], sizes = [17, 8], strides = [1, 1]} : vector<17x96xf32> to vector<17x8xf32>
    %cst_45 = arith.constant dense<0.000000e+00> : vector<17x17xf32>
    %100 = tpu.matmul %97, %98, %cst_45 {dimension_numbers = #tpu.dot_dimension_numbers<[1], [1], [0], [0], [0, 0, 1, 0], [], []>} : vector<17x8xf32>, vector<17x8xf32>, vector<17x17xf32> -> vector<17x17xf32>
    %cst_46 = arith.constant dense<0xFF800000> : vector<17xf32>
    %101 = vector.multi_reduction <maximumf>, %100, %cst_46 [1] : vector<17x17xf32> to vector<17xf32>
    %102 = vector.shape_cast %101 : vector<17xf32> to vector<17x1xf32>
    %103 = vector.broadcast %102 : vector<17x1xf32> to vector<17x17xf32>
    %104 = arith.subf %100, %103 : vector<17x17xf32>
    %105 = math.exp %104 : vector<17x17xf32>
    %cst_47 = arith.constant dense<0.000000e+00> : vector<17xf32>
    %106 = vector.multi_reduction <add>, %105, %cst_47 [1] : vector<17x17xf32> to vector<17xf32>
    %107 = vector.shape_cast %106 : vector<17xf32> to vector<17x1xf32>
    %108 = tpu.reciprocal %107 {approx = true} : vector<17x1xf32> -> vector<17x1xf32>
    %109 = vector.broadcast %108 : vector<17x1xf32> to vector<17x17xf32>
    %110 = arith.mulf %105, %109 : vector<17x17xf32>
    %cst_48 = arith.constant dense<0.000000e+00> : vector<17x8xf32>
    %111 = tpu.matmul %110, %99, %cst_48 {dimension_numbers = #tpu.dot_dimension_numbers<[1], [0], [0], [1], [0, 0, 1, 1], [], []>} : vector<17x17xf32>, vector<17x8xf32>, vector<17x8xf32> -> vector<17x8xf32>
    %c0_49 = arith.constant 0 : index
    %c24 = arith.constant 24 : index
    %c0_50 = arith.constant 0 : index
    %112 = vector.load %arg6[%c0_49, %c24, %c0_50] : memref<1x32x32xf32, #tpu.memory_space<vmem>>, vector<1x8x32xf32>
    %113 = vector.shape_cast %112 : vector<1x8x32xf32> to vector<8x32xf32>
    %cst_51 = arith.constant dense<0.000000e+00> : vector<17x32xf32>
    %114 = tpu.matmul %111, %113, %cst_51 {dimension_numbers = #tpu.dot_dimension_numbers<[1], [0], [0], [1], [0, 0, 1, 1], [], []>} : vector<17x8xf32>, vector<8x32xf32>, vector<17x32xf32> -> vector<17x32xf32>
    %115 = arith.addf %94, %114 : vector<17x32xf32>
    %116 = arith.addf %1, %115 : vector<17x32xf32>
    %c0_52 = arith.constant 0 : index
    %c0_53 = arith.constant 0 : index
    %c0_54 = arith.constant 0 : index
    %117 = vector.load %arg7[%c0_52, %c0_53, %c0_54] : memref<1x1x32xf32, #tpu.memory_space<vmem>>, vector<1x1x32xf32>
    %118 = vector.shape_cast %117 : vector<1x1x32xf32> to vector<1x32xf32>
    %119 = vector.broadcast %118 : vector<1x32xf32> to vector<17x32xf32>
    %120 = arith.addf %116, %119 : vector<17x32xf32>
    %c0_55 = arith.constant 0 : index
    %c0_56 = arith.constant 0 : index
    %c0_57 = arith.constant 0 : index
    %121 = vector.load %arg8[%c0_55, %c0_56, %c0_57] : memref<1x1x32xf32, #tpu.memory_space<vmem>>, vector<1x1x32xf32>
    %122 = vector.shape_cast %121 : vector<1x1x32xf32> to vector<1x32xf32>
    %c0_58 = arith.constant 0 : index
    %c0_59 = arith.constant 0 : index
    %c0_60 = arith.constant 0 : index
    %123 = vector.load %arg9[%c0_58, %c0_59, %c0_60] : memref<1x1x32xf32, #tpu.memory_space<vmem>>, vector<1x1x32xf32>
    %124 = vector.shape_cast %123 : vector<1x1x32xf32> to vector<1x32xf32>
    %cst_61 = arith.constant dense<0.000000e+00> : vector<17xf32>
    %125 = vector.multi_reduction <add>, %120, %cst_61 [1] : vector<17x32xf32> to vector<17xf32>
    %126 = vector.shape_cast %125 : vector<17xf32> to vector<17x1xf32>
    %cst_62 = arith.constant 3.200000e+01 : f32
    %127 = vector.broadcast %cst_62 : f32 to vector<17x1xf32>
    %128 = arith.divf %126, %127 : vector<17x1xf32>
    %129 = vector.broadcast %128 : vector<17x1xf32> to vector<17x32xf32>
    %130 = arith.subf %120, %129 : vector<17x32xf32>
    %131 = arith.mulf %130, %130 : vector<17x32xf32>
    %cst_63 = arith.constant dense<0.000000e+00> : vector<17xf32>
    %132 = vector.multi_reduction <add>, %131, %cst_63 [1] : vector<17x32xf32> to vector<17xf32>
    %133 = vector.shape_cast %132 : vector<17xf32> to vector<17x1xf32>
    %cst_64 = arith.constant 3.200000e+01 : f32
    %134 = vector.broadcast %cst_64 : f32 to vector<17x1xf32>
    %135 = arith.divf %133, %134 : vector<17x1xf32>
    %cst_65 = arith.constant 9.99999974E-6 : f32
    %136 = vector.broadcast %cst_65 : f32 to vector<17x1xf32>
    %137 = arith.addf %135, %136 : vector<17x1xf32>
    %138 = math.rsqrt %137 : vector<17x1xf32>
    %139 = vector.broadcast %138 : vector<17x1xf32> to vector<17x32xf32>
    %140 = arith.mulf %130, %139 : vector<17x32xf32>
    %141 = vector.broadcast %122 : vector<1x32xf32> to vector<17x32xf32>
    %142 = arith.mulf %140, %141 : vector<17x32xf32>
    %143 = vector.broadcast %124 : vector<1x32xf32> to vector<17x32xf32>
    %144 = arith.addf %142, %143 : vector<17x32xf32>
    %c0_66 = arith.constant 0 : index
    %c0_67 = arith.constant 0 : index
    %c0_68 = arith.constant 0 : index
    %145 = vector.load %arg10[%c0_66, %c0_67, %c0_68] : memref<1x32x128xf32, #tpu.memory_space<vmem>>, vector<1x32x128xf32>
    %146 = vector.shape_cast %145 : vector<1x32x128xf32> to vector<32x128xf32>
    %cst_69 = arith.constant dense<0.000000e+00> : vector<17x128xf32>
    %147 = tpu.matmul %144, %146, %cst_69 {dimension_numbers = #tpu.dot_dimension_numbers<[1], [0], [0], [1], [0, 0, 1, 1], [], []>} : vector<17x32xf32>, vector<32x128xf32>, vector<17x128xf32> -> vector<17x128xf32>
    %c0_70 = arith.constant 0 : index
    %c0_71 = arith.constant 0 : index
    %c0_72 = arith.constant 0 : index
    %148 = vector.load %arg11[%c0_70, %c0_71, %c0_72] : memref<1x1x128xf32, #tpu.memory_space<vmem>>, vector<1x1x128xf32>
    %149 = vector.shape_cast %148 : vector<1x1x128xf32> to vector<1x128xf32>
    %150 = vector.broadcast %149 : vector<1x128xf32> to vector<17x128xf32>
    %151 = arith.addf %147, %150 : vector<17x128xf32>
    %cst_73 = arith.constant 5.000000e-01 : f32
    %152 = vector.broadcast %cst_73 : f32 to vector<17x128xf32>
    %153 = arith.mulf %152, %151 : vector<17x128xf32>
    %cst_74 = arith.constant 0.707106769 : f32
    %154 = vector.broadcast %cst_74 : f32 to vector<17x128xf32>
    %155 = arith.mulf %151, %154 : vector<17x128xf32>
    %cst_75 = arith.constant 0.000000e+00 : f32
    %156 = vector.broadcast %cst_75 : f32 to vector<17x128xf32>
    %157 = arith.cmpf oge, %155, %156 : vector<17x128xf32>
    %cst_76 = arith.constant 1.000000e+00 : f32
    %cst_77 = arith.constant -1.000000e+00 : f32
    %158 = vector.broadcast %cst_76 : f32 to vector<17x128xf32>
    %159 = vector.broadcast %cst_77 : f32 to vector<17x128xf32>
    %160 = arith.select %157, %158, %159 : vector<17x128xi1>, vector<17x128xf32>
    %161 = math.absf %155 : vector<17x128xf32>
    %cst_78 = arith.constant 0.327591091 : f32
    %162 = vector.broadcast %cst_78 : f32 to vector<17x128xf32>
    %163 = arith.mulf %162, %161 : vector<17x128xf32>
    %cst_79 = arith.constant 1.000000e+00 : f32
    %164 = vector.broadcast %cst_79 : f32 to vector<17x128xf32>
    %165 = arith.addf %164, %163 : vector<17x128xf32>
    %cst_80 = arith.constant 1.000000e+00 : f32
    %166 = vector.broadcast %cst_80 : f32 to vector<17x128xf32>
    %167 = arith.divf %166, %165 : vector<17x128xf32>
    %cst_81 = arith.constant 1.06140542 : f32
    %168 = vector.broadcast %cst_81 : f32 to vector<17x128xf32>
    %169 = arith.mulf %168, %167 : vector<17x128xf32>
    %cst_82 = arith.constant -1.45315206 : f32
    %170 = vector.broadcast %cst_82 : f32 to vector<17x128xf32>
    %171 = arith.addf %169, %170 : vector<17x128xf32>
    %172 = arith.mulf %171, %167 : vector<17x128xf32>
    %cst_83 = arith.constant 1.42141378 : f32
    %173 = vector.broadcast %cst_83 : f32 to vector<17x128xf32>
    %174 = arith.addf %172, %173 : vector<17x128xf32>
    %175 = arith.mulf %174, %167 : vector<17x128xf32>
    %cst_84 = arith.constant -0.284496725 : f32
    %176 = vector.broadcast %cst_84 : f32 to vector<17x128xf32>
    %177 = arith.addf %175, %176 : vector<17x128xf32>
    %178 = arith.mulf %177, %167 : vector<17x128xf32>
    %cst_85 = arith.constant 0.254829586 : f32
    %179 = vector.broadcast %cst_85 : f32 to vector<17x128xf32>
    %180 = arith.addf %178, %179 : vector<17x128xf32>
    %181 = arith.mulf %180, %167 : vector<17x128xf32>
    %cst_86 = arith.constant 0.000000e+00 : f32
    %182 = vector.broadcast %cst_86 : f32 to vector<17x128xf32>
    %183 = arith.subf %182, %161 : vector<17x128xf32>
    %184 = arith.mulf %183, %161 : vector<17x128xf32>
    %185 = math.exp %184 : vector<17x128xf32>
    %186 = arith.mulf %181, %185 : vector<17x128xf32>
    %cst_87 = arith.constant 1.000000e+00 : f32
    %187 = vector.broadcast %cst_87 : f32 to vector<17x128xf32>
    %188 = arith.subf %187, %186 : vector<17x128xf32>
    %189 = arith.mulf %160, %188 : vector<17x128xf32>
    %cst_88 = arith.constant 1.000000e+00 : f32
    %190 = vector.broadcast %cst_88 : f32 to vector<17x128xf32>
    %191 = arith.addf %190, %189 : vector<17x128xf32>
    %192 = arith.mulf %153, %191 : vector<17x128xf32>
    %c0_89 = arith.constant 0 : index
    %c0_90 = arith.constant 0 : index
    %c0_91 = arith.constant 0 : index
    %193 = vector.load %arg12[%c0_89, %c0_90, %c0_91] : memref<1x128x32xf32, #tpu.memory_space<vmem>>, vector<1x128x32xf32>
    %194 = vector.shape_cast %193 : vector<1x128x32xf32> to vector<128x32xf32>
    %cst_92 = arith.constant dense<0.000000e+00> : vector<17x32xf32>
    %195 = tpu.matmul %192, %194, %cst_92 {dimension_numbers = #tpu.dot_dimension_numbers<[1], [0], [0], [1], [0, 0, 1, 1], [], []>} : vector<17x128xf32>, vector<128x32xf32>, vector<17x32xf32> -> vector<17x32xf32>
    %196 = arith.addf %120, %195 : vector<17x32xf32>
    %c0_93 = arith.constant 0 : index
    %c0_94 = arith.constant 0 : index
    %c0_95 = arith.constant 0 : index
    %197 = vector.load %arg13[%c0_93, %c0_94, %c0_95] : memref<1x1x32xf32, #tpu.memory_space<vmem>>, vector<1x1x32xf32>
    %198 = vector.shape_cast %197 : vector<1x1x32xf32> to vector<1x32xf32>
    %199 = vector.broadcast %198 : vector<1x32xf32> to vector<17x32xf32>
    %200 = arith.addf %196, %199 : vector<17x32xf32>
    %c0_96 = arith.constant 0 : index
    %c0_97 = arith.constant 0 : index
    %201 = vector.load %arg14[%c0_96, %c0_97] : memref<1x32xf32, #tpu.memory_space<vmem>>, vector<1x32xf32>
    %c0_98 = arith.constant 0 : index
    %c0_99 = arith.constant 0 : index
    %202 = vector.load %arg15[%c0_98, %c0_99] : memref<1x32xf32, #tpu.memory_space<vmem>>, vector<1x32xf32>
    %cst_100 = arith.constant dense<0.000000e+00> : vector<17xf32>
    %203 = vector.multi_reduction <add>, %200, %cst_100 [1] : vector<17x32xf32> to vector<17xf32>
    %204 = vector.shape_cast %203 : vector<17xf32> to vector<17x1xf32>
    %cst_101 = arith.constant 3.200000e+01 : f32
    %205 = vector.broadcast %cst_101 : f32 to vector<17x1xf32>
    %206 = arith.divf %204, %205 : vector<17x1xf32>
    %207 = vector.broadcast %206 : vector<17x1xf32> to vector<17x32xf32>
    %208 = arith.subf %200, %207 : vector<17x32xf32>
    %209 = arith.mulf %208, %208 : vector<17x32xf32>
    %cst_102 = arith.constant dense<0.000000e+00> : vector<17xf32>
    %210 = vector.multi_reduction <add>, %209, %cst_102 [1] : vector<17x32xf32> to vector<17xf32>
    %211 = vector.shape_cast %210 : vector<17xf32> to vector<17x1xf32>
    %cst_103 = arith.constant 3.200000e+01 : f32
    %212 = vector.broadcast %cst_103 : f32 to vector<17x1xf32>
    %213 = arith.divf %211, %212 : vector<17x1xf32>
    %cst_104 = arith.constant 9.99999974E-6 : f32
    %214 = vector.broadcast %cst_104 : f32 to vector<17x1xf32>
    %215 = arith.addf %213, %214 : vector<17x1xf32>
    %216 = math.rsqrt %215 : vector<17x1xf32>
    %217 = vector.broadcast %216 : vector<17x1xf32> to vector<17x32xf32>
    %218 = arith.mulf %208, %217 : vector<17x32xf32>
    %219 = vector.broadcast %201 : vector<1x32xf32> to vector<17x32xf32>
    %220 = arith.mulf %218, %219 : vector<17x32xf32>
    %221 = vector.broadcast %202 : vector<1x32xf32> to vector<17x32xf32>
    %222 = arith.addf %220, %221 : vector<17x32xf32>
    %c0_105 = arith.constant 0 : index
    %c0_106 = arith.constant 0 : index
    %223 = vector.load %arg16[%c0_105, %c0_106] : memref<32x48xf32, #tpu.memory_space<vmem>>, vector<32x48xf32>
    %cst_107 = arith.constant dense<0.000000e+00> : vector<17x48xf32>
    %224 = tpu.matmul %222, %223, %cst_107 {dimension_numbers = #tpu.dot_dimension_numbers<[1], [0], [0], [1], [0, 0, 1, 1], [], []>} : vector<17x32xf32>, vector<32x48xf32>, vector<17x48xf32> -> vector<17x48xf32>
    %c0_108 = arith.constant 0 : index
    %c0_109 = arith.constant 0 : index
    %225 = vector.load %arg17[%c0_108, %c0_109] : memref<1x48xf32, #tpu.memory_space<vmem>>, vector<1x48xf32>
    %226 = vector.broadcast %225 : vector<1x48xf32> to vector<17x48xf32>
    %227 = arith.addf %224, %226 : vector<17x48xf32>
    %c0_110 = arith.constant 0 : index
    %c0_111 = arith.constant 0 : index
    %c0_112 = arith.constant 0 : index
    %228 = vector.load %arg18[%c0_110, %c0_111, %c0_112] : memref<1x17x48xf32, #tpu.memory_space<vmem>>, vector<1x17x48xf32>
    %229 = vector.shape_cast %228 : vector<1x17x48xf32> to vector<17x48xf32>
    %230 = vector.shape_cast %227 : vector<17x48xf32> to vector<1x17x48xf32>
    tpu.vector_store %arg18[%c0_110, %c0_111, %c0_112], %230 {strides = array<i32>} : memref<1x17x48xf32, #tpu.memory_space<vmem>>, vector<1x17x48xf32>,
    return
  }
  func.func @transform_0(%arg0: i32) -> (i32, i32, i32) {
    %c0_i32 = arith.constant 0 : i32
    %c0_i32_0 = arith.constant 0 : i32
    %c0_i32_1 = arith.constant 0 : i32
    return %arg0, %c0_i32, %c0_i32_0 : i32, i32, i32
  }
  func.func @transform_1(%arg0: i32) -> (i32, i32, i32) {
    %c0_i32 = arith.constant 0 : i32
    %c0_i32_0 = arith.constant 0 : i32
    %c0_i32_1 = arith.constant 0 : i32
    %c0_i32_2 = arith.constant 0 : i32
    return %c0_i32, %c0_i32_0, %c0_i32_1 : i32, i32, i32
  }
  func.func @transform_2(%arg0: i32) -> (i32, i32, i32) {
    %c0_i32 = arith.constant 0 : i32
    %c0_i32_0 = arith.constant 0 : i32
    %c0_i32_1 = arith.constant 0 : i32
    %c0_i32_2 = arith.constant 0 : i32
    return %c0_i32, %c0_i32_0, %c0_i32_1 : i32, i32, i32
  }
  func.func @transform_3(%arg0: i32) -> (i32, i32, i32) {
    %c0_i32 = arith.constant 0 : i32
    %c0_i32_0 = arith.constant 0 : i32
    %c0_i32_1 = arith.constant 0 : i32
    %c0_i32_2 = arith.constant 0 : i32
    return %c0_i32, %c0_i32_0, %c0_i32_1 : i32, i32, i32
  }
  func.func @transform_4(%arg0: i32) -> (i32, i32, i32) {
    %c0_i32 = arith.constant 0 : i32
    %c0_i32_0 = arith.constant 0 : i32
    %c0_i32_1 = arith.constant 0 : i32
    %c0_i32_2 = arith.constant 0 : i32
    return %c0_i32, %c0_i32_0, %c0_i32_1 : i32, i32, i32
  }
  func.func @transform_5(%arg0: i32) -> (i32, i32, i32) {
    %c0_i32 = arith.constant 0 : i32
    %c0_i32_0 = arith.constant 0 : i32
    %c0_i32_1 = arith.constant 0 : i32
    %c0_i32_2 = arith.constant 0 : i32
    return %c0_i32, %c0_i32_0, %c0_i32_1 : i32, i32, i32
  }
  func.func @transform_6(%arg0: i32) -> (i32, i32, i32) {
    %c0_i32 = arith.constant 0 : i32
    %c0_i32_0 = arith.constant 0 : i32
    %c0_i32_1 = arith.constant 0 : i32
    %c0_i32_2 = arith.constant 0 : i32
    return %c0_i32, %c0_i32_0, %c0_i32_1 : i32, i32, i32
  }
  func.func @transform_7(%arg0: i32) -> (i32, i32, i32) {
    %c0_i32 = arith.constant 0 : i32
    %c0_i32_0 = arith.constant 0 : i32
    %c0_i32_1 = arith.constant 0 : i32
    %c0_i32_2 = arith.constant 0 : i32
    return %c0_i32, %c0_i32_0, %c0_i32_1 : i32, i32, i32
  }
  func.func @transform_8(%arg0: i32) -> (i32, i32, i32) {
    %c0_i32 = arith.constant 0 : i32
    %c0_i32_0 = arith.constant 0 : i32
    %c0_i32_1 = arith.constant 0 : i32
    %c0_i32_2 = arith.constant 0 : i32
    return %c0_i32, %c0_i32_0, %c0_i32_1 : i32, i32, i32
  }
  func.func @transform_9(%arg0: i32) -> (i32, i32, i32) {
    %c0_i32 = arith.constant 0 : i32
    %c0_i32_0 = arith.constant 0 : i32
    %c0_i32_1 = arith.constant 0 : i32
    %c0_i32_2 = arith.constant 0 : i32
    return %c0_i32, %c0_i32_0, %c0_i32_1 : i32, i32, i32
  }
  func.func @transform_10(%arg0: i32) -> (i32, i32, i32) {
    %c0_i32 = arith.constant 0 : i32
    %c0_i32_0 = arith.constant 0 : i32
    %c0_i32_1 = arith.constant 0 : i32
    %c0_i32_2 = arith.constant 0 : i32
    return %c0_i32, %c0_i32_0, %c0_i32_1 : i32, i32, i32
  }
  func.func @transform_11(%arg0: i32) -> (i32, i32, i32) {
    %c0_i32 = arith.constant 0 : i32
    %c0_i32_0 = arith.constant 0 : i32
    %c0_i32_1 = arith.constant 0 : i32
    %c0_i32_2 = arith.constant 0 : i32
    return %c0_i32, %c0_i32_0, %c0_i32_1 : i32, i32, i32
  }
  func.func @transform_12(%arg0: i32) -> (i32, i32, i32) {
    %c0_i32 = arith.constant 0 : i32
    %c0_i32_0 = arith.constant 0 : i32
    %c0_i32_1 = arith.constant 0 : i32
    %c0_i32_2 = arith.constant 0 : i32
    return %c0_i32, %c0_i32_0, %c0_i32_1 : i32, i32, i32
  }
  func.func @transform_13(%arg0: i32) -> (i32, i32) {
    %c0_i32 = arith.constant 0 : i32
    %c0_i32_0 = arith.constant 0 : i32
    %c0_i32_1 = arith.constant 0 : i32
    return %c0_i32, %c0_i32_0 : i32, i32
  }
  func.func @transform_14(%arg0: i32) -> (i32, i32) {
    %c0_i32 = arith.constant 0 : i32
    %c0_i32_0 = arith.constant 0 : i32
    %c0_i32_1 = arith.constant 0 : i32
    return %c0_i32, %c0_i32_0 : i32, i32
  }
  func.func @transform_15(%arg0: i32) -> (i32, i32) {
    %c0_i32 = arith.constant 0 : i32
    %c0_i32_0 = arith.constant 0 : i32
    %c0_i32_1 = arith.constant 0 : i32
    return %c0_i32, %c0_i32_0 : i32, i32
  }
  func.func @transform_16(%arg0: i32) -> (i32, i32) {
    %c0_i32 = arith.constant 0 : i32
    %c0_i32_0 = arith.constant 0 : i32
    %c0_i32_1 = arith.constant 0 : i32
    return %c0_i32, %c0_i32_0 : i32, i32
  }
  func.func @transform_17(%arg0: i32) -> (i32, i32, i32) {
    %c0_i32 = arith.constant 0 : i32
    %c0_i32_0 = arith.constant 0 : i32
    %c0_i32_1 = arith.constant 0 : i32
    return %arg0, %c0_i32, %c0_i32_0 : i32, i32, i32
  }
}

module attributes {stable_mosaic.version = 11 : i64} {
  func.func @_masked_mse_kernel(%arg0: i32, %arg1: memref<32x48xf32, #tpu.memory_space<vmem>>, %arg2: memref<32x48xf32, #tpu.memory_space<vmem>>, %arg3: memref<32x1xf32, #tpu.memory_space<vmem>>, %arg4: memref<1x1xf32, #tpu.memory_space<smem>>) attributes {dimension_semantics = [#tpu.dimension_semantics<arbitrary>], iteration_bounds = array<i64: 1>, scalar_prefetch = 0 : i64, scratch_operands = 0 : i64, tpu.core_type = #tpu.core_type<tc>, window_params = [{pipeline_mode = #tpu.pipeline_mode<synchronous>, transform_indices = @transform_0, window_bounds = array<i64: 32, 48>}, {pipeline_mode = #tpu.pipeline_mode<synchronous>, transform_indices = @transform_1, window_bounds = array<i64: 32, 48>}, {pipeline_mode = #tpu.pipeline_mode<synchronous>, transform_indices = @transform_2, window_bounds = array<i64: 32, 1>}, {transform_indices = @transform_3, window_bounds = array<i64: 1, 1>}]} {
    %c0 = arith.constant 0 : index
    %c0_0 = arith.constant 0 : index
    %0 = vector.load %arg1[%c0, %c0_0] : memref<32x48xf32, #tpu.memory_space<vmem>>, vector<32x48xf32>
    %c0_1 = arith.constant 0 : index
    %c0_2 = arith.constant 0 : index
    %1 = vector.load %arg2[%c0_1, %c0_2] : memref<32x48xf32, #tpu.memory_space<vmem>>, vector<32x48xf32>
    %2 = arith.subf %0, %1 : vector<32x48xf32>
    %3 = arith.mulf %2, %2 : vector<32x48xf32>
    %cst = arith.constant dense<0.000000e+00> : vector<32xf32>
    %4 = vector.multi_reduction <add>, %3, %cst [1] : vector<32x48xf32> to vector<32xf32>
    %5 = vector.shape_cast %4 : vector<32xf32> to vector<32x1xf32>
    %cst_3 = arith.constant 0.020833334 : f32
    %6 = vector.broadcast %cst_3 : f32 to vector<32x1xf32>
    %7 = arith.mulf %5, %6 : vector<32x1xf32>
    %c0_4 = arith.constant 0 : index
    %c0_5 = arith.constant 0 : index
    %8 = vector.load %arg3[%c0_4, %c0_5] : memref<32x1xf32, #tpu.memory_space<vmem>>, vector<32x1xf32>
    %9 = arith.mulf %7, %8 : vector<32x1xf32>
    %10 = vector.shape_cast %9 : vector<32x1xf32> to vector<1x32x1xf32>
    %cst_6 = arith.constant dense<0.000000e+00> : vector<1xf32>
    %11 = vector.multi_reduction <add>, %10, %cst_6 [1, 2] : vector<1x32x1xf32> to vector<1xf32>
    %12 = vector.shape_cast %11 : vector<1xf32> to vector<1x1x1xf32>
    %13 = vector.extract %12[0, 0, 0] : f32 from vector<1x1x1xf32>
    %14 = vector.shape_cast %8 : vector<32x1xf32> to vector<1x32x1xf32>
    %cst_7 = arith.constant dense<0.000000e+00> : vector<1xf32>
    %15 = vector.multi_reduction <add>, %14, %cst_7 [1, 2] : vector<1x32x1xf32> to vector<1xf32>
    %16 = vector.shape_cast %15 : vector<1xf32> to vector<1x1x1xf32>
    %17 = vector.extract %16[0, 0, 0] : f32 from vector<1x1x1xf32>
    %18 = arith.divf %13, %17 : f32
    %c0_8 = arith.constant 0 : index
    %c0_9 = arith.constant 0 : index
    %19 = memref.load %arg4[%c0_8, %c0_9] : memref<1x1xf32, #tpu.memory_space<smem>>
    memref.store %18, %arg4[%c0_8, %c0_9] : memref<1x1xf32, #tpu.memory_space<smem>>
    return
  }
  func.func @transform_0(%arg0: i32) -> (i32, i32) {
    %c0_i32 = arith.constant 0 : i32
    %c0_i32_0 = arith.constant 0 : i32
    %c0_i32_1 = arith.constant 0 : i32
    return %c0_i32, %c0_i32_0 : i32, i32
  }
  func.func @transform_1(%arg0: i32) -> (i32, i32) {
    %c0_i32 = arith.constant 0 : i32
    %c0_i32_0 = arith.constant 0 : i32
    %c0_i32_1 = arith.constant 0 : i32
    return %c0_i32, %c0_i32_0 : i32, i32
  }
  func.func @transform_2(%arg0: i32) -> (i32, i32) {
    %c0_i32 = arith.constant 0 : i32
    %c0_i32_0 = arith.constant 0 : i32
    %c0_i32_1 = arith.constant 0 : i32
    return %c0_i32, %c0_i32_0 : i32, i32
  }
  func.func @transform_3(%arg0: i32) -> (i32, i32) {
    %c0_i32 = arith.constant 0 : i32
    %c0_i32_0 = arith.constant 0 : i32
    %c0_i32_1 = arith.constant 0 : i32
    return %c0_i32, %c0_i32_0 : i32, i32
  }
}

</mosaic_0001>

<llo_original>
// kernel: mae_forward.4
$region0: #{mae_forward.4}
  #allocation0 [shape = 'u32[]', space=smem, size = 0x4, offset = 0x4, fixed_abs, tag = 'smem constant byte address 0x4 - core index']
  #allocation1 [shape = 'u32[144,128]{1,0:T(1,128)}', space=vmem, size = 0x12000, scoped, tag = 'internal scratch']
  %s0 = inlined_call_operand.vmem [shape: f32[2,16,48], index: 0, kind: input, shape index: {}]
  %s1 = inlined_call_operand.vmem [shape: f32[48,32], index: 1, kind: input, shape index: {}]
  %s2 = inlined_call_operand.vmem [shape: f32[1,32], index: 2, kind: input, shape index: {}]
  %s3 = inlined_call_operand.vmem [shape: f32[1,16,32], index: 3, kind: input, shape index: {}]
  %s4 = inlined_call_operand.vmem [shape: f32[2,16,32], index: 4, kind: output, shape index: {}]
  %s5 = sld [smem:[#allocation0]]
  $region49: #{mae_forward.4} parent=0
    _
  %s7 = ssub.s32 1, %s5
  %s8 = scalar_select 0, %s7, %s5
  loop: start=0, step=1, limit=4
  $region2: #{mae_forward.4} parent=0 // loop_pre_header
    _
  $region3: #{mae_forward.4} parent=0 // loop_header
    %s10 = sphi 0, %s14
    %p11 = scmp.ge.s32.totalorder %s10, 4
    %s20 = sphi 0, %s22
    %s23 = sphi 0, %s20
    %s24 = sphi 0, %s23
    %s40 = sphi 0, %s24
    %s44 = sphi 0, %s44
    %s46 = sphi 0, %s44
    %s47 = sphi 0, %s46
    %s61 = sphi 0, %s47
    %s65 = sphi 0, %s65
    %s67 = sphi 0, %s65
    %s68 = sphi 0, %s67
    %s82 = sphi 0, %s68
    %s86 = sphi 0, %s86
    %s88 = sphi 0, %s86
    %s89 = sphi 0, %s88
    %s103 = sphi 0, %s89
    %s109 = sphi 0, %s111
    %s112 = sphi 0, %s109
    %s113 = sphi 0, %s112
    %s129 = sphi 0, %s113
  $region4: #{mae_forward.4} parent=0 // loop_header_branch
    %13 = sbr.rel (%p11) target = $region8
  $region5: #{mae_forward.4} parent=0 // loop_body
    %s15 = ssub.s32 %s10, 1
    %s16 = ssub.s32 %s10, 2
    %s17 = sadd.s32 %s10, 1
    %s18 = ssub.s32 %s10, %s17
    %p19 = scmp.eq.s32.totalorder %s18, 0
    %s21 = sadd.s32 %s20, 1
    %s22 = scalar_select %p19, %s20, %s21
    %p25 = pneg %p19
    %p26 = scmp.eq.s32.totalorder %s10, 1
    %p27 = por %p25, %p26
    %p28 = scmp.ne.s32.totalorder %s20, %s23
    %p29 = scmp.eq.s32.totalorder %s10, 0
    %p30 = por %p28, %p29
    %p31 = scmp.ne.s32.totalorder %s20, %s23
    %p32 = scmp.eq.s32.totalorder %s15, 1
    %p33 = por %p31, %p32
    %p34 = scmp.ne.s32.totalorder %s23, %s24
    %p35 = scmp.eq.s32.totalorder %s15, 0
    %p36 = por %p34, %p35
    %p37 = scmp.ne.s32.totalorder %s23, %s24
    %p38 = scmp.eq.s32.totalorder %s16, 1
    %p39 = por %p37, %p38
    %p41 = scmp.ne.s32.totalorder %s24, %s40
    %p42 = scmp.eq.s32.totalorder %s16, 0
    %p43 = por %p41, %p42
    %s45 = sadd.s32 %s44, 1
    %p48 = scmp.eq.s32.totalorder %s10, 1
    %p49 = scmp.ne.s32.totalorder %s44, %s46
    %p50 = scmp.eq.s32.totalorder %s10, 0
    %p51 = por %p49, %p50
    %p52 = scmp.ne.s32.totalorder %s44, %s46
    %p53 = scmp.eq.s32.totalorder %s15, 1
    %p54 = por %p52, %p53
    %p55 = scmp.ne.s32.totalorder %s46, %s47
    %p56 = scmp.eq.s32.totalorder %s15, 0
    %p57 = por %p55, %p56
    %p58 = scmp.ne.s32.totalorder %s46, %s47
    %p59 = scmp.eq.s32.totalorder %s16, 1
    %p60 = por %p58, %p59
    %p62 = scmp.ne.s32.totalorder %s47, %s61
    %p63 = scmp.eq.s32.totalorder %s16, 0
    %p64 = por %p62, %p63
    %s66 = sadd.s32 %s65, 1
    %p69 = scmp.eq.s32.totalorder %s10, 1
    %p70 = scmp.ne.s32.totalorder %s65, %s67
    %p71 = scmp.eq.s32.totalorder %s10, 0
    %p72 = por %p70, %p71
    %p73 = scmp.ne.s32.totalorder %s65, %s67
    %p74 = scmp.eq.s32.totalorder %s15, 1
    %p75 = por %p73, %p74
    %p76 = scmp.ne.s32.totalorder %s67, %s68
    %p77 = scmp.eq.s32.totalorder %s15, 0
    %p78 = por %p76, %p77
    %p79 = scmp.ne.s32.totalorder %s67, %s68
    %p80 = scmp.eq.s32.totalorder %s16, 1
    %p81 = por %p79, %p80
    %p83 = scmp.ne.s32.totalorder %s68, %s82
    %p84 = scmp.eq.s32.totalorder %s16, 0
    %p85 = por %p83, %p84
    %s87 = sadd.s32 %s86, 1
    %p90 = scmp.eq.s32.totalorder %s10, 1
    %p91 = scmp.ne.s32.totalorder %s86, %s88
    %p92 = scmp.eq.s32.totalorder %s10, 0
    %p93 = por %p91, %p92
    %p94 = scmp.ne.s32.totalorder %s86, %s88
    %p95 = scmp.eq.s32.totalorder %s15, 1
    %p96 = por %p94, %p95
    %p97 = scmp.ne.s32.totalorder %s88, %s89
    %p98 = scmp.eq.s32.totalorder %s15, 0
    %p99 = por %p97, %p98
    %p100 = scmp.ne.s32.totalorder %s88, %s89
    %p101 = scmp.eq.s32.totalorder %s16, 1
    %p102 = por %p100, %p101
    %p104 = scmp.ne.s32.totalorder %s89, %s103
    %p105 = scmp.eq.s32.totalorder %s16, 0
    %p106 = por %p104, %p105
    %s107 = ssub.s32 %s10, %s17
    %p108 = scmp.eq.s32.totalorder %s107, 0
    %s110 = sadd.s32 %s109, 1
    %s111 = scalar_select %p108, %s109, %s110
    %p114 = pneg %p108
    %p115 = scmp.eq.s32.totalorder %s10, 1
    %p116 = por %p114, %p115
    %p117 = scmp.ne.s32.totalorder %s109, %s112
    %p118 = scmp.eq.s32.totalorder %s10, 0
    %p119 = por %p117, %p118
    %p120 = scmp.ne.s32.totalorder %s109, %s112
    %p121 = scmp.eq.s32.totalorder %s15, 1
    %p122 = por %p120, %p121
    %p123 = scmp.ne.s32.totalorder %s112, %s113
    %p124 = scmp.eq.s32.totalorder %s15, 0
    %p125 = por %p123, %p124
    %p126 = scmp.ne.s32.totalorder %s112, %s113
    %p127 = scmp.eq.s32.totalorder %s16, 1
    %p128 = por %p126, %p127
    %p130 = scmp.ne.s32.totalorder %s113, %s129
    %p131 = scmp.eq.s32.totalorder %s16, 0
    %p132 = por %p130, %p131
    %p133 = scmp.le.s32.totalorder 1, %s10
    %p134 = scmp.lt.s32.totalorder %s10, 3
    %p135 = pnand %p133, %p134
    %p136 = pneg %p135
    // Predicated region
    $region9: #{mae_forward.4} parent=5 // pred_check
      _
    $region10: #{mae_forward.4} parent=5 // pred_check_branch
      %138 = sbr.rel (%p135) target = $region12
    $region11: #{mae_forward.4} parent=5 // pred_region
      %s139 = ssub.s32 %s10, 1
      // Predicated region
      $region13: #{mae_forward.4} parent=11 // pred_check
        %p140 = pneg %p57
      $region14: #{mae_forward.4} parent=11 // pred_check_branch
        %142 = sbr.rel (%p140) target = $region16
      $region15: #{mae_forward.4} parent=11 // pred_region
        _
      $region16: #{mae_forward.4} parent=11 // pred_fallthru
        _
      // Predicated region
      $region17: #{mae_forward.4} parent=11 // pred_check
        %p143 = pneg %p78
      $region18: #{mae_forward.4} parent=11 // pred_check_branch
        %145 = sbr.rel (%p143) target = $region20
      $region19: #{mae_forward.4} parent=11 // pred_region
        _
      $region20: #{mae_forward.4} parent=11 // pred_fallthru
        _
      // Predicated region
      $region21: #{mae_forward.4} parent=11 // pred_check
        %p146 = pneg %p99
      $region22: #{mae_forward.4} parent=11 // pred_check_branch
        %148 = sbr.rel (%p146) target = $region24
      $region23: #{mae_forward.4} parent=11 // pred_region
        _
      $region24: #{mae_forward.4} parent=11 // pred_fallthru
        _
    $region12: #{mae_forward.4} parent=5 // pred_fallthru
      _
    %p149 = scmp.lt.s32.totalorder %s10, 2
    // Predicated region
    $region25: #{mae_forward.4} parent=5 // pred_check
      %p150 = pneg %p149
    $region26: #{mae_forward.4} parent=5 // pred_check_branch
      %152 = sbr.rel (%p150) target = $region28
    $region27: #{mae_forward.4} parent=5 // pred_region
      // Predicated region
      $region29: #{mae_forward.4} parent=27 // pred_check
        %p153 = pneg %p30
      $region30: #{mae_forward.4} parent=27 // pred_check_branch
        %155 = sbr.rel (%p153) target = $region32
      $region31: #{mae_forward.4} parent=27 // pred_region
        %p156 = scmp.lt.s32.totalorder %s10, 1
        %s157 = scalar_select %p156, %s10, 1
        %s158 = smul.addr %s157, 2
        %s159 = smul.addr %s158, 8
        %s160 = scalar_lea.vmem %s0, %s159
      $region32: #{mae_forward.4} parent=27 // pred_fallthru
        _
    $region28: #{mae_forward.4} parent=5 // pred_fallthru
      _
    %p161 = scmp.le.s32.totalorder 1, %s10
    %p162 = scmp.lt.s32.totalorder %s10, 3
    %p163 = pnand %p161, %p162
    %p164 = pneg %p163
    // Predicated region
    $region33: #{mae_forward.4} parent=5 // pred_check
      _
    $region34: #{mae_forward.4} parent=5 // pred_check_branch
      %166 = sbr.rel (%p163) target = $region36
    $region35: #{mae_forward.4} parent=5 // pred_region
      %s167 = ssub.s32 %s10, 1
      %p168 = scmp.lt.s32.totalorder %s15, 1
      %s169 = scalar_select %p168, %s15, 1
      %s170 = smul.addr %s169, 2
      %s171 = smul.addr %s170, 8
      %s172 = scalar_lea.vmem %s0, %s171
      %p173 = pneg %p36
      %p174 = pneg %p33
      %p175 = pneg %p57
      %p176 = pneg %p54
      %p177 = pneg %p78
      %p178 = pneg %p75
      %p179 = pneg %p99
      %p180 = pneg %p96
      %p181 = pneg %p125
      %p182 = pneg %p122
      %p183 = scmp.lt.s32.totalorder %s15, 1
      %s184 = scalar_select %p183, %s15, 1
      %s185 = smul.addr %s184, 2
      %s186 = smul.addr %s185, 8
      %s187 = scalar_lea.vmem %s4, %s186
      %p188 = scmp.lt.s32.totalorder %s15, 1
      %s189 = scalar_select %p188, %s15, 1
      %s190 = smul.addr %s189, 2
      %s191 = smul.addr %s190, 8
      %s192 = scalar_lea.vmem %s0, %s191
      %p193 = scmp.lt.s32.totalorder %s15, 1
      %s194 = scalar_select %p193, %s15, 1
      %s195 = smul.addr %s194, 2
      %s196 = smul.addr %s195, 8
      %s197 = scalar_lea.vmem %s4, %s196
      %v198 = vld [vmem:[%s192] sm:$0xff]
      %v199 = vld [vmem:[%s192 + $0x8] sm:$0xff]
      %v200 = vld [vmem:[%s1] sm:$0xff]
      %v201 = vld [vmem:[%s1 + $0x8] sm:$0xff]
      %v202 = vld [vmem:[%s1 + $0x10] sm:$0xff]
      %v203 = vld [vmem:[%s1 + $0x18] sm:$0xff]
      %v204 = vld [vmem:[%s1 + $0x20] sm:$0xff]
      %v205 = vld [vmem:[%s1 + $0x28] sm:$0xff]
      %v206 = vld [vmem:[%s2] sm:$0x1]
      %v208 = vlaneseq
      %v209 = vshrl.u32 %v208, 7
      %v210 = vsub.s32 0, %v209
      %v211 = vrot.slane %v206, %v210
      %vm213 = vcmask 392192
      %v215 = vsel %vm213, %v198, 0
      %v218 = vsel %vm213, %v199, 0
      %220 = vmatprep.subr.mxu0 0.0
      %221 = vmatpush1.msra.mxu0 %v200
      %222 = vmatprep.subr.mxu0 0.0
      %223 = vmatpush1.msra.mxu0 %v201
      %224 = vmatprep.subr.mxu0 0.0
      %225 = vmatpush1.msra.mxu0 %v202
      %226 = vmatprep.subr.mxu0 0.0
      %227 = vmatpush1.msra.mxu0 %v203
      %228 = vmatprep.subr.mxu0 0.0
      %229 = vmatpush1.msra.mxu0 %v204
      %230 = vmatprep.subr.mxu0 0.0
      %231 = vmatpush1.msra.mxu0 %v205
      %232 = vmatprep.subr.mxu0 0.0
      %233 = vmatpush1.msra.mxu0 0.0
      %234 = vmatprep.subr.mxu0 0.0
      %235 = vmatpush1.msra.mxu0 0.0
      %236 = vmatprep.subr.mxu0 0.0
      %237 = vmatpush1.msra.mxu0 0.0
      %238 = vmatprep.subr.mxu0 0.0
      %239 = vmatpush1.msra.mxu0 0.0
      %240 = vmatprep.subr.mxu0 0.0
      %241 = vmatpush1.msra.mxu0 0.0
      %242 = vmatprep.subr.mxu0 0.0
      %243 = vmatpush1.msra.mxu0 0.0
      %244 = vmatprep.subr.mxu0 0.0
      %245 = vmatpush1.msra.mxu0 0.0
      %246 = vmatprep.subr.mxu0 0.0
      %247 = vmatpush1.msra.mxu0 0.0
      %248 = vmatprep.subr.mxu0 0.0
      %249 = vmatpush1.msra.mxu0 0.0
      %250 = vmatprep.subr.mxu0 0.0
      %251 = vmatpush1.msra.mxu0 0.0
      %252 = vmatprep.subr.mxu0 0.0
      %253 = vmatpush1.msra.mxu0 0.0
      %254 = vmatprep.subr.mxu0 0.0
      %255 = vmatpush1.msra.mxu0 0.0
      %256 = vmatprep.subr.mxu0 0.0
      %257 = vmatpush1.msra.mxu0 0.0
      %258 = vmatprep.subr.mxu0 0.0
      %259 = vmatpush1.msra.mxu0 0.0
      %260 = vmatprep.subr.mxu0 0.0
      %261 = vmatpush1.msra.mxu0 0.0
      %262 = vmatprep.subr.mxu0 0.0
      %263 = vmatpush1.msra.mxu0 0.0
      %264 = vmatprep.subr.mxu0 0.0
      %265 = vmatpush1.msra.mxu0 0.0
      %266 = vmatprep.subr.mxu0 0.0
      %267 = vmatpush1.msra.mxu0 0.0
      %268 = vmatprep.subr.mxu0 0.0
      %269 = vmatpush1.msra.mxu0 0.0
      %270 = vmatprep.subr.mxu0 0.0
      %271 = vmatpush1.msra.mxu0 0.0
      %272 = vmatprep.subr.mxu0 0.0
      %273 = vmatpush1.msra.mxu0 0.0
      %274 = vmatprep.subr.mxu0 0.0
      %275 = vmatpush1.msra.mxu0 0.0
      %276 = vmatprep.subr.mxu0 0.0
      %277 = vmatpush1.msra.mxu0 0.0
      %278 = vmatprep.subr.mxu0 0.0
      %279 = vmatpush1.msra.mxu0 0.0
      %280 = vmatprep.subr.mxu0 0.0
      %281 = vmatpush1.msra.mxu0 0.0
      %282 = vmatprep.subr.mxu0 0.0
      %283 = vmatpush1.msra.mxu0 0.0
      %284 = vmatprep.mubr.f32.mxu0 0.0
      %285 = vmatmul.mubr.f32.gmra.mrb[0].mxu0 %v215
      %v286 = vpop.f32.mrb[0].mxu0
      %v287 = vadd.f32 %v211, %v286
      %v288 = vpop.f32.mrb[0].mxu0
      %289 = vmatprep.mubr.f32.mxu0 0.0
      %290 = vmatmul.mubr.f32.gmra.mrb[0].mxu0 %v218
      %v291 = vpop.f32.mrb[0].mxu0
      %v292 = vadd.f32 %v211, %v291
      %v293 = vpop.f32.mrb[0].mxu0
      %294 = vdwg.mxu0
      %v295 = vld [vmem:[%s3] sm:$0xff]
      %v296 = vld [vmem:[%s3 + $0x8] sm:$0xff]
      %v297 = vadd.f32 %v287, %v295
      %v298 = vadd.f32 %v292, %v296
      %vm299 = vcmask 261120
      %300 = vst.msk [vmem:[%s197] sm:$0xff] %vm299, %v297
      %301 = vst.msk [vmem:[%s197 + $0x8] sm:$0xff] %vm299, %v298
      %p302 = scmp.lt.s32.totalorder %s15, 1
      %s303 = scalar_select %p302, %s15, 1
      %s304 = smul.addr %s303, 2
      %s305 = smul.addr %s304, 8
      %s306 = scalar_lea.vmem %s4, %s305
      // Predicated region
      $region37: #{mae_forward.4} parent=35 // pred_check
        %p307 = pneg %p122
      $region38: #{mae_forward.4} parent=35 // pred_check_branch
        %309 = sbr.rel (%p307) target = $region40
      $region39: #{mae_forward.4} parent=35 // pred_region
        _
      $region40: #{mae_forward.4} parent=35 // pred_fallthru
        _
    $region36: #{mae_forward.4} parent=5 // pred_fallthru
      _
    %p310 = scmp.le.s32.totalorder 2, %s10
    // Predicated region
    $region41: #{mae_forward.4} parent=5 // pred_check
      %p311 = pneg %p310
    $region42: #{mae_forward.4} parent=5 // pred_check_branch
      %313 = sbr.rel (%p311) target = $region44
    $region43: #{mae_forward.4} parent=5 // pred_region
      %s314 = ssub.s32 %s10, 2
      // Predicated region
      $region45: #{mae_forward.4} parent=43 // pred_check
        %p315 = pneg %p128
      $region46: #{mae_forward.4} parent=43 // pred_check_branch
        %317 = sbr.rel (%p315) target = $region48
      $region47: #{mae_forward.4} parent=43 // pred_region
        %p318 = scmp.lt.s32.totalorder %s16, 1
        %s319 = scalar_select %p318, %s16, 1
        %s320 = smul.addr %s319, 2
        %s321 = smul.addr %s320, 8
        %s322 = scalar_lea.vmem %s4, %s321
      $region48: #{mae_forward.4} parent=43 // pred_fallthru
        _
    $region44: #{mae_forward.4} parent=5 // pred_fallthru
      _
  $region6: #{mae_forward.4} parent=0 // loop_footer
    %s14 = sadd.s32 1, %s10
  $region7: #{mae_forward.4} parent=0 // loop_footer_branch
    %9 = sbr.rel target = $region3
  $region8: #{mae_forward.4} parent=0 // loop_exit
    _

// kernel: mae_forward.5
$region0: #{mae_forward.5}
  #allocation0 [shape = 'u32[]', space=smem, size = 0x4, offset = 0x4, fixed_abs, tag = 'smem constant byte address 0x4 - core index']
  #allocation1 [shape = 'u32[144,128]{1,0:T(1,128)}', space=vmem, size = 0x12000, scoped, tag = 'internal scratch']
  %s0 = inlined_call_operand.vmem [shape: f32[2,5,32], index: 0, kind: input, shape index: {}]
  %s1 = inlined_call_operand.vmem [shape: f32[2,1,32], index: 1, kind: input, shape index: {}]
  %s2 = inlined_call_operand.vmem [shape: f32[2,1,32], index: 2, kind: input, shape index: {}]
  %s3 = inlined_call_operand.vmem [shape: f32[2,32,96], index: 3, kind: input, shape index: {}]
  %s4 = inlined_call_operand.vmem [shape: f32[2,1,96], index: 4, kind: input, shape index: {}]
  %s5 = inlined_call_operand.vmem [shape: f32[2,32,32], index: 5, kind: input, shape index: {}]
  %s6 = inlined_call_operand.vmem [shape: f32[2,1,32], index: 6, kind: input, shape index: {}]
  %s7 = inlined_call_operand.vmem [shape: f32[2,1,32], index: 7, kind: input, shape index: {}]
  %s8 = inlined_call_operand.vmem [shape: f32[2,1,32], index: 8, kind: input, shape index: {}]
  %s9 = inlined_call_operand.vmem [shape: f32[2,32,128], index: 9, kind: input, shape index: {}]
  %s10 = inlined_call_operand.vmem [shape: f32[2,1,128], index: 10, kind: input, shape index: {}]
  %s11 = inlined_call_operand.vmem [shape: f32[2,128,32], index: 11, kind: input, shape index: {}]
  %s12 = inlined_call_operand.vmem [shape: f32[2,1,32], index: 12, kind: input, shape index: {}]
  %s13 = inlined_call_operand.vmem [shape: f32[1,32], index: 13, kind: input, shape index: {}]
  %s14 = inlined_call_operand.vmem [shape: f32[1,32], index: 14, kind: input, shape index: {}]
  %s15 = inlined_call_operand.vmem [shape: f32[32,32], index: 15, kind: input, shape index: {}]
  %s16 = inlined_call_operand.vmem [shape: f32[1,32], index: 16, kind: input, shape index: {}]
  %s17 = inlined_call_operand.vmem [shape: f32[2,5,32], index: 17, kind: output, shape index: {}]
  %s18 = sld [smem:[#allocation0]]
  $region101: #{mae_forward.5} parent=0
    _
  %s20 = ssub.s32 1, %s18
  %s21 = scalar_select 0, %s20, %s18
  loop: start=0, step=1, limit=4
  $region2: #{mae_forward.5} parent=0 // loop_pre_header
    _
  $region3: #{mae_forward.5} parent=0 // loop_header
    %s23 = sphi 0, %s27
    %p24 = scmp.ge.s32.totalorder %s23, 4
    %s33 = sphi 0, %s35
    %s36 = sphi 0, %s33
    %s37 = sphi 0, %s36
    %s53 = sphi 0, %s37
    %s57 = sphi 0, %s57
    %s59 = sphi 0, %s57
    %s60 = sphi 0, %s59
    %s74 = sphi 0, %s60
    %s78 = sphi 0, %s78
    %s80 = sphi 0, %s78
    %s81 = sphi 0, %s80
    %s95 = sphi 0, %s81
    %s99 = sphi 0, %s99
    %s101 = sphi 0, %s99
    %s102 = sphi 0, %s101
    %s116 = sphi 0, %s102
    %s120 = sphi 0, %s120
    %s122 = sphi 0, %s120
    %s123 = sphi 0, %s122
    %s137 = sphi 0, %s123
    %s141 = sphi 0, %s141
    %s143 = sphi 0, %s141
    %s144 = sphi 0, %s143
    %s158 = sphi 0, %s144
    %s162 = sphi 0, %s162
    %s164 = sphi 0, %s162
    %s165 = sphi 0, %s164
    %s179 = sphi 0, %s165
    %s183 = sphi 0, %s183
    %s185 = sphi 0, %s183
    %s186 = sphi 0, %s185
    %s200 = sphi 0, %s186
    %s204 = sphi 0, %s204
    %s206 = sphi 0, %s204
    %s207 = sphi 0, %s206
    %s221 = sphi 0, %s207
    %s225 = sphi 0, %s225
    %s227 = sphi 0, %s225
    %s228 = sphi 0, %s227
    %s242 = sphi 0, %s228
    %s246 = sphi 0, %s246
    %s248 = sphi 0, %s246
    %s249 = sphi 0, %s248
    %s263 = sphi 0, %s249
    %s267 = sphi 0, %s267
    %s269 = sphi 0, %s267
    %s270 = sphi 0, %s269
    %s284 = sphi 0, %s270
    %s288 = sphi 0, %s288
    %s290 = sphi 0, %s288
    %s291 = sphi 0, %s290
    %s305 = sphi 0, %s291
    %s309 = sphi 0, %s309
    %s311 = sphi 0, %s309
    %s312 = sphi 0, %s311
    %s326 = sphi 0, %s312
    %s330 = sphi 0, %s330
    %s332 = sphi 0, %s330
    %s333 = sphi 0, %s332
    %s347 = sphi 0, %s333
    %s351 = sphi 0, %s351
    %s353 = sphi 0, %s351
    %s354 = sphi 0, %s353
    %s368 = sphi 0, %s354
    %s372 = sphi 0, %s372
    %s374 = sphi 0, %s372
    %s375 = sphi 0, %s374
    %s389 = sphi 0, %s375
    %s395 = sphi 0, %s397
    %s398 = sphi 0, %s395
    %s399 = sphi 0, %s398
    %s415 = sphi 0, %s399
  $region4: #{mae_forward.5} parent=0 // loop_header_branch
    %26 = sbr.rel (%p24) target = $region8
  $region5: #{mae_forward.5} parent=0 // loop_body
    %s28 = ssub.s32 %s23, 1
    %s29 = ssub.s32 %s23, 2
    %s30 = sadd.s32 %s23, 1
    %s31 = ssub.s32 %s23, %s30
    %p32 = scmp.eq.s32.totalorder %s31, 0
    %s34 = sadd.s32 %s33, 1
    %s35 = scalar_select %p32, %s33, %s34
    %p38 = pneg %p32
    %p39 = scmp.eq.s32.totalorder %s23, 1
    %p40 = por %p38, %p39
    %p41 = scmp.ne.s32.totalorder %s33, %s36
    %p42 = scmp.eq.s32.totalorder %s23, 0
    %p43 = por %p41, %p42
    %p44 = scmp.ne.s32.totalorder %s33, %s36
    %p45 = scmp.eq.s32.totalorder %s28, 1
    %p46 = por %p44, %p45
    %p47 = scmp.ne.s32.totalorder %s36, %s37
    %p48 = scmp.eq.s32.totalorder %s28, 0
    %p49 = por %p47, %p48
    %p50 = scmp.ne.s32.totalorder %s36, %s37
    %p51 = scmp.eq.s32.totalorder %s29, 1
    %p52 = por %p50, %p51
    %p54 = scmp.ne.s32.totalorder %s37, %s53
    %p55 = scmp.eq.s32.totalorder %s29, 0
    %p56 = por %p54, %p55
    %s58 = sadd.s32 %s57, 1
    %p61 = scmp.eq.s32.totalorder %s23, 1
    %p62 = scmp.ne.s32.totalorder %s57, %s59
    %p63 = scmp.eq.s32.totalorder %s23, 0
    %p64 = por %p62, %p63
    %p65 = scmp.ne.s32.totalorder %s57, %s59
    %p66 = scmp.eq.s32.totalorder %s28, 1
    %p67 = por %p65, %p66
    %p68 = scmp.ne.s32.totalorder %s59, %s60
    %p69 = scmp.eq.s32.totalorder %s28, 0
    %p70 = por %p68, %p69
    %p71 = scmp.ne.s32.totalorder %s59, %s60
    %p72 = scmp.eq.s32.totalorder %s29, 1
    %p73 = por %p71, %p72
    %p75 = scmp.ne.s32.totalorder %s60, %s74
    %p76 = scmp.eq.s32.totalorder %s29, 0
    %p77 = por %p75, %p76
    %s79 = sadd.s32 %s78, 1
    %p82 = scmp.eq.s32.totalorder %s23, 1
    %p83 = scmp.ne.s32.totalorder %s78, %s80
    %p84 = scmp.eq.s32.totalorder %s23, 0
    %p85 = por %p83, %p84
    %p86 = scmp.ne.s32.totalorder %s78, %s80
    %p87 = scmp.eq.s32.totalorder %s28, 1
    %p88 = por %p86, %p87
    %p89 = scmp.ne.s32.totalorder %s80, %s81
    %p90 = scmp.eq.s32.totalorder %s28, 0
    %p91 = por %p89, %p90
    %p92 = scmp.ne.s32.totalorder %s80, %s81
    %p93 = scmp.eq.s32.totalorder %s29, 1
    %p94 = por %p92, %p93
    %p96 = scmp.ne.s32.totalorder %s81, %s95
    %p97 = scmp.eq.s32.totalorder %s29, 0
    %p98 = por %p96, %p97
    %s100 = sadd.s32 %s99, 1
    %p103 = scmp.eq.s32.totalorder %s23, 1
    %p104 = scmp.ne.s32.totalorder %s99, %s101
    %p105 = scmp.eq.s32.totalorder %s23, 0
    %p106 = por %p104, %p105
    %p107 = scmp.ne.s32.totalorder %s99, %s101
    %p108 = scmp.eq.s32.totalorder %s28, 1
    %p109 = por %p107, %p108
    %p110 = scmp.ne.s32.totalorder %s101, %s102
    %p111 = scmp.eq.s32.totalorder %s28, 0
    %p112 = por %p110, %p111
    %p113 = scmp.ne.s32.totalorder %s101, %s102
    %p114 = scmp.eq.s32.totalorder %s29, 1
    %p115 = por %p113, %p114
    %p117 = scmp.ne.s32.totalorder %s102, %s116
    %p118 = scmp.eq.s32.totalorder %s29, 0
    %p119 = por %p117, %p118
    %s121 = sadd.s32 %s120, 1
    %p124 = scmp.eq.s32.totalorder %s23, 1
    %p125 = scmp.ne.s32.totalorder %s120, %s122
    %p126 = scmp.eq.s32.totalorder %s23, 0
    %p127 = por %p125, %p126
    %p128 = scmp.ne.s32.totalorder %s120, %s122
    %p129 = scmp.eq.s32.totalorder %s28, 1
    %p130 = por %p128, %p129
    %p131 = scmp.ne.s32.totalorder %s122, %s123
    %p132 = scmp.eq.s32.totalorder %s28, 0
    %p133 = por %p131, %p132
    %p134 = scmp.ne.s32.totalorder %s122, %s123
    %p135 = scmp.eq.s32.totalorder %s29, 1
    %p136 = por %p134, %p135
    %p138 = scmp.ne.s32.totalorder %s123, %s137
    %p139 = scmp.eq.s32.totalorder %s29, 0
    %p140 = por %p138, %p139
    %s142 = sadd.s32 %s141, 1
    %p145 = scmp.eq.s32.totalorder %s23, 1
    %p146 = scmp.ne.s32.totalorder %s141, %s143
    %p147 = scmp.eq.s32.totalorder %s23, 0
    %p148 = por %p146, %p147
    %p149 = scmp.ne.s32.totalorder %s141, %s143
    %p150 = scmp.eq.s32.totalorder %s28, 1
    %p151 = por %p149, %p150
    %p152 = scmp.ne.s32.totalorder %s143, %s144
    %p153 = scmp.eq.s32.totalorder %s28, 0
    %p154 = por %p152, %p153
    %p155 = scmp.ne.s32.totalorder %s143, %s144
    %p156 = scmp.eq.s32.totalorder %s29, 1
    %p157 = por %p155, %p156
    %p159 = scmp.ne.s32.totalorder %s144, %s158
    %p160 = scmp.eq.s32.totalorder %s29, 0
    %p161 = por %p159, %p160
    %s163 = sadd.s32 %s162, 1
    %p166 = scmp.eq.s32.totalorder %s23, 1
    %p167 = scmp.ne.s32.totalorder %s162, %s164
    %p168 = scmp.eq.s32.totalorder %s23, 0
    %p169 = por %p167, %p168
    %p170 = scmp.ne.s32.totalorder %s162, %s164
    %p171 = scmp.eq.s32.totalorder %s28, 1
    %p172 = por %p170, %p171
    %p173 = scmp.ne.s32.totalorder %s164, %s165
    %p174 = scmp.eq.s32.totalorder %s28, 0
    %p175 = por %p173, %p174
    %p176 = scmp.ne.s32.totalorder %s164, %s165
    %p177 = scmp.eq.s32.totalorder %s29, 1
    %p178 = por %p176, %p177
    %p180 = scmp.ne.s32.totalorder %s165, %s179
    %p181 = scmp.eq.s32.totalorder %s29, 0
    %p182 = por %p180, %p181
    %s184 = sadd.s32 %s183, 1
    %p187 = scmp.eq.s32.totalorder %s23, 1
    %p188 = scmp.ne.s32.totalorder %s183, %s185
    %p189 = scmp.eq.s32.totalorder %s23, 0
    %p190 = por %p188, %p189
    %p191 = scmp.ne.s32.totalorder %s183, %s185
    %p192 = scmp.eq.s32.totalorder %s28, 1
    %p193 = por %p191, %p192
    %p194 = scmp.ne.s32.totalorder %s185, %s186
    %p195 = scmp.eq.s32.totalorder %s28, 0
    %p196 = por %p194, %p195
    %p197 = scmp.ne.s32.totalorder %s185, %s186
    %p198 = scmp.eq.s32.totalorder %s29, 1
    %p199 = por %p197, %p198
    %p201 = scmp.ne.s32.totalorder %s186, %s200
    %p202 = scmp.eq.s32.totalorder %s29, 0
    %p203 = por %p201, %p202
    %s205 = sadd.s32 %s204, 1
    %p208 = scmp.eq.s32.totalorder %s23, 1
    %p209 = scmp.ne.s32.totalorder %s204, %s206
    %p210 = scmp.eq.s32.totalorder %s23, 0
    %p211 = por %p209, %p210
    %p212 = scmp.ne.s32.totalorder %s204, %s206
    %p213 = scmp.eq.s32.totalorder %s28, 1
    %p214 = por %p212, %p213
    %p215 = scmp.ne.s32.totalorder %s206, %s207
    %p216 = scmp.eq.s32.totalorder %s28, 0
    %p217 = por %p215, %p216
    %p218 = scmp.ne.s32.totalorder %s206, %s207
    %p219 = scmp.eq.s32.totalorder %s29, 1
    %p220 = por %p218, %p219
    %p222 = scmp.ne.s32.totalorder %s207, %s221
    %p223 = scmp.eq.s32.totalorder %s29, 0
    %p224 = por %p222, %p223
    %s226 = sadd.s32 %s225, 1
    %p229 = scmp.eq.s32.totalorder %s23, 1
    %p230 = scmp.ne.s32.totalorder %s225, %s227
    %p231 = scmp.eq.s32.totalorder %s23, 0
    %p232 = por %p230, %p231
    %p233 = scmp.ne.s32.totalorder %s225, %s227
    %p234 = scmp.eq.s32.totalorder %s28, 1
    %p235 = por %p233, %p234
    %p236 = scmp.ne.s32.totalorder %s227, %s228
    %p237 = scmp.eq.s32.totalorder %s28, 0
    %p238 = por %p236, %p237
    %p239 = scmp.ne.s32.totalorder %s227, %s228
    %p240 = scmp.eq.s32.totalorder %s29, 1
    %p241 = por %p239, %p240
    %p243 = scmp.ne.s32.totalorder %s228, %s242
    %p244 = scmp.eq.s32.totalorder %s29, 0
    %p245 = por %p243, %p244
    %s247 = sadd.s32 %s246, 1
    %p250 = scmp.eq.s32.totalorder %s23, 1
    %p251 = scmp.ne.s32.totalorder %s246, %s248
    %p252 = scmp.eq.s32.totalorder %s23, 0
    %p253 = por %p251, %p252
    %p254 = scmp.ne.s32.totalorder %s246, %s248
    %p255 = scmp.eq.s32.totalorder %s28, 1
    %p256 = por %p254, %p255
    %p257 = scmp.ne.s32.totalorder %s248, %s249
    %p258 = scmp.eq.s32.totalorder %s28, 0
    %p259 = por %p257, %p258
    %p260 = scmp.ne.s32.totalorder %s248, %s249
    %p261 = scmp.eq.s32.totalorder %s29, 1
    %p262 = por %p260, %p261
    %p264 = scmp.ne.s32.totalorder %s249, %s263
    %p265 = scmp.eq.s32.totalorder %s29, 0
    %p266 = por %p264, %p265
    %s268 = sadd.s32 %s267, 1
    %p271 = scmp.eq.s32.totalorder %s23, 1
    %p272 = scmp.ne.s32.totalorder %s267, %s269
    %p273 = scmp.eq.s32.totalorder %s23, 0
    %p274 = por %p272, %p273
    %p275 = scmp.ne.s32.totalorder %s267, %s269
    %p276 = scmp.eq.s32.totalorder %s28, 1
    %p277 = por %p275, %p276
    %p278 = scmp.ne.s32.totalorder %s269, %s270
    %p279 = scmp.eq.s32.totalorder %s28, 0
    %p280 = por %p278, %p279
    %p281 = scmp.ne.s32.totalorder %s269, %s270
    %p282 = scmp.eq.s32.totalorder %s29, 1
    %p283 = por %p281, %p282
    %p285 = scmp.ne.s32.totalorder %s270, %s284
    %p286 = scmp.eq.s32.totalorder %s29, 0
    %p287 = por %p285, %p286
    %s289 = sadd.s32 %s288, 1
    %p292 = scmp.eq.s32.totalorder %s23, 1
    %p293 = scmp.ne.s32.totalorder %s288, %s290
    %p294 = scmp.eq.s32.totalorder %s23, 0
    %p295 = por %p293, %p294
    %p296 = scmp.ne.s32.totalorder %s288, %s290
    %p297 = scmp.eq.s32.totalorder %s28, 1
    %p298 = por %p296, %p297
    %p299 = scmp.ne.s32.totalorder %s290, %s291
    %p300 = scmp.eq.s32.totalorder %s28, 0
    %p301 = por %p299, %p300
    %p302 = scmp.ne.s32.totalorder %s290, %s291
    %p303 = scmp.eq.s32.totalorder %s29, 1
    %p304 = por %p302, %p303
    %p306 = scmp.ne.s32.totalorder %s291, %s305
    %p307 = scmp.eq.s32.totalorder %s29, 0
    %p308 = por %p306, %p307
    %s310 = sadd.s32 %s309, 1
    %p313 = scmp.eq.s32.totalorder %s23, 1
    %p314 = scmp.ne.s32.totalorder %s309, %s311
    %p315 = scmp.eq.s32.totalorder %s23, 0
    %p316 = por %p314, %p315
    %p317 = scmp.ne.s32.totalorder %s309, %s311
    %p318 = scmp.eq.s32.totalorder %s28, 1
    %p319 = por %p317, %p318
    %p320 = scmp.ne.s32.totalorder %s311, %s312
    %p321 = scmp.eq.s32.totalorder %s28, 0
    %p322 = por %p320, %p321
    %p323 = scmp.ne.s32.totalorder %s311, %s312
    %p324 = scmp.eq.s32.totalorder %s29, 1
    %p325 = por %p323, %p324
    %p327 = scmp.ne.s32.totalorder %s312, %s326
    %p328 = scmp.eq.s32.totalorder %s29, 0
    %p329 = por %p327, %p328
    %s331 = sadd.s32 %s330, 1
    %p334 = scmp.eq.s32.totalorder %s23, 1
    %p335 = scmp.ne.s32.totalorder %s330, %s332
    %p336 = scmp.eq.s32.totalorder %s23, 0
    %p337 = por %p335, %p336
    %p338 = scmp.ne.s32.totalorder %s330, %s332
    %p339 = scmp.eq.s32.totalorder %s28, 1
    %p340 = por %p338, %p339
    %p341 = scmp.ne.s32.totalorder %s332, %s333
    %p342 = scmp.eq.s32.totalorder %s28, 0
    %p343 = por %p341, %p342
    %p344 = scmp.ne.s32.totalorder %s332, %s333
    %p345 = scmp.eq.s32.totalorder %s29, 1
    %p346 = por %p344, %p345
    %p348 = scmp.ne.s32.totalorder %s333, %s347
    %p349 = scmp.eq.s32.totalorder %s29, 0
    %p350 = por %p348, %p349
    %s352 = sadd.s32 %s351, 1
    %p355 = scmp.eq.s32.totalorder %s23, 1
    %p356 = scmp.ne.s32.totalorder %s351, %s353
    %p357 = scmp.eq.s32.totalorder %s23, 0
    %p358 = por %p356, %p357
    %p359 = scmp.ne.s32.totalorder %s351, %s353
    %p360 = scmp.eq.s32.totalorder %s28, 1
    %p361 = por %p359, %p360
    %p362 = scmp.ne.s32.totalorder %s353, %s354
    %p363 = scmp.eq.s32.totalorder %s28, 0
    %p364 = por %p362, %p363
    %p365 = scmp.ne.s32.totalorder %s353, %s354
    %p366 = scmp.eq.s32.totalorder %s29, 1
    %p367 = por %p365, %p366
    %p369 = scmp.ne.s32.totalorder %s354, %s368
    %p370 = scmp.eq.s32.totalorder %s29, 0
    %p371 = por %p369, %p370
    %s373 = sadd.s32 %s372, 1
    %p376 = scmp.eq.s32.totalorder %s23, 1
    %p377 = scmp.ne.s32.totalorder %s372, %s374
    %p378 = scmp.eq.s32.totalorder %s23, 0
    %p379 = por %p377, %p378
    %p380 = scmp.ne.s32.totalorder %s372, %s374
    %p381 = scmp.eq.s32.totalorder %s28, 1
    %p382 = por %p380, %p381
    %p383 = scmp.ne.s32.totalorder %s374, %s375
    %p384 = scmp.eq.s32.totalorder %s28, 0
    %p385 = por %p383, %p384
    %p386 = scmp.ne.s32.totalorder %s374, %s375
    %p387 = scmp.eq.s32.totalorder %s29, 1
    %p388 = por %p386, %p387
    %p390 = scmp.ne.s32.totalorder %s375, %s389
    %p391 = scmp.eq.s32.totalorder %s29, 0
    %p392 = por %p390, %p391
    %s393 = ssub.s32 %s23, %s30
    %p394 = scmp.eq.s32.totalorder %s393, 0
    %s396 = sadd.s32 %s395, 1
    %s397 = scalar_select %p394, %s395, %s396
    %p400 = pneg %p394
    %p401 = scmp.eq.s32.totalorder %s23, 1
    %p402 = por %p400, %p401
    %p403 = scmp.ne.s32.totalorder %s395, %s398
    %p404 = scmp.eq.s32.totalorder %s23, 0
    %p405 = por %p403, %p404
    %p406 = scmp.ne.s32.totalorder %s395, %s398
    %p407 = scmp.eq.s32.totalorder %s28, 1
    %p408 = por %p406, %p407
    %p409 = scmp.ne.s32.totalorder %s398, %s399
    %p410 = scmp.eq.s32.totalorder %s28, 0
    %p411 = por %p409, %p410
    %p412 = scmp.ne.s32.totalorder %s398, %s399
    %p413 = scmp.eq.s32.totalorder %s29, 1
    %p414 = por %p412, %p413
    %p416 = scmp.ne.s32.totalorder %s399, %s415
    %p417 = scmp.eq.s32.totalorder %s29, 0
    %p418 = por %p416, %p417
    %p419 = scmp.le.s32.totalorder 1, %s23
    %p420 = scmp.lt.s32.totalorder %s23, 3
    %p421 = pnand %p419, %p420
    %p422 = pneg %p421
    // Predicated region
    $region9: #{mae_forward.5} parent=5 // pred_check
      _
    $region10: #{mae_forward.5} parent=5 // pred_check_branch
      %424 = sbr.rel (%p421) target = $region12
    $region11: #{mae_forward.5} parent=5 // pred_region
      %s425 = ssub.s32 %s23, 1
      // Predicated region
      $region13: #{mae_forward.5} parent=11 // pred_check
        %p426 = pneg %p70
      $region14: #{mae_forward.5} parent=11 // pred_check_branch
        %428 = sbr.rel (%p426) target = $region16
      $region15: #{mae_forward.5} parent=11 // pred_region
        _
      $region16: #{mae_forward.5} parent=11 // pred_fallthru
        _
      // Predicated region
      $region17: #{mae_forward.5} parent=11 // pred_check
        %p429 = pneg %p91
      $region18: #{mae_forward.5} parent=11 // pred_check_branch
        %431 = sbr.rel (%p429) target = $region20
      $region19: #{mae_forward.5} parent=11 // pred_region
        _
      $region20: #{mae_forward.5} parent=11 // pred_fallthru
        _
      // Predicated region
      $region21: #{mae_forward.5} parent=11 // pred_check
        %p432 = pneg %p112
      $region22: #{mae_forward.5} parent=11 // pred_check_branch
        %434 = sbr.rel (%p432) target = $region24
      $region23: #{mae_forward.5} parent=11 // pred_region
        _
      $region24: #{mae_forward.5} parent=11 // pred_fallthru
        _
      // Predicated region
      $region25: #{mae_forward.5} parent=11 // pred_check
        %p435 = pneg %p133
      $region26: #{mae_forward.5} parent=11 // pred_check_branch
        %437 = sbr.rel (%p435) target = $region28
      $region27: #{mae_forward.5} parent=11 // pred_region
        _
      $region28: #{mae_forward.5} parent=11 // pred_fallthru
        _
      // Predicated region
      $region29: #{mae_forward.5} parent=11 // pred_check
        %p438 = pneg %p154
      $region30: #{mae_forward.5} parent=11 // pred_check_branch
        %440 = sbr.rel (%p438) target = $region32
      $region31: #{mae_forward.5} parent=11 // pred_region
        _
      $region32: #{mae_forward.5} parent=11 // pred_fallthru
        _
      // Predicated region
      $region33: #{mae_forward.5} parent=11 // pred_check
        %p441 = pneg %p175
      $region34: #{mae_forward.5} parent=11 // pred_check_branch
        %443 = sbr.rel (%p441) target = $region36
      $region35: #{mae_forward.5} parent=11 // pred_region
        _
      $region36: #{mae_forward.5} parent=11 // pred_fallthru
        _
      // Predicated region
      $region37: #{mae_forward.5} parent=11 // pred_check
        %p444 = pneg %p196
      $region38: #{mae_forward.5} parent=11 // pred_check_branch
        %446 = sbr.rel (%p444) target = $region40
      $region39: #{mae_forward.5} parent=11 // pred_region
        _
      $region40: #{mae_forward.5} parent=11 // pred_fallthru
        _
      // Predicated region
      $region41: #{mae_forward.5} parent=11 // pred_check
        %p447 = pneg %p217
      $region42: #{mae_forward.5} parent=11 // pred_check_branch
        %449 = sbr.rel (%p447) target = $region44
      $region43: #{mae_forward.5} parent=11 // pred_region
        _
      $region44: #{mae_forward.5} parent=11 // pred_fallthru
        _
      // Predicated region
      $region45: #{mae_forward.5} parent=11 // pred_check
        %p450 = pneg %p238
      $region46: #{mae_forward.5} parent=11 // pred_check_branch
        %452 = sbr.rel (%p450) target = $region48
      $region47: #{mae_forward.5} parent=11 // pred_region
        _
      $region48: #{mae_forward.5} parent=11 // pred_fallthru
        _
      // Predicated region
      $region49: #{mae_forward.5} parent=11 // pred_check
        %p453 = pneg %p259
      $region50: #{mae_forward.5} parent=11 // pred_check_branch
        %455 = sbr.rel (%p453) target = $region52
      $region51: #{mae_forward.5} parent=11 // pred_region
        _
      $region52: #{mae_forward.5} parent=11 // pred_fallthru
        _
      // Predicated region
      $region53: #{mae_forward.5} parent=11 // pred_check
        %p456 = pneg %p280
      $region54: #{mae_forward.5} parent=11 // pred_check_branch
        %458 = sbr.rel (%p456) target = $region56
      $region55: #{mae_forward.5} parent=11 // pred_region
        _
      $region56: #{mae_forward.5} parent=11 // pred_fallthru
        _
      // Predicated region
      $region57: #{mae_forward.5} parent=11 // pred_check
        %p459 = pneg %p301
      $region58: #{mae_forward.5} parent=11 // pred_check_branch
        %461 = sbr.rel (%p459) target = $region60
      $region59: #{mae_forward.5} parent=11 // pred_region
        _
      $region60: #{mae_forward.5} parent=11 // pred_fallthru
        _
      // Predicated region
      $region61: #{mae_forward.5} parent=11 // pred_check
        %p462 = pneg %p322
      $region62: #{mae_forward.5} parent=11 // pred_check_branch
        %464 = sbr.rel (%p462) target = $region64
      $region63: #{mae_forward.5} parent=11 // pred_region
        _
      $region64: #{mae_forward.5} parent=11 // pred_fallthru
        _
      // Predicated region
      $region65: #{mae_forward.5} parent=11 // pred_check
        %p465 = pneg %p343
      $region66: #{mae_forward.5} parent=11 // pred_check_branch
        %467 = sbr.rel (%p465) target = $region68
      $region67: #{mae_forward.5} parent=11 // pred_region
        _
      $region68: #{mae_forward.5} parent=11 // pred_fallthru
        _
      // Predicated region
      $region69: #{mae_forward.5} parent=11 // pred_check
        %p468 = pneg %p364
      $region70: #{mae_forward.5} parent=11 // pred_check_branch
        %470 = sbr.rel (%p468) target = $region72
      $region71: #{mae_forward.5} parent=11 // pred_region
        _
      $region72: #{mae_forward.5} parent=11 // pred_fallthru
        _
      // Predicated region
      $region73: #{mae_forward.5} parent=11 // pred_check
        %p471 = pneg %p385
      $region74: #{mae_forward.5} parent=11 // pred_check_branch
        %473 = sbr.rel (%p471) target = $region76
      $region75: #{mae_forward.5} parent=11 // pred_region
        _
      $region76: #{mae_forward.5} parent=11 // pred_fallthru
        _
    $region12: #{mae_forward.5} parent=5 // pred_fallthru
      _
    %p474 = scmp.lt.s32.totalorder %s23, 2
    // Predicated region
    $region77: #{mae_forward.5} parent=5 // pred_check
      %p475 = pneg %p474
    $region78: #{mae_forward.5} parent=5 // pred_check_branch
      %477 = sbr.rel (%p475) target = $region80
    $region79: #{mae_forward.5} parent=5 // pred_region
      // Predicated region
      $region81: #{mae_forward.5} parent=79 // pred_check
        %p478 = pneg %p43
      $region82: #{mae_forward.5} parent=79 // pred_check_branch
        %480 = sbr.rel (%p478) target = $region84
      $region83: #{mae_forward.5} parent=79 // pred_region
        %p481 = scmp.lt.s32.totalorder %s23, 1
        %s482 = scalar_select %p481, %s23, 1
        %s483 = smul.addr %s482, 8
        %s484 = scalar_lea.vmem %s0, %s483
      $region84: #{mae_forward.5} parent=79 // pred_fallthru
        _
    $region80: #{mae_forward.5} parent=5 // pred_fallthru
      _
    %p485 = scmp.le.s32.totalorder 1, %s23
    %p486 = scmp.lt.s32.totalorder %s23, 3
    %p487 = pnand %p485, %p486
    %p488 = pneg %p487
    // Predicated region
    $region85: #{mae_forward.5} parent=5 // pred_check
      _
    $region86: #{mae_forward.5} parent=5 // pred_check_branch
      %490 = sbr.rel (%p487) target = $region88
    $region87: #{mae_forward.5} parent=5 // pred_region
      %s491 = ssub.s32 %s23, 1
      %p492 = scmp.lt.s32.totalorder %s28, 1
      %s493 = scalar_select %p492, %s28, 1
      %s494 = smul.addr %s493, 8
      %s495 = scalar_lea.vmem %s0, %s494
      %p496 = pneg %p49
      %p497 = pneg %p46
      %p498 = pneg %p70
      %p499 = pneg %p67
      %p500 = pneg %p91
      %p501 = pneg %p88
      %p502 = pneg %p112
      %p503 = pneg %p109
      %p504 = pneg %p133
      %p505 = pneg %p130
      %p506 = pneg %p154
      %p507 = pneg %p151
      %p508 = pneg %p175
      %p509 = pneg %p172
      %p510 = pneg %p196
      %p511 = pneg %p193
      %p512 = pneg %p217
      %p513 = pneg %p214
      %p514 = pneg %p238
      %p515 = pneg %p235
      %p516 = pneg %p259
      %p517 = pneg %p256
      %p518 = pneg %p280
      %p519 = pneg %p277
      %p520 = pneg %p301
      %p521 = pneg %p298
      %p522 = pneg %p322
      %p523 = pneg %p319
      %p524 = pneg %p343
      %p525 = pneg %p340
      %p526 = pneg %p364
      %p527 = pneg %p361
      %p528 = pneg %p385
      %p529 = pneg %p382
      %p530 = pneg %p411
      %p531 = pneg %p408
      %p532 = scmp.lt.s32.totalorder %s28, 1
      %s533 = scalar_select %p532, %s28, 1
      %s534 = smul.addr %s533, 8
      %s535 = scalar_lea.vmem %s17, %s534
      %p536 = scmp.lt.s32.totalorder %s28, 1
      %s537 = scalar_select %p536, %s28, 1
      %s538 = smul.addr %s537, 8
      %s539 = scalar_lea.vmem %s0, %s538
      %p540 = scmp.lt.s32.totalorder %s28, 1
      %s541 = scalar_select %p540, %s28, 1
      %s542 = smul.addr %s541, 8
      %s543 = scalar_lea.vmem %s17, %s542
      %v544 = vld [vmem:[%s539] sm:$0x1f]
      %v545 = vld [vmem:[%s1] sm:$0x1]
      %v546 = vld [vmem:[%s2] sm:$0x1]
      %vm547 = vcmask 258048
      %v548 = vsel %vm547, %v544, 0.0
      %549 = vadd.xlane.f32.xlu0 %v548
      %v550 = vpop.xlane.xlu0 %549
      %v551 = vrcp.pop 32.0
      %v552 = vmul.f32 %v550, %v551
      %v553 = vsub.f32 %v544, %v552
      %v554 = vmul.f32 %v553, %v553
      %v555 = vsel %vm547, %v554, 0.0
      %556 = vadd.xlane.f32.xlu0 %v555
      %v557 = vpop.xlane.xlu0 %556
      %v558 = vmul.f32 %v557, %v551
      %v559 = vadd.f32 %v558, 1e-05
      %v560 = vrsqrt.pop %v559
      %v561 = vmul.f32 %v553, %v560
      %v563 = vlaneseq
      %v564 = vshrl.u32 %v563, 7
      %v565 = vsub.s32 0, %v564
      %v566 = vrot.slane %v545, %v565
      %v568 = vmul.f32 %v561, %v566
      %v570 = vlaneseq
      %v571 = vshrl.u32 %v570, 7
      %v572 = vsub.s32 0, %v571
      %v573 = vrot.slane %v546, %v572
      %v575 = vadd.f32 %v568, %v573
      %v576 = vld [vmem:[%s3] sm:$0xff]
      %v577 = vld [vmem:[%s3 + $0x8] sm:$0xff]
      %v578 = vld [vmem:[%s3 + $0x10] sm:$0xff]
      %v579 = vld [vmem:[%s3 + $0x18] sm:$0xff]
      %v580 = vld [vmem:[%s4] sm:$0x1]
      %v582 = vlaneseq
      %v583 = vshrl.u32 %v582, 7
      %v584 = vsub.s32 0, %v583
      %v585 = vrot.slane %v580, %v584
      %vm587 = vcmask 261120
      %v589 = vsel %vm587, %v575, 0
      %591 = vmatprep.subr.mxu0 0.0
      %592 = vmatpush1.msra.mxu0 %v576
      %593 = vmatprep.subr.mxu0 0.0
      %594 = vmatpush1.msra.mxu0 %v577
      %595 = vmatprep.subr.mxu0 0.0
      %596 = vmatpush1.msra.mxu0 %v578
      %597 = vmatprep.subr.mxu0 0.0
      %598 = vmatpush1.msra.mxu0 %v579
      %599 = vmatprep.subr.mxu0 0.0
      %600 = vmatpush1.msra.mxu0 0.0
      %601 = vmatprep.subr.mxu0 0.0
      %602 = vmatpush1.msra.mxu0 0.0
      %603 = vmatprep.subr.mxu0 0.0
      %604 = vmatpush1.msra.mxu0 0.0
      %605 = vmatprep.subr.mxu0 0.0
      %606 = vmatpush1.msra.mxu0 0.0
      %607 = vmatprep.subr.mxu0 0.0
      %608 = vmatpush1.msra.mxu0 0.0
      %609 = vmatprep.subr.mxu0 0.0
      %610 = vmatpush1.msra.mxu0 0.0
      %611 = vmatprep.subr.mxu0 0.0
      %612 = vmatpush1.msra.mxu0 0.0
      %613 = vmatprep.subr.mxu0 0.0
      %614 = vmatpush1.msra.mxu0 0.0
      %615 = vmatprep.subr.mxu0 0.0
      %616 = vmatpush1.msra.mxu0 0.0
      %617 = vmatprep.subr.mxu0 0.0
      %618 = vmatpush1.msra.mxu0 0.0
      %619 = vmatprep.subr.mxu0 0.0
      %620 = vmatpush1.msra.mxu0 0.0
      %621 = vmatprep.subr.mxu0 0.0
      %622 = vmatpush1.msra.mxu0 0.0
      %623 = vmatprep.subr.mxu0 0.0
      %624 = vmatpush1.msra.mxu0 0.0
      %625 = vmatprep.subr.mxu0 0.0
      %626 = vmatpush1.msra.mxu0 0.0
      %627 = vmatprep.subr.mxu0 0.0
      %628 = vmatpush1.msra.mxu0 0.0
      %629 = vmatprep.subr.mxu0 0.0
      %630 = vmatpush1.msra.mxu0 0.0
      %631 = vmatprep.subr.mxu0 0.0
      %632 = vmatpush1.msra.mxu0 0.0
      %633 = vmatprep.subr.mxu0 0.0
      %634 = vmatpush1.msra.mxu0 0.0
      %635 = vmatprep.subr.mxu0 0.0
      %636 = vmatpush1.msra.mxu0 0.0
      %637 = vmatprep.subr.mxu0 0.0
      %638 = vmatpush1.msra.mxu0 0.0
      %639 = vmatprep.subr.mxu0 0.0
      %640 = vmatpush1.msra.mxu0 0.0
      %641 = vmatprep.subr.mxu0 0.0
      %642 = vmatpush1.msra.mxu0 0.0
      %643 = vmatprep.subr.mxu0 0.0
      %644 = vmatpush1.msra.mxu0 0.0
      %645 = vmatprep.subr.mxu0 0.0
      %646 = vmatpush1.msra.mxu0 0.0
      %647 = vmatprep.subr.mxu0 0.0
      %648 = vmatpush1.msra.mxu0 0.0
      %649 = vmatprep.subr.mxu0 0.0
      %650 = vmatpush1.msra.mxu0 0.0
      %651 = vmatprep.subr.mxu0 0.0
      %652 = vmatpush1.msra.mxu0 0.0
      %653 = vmatprep.subr.mxu0 0.0
      %654 = vmatpush1.msra.mxu0 0.0
      %655 = vmatprep.mubr.f32.mxu0 0.0
      %656 = vmatmul.mubr.f32.gmra.mrb[0].mxu0 %v589
      %v657 = vpop.f32.mrb[0].mxu0
      %v658 = vadd.f32 %v585, %v657
      %v659 = vpop.f32.mrb[0].mxu0
      %660 = vdwg.mxu0
      %v661 = vmul.f32 %v658, 0.35355338
      %663 = vrot.lane.b32.xlu0 %v658, 96
      %v664 = vpop.permute.xlu0 %663
      %vm665 = vcmask 64512
      %v667 = vsel %vm665, %v661, 0
      %v669 = vsel %vm665, %v664, 0
      %671 = vmatprep.subr.mxu0 0.0
      %672 = vmatpush1.xpose.msra.mxu0 %v669
      %673 = vmatprep.subr.mxu0 0.0
      %674 = vmatpush1.xpose.msra.mxu0 0.0
      %675 = vmatprep.subr.mxu0 0.0
      %676 = vmatpush1.xpose.msra.mxu0 0.0
      %677 = vmatprep.subr.mxu0 0.0
      %678 = vmatpush1.xpose.msra.mxu0 0.0
      %679 = vmatprep.subr.mxu0 0.0
      %680 = vmatpush1.xpose.msra.mxu0 0.0
      %681 = vmatprep.subr.mxu0 0.0
      %682 = vmatpush1.xpose.msra.mxu0 0.0
      %683 = vmatprep.subr.mxu0 0.0
      %684 = vmatpush1.xpose.msra.mxu0 0.0
      %685 = vmatprep.subr.mxu0 0.0
      %686 = vmatpush1.xpose.msra.mxu0 0.0
      %687 = vmatprep.subr.mxu0 0.0
      %688 = vmatpush1.xpose.msra.mxu0 0.0
      %689 = vmatprep.subr.mxu0 0.0
      %690 = vmatpush1.xpose.msra.mxu0 0.0
      %691 = vmatprep.subr.mxu0 0.0
      %692 = vmatpush1.xpose.msra.mxu0 0.0
      %693 = vmatprep.subr.mxu0 0.0
      %694 = vmatpush1.xpose.msra.mxu0 0.0
      %695 = vmatprep.subr.mxu0 0.0
      %696 = vmatpush1.xpose.msra.mxu0 0.0
      %697 = vmatprep.subr.mxu0 0.0
      %698 = vmatpush1.xpose.msra.mxu0 0.0
      %699 = vmatprep.subr.mxu0 0.0
      %700 = vmatpush1.xpose.msra.mxu0 0.0
      %701 = vmatprep.subr.mxu0 0.0
      %702 = vmatpush1.xpose.msra.mxu0 0.0
      %703 = vmatprep.subr.mxu0 0.0
      %704 = vmatpush1.xpose.msra.mxu0 0.0
      %705 = vmatprep.subr.mxu0 0.0
      %706 = vmatpush1.xpose.msra.mxu0 0.0
      %707 = vmatprep.subr.mxu0 0.0
      %708 = vmatpush1.xpose.msra.mxu0 0.0
      %709 = vmatprep.subr.mxu0 0.0
      %710 = vmatpush1.xpose.msra.mxu0 0.0
      %711 = vmatprep.subr.mxu0 0.0
      %712 = vmatpush1.xpose.msra.mxu0 0.0
      %713 = vmatprep.subr.mxu0 0.0
      %714 = vmatpush1.xpose.msra.mxu0 0.0
      %715 = vmatprep.subr.mxu0 0.0
      %716 = vmatpush1.xpose.msra.mxu0 0.0
      %717 = vmatprep.subr.mxu0 0.0
      %718 = vmatpush1.xpose.msra.mxu0 0.0
      %719 = vmatprep.subr.mxu0 0.0
      %720 = vmatpush1.xpose.msra.mxu0 0.0
      %721 = vmatprep.subr.mxu0 0.0
      %722 = vmatpush1.xpose.msra.mxu0 0.0
      %723 = vmatprep.subr.mxu0 0.0
      %724 = vmatpush1.xpose.msra.mxu0 0.0
      %725 = vmatprep.subr.mxu0 0.0
      %726 = vmatpush1.xpose.msra.mxu0 0.0
      %727 = vmatprep.subr.mxu0 0.0
      %728 = vmatpush1.xpose.msra.mxu0 0.0
      %729 = vmatprep.subr.mxu0 0.0
      %730 = vmatpush1.xpose.msra.mxu0 0.0
      %731 = vmatprep.subr.mxu0 0.0
      %732 = vmatpush1.xpose.msra.mxu0 0.0
      %733 = vmatprep.subr.mxu0 0.0
      %734 = vmatpush1.xpose.msra.mxu0 0.0
      %735 = vmatprep.mubr.f32.mxu0 0.0
      %736 = vmatmul.mubr.f32.gmra.mrb[0].mxu0 %v667
      %v737 = vpop.f32.mrb[0].mxu0
      %v738 = vadd.f32 0.0, %v737
      %v739 = vpop.f32.mrb[0].mxu0
      %740 = vdwg.mxu0
      %vm741 = vcmask 36864
      %v742 = vsel %vm741, %v738, -inf
      %743 = vmax.xlane.f32.xlu0 %v742
      %v744 = vpop.xlane.xlu0 %743
      %v745 = vsub.f32 %v738, %v744
      %v746 = vmul.f32 %v745, 1.442695
      %v747 = vpow.pop %v746
      %v748 = vsel %vm741, %v747, 0.0
      %749 = vadd.xlane.f32.xlu0 %v748
      %v750 = vpop.xlane.xlu0 %749
      %v751 = vrcp.pop %v750
      %v752 = vmul.f32 %v747, %v751
      %753 = vrot.lane.b32.xlu0 %v658, 64
      %v754 = vpop.permute.xlu0 %753
      %vm755 = vcmask 39936
      %v757 = vsel %vm755, %v752, 0
      %vm759 = vcmask 1044480
      %v760 = vsel %vm759, %v754, 0
      %762 = vmatprep.subr.mxu0 0.0
      %763 = vmatpush1.msra.mxu0 %v760
      %764 = vmatprep.subr.mxu0 0.0
      %765 = vmatpush1.msra.mxu0 0.0
      %766 = vmatprep.subr.mxu0 0.0
      %767 = vmatpush1.msra.mxu0 0.0
      %768 = vmatprep.subr.mxu0 0.0
      %769 = vmatpush1.msra.mxu0 0.0
      %770 = vmatprep.subr.mxu0 0.0
      %771 = vmatpush1.msra.mxu0 0.0
      %772 = vmatprep.subr.mxu0 0.0
      %773 = vmatpush1.msra.mxu0 0.0
      %774 = vmatprep.subr.mxu0 0.0
      %775 = vmatpush1.msra.mxu0 0.0
      %776 = vmatprep.subr.mxu0 0.0
      %777 = vmatpush1.msra.mxu0 0.0
      %778 = vmatprep.subr.mxu0 0.0
      %779 = vmatpush1.msra.mxu0 0.0
      %780 = vmatprep.subr.mxu0 0.0
      %781 = vmatpush1.msra.mxu0 0.0
      %782 = vmatprep.subr.mxu0 0.0
      %783 = vmatpush1.msra.mxu0 0.0
      %784 = vmatprep.subr.mxu0 0.0
      %785 = vmatpush1.msra.mxu0 0.0
      %786 = vmatprep.subr.mxu0 0.0
      %787 = vmatpush1.msra.mxu0 0.0
      %788 = vmatprep.subr.mxu0 0.0
      %789 = vmatpush1.msra.mxu0 0.0
      %790 = vmatprep.subr.mxu0 0.0
      %791 = vmatpush1.msra.mxu0 0.0
      %792 = vmatprep.subr.mxu0 0.0
      %793 = vmatpush1.msra.mxu0 0.0
      %794 = vmatprep.subr.mxu0 0.0
      %795 = vmatpush1.msra.mxu0 0.0
      %796 = vmatprep.subr.mxu0 0.0
      %797 = vmatpush1.msra.mxu0 0.0
      %798 = vmatprep.subr.mxu0 0.0
      %799 = vmatpush1.msra.mxu0 0.0
      %800 = vmatprep.subr.mxu0 0.0
      %801 = vmatpush1.msra.mxu0 0.0
      %802 = vmatprep.subr.mxu0 0.0
      %803 = vmatpush1.msra.mxu0 0.0
      %804 = vmatprep.subr.mxu0 0.0
      %805 = vmatpush1.msra.mxu0 0.0
      %806 = vmatprep.subr.mxu0 0.0
      %807 = vmatpush1.msra.mxu0 0.0
      %808 = vmatprep.subr.mxu0 0.0
      %809 = vmatpush1.msra.mxu0 0.0
      %810 = vmatprep.subr.mxu0 0.0
      %811 = vmatpush1.msra.mxu0 0.0
      %812 = vmatprep.subr.mxu0 0.0
      %813 = vmatpush1.msra.mxu0 0.0
      %814 = vmatprep.subr.mxu0 0.0
      %815 = vmatpush1.msra.mxu0 0.0
      %816 = vmatprep.subr.mxu0 0.0
      %817 = vmatpush1.msra.mxu0 0.0
      %818 = vmatprep.subr.mxu0 0.0
      %819 = vmatpush1.msra.mxu0 0.0
      %820 = vmatprep.subr.mxu0 0.0
      %821 = vmatpush1.msra.mxu0 0.0
      %822 = vmatprep.subr.mxu0 0.0
      %823 = vmatpush1.msra.mxu0 0.0
      %824 = vmatprep.subr.mxu0 0.0
      %825 = vmatpush1.msra.mxu0 0.0
      %826 = vmatprep.mubr.f32.mxu0 0.0
      %827 = vmatmul.mubr.f32.gmra.mrb[0].mxu0 %v757
      %v828 = vpop.f32.mrb[0].mxu0
      %v829 = vadd.f32 0.0, %v828
      %v830 = vpop.f32.mrb[0].mxu0
      %831 = vdwg.mxu0
      %v832 = vld [vmem:[%s5] sm:$0xff]
      %833 = vrot.lane.b32.xlu0 %v661, 120
      %v834 = vpop.permute.xlu0 %833
      %835 = vrot.lane.b32.xlu0 %v658, 88
      %v836 = vpop.permute.xlu0 %835
      %v837 = vsel %vm665, %v834, 0
      %v839 = vsel %vm665, %v836, 0
      %841 = vmatprep.subr.mxu0 0.0
      %842 = vmatpush1.xpose.msra.mxu0 %v839
      %843 = vmatprep.subr.mxu0 0.0
      %844 = vmatpush1.xpose.msra.mxu0 0.0
      %845 = vmatprep.subr.mxu0 0.0
      %846 = vmatpush1.xpose.msra.mxu0 0.0
      %847 = vmatprep.subr.mxu0 0.0
      %848 = vmatpush1.xpose.msra.mxu0 0.0
      %849 = vmatprep.subr.mxu0 0.0
      %850 = vmatpush1.xpose.msra.mxu0 0.0
      %851 = vmatprep.subr.mxu0 0.0
      %852 = vmatpush1.xpose.msra.mxu0 0.0
      %853 = vmatprep.subr.mxu0 0.0
      %854 = vmatpush1.xpose.msra.mxu0 0.0
      %855 = vmatprep.subr.mxu0 0.0
      %856 = vmatpush1.xpose.msra.mxu0 0.0
      %857 = vmatprep.subr.mxu0 0.0
      %858 = vmatpush1.xpose.msra.mxu0 0.0
      %859 = vmatprep.subr.mxu0 0.0
      %860 = vmatpush1.xpose.msra.mxu0 0.0
      %861 = vmatprep.subr.mxu0 0.0
      %862 = vmatpush1.xpose.msra.mxu0 0.0
      %863 = vmatprep.subr.mxu0 0.0
      %864 = vmatpush1.xpose.msra.mxu0 0.0
      %865 = vmatprep.subr.mxu0 0.0
      %866 = vmatpush1.xpose.msra.mxu0 0.0
      %867 = vmatprep.subr.mxu0 0.0
      %868 = vmatpush1.xpose.msra.mxu0 0.0
      %869 = vmatprep.subr.mxu0 0.0
      %870 = vmatpush1.xpose.msra.mxu0 0.0
      %871 = vmatprep.subr.mxu0 0.0
      %872 = vmatpush1.xpose.msra.mxu0 0.0
      %873 = vmatprep.subr.mxu0 0.0
      %874 = vmatpush1.xpose.msra.mxu0 0.0
      %875 = vmatprep.subr.mxu0 0.0
      %876 = vmatpush1.xpose.msra.mxu0 0.0
      %877 = vmatprep.subr.mxu0 0.0
      %878 = vmatpush1.xpose.msra.mxu0 0.0
      %879 = vmatprep.subr.mxu0 0.0
      %880 = vmatpush1.xpose.msra.mxu0 0.0
      %881 = vmatprep.subr.mxu0 0.0
      %882 = vmatpush1.xpose.msra.mxu0 0.0
      %883 = vmatprep.subr.mxu0 0.0
      %884 = vmatpush1.xpose.msra.mxu0 0.0
      %885 = vmatprep.subr.mxu0 0.0
      %886 = vmatpush1.xpose.msra.mxu0 0.0
      %887 = vmatprep.subr.mxu0 0.0
      %888 = vmatpush1.xpose.msra.mxu0 0.0
      %889 = vmatprep.subr.mxu0 0.0
      %890 = vmatpush1.xpose.msra.mxu0 0.0
      %891 = vmatprep.subr.mxu0 0.0
      %892 = vmatpush1.xpose.msra.mxu0 0.0
      %893 = vmatprep.subr.mxu0 0.0
      %894 = vmatpush1.xpose.msra.mxu0 0.0
      %895 = vmatprep.subr.mxu0 0.0
      %896 = vmatpush1.xpose.msra.mxu0 0.0
      %897 = vmatprep.subr.mxu0 0.0
      %898 = vmatpush1.xpose.msra.mxu0 0.0
      %899 = vmatprep.subr.mxu0 0.0
      %900 = vmatpush1.xpose.msra.mxu0 0.0
      %901 = vmatprep.subr.mxu0 0.0
      %902 = vmatpush1.xpose.msra.mxu0 0.0
      %903 = vmatprep.subr.mxu0 0.0
      %904 = vmatpush1.xpose.msra.mxu0 0.0
      %905 = vmatprep.mubr.f32.mxu0 0.0
      %906 = vmatmul.mubr.f32.gmra.mrb[0].mxu0 %v837
      %v907 = vpop.f32.mrb[0].mxu0
      %v908 = vadd.f32 0.0, %v907
      %v909 = vpop.f32.mrb[0].mxu0
      %910 = vdwg.mxu0
      %v911 = vsel %vm741, %v908, -inf
      %912 = vmax.xlane.f32.xlu0 %v911
      %v913 = vpop.xlane.xlu0 %912
      %v914 = vsub.f32 %v908, %v913
      %v915 = vmul.f32 %v914, 1.442695
      %v916 = vpow.pop %v915
      %v917 = vsel %vm741, %v916, 0.0
      %918 = vadd.xlane.f32.xlu0 %v917
      %v919 = vpop.xlane.xlu0 %918
      %v920 = vrcp.pop %v919
      %v921 = vmul.f32 %v916, %v920
      %922 = vrot.lane.b32.xlu0 %v658, 56
      %v923 = vpop.permute.xlu0 %922
      %v925 = vsel %vm755, %v921, 0
      %v927 = vsel %vm759, %v923, 0
      %929 = vmatprep.subr.mxu0 0.0
      %930 = vmatpush1.msra.mxu0 %v927
      %931 = vmatprep.subr.mxu0 0.0
      %932 = vmatpush1.msra.mxu0 0.0
      %933 = vmatprep.subr.mxu0 0.0
      %934 = vmatpush1.msra.mxu0 0.0
      %935 = vmatprep.subr.mxu0 0.0
      %936 = vmatpush1.msra.mxu0 0.0
      %937 = vmatprep.subr.mxu0 0.0
      %938 = vmatpush1.msra.mxu0 0.0
      %939 = vmatprep.subr.mxu0 0.0
      %940 = vmatpush1.msra.mxu0 0.0
      %941 = vmatprep.subr.mxu0 0.0
      %942 = vmatpush1.msra.mxu0 0.0
      %943 = vmatprep.subr.mxu0 0.0
      %944 = vmatpush1.msra.mxu0 0.0
      %945 = vmatprep.subr.mxu0 0.0
      %946 = vmatpush1.msra.mxu0 0.0
      %947 = vmatprep.subr.mxu0 0.0
      %948 = vmatpush1.msra.mxu0 0.0
      %949 = vmatprep.subr.mxu0 0.0
      %950 = vmatpush1.msra.mxu0 0.0
      %951 = vmatprep.subr.mxu0 0.0
      %952 = vmatpush1.msra.mxu0 0.0
      %953 = vmatprep.subr.mxu0 0.0
      %954 = vmatpush1.msra.mxu0 0.0
      %955 = vmatprep.subr.mxu0 0.0
      %956 = vmatpush1.msra.mxu0 0.0
      %957 = vmatprep.subr.mxu0 0.0
      %958 = vmatpush1.msra.mxu0 0.0
      %959 = vmatprep.subr.mxu0 0.0
      %960 = vmatpush1.msra.mxu0 0.0
      %961 = vmatprep.subr.mxu0 0.0
      %962 = vmatpush1.msra.mxu0 0.0
      %963 = vmatprep.subr.mxu0 0.0
      %964 = vmatpush1.msra.mxu0 0.0
      %965 = vmatprep.subr.mxu0 0.0
      %966 = vmatpush1.msra.mxu0 0.0
      %967 = vmatprep.subr.mxu0 0.0
      %968 = vmatpush1.msra.mxu0 0.0
      %969 = vmatprep.subr.mxu0 0.0
      %970 = vmatpush1.msra.mxu0 0.0
      %971 = vmatprep.subr.mxu0 0.0
      %972 = vmatpush1.msra.mxu0 0.0
      %973 = vmatprep.subr.mxu0 0.0
      %974 = vmatpush1.msra.mxu0 0.0
      %975 = vmatprep.subr.mxu0 0.0
      %976 = vmatpush1.msra.mxu0 0.0
      %977 = vmatprep.subr.mxu0 0.0
      %978 = vmatpush1.msra.mxu0 0.0
      %979 = vmatprep.subr.mxu0 0.0
      %980 = vmatpush1.msra.mxu0 0.0
      %981 = vmatprep.subr.mxu0 0.0
      %982 = vmatpush1.msra.mxu0 0.0
      %983 = vmatprep.subr.mxu0 0.0
      %984 = vmatpush1.msra.mxu0 0.0
      %985 = vmatprep.subr.mxu0 0.0
      %986 = vmatpush1.msra.mxu0 0.0
      %987 = vmatprep.subr.mxu0 0.0
      %988 = vmatpush1.msra.mxu0 0.0
      %989 = vmatprep.subr.mxu0 0.0
      %990 = vmatpush1.msra.mxu0 0.0
      %991 = vmatprep.subr.mxu0 0.0
      %992 = vmatpush1.msra.mxu0 0.0
      %993 = vmatprep.mubr.f32.mxu0 0.0
      %994 = vmatmul.mubr.f32.gmra.mrb[0].mxu0 %v925
      %v995 = vpop.f32.mrb[0].mxu0
      %v996 = vadd.f32 0.0, %v995
      %v997 = vpop.f32.mrb[0].mxu0
      %998 = vdwg.mxu0
      %v999 = vld [vmem:[%s5 + $0x8] sm:$0xff]
      %v1001 = vsel %vm665, %v996, 0
      %1003 = vmatprep.subr.mxu0 0.0
      %1004 = vmatpush1.msra.mxu0 %v999
      %1005 = vmatprep.subr.mxu0 0.0
      %1006 = vmatpush1.msra.mxu0 0.0
      %1007 = vmatprep.subr.mxu0 0.0
      %1008 = vmatpush1.msra.mxu0 0.0
      %1009 = vmatprep.subr.mxu0 0.0
      %1010 = vmatpush1.msra.mxu0 0.0
      %1011 = vmatprep.subr.mxu0 0.0
      %1012 = vmatpush1.msra.mxu0 0.0
      %1013 = vmatprep.subr.mxu0 0.0
      %1014 = vmatpush1.msra.mxu0 0.0
      %1015 = vmatprep.subr.mxu0 0.0
      %1016 = vmatpush1.msra.mxu0 0.0
      %1017 = vmatprep.subr.mxu0 0.0
      %1018 = vmatpush1.msra.mxu0 0.0
      %1019 = vmatprep.subr.mxu0 0.0
      %1020 = vmatpush1.msra.mxu0 0.0
      %1021 = vmatprep.subr.mxu0 0.0
      %1022 = vmatpush1.msra.mxu0 0.0
      %1023 = vmatprep.subr.mxu0 0.0
      %1024 = vmatpush1.msra.mxu0 0.0
      %1025 = vmatprep.subr.mxu0 0.0
      %1026 = vmatpush1.msra.mxu0 0.0
      %1027 = vmatprep.subr.mxu0 0.0
      %1028 = vmatpush1.msra.mxu0 0.0
      %1029 = vmatprep.subr.mxu0 0.0
      %1030 = vmatpush1.msra.mxu0 0.0
      %1031 = vmatprep.subr.mxu0 0.0
      %1032 = vmatpush1.msra.mxu0 0.0
      %1033 = vmatprep.subr.mxu0 0.0
      %1034 = vmatpush1.msra.mxu0 0.0
      %1035 = vmatprep.subr.mxu0 0.0
      %1036 = vmatpush1.msra.mxu0 0.0
      %1037 = vmatprep.subr.mxu0 0.0
      %1038 = vmatpush1.msra.mxu0 0.0
      %1039 = vmatprep.subr.mxu0 0.0
      %1040 = vmatpush1.msra.mxu0 0.0
      %1041 = vmatprep.subr.mxu0 0.0
      %1042 = vmatpush1.msra.mxu0 0.0
      %1043 = vmatprep.subr.mxu0 0.0
      %1044 = vmatpush1.msra.mxu0 0.0
      %1045 = vmatprep.subr.mxu0 0.0
      %1046 = vmatpush1.msra.mxu0 0.0
      %1047 = vmatprep.subr.mxu0 0.0
      %1048 = vmatpush1.msra.mxu0 0.0
      %1049 = vmatprep.subr.mxu0 0.0
      %1050 = vmatpush1.msra.mxu0 0.0
      %1051 = vmatprep.subr.mxu0 0.0
      %1052 = vmatpush1.msra.mxu0 0.0
      %1053 = vmatprep.subr.mxu0 0.0
      %1054 = vmatpush1.msra.mxu0 0.0
      %1055 = vmatprep.subr.mxu0 0.0
      %1056 = vmatpush1.msra.mxu0 0.0
      %1057 = vmatprep.subr.mxu0 0.0
      %1058 = vmatpush1.msra.mxu0 0.0
      %1059 = vmatprep.subr.mxu0 0.0
      %1060 = vmatpush1.msra.mxu0 0.0
      %1061 = vmatprep.subr.mxu0 0.0
      %1062 = vmatpush1.msra.mxu0 0.0
      %1063 = vmatprep.subr.mxu0 0.0
      %1064 = vmatpush1.msra.mxu0 0.0
      %1065 = vmatprep.subr.mxu0 0.0
      %1066 = vmatpush1.msra.mxu0 0.0
      %1067 = vmatprep.mubr.f32.mxu0 0.0
      %1068 = vmatmul.mubr.f32.gmra.mrb[0].mxu0 %v1001
      %v1069 = vpop.f32.mrb[0].mxu0
      %v1070 = vadd.f32 0.0, %v1069
      %v1071 = vpop.f32.mrb[0].mxu0
      %1072 = vdwg.mxu0
      %v1074 = vsel %vm665, %v829, 0
      %1076 = vmatprep.subr.mxu0 0.0
      %1077 = vmatpush1.msra.mxu0 %v832
      %1078 = vmatprep.subr.mxu0 0.0
      %1079 = vmatpush1.msra.mxu0 0.0
      %1080 = vmatprep.subr.mxu0 0.0
      %1081 = vmatpush1.msra.mxu0 0.0
      %1082 = vmatprep.subr.mxu0 0.0
      %1083 = vmatpush1.msra.mxu0 0.0
      %1084 = vmatprep.subr.mxu0 0.0
      %1085 = vmatpush1.msra.mxu0 0.0
      %1086 = vmatprep.subr.mxu0 0.0
      %1087 = vmatpush1.msra.mxu0 0.0
      %1088 = vmatprep.subr.mxu0 0.0
      %1089 = vmatpush1.msra.mxu0 0.0
      %1090 = vmatprep.subr.mxu0 0.0
      %1091 = vmatpush1.msra.mxu0 0.0
      %1092 = vmatprep.subr.mxu0 0.0
      %1093 = vmatpush1.msra.mxu0 0.0
      %1094 = vmatprep.subr.mxu0 0.0
      %1095 = vmatpush1.msra.mxu0 0.0
      %1096 = vmatprep.subr.mxu0 0.0
      %1097 = vmatpush1.msra.mxu0 0.0
      %1098 = vmatprep.subr.mxu0 0.0
      %1099 = vmatpush1.msra.mxu0 0.0
      %1100 = vmatprep.subr.mxu0 0.0
      %1101 = vmatpush1.msra.mxu0 0.0
      %1102 = vmatprep.subr.mxu0 0.0
      %1103 = vmatpush1.msra.mxu0 0.0
      %1104 = vmatprep.subr.mxu0 0.0
      %1105 = vmatpush1.msra.mxu0 0.0
      %1106 = vmatprep.subr.mxu0 0.0
      %1107 = vmatpush1.msra.mxu0 0.0
      %1108 = vmatprep.subr.mxu0 0.0
      %1109 = vmatpush1.msra.mxu0 0.0
      %1110 = vmatprep.subr.mxu0 0.0
      %1111 = vmatpush1.msra.mxu0 0.0
      %1112 = vmatprep.subr.mxu0 0.0
      %1113 = vmatpush1.msra.mxu0 0.0
      %1114 = vmatprep.subr.mxu0 0.0
      %1115 = vmatpush1.msra.mxu0 0.0
      %1116 = vmatprep.subr.mxu0 0.0
      %1117 = vmatpush1.msra.mxu0 0.0
      %1118 = vmatprep.subr.mxu0 0.0
      %1119 = vmatpush1.msra.mxu0 0.0
      %1120 = vmatprep.subr.mxu0 0.0
      %1121 = vmatpush1.msra.mxu0 0.0
      %1122 = vmatprep.subr.mxu0 0.0
      %1123 = vmatpush1.msra.mxu0 0.0
      %1124 = vmatprep.subr.mxu0 0.0
      %1125 = vmatpush1.msra.mxu0 0.0
      %1126 = vmatprep.subr.mxu0 0.0
      %1127 = vmatpush1.msra.mxu0 0.0
      %1128 = vmatprep.subr.mxu0 0.0
      %1129 = vmatpush1.msra.mxu0 0.0
      %1130 = vmatprep.subr.mxu0 0.0
      %1131 = vmatpush1.msra.mxu0 0.0
      %1132 = vmatprep.subr.mxu0 0.0
      %1133 = vmatpush1.msra.mxu0 0.0
      %1134 = vmatprep.subr.mxu0 0.0
      %1135 = vmatpush1.msra.mxu0 0.0
      %1136 = vmatprep.subr.mxu0 0.0
      %1137 = vmatpush1.msra.mxu0 0.0
      %1138 = vmatprep.subr.mxu0 0.0
      %1139 = vmatpush1.msra.mxu0 0.0
      %1140 = vmatprep.mubr.f32.mxu0 0.0
      %1141 = vmatmul.mubr.f32.gmra.mrb[0].mxu0 %v1074
      %v1142 = vpop.f32.mrb[0].mxu0
      %v1143 = vadd.f32 %v1070, %v1142
      %v1144 = vpop.f32.mrb[0].mxu0
      %1145 = vdwg.mxu0
      %1146 = vrot.lane.b32.xlu0 %v661, 112
      %v1147 = vpop.permute.xlu0 %1146
      %1148 = vrot.lane.b32.xlu0 %v658, 80
      %v1149 = vpop.permute.xlu0 %1148
      %v1150 = vsel %vm665, %v1147, 0
      %v1152 = vsel %vm665, %v1149, 0
      %1154 = vmatprep.subr.mxu0 0.0
      %1155 = vmatpush1.xpose.msra.mxu0 %v1152
      %1156 = vmatprep.subr.mxu0 0.0
      %1157 = vmatpush1.xpose.msra.mxu0 0.0
      %1158 = vmatprep.subr.mxu0 0.0
      %1159 = vmatpush1.xpose.msra.mxu0 0.0
      %1160 = vmatprep.subr.mxu0 0.0
      %1161 = vmatpush1.xpose.msra.mxu0 0.0
      %1162 = vmatprep.subr.mxu0 0.0
      %1163 = vmatpush1.xpose.msra.mxu0 0.0
      %1164 = vmatprep.subr.mxu0 0.0
      %1165 = vmatpush1.xpose.msra.mxu0 0.0
      %1166 = vmatprep.subr.mxu0 0.0
      %1167 = vmatpush1.xpose.msra.mxu0 0.0
      %1168 = vmatprep.subr.mxu0 0.0
      %1169 = vmatpush1.xpose.msra.mxu0 0.0
      %1170 = vmatprep.subr.mxu0 0.0
      %1171 = vmatpush1.xpose.msra.mxu0 0.0
      %1172 = vmatprep.subr.mxu0 0.0
      %1173 = vmatpush1.xpose.msra.mxu0 0.0
      %1174 = vmatprep.subr.mxu0 0.0
      %1175 = vmatpush1.xpose.msra.mxu0 0.0
      %1176 = vmatprep.subr.mxu0 0.0
      %1177 = vmatpush1.xpose.msra.mxu0 0.0
      %1178 = vmatprep.subr.mxu0 0.0
      %1179 = vmatpush1.xpose.msra.mxu0 0.0
      %1180 = vmatprep.subr.mxu0 0.0
      %1181 = vmatpush1.xpose.msra.mxu0 0.0
      %1182 = vmatprep.subr.mxu0 0.0
      %1183 = vmatpush1.xpose.msra.mxu0 0.0
      %1184 = vmatprep.subr.mxu0 0.0
      %1185 = vmatpush1.xpose.msra.mxu0 0.0
      %1186 = vmatprep.subr.mxu0 0.0
      %1187 = vmatpush1.xpose.msra.mxu0 0.0
      %1188 = vmatprep.subr.mxu0 0.0
      %1189 = vmatpush1.xpose.msra.mxu0 0.0
      %1190 = vmatprep.subr.mxu0 0.0
      %1191 = vmatpush1.xpose.msra.mxu0 0.0
      %1192 = vmatprep.subr.mxu0 0.0
      %1193 = vmatpush1.xpose.msra.mxu0 0.0
      %1194 = vmatprep.subr.mxu0 0.0
      %1195 = vmatpush1.xpose.msra.mxu0 0.0
      %1196 = vmatprep.subr.mxu0 0.0
      %1197 = vmatpush1.xpose.msra.mxu0 0.0
      %1198 = vmatprep.subr.mxu0 0.0
      %1199 = vmatpush1.xpose.msra.mxu0 0.0
      %1200 = vmatprep.subr.mxu0 0.0
      %1201 = vmatpush1.xpose.msra.mxu0 0.0
      %1202 = vmatprep.subr.mxu0 0.0
      %1203 = vmatpush1.xpose.msra.mxu0 0.0
      %1204 = vmatprep.subr.mxu0 0.0
      %1205 = vmatpush1.xpose.msra.mxu0 0.0
      %1206 = vmatprep.subr.mxu0 0.0
      %1207 = vmatpush1.xpose.msra.mxu0 0.0
      %1208 = vmatprep.subr.mxu0 0.0
      %1209 = vmatpush1.xpose.msra.mxu0 0.0
      %1210 = vmatprep.subr.mxu0 0.0
      %1211 = vmatpush1.xpose.msra.mxu0 0.0
      %1212 = vmatprep.subr.mxu0 0.0
      %1213 = vmatpush1.xpose.msra.mxu0 0.0
      %1214 = vmatprep.subr.mxu0 0.0
      %1215 = vmatpush1.xpose.msra.mxu0 0.0
      %1216 = vmatprep.subr.mxu0 0.0
      %1217 = vmatpush1.xpose.msra.mxu0 0.0
      %1218 = vmatprep.mubr.f32.mxu0 0.0
      %1219 = vmatmul.mubr.f32.gmra.mrb[0].mxu0 %v1150
      %v1220 = vpop.f32.mrb[0].mxu0
      %v1221 = vadd.f32 0.0, %v1220
      %v1222 = vpop.f32.mrb[0].mxu0
      %1223 = vdwg.mxu0
      %v1224 = vsel %vm741, %v1221, -inf
      %1225 = vmax.xlane.f32.xlu0 %v1224
      %v1226 = vpop.xlane.xlu0 %1225
      %v1227 = vsub.f32 %v1221, %v1226
      %v1228 = vmul.f32 %v1227, 1.442695
      %v1229 = vpow.pop %v1228
      %v1230 = vsel %vm741, %v1229, 0.0
      %1231 = vadd.xlane.f32.xlu0 %v1230
      %v1232 = vpop.xlane.xlu0 %1231
      %v1233 = vrcp.pop %v1232
      %v1234 = vmul.f32 %v1229, %v1233
      %1235 = vrot.lane.b32.xlu0 %v658, 48
      %v1236 = vpop.permute.xlu0 %1235
      %v1238 = vsel %vm755, %v1234, 0
      %v1240 = vsel %vm759, %v1236, 0
      %1242 = vmatprep.subr.mxu0 0.0
      %1243 = vmatpush1.msra.mxu0 %v1240
      %1244 = vmatprep.subr.mxu0 0.0
      %1245 = vmatpush1.msra.mxu0 0.0
      %1246 = vmatprep.subr.mxu0 0.0
      %1247 = vmatpush1.msra.mxu0 0.0
      %1248 = vmatprep.subr.mxu0 0.0
      %1249 = vmatpush1.msra.mxu0 0.0
      %1250 = vmatprep.subr.mxu0 0.0
      %1251 = vmatpush1.msra.mxu0 0.0
      %1252 = vmatprep.subr.mxu0 0.0
      %1253 = vmatpush1.msra.mxu0 0.0
      %1254 = vmatprep.subr.mxu0 0.0
      %1255 = vmatpush1.msra.mxu0 0.0
      %1256 = vmatprep.subr.mxu0 0.0
      %1257 = vmatpush1.msra.mxu0 0.0
      %1258 = vmatprep.subr.mxu0 0.0
      %1259 = vmatpush1.msra.mxu0 0.0
      %1260 = vmatprep.subr.mxu0 0.0
      %1261 = vmatpush1.msra.mxu0 0.0
      %1262 = vmatprep.subr.mxu0 0.0
      %1263 = vmatpush1.msra.mxu0 0.0
      %1264 = vmatprep.subr.mxu0 0.0
      %1265 = vmatpush1.msra.mxu0 0.0
      %1266 = vmatprep.subr.mxu0 0.0
      %1267 = vmatpush1.msra.mxu0 0.0
      %1268 = vmatprep.subr.mxu0 0.0
      %1269 = vmatpush1.msra.mxu0 0.0
      %1270 = vmatprep.subr.mxu0 0.0
      %1271 = vmatpush1.msra.mxu0 0.0
      %1272 = vmatprep.subr.mxu0 0.0
      %1273 = vmatpush1.msra.mxu0 0.0
      %1274 = vmatprep.subr.mxu0 0.0
      %1275 = vmatpush1.msra.mxu0 0.0
      %1276 = vmatprep.subr.mxu0 0.0
      %1277 = vmatpush1.msra.mxu0 0.0
      %1278 = vmatprep.subr.mxu0 0.0
      %1279 = vmatpush1.msra.mxu0 0.0
      %1280 = vmatprep.subr.mxu0 0.0
      %1281 = vmatpush1.msra.mxu0 0.0
      %1282 = vmatprep.subr.mxu0 0.0
      %1283 = vmatpush1.msra.mxu0 0.0
      %1284 = vmatprep.subr.mxu0 0.0
      %1285 = vmatpush1.msra.mxu0 0.0
      %1286 = vmatprep.subr.mxu0 0.0
      %1287 = vmatpush1.msra.mxu0 0.0
      %1288 = vmatprep.subr.mxu0 0.0
      %1289 = vmatpush1.msra.mxu0 0.0
      %1290 = vmatprep.subr.mxu0 0.0
      %1291 = vmatpush1.msra.mxu0 0.0
      %1292 = vmatprep.subr.mxu0 0.0
      %1293 = vmatpush1.msra.mxu0 0.0
      %1294 = vmatprep.subr.mxu0 0.0
      %1295 = vmatpush1.msra.mxu0 0.0
      %1296 = vmatprep.subr.mxu0 0.0
      %1297 = vmatpush1.msra.mxu0 0.0
      %1298 = vmatprep.subr.mxu0 0.0
      %1299 = vmatpush1.msra.mxu0 0.0
      %1300 = vmatprep.subr.mxu0 0.0
      %1301 = vmatpush1.msra.mxu0 0.0
      %1302 = vmatprep.subr.mxu0 0.0
      %1303 = vmatpush1.msra.mxu0 0.0
      %1304 = vmatprep.subr.mxu0 0.0
      %1305 = vmatpush1.msra.mxu0 0.0
      %1306 = vmatprep.mubr.f32.mxu0 0.0
      %1307 = vmatmul.mubr.f32.gmra.mrb[0].mxu0 %v1238
      %v1308 = vpop.f32.mrb[0].mxu0
      %v1309 = vadd.f32 0.0, %v1308
      %v1310 = vpop.f32.mrb[0].mxu0
      %1311 = vdwg.mxu0
      %v1312 = vld [vmem:[%s5 + $0x10] sm:$0xff]
      %v1314 = vsel %vm665, %v1309, 0
      %1316 = vmatprep.subr.mxu0 0.0
      %1317 = vmatpush1.msra.mxu0 %v1312
      %1318 = vmatprep.subr.mxu0 0.0
      %1319 = vmatpush1.msra.mxu0 0.0
      %1320 = vmatprep.subr.mxu0 0.0
      %1321 = vmatpush1.msra.mxu0 0.0
      %1322 = vmatprep.subr.mxu0 0.0
      %1323 = vmatpush1.msra.mxu0 0.0
      %1324 = vmatprep.subr.mxu0 0.0
      %1325 = vmatpush1.msra.mxu0 0.0
      %1326 = vmatprep.subr.mxu0 0.0
      %1327 = vmatpush1.msra.mxu0 0.0
      %1328 = vmatprep.subr.mxu0 0.0
      %1329 = vmatpush1.msra.mxu0 0.0
      %1330 = vmatprep.subr.mxu0 0.0
      %1331 = vmatpush1.msra.mxu0 0.0
      %1332 = vmatprep.subr.mxu0 0.0
      %1333 = vmatpush1.msra.mxu0 0.0
      %1334 = vmatprep.subr.mxu0 0.0
      %1335 = vmatpush1.msra.mxu0 0.0
      %1336 = vmatprep.subr.mxu0 0.0
      %1337 = vmatpush1.msra.mxu0 0.0
      %1338 = vmatprep.subr.mxu0 0.0
      %1339 = vmatpush1.msra.mxu0 0.0
      %1340 = vmatprep.subr.mxu0 0.0
      %1341 = vmatpush1.msra.mxu0 0.0
      %1342 = vmatprep.subr.mxu0 0.0
      %1343 = vmatpush1.msra.mxu0 0.0
      %1344 = vmatprep.subr.mxu0 0.0
      %1345 = vmatpush1.msra.mxu0 0.0
      %1346 = vmatprep.subr.mxu0 0.0
      %1347 = vmatpush1.msra.mxu0 0.0
      %1348 = vmatprep.subr.mxu0 0.0
      %1349 = vmatpush1.msra.mxu0 0.0
      %1350 = vmatprep.subr.mxu0 0.0
      %1351 = vmatpush1.msra.mxu0 0.0
      %1352 = vmatprep.subr.mxu0 0.0
      %1353 = vmatpush1.msra.mxu0 0.0
      %1354 = vmatprep.subr.mxu0 0.0
      %1355 = vmatpush1.msra.mxu0 0.0
      %1356 = vmatprep.subr.mxu0 0.0
      %1357 = vmatpush1.msra.mxu0 0.0
      %1358 = vmatprep.subr.mxu0 0.0
      %1359 = vmatpush1.msra.mxu0 0.0
      %1360 = vmatprep.subr.mxu0 0.0
      %1361 = vmatpush1.msra.mxu0 0.0
      %1362 = vmatprep.subr.mxu0 0.0
      %1363 = vmatpush1.msra.mxu0 0.0
      %1364 = vmatprep.subr.mxu0 0.0
      %1365 = vmatpush1.msra.mxu0 0.0
      %1366 = vmatprep.subr.mxu0 0.0
      %1367 = vmatpush1.msra.mxu0 0.0
      %1368 = vmatprep.subr.mxu0 0.0
      %1369 = vmatpush1.msra.mxu0 0.0
      %1370 = vmatprep.subr.mxu0 0.0
      %1371 = vmatpush1.msra.mxu0 0.0
      %1372 = vmatprep.subr.mxu0 0.0
      %1373 = vmatpush1.msra.mxu0 0.0
      %1374 = vmatprep.subr.mxu0 0.0
      %1375 = vmatpush1.msra.mxu0 0.0
      %1376 = vmatprep.subr.mxu0 0.0
      %1377 = vmatpush1.msra.mxu0 0.0
      %1378 = vmatprep.subr.mxu0 0.0
      %1379 = vmatpush1.msra.mxu0 0.0
      %1380 = vmatprep.mubr.f32.mxu0 0.0
      %1381 = vmatmul.mubr.f32.gmra.mrb[0].mxu0 %v1314
      %v1382 = vpop.f32.mrb[0].mxu0
      %v1383 = vadd.f32 0.0, %v1382
      %v1384 = vpop.f32.mrb[0].mxu0
      %1385 = vdwg.mxu0
      %v1386 = vadd.f32 %v1143, %v1383
      %1387 = vrot.lane.b32.xlu0 %v661, 104
      %v1388 = vpop.permute.xlu0 %1387
      %1389 = vrot.lane.b32.xlu0 %v658, 72
      %v1390 = vpop.permute.xlu0 %1389
      %v1391 = vsel %vm665, %v1388, 0
      %v1393 = vsel %vm665, %v1390, 0
      %1395 = vmatprep.subr.mxu0 0.0
      %1396 = vmatpush1.xpose.msra.mxu0 %v1393
      %1397 = vmatprep.subr.mxu0 0.0
      %1398 = vmatpush1.xpose.msra.mxu0 0.0
      %1399 = vmatprep.subr.mxu0 0.0
      %1400 = vmatpush1.xpose.msra.mxu0 0.0
      %1401 = vmatprep.subr.mxu0 0.0
      %1402 = vmatpush1.xpose.msra.mxu0 0.0
      %1403 = vmatprep.subr.mxu0 0.0
      %1404 = vmatpush1.xpose.msra.mxu0 0.0
      %1405 = vmatprep.subr.mxu0 0.0
      %1406 = vmatpush1.xpose.msra.mxu0 0.0
      %1407 = vmatprep.subr.mxu0 0.0
      %1408 = vmatpush1.xpose.msra.mxu0 0.0
      %1409 = vmatprep.subr.mxu0 0.0
      %1410 = vmatpush1.xpose.msra.mxu0 0.0
      %1411 = vmatprep.subr.mxu0 0.0
      %1412 = vmatpush1.xpose.msra.mxu0 0.0
      %1413 = vmatprep.subr.mxu0 0.0
      %1414 = vmatpush1.xpose.msra.mxu0 0.0
      %1415 = vmatprep.subr.mxu0 0.0
      %1416 = vmatpush1.xpose.msra.mxu0 0.0
      %1417 = vmatprep.subr.mxu0 0.0
      %1418 = vmatpush1.xpose.msra.mxu0 0.0
      %1419 = vmatprep.subr.mxu0 0.0
      %1420 = vmatpush1.xpose.msra.mxu0 0.0
      %1421 = vmatprep.subr.mxu0 0.0
      %1422 = vmatpush1.xpose.msra.mxu0 0.0
      %1423 = vmatprep.subr.mxu0 0.0
      %1424 = vmatpush1.xpose.msra.mxu0 0.0
      %1425 = vmatprep.subr.mxu0 0.0
      %1426 = vmatpush1.xpose.msra.mxu0 0.0
      %1427 = vmatprep.subr.mxu0 0.0
      %1428 = vmatpush1.xpose.msra.mxu0 0.0
      %1429 = vmatprep.subr.mxu0 0.0
      %1430 = vmatpush1.xpose.msra.mxu0 0.0
      %1431 = vmatprep.subr.mxu0 0.0
      %1432 = vmatpush1.xpose.msra.mxu0 0.0
      %1433 = vmatprep.subr.mxu0 0.0
      %1434 = vmatpush1.xpose.msra.mxu0 0.0
      %1435 = vmatprep.subr.mxu0 0.0
      %1436 = vmatpush1.xpose.msra.mxu0 0.0
      %1437 = vmatprep.subr.mxu0 0.0
      %1438 = vmatpush1.xpose.msra.mxu0 0.0
      %1439 = vmatprep.subr.mxu0 0.0
      %1440 = vmatpush1.xpose.msra.mxu0 0.0
      %1441 = vmatprep.subr.mxu0 0.0
      %1442 = vmatpush1.xpose.msra.mxu0 0.0
      %1443 = vmatprep.subr.mxu0 0.0
      %1444 = vmatpush1.xpose.msra.mxu0 0.0
      %1445 = vmatprep.subr.mxu0 0.0
      %1446 = vmatpush1.xpose.msra.mxu0 0.0
      %1447 = vmatprep.subr.mxu0 0.0
      %1448 = vmatpush1.xpose.msra.mxu0 0.0
      %1449 = vmatprep.subr.mxu0 0.0
      %1450 = vmatpush1.xpose.msra.mxu0 0.0
      %1451 = vmatprep.subr.mxu0 0.0
      %1452 = vmatpush1.xpose.msra.mxu0 0.0
      %1453 = vmatprep.subr.mxu0 0.0
      %1454 = vmatpush1.xpose.msra.mxu0 0.0
      %1455 = vmatprep.subr.mxu0 0.0
      %1456 = vmatpush1.xpose.msra.mxu0 0.0
      %1457 = vmatprep.subr.mxu0 0.0
      %1458 = vmatpush1.xpose.msra.mxu0 0.0
      %1459 = vmatprep.mubr.f32.mxu0 0.0
      %1460 = vmatmul.mubr.f32.gmra.mrb[0].mxu0 %v1391
      %v1461 = vpop.f32.mrb[0].mxu0
      %v1462 = vadd.f32 0.0, %v1461
      %v1463 = vpop.f32.mrb[0].mxu0
      %1464 = vdwg.mxu0
      %v1465 = vsel %vm741, %v1462, -inf
      %1466 = vmax.xlane.f32.xlu0 %v1465
      %v1467 = vpop.xlane.xlu0 %1466
      %v1468 = vsub.f32 %v1462, %v1467
      %v1469 = vmul.f32 %v1468, 1.442695
      %v1470 = vpow.pop %v1469
      %v1471 = vsel %vm741, %v1470, 0.0
      %1472 = vadd.xlane.f32.xlu0 %v1471
      %v1473 = vpop.xlane.xlu0 %1472
      %v1474 = vrcp.pop %v1473
      %v1475 = vmul.f32 %v1470, %v1474
      %1476 = vrot.lane.b32.xlu0 %v658, 40
      %v1477 = vpop.permute.xlu0 %1476
      %v1479 = vsel %vm755, %v1475, 0
      %v1481 = vsel %vm759, %v1477, 0
      %1483 = vmatprep.subr.mxu0 0.0
      %1484 = vmatpush1.msra.mxu0 %v1481
      %1485 = vmatprep.subr.mxu0 0.0
      %1486 = vmatpush1.msra.mxu0 0.0
      %1487 = vmatprep.subr.mxu0 0.0
      %1488 = vmatpush1.msra.mxu0 0.0
      %1489 = vmatprep.subr.mxu0 0.0
      %1490 = vmatpush1.msra.mxu0 0.0
      %1491 = vmatprep.subr.mxu0 0.0
      %1492 = vmatpush1.msra.mxu0 0.0
      %1493 = vmatprep.subr.mxu0 0.0
      %1494 = vmatpush1.msra.mxu0 0.0
      %1495 = vmatprep.subr.mxu0 0.0
      %1496 = vmatpush1.msra.mxu0 0.0
      %1497 = vmatprep.subr.mxu0 0.0
      %1498 = vmatpush1.msra.mxu0 0.0
      %1499 = vmatprep.subr.mxu0 0.0
      %1500 = vmatpush1.msra.mxu0 0.0
      %1501 = vmatprep.subr.mxu0 0.0
      %1502 = vmatpush1.msra.mxu0 0.0
      %1503 = vmatprep.subr.mxu0 0.0
      %1504 = vmatpush1.msra.mxu0 0.0
      %1505 = vmatprep.subr.mxu0 0.0
      %1506 = vmatpush1.msra.mxu0 0.0
      %1507 = vmatprep.subr.mxu0 0.0
      %1508 = vmatpush1.msra.mxu0 0.0
      %1509 = vmatprep.subr.mxu0 0.0
      %1510 = vmatpush1.msra.mxu0 0.0
      %1511 = vmatprep.subr.mxu0 0.0
      %1512 = vmatpush1.msra.mxu0 0.0
      %1513 = vmatprep.subr.mxu0 0.0
      %1514 = vmatpush1.msra.mxu0 0.0
      %1515 = vmatprep.subr.mxu0 0.0
      %1516 = vmatpush1.msra.mxu0 0.0
      %1517 = vmatprep.subr.mxu0 0.0
      %1518 = vmatpush1.msra.mxu0 0.0
      %1519 = vmatprep.subr.mxu0 0.0
      %1520 = vmatpush1.msra.mxu0 0.0
      %1521 = vmatprep.subr.mxu0 0.0
      %1522 = vmatpush1.msra.mxu0 0.0
      %1523 = vmatprep.subr.mxu0 0.0
      %1524 = vmatpush1.msra.mxu0 0.0
      %1525 = vmatprep.subr.mxu0 0.0
      %1526 = vmatpush1.msra.mxu0 0.0
      %1527 = vmatprep.subr.mxu0 0.0
      %1528 = vmatpush1.msra.mxu0 0.0
      %1529 = vmatprep.subr.mxu0 0.0
      %1530 = vmatpush1.msra.mxu0 0.0
      %1531 = vmatprep.subr.mxu0 0.0
      %1532 = vmatpush1.msra.mxu0 0.0
      %1533 = vmatprep.subr.mxu0 0.0
      %1534 = vmatpush1.msra.mxu0 0.0
      %1535 = vmatprep.subr.mxu0 0.0
      %1536 = vmatpush1.msra.mxu0 0.0
      %1537 = vmatprep.subr.mxu0 0.0
      %1538 = vmatpush1.msra.mxu0 0.0
      %1539 = vmatprep.subr.mxu0 0.0
      %1540 = vmatpush1.msra.mxu0 0.0
      %1541 = vmatprep.subr.mxu0 0.0
      %1542 = vmatpush1.msra.mxu0 0.0
      %1543 = vmatprep.subr.mxu0 0.0
      %1544 = vmatpush1.msra.mxu0 0.0
      %1545 = vmatprep.subr.mxu0 0.0
      %1546 = vmatpush1.msra.mxu0 0.0
      %1547 = vmatprep.mubr.f32.mxu0 0.0
      %1548 = vmatmul.mubr.f32.gmra.mrb[0].mxu0 %v1479
      %v1549 = vpop.f32.mrb[0].mxu0
      %v1550 = vadd.f32 0.0, %v1549
      %v1551 = vpop.f32.mrb[0].mxu0
      %1552 = vdwg.mxu0
      %v1553 = vld [vmem:[%s5 + $0x18] sm:$0xff]
      %v1555 = vsel %vm665, %v1550, 0
      %1557 = vmatprep.subr.mxu0 0.0
      %1558 = vmatpush1.msra.mxu0 %v1553
      %1559 = vmatprep.subr.mxu0 0.0
      %1560 = vmatpush1.msra.mxu0 0.0
      %1561 = vmatprep.subr.mxu0 0.0
      %1562 = vmatpush1.msra.mxu0 0.0
      %1563 = vmatprep.subr.mxu0 0.0
      %1564 = vmatpush1.msra.mxu0 0.0
      %1565 = vmatprep.subr.mxu0 0.0
      %1566 = vmatpush1.msra.mxu0 0.0
      %1567 = vmatprep.subr.mxu0 0.0
      %1568 = vmatpush1.msra.mxu0 0.0
      %1569 = vmatprep.subr.mxu0 0.0
      %1570 = vmatpush1.msra.mxu0 0.0
      %1571 = vmatprep.subr.mxu0 0.0
      %1572 = vmatpush1.msra.mxu0 0.0
      %1573 = vmatprep.subr.mxu0 0.0
      %1574 = vmatpush1.msra.mxu0 0.0
      %1575 = vmatprep.subr.mxu0 0.0
      %1576 = vmatpush1.msra.mxu0 0.0
      %1577 = vmatprep.subr.mxu0 0.0
      %1578 = vmatpush1.msra.mxu0 0.0
      %1579 = vmatprep.subr.mxu0 0.0
      %1580 = vmatpush1.msra.mxu0 0.0
      %1581 = vmatprep.subr.mxu0 0.0
      %1582 = vmatpush1.msra.mxu0 0.0
      %1583 = vmatprep.subr.mxu0 0.0
      %1584 = vmatpush1.msra.mxu0 0.0
      %1585 = vmatprep.subr.mxu0 0.0
      %1586 = vmatpush1.msra.mxu0 0.0
      %1587 = vmatprep.subr.mxu0 0.0
      %1588 = vmatpush1.msra.mxu0 0.0
      %1589 = vmatprep.subr.mxu0 0.0
      %1590 = vmatpush1.msra.mxu0 0.0
      %1591 = vmatprep.subr.mxu0 0.0
      %1592 = vmatpush1.msra.mxu0 0.0
      %1593 = vmatprep.subr.mxu0 0.0
      %1594 = vmatpush1.msra.mxu0 0.0
      %1595 = vmatprep.subr.mxu0 0.0
      %1596 = vmatpush1.msra.mxu0 0.0
      %1597 = vmatprep.subr.mxu0 0.0
      %1598 = vmatpush1.msra.mxu0 0.0
      %1599 = vmatprep.subr.mxu0 0.0
      %1600 = vmatpush1.msra.mxu0 0.0
      %1601 = vmatprep.subr.mxu0 0.0
      %1602 = vmatpush1.msra.mxu0 0.0
      %1603 = vmatprep.subr.mxu0 0.0
      %1604 = vmatpush1.msra.mxu0 0.0
      %1605 = vmatprep.subr.mxu0 0.0
      %1606 = vmatpush1.msra.mxu0 0.0
      %1607 = vmatprep.subr.mxu0 0.0
      %1608 = vmatpush1.msra.mxu0 0.0
      %1609 = vmatprep.subr.mxu0 0.0
      %1610 = vmatpush1.msra.mxu0 0.0
      %1611 = vmatprep.subr.mxu0 0.0
      %1612 = vmatpush1.msra.mxu0 0.0
      %1613 = vmatprep.subr.mxu0 0.0
      %1614 = vmatpush1.msra.mxu0 0.0
      %1615 = vmatprep.subr.mxu0 0.0
      %1616 = vmatpush1.msra.mxu0 0.0
      %1617 = vmatprep.subr.mxu0 0.0
      %1618 = vmatpush1.msra.mxu0 0.0
      %1619 = vmatprep.subr.mxu0 0.0
      %1620 = vmatpush1.msra.mxu0 0.0
      %1621 = vmatprep.mubr.f32.mxu0 0.0
      %1622 = vmatmul.mubr.f32.gmra.mrb[0].mxu0 %v1555
      %v1623 = vpop.f32.mrb[0].mxu0
      %v1624 = vadd.f32 0.0, %v1623
      %v1625 = vpop.f32.mrb[0].mxu0
      %1626 = vdwg.mxu0
      %v1627 = vadd.f32 %v1386, %v1624
      %v1628 = vadd.f32 %v544, %v1627
      %v1629 = vld [vmem:[%s6] sm:$0x1]
      %v1631 = vlaneseq
      %v1632 = vshrl.u32 %v1631, 7
      %v1633 = vsub.s32 0, %v1632
      %v1634 = vrot.slane %v1629, %v1633
      %v1636 = vadd.f32 %v1628, %v1634
      %v1637 = vld [vmem:[%s7] sm:$0x1]
      %v1638 = vld [vmem:[%s8] sm:$0x1]
      %v1639 = vsel %vm547, %v1636, 0.0
      %1640 = vadd.xlane.f32.xlu0 %v1639
      %v1641 = vpop.xlane.xlu0 %1640
      %v1642 = vmul.f32 %v1641, %v551
      %v1643 = vsub.f32 %v1636, %v1642
      %v1644 = vmul.f32 %v1643, %v1643
      %v1645 = vsel %vm547, %v1644, 0.0
      %1646 = vadd.xlane.f32.xlu0 %v1645
      %v1647 = vpop.xlane.xlu0 %1646
      %v1648 = vmul.f32 %v1647, %v551
      %v1649 = vadd.f32 %v1648, 1e-05
      %v1650 = vrsqrt.pop %v1649
      %v1651 = vmul.f32 %v1643, %v1650
      %v1653 = vlaneseq
      %v1654 = vshrl.u32 %v1653, 7
      %v1655 = vsub.s32 0, %v1654
      %v1656 = vrot.slane %v1637, %v1655
      %v1658 = vmul.f32 %v1651, %v1656
      %v1660 = vlaneseq
      %v1661 = vshrl.u32 %v1660, 7
      %v1662 = vsub.s32 0, %v1661
      %v1663 = vrot.slane %v1638, %v1662
      %v1665 = vadd.f32 %v1658, %v1663
      %v1666 = vld [vmem:[%s9] sm:$0xff]
      %v1667 = vld [vmem:[%s9 + $0x8] sm:$0xff]
      %v1668 = vld [vmem:[%s9 + $0x10] sm:$0xff]
      %v1669 = vld [vmem:[%s9 + $0x18] sm:$0xff]
      %v1670 = vld [vmem:[%s10] sm:$0x1]
      %v1672 = vlaneseq
      %v1673 = vshrl.u32 %v1672, 7
      %v1674 = vsub.s32 0, %v1673
      %v1675 = vrot.slane %v1670, %v1674
      %v1678 = vsel %vm587, %v1665, 0
      %1680 = vmatprep.subr.mxu0 0.0
      %1681 = vmatpush1.msra.mxu0 %v1666
      %1682 = vmatprep.subr.mxu0 0.0
      %1683 = vmatpush1.msra.mxu0 %v1667
      %1684 = vmatprep.subr.mxu0 0.0
      %1685 = vmatpush1.msra.mxu0 %v1668
      %1686 = vmatprep.subr.mxu0 0.0
      %1687 = vmatpush1.msra.mxu0 %v1669
      %1688 = vmatprep.subr.mxu0 0.0
      %1689 = vmatpush1.msra.mxu0 0.0
      %1690 = vmatprep.subr.mxu0 0.0
      %1691 = vmatpush1.msra.mxu0 0.0
      %1692 = vmatprep.subr.mxu0 0.0
      %1693 = vmatpush1.msra.mxu0 0.0
      %1694 = vmatprep.subr.mxu0 0.0
      %1695 = vmatpush1.msra.mxu0 0.0
      %1696 = vmatprep.subr.mxu0 0.0
      %1697 = vmatpush1.msra.mxu0 0.0
      %1698 = vmatprep.subr.mxu0 0.0
      %1699 = vmatpush1.msra.mxu0 0.0
      %1700 = vmatprep.subr.mxu0 0.0
      %1701 = vmatpush1.msra.mxu0 0.0
      %1702 = vmatprep.subr.mxu0 0.0
      %1703 = vmatpush1.msra.mxu0 0.0
      %1704 = vmatprep.subr.mxu0 0.0
      %1705 = vmatpush1.msra.mxu0 0.0
      %1706 = vmatprep.subr.mxu0 0.0
      %1707 = vmatpush1.msra.mxu0 0.0
      %1708 = vmatprep.subr.mxu0 0.0
      %1709 = vmatpush1.msra.mxu0 0.0
      %1710 = vmatprep.subr.mxu0 0.0
      %1711 = vmatpush1.msra.mxu0 0.0
      %1712 = vmatprep.subr.mxu0 0.0
      %1713 = vmatpush1.msra.mxu0 0.0
      %1714 = vmatprep.subr.mxu0 0.0
      %1715 = vmatpush1.msra.mxu0 0.0
      %1716 = vmatprep.subr.mxu0 0.0
      %1717 = vmatpush1.msra.mxu0 0.0
      %1718 = vmatprep.subr.mxu0 0.0
      %1719 = vmatpush1.msra.mxu0 0.0
      %1720 = vmatprep.subr.mxu0 0.0
      %1721 = vmatpush1.msra.mxu0 0.0
      %1722 = vmatprep.subr.mxu0 0.0
      %1723 = vmatpush1.msra.mxu0 0.0
      %1724 = vmatprep.subr.mxu0 0.0
      %1725 = vmatpush1.msra.mxu0 0.0
      %1726 = vmatprep.subr.mxu0 0.0
      %1727 = vmatpush1.msra.mxu0 0.0
      %1728 = vmatprep.subr.mxu0 0.0
      %1729 = vmatpush1.msra.mxu0 0.0
      %1730 = vmatprep.subr.mxu0 0.0
      %1731 = vmatpush1.msra.mxu0 0.0
      %1732 = vmatprep.subr.mxu0 0.0
      %1733 = vmatpush1.msra.mxu0 0.0
      %1734 = vmatprep.subr.mxu0 0.0
      %1735 = vmatpush1.msra.mxu0 0.0
      %1736 = vmatprep.subr.mxu0 0.0
      %1737 = vmatpush1.msra.mxu0 0.0
      %1738 = vmatprep.subr.mxu0 0.0
      %1739 = vmatpush1.msra.mxu0 0.0
      %1740 = vmatprep.subr.mxu0 0.0
      %1741 = vmatpush1.msra.mxu0 0.0
      %1742 = vmatprep.subr.mxu0 0.0
      %1743 = vmatpush1.msra.mxu0 0.0
      %1744 = vmatprep.mubr.f32.mxu0 0.0
      %1745 = vmatmul.mubr.f32.gmra.mrb[0].mxu0 %v1678
      %v1746 = vpop.f32.mrb[0].mxu0
      %v1747 = vadd.f32 %v1675, %v1746
      %v1748 = vpop.f32.mrb[0].mxu0
      %1749 = vdwg.mxu0
      %v1750 = vmul.f32 %v1747, 0.5
      %v1751 = vmul.f32 %v1747, 0.70710677
      %vm1752 = vcmp.ge.f32.partialorder %v1751, 0.0
      %v1753 = vsel %vm1752, 1.0, -1.0
      %v1754 = vand.u32 2147483647, %v1751
      %v1755 = vmul.f32 %v1754, 0.3275911
      %v1756 = vadd.f32 %v1755, 1.0
      %v1757 = vrcp.pop %v1756
      %v1758 = vmul.f32 1.0, %v1757
      %v1759 = vmul.f32 %v1758, 1.0614054
      %v1760 = vadd.f32 %v1759, -1.4531521
      %v1761 = vmul.f32 %v1760, %v1758
      %v1762 = vadd.f32 %v1761, 1.4214138
      %v1763 = vmul.f32 %v1762, %v1758
      %v1764 = vadd.f32 %v1763, -0.28449672
      %v1765 = vmul.f32 %v1764, %v1758
      %v1766 = vadd.f32 %v1765, 0.2548296
      %v1767 = vmul.f32 %v1766, %v1758
      %v1768 = vsub.f32 0.0, %v1754
      %v1769 = vmul.f32 %v1768, %v1754
      %v1770 = vmul.f32 %v1769, 1.442695
      %v1771 = vpow.pop %v1770
      %v1772 = vmul.f32 %v1767, %v1771
      %v1773 = vsub.f32 1.0, %v1772
      %v1774 = vmul.f32 %v1753, %v1773
      %v1775 = vadd.f32 %v1774, 1.0
      %v1776 = vmul.f32 %v1750, %v1775
      %v1777 = vld [vmem:[%s11] sm:$0xff]
      %v1778 = vld [vmem:[%s11 + $0x8] sm:$0xff]
      %v1779 = vld [vmem:[%s11 + $0x10] sm:$0xff]
      %v1780 = vld [vmem:[%s11 + $0x18] sm:$0xff]
      %v1781 = vld [vmem:[%s11 + $0x20] sm:$0xff]
      %v1782 = vld [vmem:[%s11 + $0x28] sm:$0xff]
      %v1783 = vld [vmem:[%s11 + $0x30] sm:$0xff]
      %v1784 = vld [vmem:[%s11 + $0x38] sm:$0xff]
      %v1785 = vld [vmem:[%s11 + $0x40] sm:$0xff]
      %v1786 = vld [vmem:[%s11 + $0x48] sm:$0xff]
      %v1787 = vld [vmem:[%s11 + $0x50] sm:$0xff]
      %v1788 = vld [vmem:[%s11 + $0x58] sm:$0xff]
      %v1789 = vld [vmem:[%s11 + $0x60] sm:$0xff]
      %v1790 = vld [vmem:[%s11 + $0x68] sm:$0xff]
      %v1791 = vld [vmem:[%s11 + $0x70] sm:$0xff]
      %v1792 = vld [vmem:[%s11 + $0x78] sm:$0xff]
      %1793 = vmatprep.subr.mxu0 0.0
      %1794 = vmatpush1.msra.mxu0 %v1777
      %1795 = vmatprep.subr.mxu0 0.0
      %1796 = vmatpush1.msra.mxu0 %v1778
      %1797 = vmatprep.subr.mxu0 0.0
      %1798 = vmatpush1.msra.mxu0 %v1779
      %1799 = vmatprep.subr.mxu0 0.0
      %1800 = vmatpush1.msra.mxu0 %v1780
      %1801 = vmatprep.subr.mxu0 0.0
      %1802 = vmatpush1.msra.mxu0 %v1781
      %1803 = vmatprep.subr.mxu0 0.0
      %1804 = vmatpush1.msra.mxu0 %v1782
      %1805 = vmatprep.subr.mxu0 0.0
      %1806 = vmatpush1.msra.mxu0 %v1783
      %1807 = vmatprep.subr.mxu0 0.0
      %1808 = vmatpush1.msra.mxu0 %v1784
      %1809 = vmatprep.subr.mxu0 0.0
      %1810 = vmatpush1.msra.mxu0 %v1785
      %1811 = vmatprep.subr.mxu0 0.0
      %1812 = vmatpush1.msra.mxu0 %v1786
      %1813 = vmatprep.subr.mxu0 0.0
      %1814 = vmatpush1.msra.mxu0 %v1787
      %1815 = vmatprep.subr.mxu0 0.0
      %1816 = vmatpush1.msra.mxu0 %v1788
      %1817 = vmatprep.subr.mxu0 0.0
      %1818 = vmatpush1.msra.mxu0 %v1789
      %1819 = vmatprep.subr.mxu0 0.0
      %1820 = vmatpush1.msra.mxu0 %v1790
      %1821 = vmatprep.subr.mxu0 0.0
      %1822 = vmatpush1.msra.mxu0 %v1791
      %1823 = vmatprep.subr.mxu0 0.0
      %1824 = vmatpush1.msra.mxu0 %v1792
      %1825 = vmatprep.subr.mxu0 0.0
      %1826 = vmatpush1.msra.mxu0 0.0
      %1827 = vmatprep.subr.mxu0 0.0
      %1828 = vmatpush1.msra.mxu0 0.0
      %1829 = vmatprep.subr.mxu0 0.0
      %1830 = vmatpush1.msra.mxu0 0.0
      %1831 = vmatprep.subr.mxu0 0.0
      %1832 = vmatpush1.msra.mxu0 0.0
      %1833 = vmatprep.subr.mxu0 0.0
      %1834 = vmatpush1.msra.mxu0 0.0
      %1835 = vmatprep.subr.mxu0 0.0
      %1836 = vmatpush1.msra.mxu0 0.0
      %1837 = vmatprep.subr.mxu0 0.0
      %1838 = vmatpush1.msra.mxu0 0.0
      %1839 = vmatprep.subr.mxu0 0.0
      %1840 = vmatpush1.msra.mxu0 0.0
      %1841 = vmatprep.subr.mxu0 0.0
      %1842 = vmatpush1.msra.mxu0 0.0
      %1843 = vmatprep.subr.mxu0 0.0
      %1844 = vmatpush1.msra.mxu0 0.0
      %1845 = vmatprep.subr.mxu0 0.0
      %1846 = vmatpush1.msra.mxu0 0.0
      %1847 = vmatprep.subr.mxu0 0.0
      %1848 = vmatpush1.msra.mxu0 0.0
      %1849 = vmatprep.subr.mxu0 0.0
      %1850 = vmatpush1.msra.mxu0 0.0
      %1851 = vmatprep.subr.mxu0 0.0
      %1852 = vmatpush1.msra.mxu0 0.0
      %1853 = vmatprep.subr.mxu0 0.0
      %1854 = vmatpush1.msra.mxu0 0.0
      %1855 = vmatprep.subr.mxu0 0.0
      %1856 = vmatpush1.msra.mxu0 0.0
      %1857 = vmatprep.mubr.f32.mxu0 0.0
      %1858 = vmatmul.mubr.f32.gmra.mrb[0].mxu0 %v1776
      %v1859 = vpop.f32.mrb[0].mxu0
      %v1860 = vadd.f32 0.0, %v1859
      %v1861 = vpop.f32.mrb[0].mxu0
      %1862 = vdwg.mxu0
      %v1863 = vadd.f32 %v1636, %v1860
      %v1864 = vld [vmem:[%s12] sm:$0x1]
      %v1866 = vlaneseq
      %v1867 = vshrl.u32 %v1866, 7
      %v1868 = vsub.s32 0, %v1867
      %v1869 = vrot.slane %v1864, %v1868
      %v1871 = vadd.f32 %v1863, %v1869
      %s1872 = scalar_lea.vmem %s1, 1
      %v1873 = vld [vmem:[%s1872] sm:$0x1]
      %s1874 = scalar_lea.vmem %s2, 1
      %v1875 = vld [vmem:[%s1874] sm:$0x1]
      %v1876 = vsel %vm547, %v1871, 0.0
      %1877 = vadd.xlane.f32.xlu0 %v1876
      %v1878 = vpop.xlane.xlu0 %1877
      %v1879 = vmul.f32 %v1878, %v551
      %v1880 = vsub.f32 %v1871, %v1879
      %v1881 = vmul.f32 %v1880, %v1880
      %v1882 = vsel %vm547, %v1881, 0.0
      %1883 = vadd.xlane.f32.xlu0 %v1882
      %v1884 = vpop.xlane.xlu0 %1883
      %v1885 = vmul.f32 %v1884, %v551
      %v1886 = vadd.f32 %v1885, 1e-05
      %v1887 = vrsqrt.pop %v1886
      %v1888 = vmul.f32 %v1880, %v1887
      %v1890 = vlaneseq
      %v1891 = vshrl.u32 %v1890, 7
      %v1892 = vsub.s32 0, %v1891
      %v1893 = vrot.slane %v1873, %v1892
      %v1895 = vmul.f32 %v1888, %v1893
      %v1897 = vlaneseq
      %v1898 = vshrl.u32 %v1897, 7
      %v1899 = vsub.s32 0, %v1898
      %v1900 = vrot.slane %v1875, %v1899
      %v1902 = vadd.f32 %v1895, %v1900
      %s1903 = scalar_lea.vmem %s3, 32
      %v1904 = vld [vmem:[%s1903] sm:$0xff]
      %v1905 = vld [vmem:[%s1903 + $0x8] sm:$0xff]
      %v1906 = vld [vmem:[%s1903 + $0x10] sm:$0xff]
      %v1907 = vld [vmem:[%s1903 + $0x18] sm:$0xff]
      %s1908 = scalar_lea.vmem %s4, 1
      %v1909 = vld [vmem:[%s1908] sm:$0x1]
      %v1911 = vlaneseq
      %v1912 = vshrl.u32 %v1911, 7
      %v1913 = vsub.s32 0, %v1912
      %v1914 = vrot.slane %v1909, %v1913
      %v1917 = vsel %vm587, %v1902, 0
      %1919 = vmatprep.subr.mxu0 0.0
      %1920 = vmatpush1.msra.mxu0 %v1904
      %1921 = vmatprep.subr.mxu0 0.0
      %1922 = vmatpush1.msra.mxu0 %v1905
      %1923 = vmatprep.subr.mxu0 0.0
      %1924 = vmatpush1.msra.mxu0 %v1906
      %1925 = vmatprep.subr.mxu0 0.0
      %1926 = vmatpush1.msra.mxu0 %v1907
      %1927 = vmatprep.subr.mxu0 0.0
      %1928 = vmatpush1.msra.mxu0 0.0
      %1929 = vmatprep.subr.mxu0 0.0
      %1930 = vmatpush1.msra.mxu0 0.0
      %1931 = vmatprep.subr.mxu0 0.0
      %1932 = vmatpush1.msra.mxu0 0.0
      %1933 = vmatprep.subr.mxu0 0.0
      %1934 = vmatpush1.msra.mxu0 0.0
      %1935 = vmatprep.subr.mxu0 0.0
      %1936 = vmatpush1.msra.mxu0 0.0
      %1937 = vmatprep.subr.mxu0 0.0
      %1938 = vmatpush1.msra.mxu0 0.0
      %1939 = vmatprep.subr.mxu0 0.0
      %1940 = vmatpush1.msra.mxu0 0.0
      %1941 = vmatprep.subr.mxu0 0.0
      %1942 = vmatpush1.msra.mxu0 0.0
      %1943 = vmatprep.subr.mxu0 0.0
      %1944 = vmatpush1.msra.mxu0 0.0
      %1945 = vmatprep.subr.mxu0 0.0
      %1946 = vmatpush1.msra.mxu0 0.0
      %1947 = vmatprep.subr.mxu0 0.0
      %1948 = vmatpush1.msra.mxu0 0.0
      %1949 = vmatprep.subr.mxu0 0.0
      %1950 = vmatpush1.msra.mxu0 0.0
      %1951 = vmatprep.subr.mxu0 0.0
      %1952 = vmatpush1.msra.mxu0 0.0
      %1953 = vmatprep.subr.mxu0 0.0
      %1954 = vmatpush1.msra.mxu0 0.0
      %1955 = vmatprep.subr.mxu0 0.0
      %1956 = vmatpush1.msra.mxu0 0.0
      %1957 = vmatprep.subr.mxu0 0.0
      %1958 = vmatpush1.msra.mxu0 0.0
      %1959 = vmatprep.subr.mxu0 0.0
      %1960 = vmatpush1.msra.mxu0 0.0
      %1961 = vmatprep.subr.mxu0 0.0
      %1962 = vmatpush1.msra.mxu0 0.0
      %1963 = vmatprep.subr.mxu0 0.0
      %1964 = vmatpush1.msra.mxu0 0.0
      %1965 = vmatprep.subr.mxu0 0.0
      %1966 = vmatpush1.msra.mxu0 0.0
      %1967 = vmatprep.subr.mxu0 0.0
      %1968 = vmatpush1.msra.mxu0 0.0
      %1969 = vmatprep.subr.mxu0 0.0
      %1970 = vmatpush1.msra.mxu0 0.0
      %1971 = vmatprep.subr.mxu0 0.0
      %1972 = vmatpush1.msra.mxu0 0.0
      %1973 = vmatprep.subr.mxu0 0.0
      %1974 = vmatpush1.msra.mxu0 0.0
      %1975 = vmatprep.subr.mxu0 0.0
      %1976 = vmatpush1.msra.mxu0 0.0
      %1977 = vmatprep.subr.mxu0 0.0
      %1978 = vmatpush1.msra.mxu0 0.0
      %1979 = vmatprep.subr.mxu0 0.0
      %1980 = vmatpush1.msra.mxu0 0.0
      %1981 = vmatprep.subr.mxu0 0.0
      %1982 = vmatpush1.msra.mxu0 0.0
      %1983 = vmatprep.mubr.f32.mxu0 0.0
      %1984 = vmatmul.mubr.f32.gmra.mrb[0].mxu0 %v1917
      %v1985 = vpop.f32.mrb[0].mxu0
      %v1986 = vadd.f32 %v1914, %v1985
      %v1987 = vpop.f32.mrb[0].mxu0
      %1988 = vdwg.mxu0
      %v1989 = vmul.f32 %v1986, 0.35355338
      %1991 = vrot.lane.b32.xlu0 %v1986, 96
      %v1992 = vpop.permute.xlu0 %1991
      %v1994 = vsel %vm665, %v1989, 0
      %v1996 = vsel %vm665, %v1992, 0
      %1998 = vmatprep.subr.mxu0 0.0
      %1999 = vmatpush1.xpose.msra.mxu0 %v1996
      %2000 = vmatprep.subr.mxu0 0.0
      %2001 = vmatpush1.xpose.msra.mxu0 0.0
      %2002 = vmatprep.subr.mxu0 0.0
      %2003 = vmatpush1.xpose.msra.mxu0 0.0
      %2004 = vmatprep.subr.mxu0 0.0
      %2005 = vmatpush1.xpose.msra.mxu0 0.0
      %2006 = vmatprep.subr.mxu0 0.0
      %2007 = vmatpush1.xpose.msra.mxu0 0.0
      %2008 = vmatprep.subr.mxu0 0.0
      %2009 = vmatpush1.xpose.msra.mxu0 0.0
      %2010 = vmatprep.subr.mxu0 0.0
      %2011 = vmatpush1.xpose.msra.mxu0 0.0
      %2012 = vmatprep.subr.mxu0 0.0
      %2013 = vmatpush1.xpose.msra.mxu0 0.0
      %2014 = vmatprep.subr.mxu0 0.0
      %2015 = vmatpush1.xpose.msra.mxu0 0.0
      %2016 = vmatprep.subr.mxu0 0.0
      %2017 = vmatpush1.xpose.msra.mxu0 0.0
      %2018 = vmatprep.subr.mxu0 0.0
      %2019 = vmatpush1.xpose.msra.mxu0 0.0
      %2020 = vmatprep.subr.mxu0 0.0
      %2021 = vmatpush1.xpose.msra.mxu0 0.0
      %2022 = vmatprep.subr.mxu0 0.0
      %2023 = vmatpush1.xpose.msra.mxu0 0.0
      %2024 = vmatprep.subr.mxu0 0.0
      %2025 = vmatpush1.xpose.msra.mxu0 0.0
      %2026 = vmatprep.subr.mxu0 0.0
      %2027 = vmatpush1.xpose.msra.mxu0 0.0
      %2028 = vmatprep.subr.mxu0 0.0
      %2029 = vmatpush1.xpose.msra.mxu0 0.0
      %2030 = vmatprep.subr.mxu0 0.0
      %2031 = vmatpush1.xpose.msra.mxu0 0.0
      %2032 = vmatprep.subr.mxu0 0.0
      %2033 = vmatpush1.xpose.msra.mxu0 0.0
      %2034 = vmatprep.subr.mxu0 0.0
      %2035 = vmatpush1.xpose.msra.mxu0 0.0
      %2036 = vmatprep.subr.mxu0 0.0
      %2037 = vmatpush1.xpose.msra.mxu0 0.0
      %2038 = vmatprep.subr.mxu0 0.0
      %2039 = vmatpush1.xpose.msra.mxu0 0.0
      %2040 = vmatprep.subr.mxu0 0.0
      %2041 = vmatpush1.xpose.msra.mxu0 0.0
      %2042 = vmatprep.subr.mxu0 0.0
      %2043 = vmatpush1.xpose.msra.mxu0 0.0
      %2044 = vmatprep.subr.mxu0 0.0
      %2045 = vmatpush1.xpose.msra.mxu0 0.0
      %2046 = vmatprep.subr.mxu0 0.0
      %2047 = vmatpush1.xpose.msra.mxu0 0.0
      %2048 = vmatprep.subr.mxu0 0.0
      %2049 = vmatpush1.xpose.msra.mxu0 0.0
      %2050 = vmatprep.subr.mxu0 0.0
      %2051 = vmatpush1.xpose.msra.mxu0 0.0
      %2052 = vmatprep.subr.mxu0 0.0
      %2053 = vmatpush1.xpose.msra.mxu0 0.0
      %2054 = vmatprep.subr.mxu0 0.0
      %2055 = vmatpush1.xpose.msra.mxu0 0.0
      %2056 = vmatprep.subr.mxu0 0.0
      %2057 = vmatpush1.xpose.msra.mxu0 0.0
      %2058 = vmatprep.subr.mxu0 0.0
      %2059 = vmatpush1.xpose.msra.mxu0 0.0
      %2060 = vmatprep.subr.mxu0 0.0
      %2061 = vmatpush1.xpose.msra.mxu0 0.0
      %2062 = vmatprep.mubr.f32.mxu0 0.0
      %2063 = vmatmul.mubr.f32.gmra.mrb[0].mxu0 %v1994
      %v2064 = vpop.f32.mrb[0].mxu0
      %v2065 = vadd.f32 0.0, %v2064
      %v2066 = vpop.f32.mrb[0].mxu0
      %2067 = vdwg.mxu0
      %v2068 = vsel %vm741, %v2065, -inf
      %2069 = vmax.xlane.f32.xlu0 %v2068
      %v2070 = vpop.xlane.xlu0 %2069
      %v2071 = vsub.f32 %v2065, %v2070
      %v2072 = vmul.f32 %v2071, 1.442695
      %v2073 = vpow.pop %v2072
      %v2074 = vsel %vm741, %v2073, 0.0
      %2075 = vadd.xlane.f32.xlu0 %v2074
      %v2076 = vpop.xlane.xlu0 %2075
      %v2077 = vrcp.pop %v2076
      %v2078 = vmul.f32 %v2073, %v2077
      %2079 = vrot.lane.b32.xlu0 %v1986, 64
      %v2080 = vpop.permute.xlu0 %2079
      %v2082 = vsel %vm755, %v2078, 0
      %v2084 = vsel %vm759, %v2080, 0
      %2086 = vmatprep.subr.mxu0 0.0
      %2087 = vmatpush1.msra.mxu0 %v2084
      %2088 = vmatprep.subr.mxu0 0.0
      %2089 = vmatpush1.msra.mxu0 0.0
      %2090 = vmatprep.subr.mxu0 0.0
      %2091 = vmatpush1.msra.mxu0 0.0
      %2092 = vmatprep.subr.mxu0 0.0
      %2093 = vmatpush1.msra.mxu0 0.0
      %2094 = vmatprep.subr.mxu0 0.0
      %2095 = vmatpush1.msra.mxu0 0.0
      %2096 = vmatprep.subr.mxu0 0.0
      %2097 = vmatpush1.msra.mxu0 0.0
      %2098 = vmatprep.subr.mxu0 0.0
      %2099 = vmatpush1.msra.mxu0 0.0
      %2100 = vmatprep.subr.mxu0 0.0
      %2101 = vmatpush1.msra.mxu0 0.0
      %2102 = vmatprep.subr.mxu0 0.0
      %2103 = vmatpush1.msra.mxu0 0.0
      %2104 = vmatprep.subr.mxu0 0.0
      %2105 = vmatpush1.msra.mxu0 0.0
      %2106 = vmatprep.subr.mxu0 0.0
      %2107 = vmatpush1.msra.mxu0 0.0
      %2108 = vmatprep.subr.mxu0 0.0
      %2109 = vmatpush1.msra.mxu0 0.0
      %2110 = vmatprep.subr.mxu0 0.0
      %2111 = vmatpush1.msra.mxu0 0.0
      %2112 = vmatprep.subr.mxu0 0.0
      %2113 = vmatpush1.msra.mxu0 0.0
      %2114 = vmatprep.subr.mxu0 0.0
      %2115 = vmatpush1.msra.mxu0 0.0
      %2116 = vmatprep.subr.mxu0 0.0
      %2117 = vmatpush1.msra.mxu0 0.0
      %2118 = vmatprep.subr.mxu0 0.0
      %2119 = vmatpush1.msra.mxu0 0.0
      %2120 = vmatprep.subr.mxu0 0.0
      %2121 = vmatpush1.msra.mxu0 0.0
      %2122 = vmatprep.subr.mxu0 0.0
      %2123 = vmatpush1.msra.mxu0 0.0
      %2124 = vmatprep.subr.mxu0 0.0
      %2125 = vmatpush1.msra.mxu0 0.0
      %2126 = vmatprep.subr.mxu0 0.0
      %2127 = vmatpush1.msra.mxu0 0.0
      %2128 = vmatprep.subr.mxu0 0.0
      %2129 = vmatpush1.msra.mxu0 0.0
      %2130 = vmatprep.subr.mxu0 0.0
      %2131 = vmatpush1.msra.mxu0 0.0
      %2132 = vmatprep.subr.mxu0 0.0
      %2133 = vmatpush1.msra.mxu0 0.0
      %2134 = vmatprep.subr.mxu0 0.0
      %2135 = vmatpush1.msra.mxu0 0.0
      %2136 = vmatprep.subr.mxu0 0.0
      %2137 = vmatpush1.msra.mxu0 0.0
      %2138 = vmatprep.subr.mxu0 0.0
      %2139 = vmatpush1.msra.mxu0 0.0
      %2140 = vmatprep.subr.mxu0 0.0
      %2141 = vmatpush1.msra.mxu0 0.0
      %2142 = vmatprep.subr.mxu0 0.0
      %2143 = vmatpush1.msra.mxu0 0.0
      %2144 = vmatprep.subr.mxu0 0.0
      %2145 = vmatpush1.msra.mxu0 0.0
      %2146 = vmatprep.subr.mxu0 0.0
      %2147 = vmatpush1.msra.mxu0 0.0
      %2148 = vmatprep.subr.mxu0 0.0
      %2149 = vmatpush1.msra.mxu0 0.0
      %2150 = vmatprep.mubr.f32.mxu0 0.0
      %2151 = vmatmul.mubr.f32.gmra.mrb[0].mxu0 %v2082
      %v2152 = vpop.f32.mrb[0].mxu0
      %v2153 = vadd.f32 0.0, %v2152
      %v2154 = vpop.f32.mrb[0].mxu0
      %2155 = vdwg.mxu0
      %s2156 = scalar_lea.vmem %s5, 32
      %v2157 = vld [vmem:[%s2156] sm:$0xff]
      %2158 = vrot.lane.b32.xlu0 %v1989, 120
      %v2159 = vpop.permute.xlu0 %2158
      %2160 = vrot.lane.b32.xlu0 %v1986, 88
      %v2161 = vpop.permute.xlu0 %2160
      %v2162 = vsel %vm665, %v2159, 0
      %v2164 = vsel %vm665, %v2161, 0
      %2166 = vmatprep.subr.mxu0 0.0
      %2167 = vmatpush1.xpose.msra.mxu0 %v2164
      %2168 = vmatprep.subr.mxu0 0.0
      %2169 = vmatpush1.xpose.msra.mxu0 0.0
      %2170 = vmatprep.subr.mxu0 0.0
      %2171 = vmatpush1.xpose.msra.mxu0 0.0
      %2172 = vmatprep.subr.mxu0 0.0
      %2173 = vmatpush1.xpose.msra.mxu0 0.0
      %2174 = vmatprep.subr.mxu0 0.0
      %2175 = vmatpush1.xpose.msra.mxu0 0.0
      %2176 = vmatprep.subr.mxu0 0.0
      %2177 = vmatpush1.xpose.msra.mxu0 0.0
      %2178 = vmatprep.subr.mxu0 0.0
      %2179 = vmatpush1.xpose.msra.mxu0 0.0
      %2180 = vmatprep.subr.mxu0 0.0
      %2181 = vmatpush1.xpose.msra.mxu0 0.0
      %2182 = vmatprep.subr.mxu0 0.0
      %2183 = vmatpush1.xpose.msra.mxu0 0.0
      %2184 = vmatprep.subr.mxu0 0.0
      %2185 = vmatpush1.xpose.msra.mxu0 0.0
      %2186 = vmatprep.subr.mxu0 0.0
      %2187 = vmatpush1.xpose.msra.mxu0 0.0
      %2188 = vmatprep.subr.mxu0 0.0
      %2189 = vmatpush1.xpose.msra.mxu0 0.0
      %2190 = vmatprep.subr.mxu0 0.0
      %2191 = vmatpush1.xpose.msra.mxu0 0.0
      %2192 = vmatprep.subr.mxu0 0.0
      %2193 = vmatpush1.xpose.msra.mxu0 0.0
      %2194 = vmatprep.subr.mxu0 0.0
      %2195 = vmatpush1.xpose.msra.mxu0 0.0
      %2196 = vmatprep.subr.mxu0 0.0
      %2197 = vmatpush1.xpose.msra.mxu0 0.0
      %2198 = vmatprep.subr.mxu0 0.0
      %2199 = vmatpush1.xpose.msra.mxu0 0.0
      %2200 = vmatprep.subr.mxu0 0.0
      %2201 = vmatpush1.xpose.msra.mxu0 0.0
      %2202 = vmatprep.subr.mxu0 0.0
      %2203 = vmatpush1.xpose.msra.mxu0 0.0
      %2204 = vmatprep.subr.mxu0 0.0
      %2205 = vmatpush1.xpose.msra.mxu0 0.0
      %2206 = vmatprep.subr.mxu0 0.0
      %2207 = vmatpush1.xpose.msra.mxu0 0.0
      %2208 = vmatprep.subr.mxu0 0.0
      %2209 = vmatpush1.xpose.msra.mxu0 0.0
      %2210 = vmatprep.subr.mxu0 0.0
      %2211 = vmatpush1.xpose.msra.mxu0 0.0
      %2212 = vmatprep.subr.mxu0 0.0
      %2213 = vmatpush1.xpose.msra.mxu0 0.0
      %2214 = vmatprep.subr.mxu0 0.0
      %2215 = vmatpush1.xpose.msra.mxu0 0.0
      %2216 = vmatprep.subr.mxu0 0.0
      %2217 = vmatpush1.xpose.msra.mxu0 0.0
      %2218 = vmatprep.subr.mxu0 0.0
      %2219 = vmatpush1.xpose.msra.mxu0 0.0
      %2220 = vmatprep.subr.mxu0 0.0
      %2221 = vmatpush1.xpose.msra.mxu0 0.0
      %2222 = vmatprep.subr.mxu0 0.0
      %2223 = vmatpush1.xpose.msra.mxu0 0.0
      %2224 = vmatprep.subr.mxu0 0.0
      %2225 = vmatpush1.xpose.msra.mxu0 0.0
      %2226 = vmatprep.subr.mxu0 0.0
      %2227 = vmatpush1.xpose.msra.mxu0 0.0
      %2228 = vmatprep.subr.mxu0 0.0
      %2229 = vmatpush1.xpose.msra.mxu0 0.0
      %2230 = vmatprep.mubr.f32.mxu0 0.0
      %2231 = vmatmul.mubr.f32.gmra.mrb[0].mxu0 %v2162
      %v2232 = vpop.f32.mrb[0].mxu0
      %v2233 = vadd.f32 0.0, %v2232
      %v2234 = vpop.f32.mrb[0].mxu0
      %2235 = vdwg.mxu0
      %v2236 = vsel %vm741, %v2233, -inf
      %2237 = vmax.xlane.f32.xlu0 %v2236
      %v2238 = vpop.xlane.xlu0 %2237
      %v2239 = vsub.f32 %v2233, %v2238
      %v2240 = vmul.f32 %v2239, 1.442695
      %v2241 = vpow.pop %v2240
      %v2242 = vsel %vm741, %v2241, 0.0
      %2243 = vadd.xlane.f32.xlu0 %v2242
      %v2244 = vpop.xlane.xlu0 %2243
      %v2245 = vrcp.pop %v2244
      %v2246 = vmul.f32 %v2241, %v2245
      %2247 = vrot.lane.b32.xlu0 %v1986, 56
      %v2248 = vpop.permute.xlu0 %2247
      %v2250 = vsel %vm755, %v2246, 0
      %v2252 = vsel %vm759, %v2248, 0
      %2254 = vmatprep.subr.mxu0 0.0
      %2255 = vmatpush1.msra.mxu0 %v2252
      %2256 = vmatprep.subr.mxu0 0.0
      %2257 = vmatpush1.msra.mxu0 0.0
      %2258 = vmatprep.subr.mxu0 0.0
      %2259 = vmatpush1.msra.mxu0 0.0
      %2260 = vmatprep.subr.mxu0 0.0
      %2261 = vmatpush1.msra.mxu0 0.0
      %2262 = vmatprep.subr.mxu0 0.0
      %2263 = vmatpush1.msra.mxu0 0.0
      %2264 = vmatprep.subr.mxu0 0.0
      %2265 = vmatpush1.msra.mxu0 0.0
      %2266 = vmatprep.subr.mxu0 0.0
      %2267 = vmatpush1.msra.mxu0 0.0
      %2268 = vmatprep.subr.mxu0 0.0
      %2269 = vmatpush1.msra.mxu0 0.0
      %2270 = vmatprep.subr.mxu0 0.0
      %2271 = vmatpush1.msra.mxu0 0.0
      %2272 = vmatprep.subr.mxu0 0.0
      %2273 = vmatpush1.msra.mxu0 0.0
      %2274 = vmatprep.subr.mxu0 0.0
      %2275 = vmatpush1.msra.mxu0 0.0
      %2276 = vmatprep.subr.mxu0 0.0
      %2277 = vmatpush1.msra.mxu0 0.0
      %2278 = vmatprep.subr.mxu0 0.0
      %2279 = vmatpush1.msra.mxu0 0.0
      %2280 = vmatprep.subr.mxu0 0.0
      %2281 = vmatpush1.msra.mxu0 0.0
      %2282 = vmatprep.subr.mxu0 0.0
      %2283 = vmatpush1.msra.mxu0 0.0
      %2284 = vmatprep.subr.mxu0 0.0
      %2285 = vmatpush1.msra.mxu0 0.0
      %2286 = vmatprep.subr.mxu0 0.0
      %2287 = vmatpush1.msra.mxu0 0.0
      %2288 = vmatprep.subr.mxu0 0.0
      %2289 = vmatpush1.msra.mxu0 0.0
      %2290 = vmatprep.subr.mxu0 0.0
      %2291 = vmatpush1.msra.mxu0 0.0
      %2292 = vmatprep.subr.mxu0 0.0
      %2293 = vmatpush1.msra.mxu0 0.0
      %2294 = vmatprep.subr.mxu0 0.0
      %2295 = vmatpush1.msra.mxu0 0.0
      %2296 = vmatprep.subr.mxu0 0.0
      %2297 = vmatpush1.msra.mxu0 0.0
      %2298 = vmatprep.subr.mxu0 0.0
      %2299 = vmatpush1.msra.mxu0 0.0
      %2300 = vmatprep.subr.mxu0 0.0
      %2301 = vmatpush1.msra.mxu0 0.0
      %2302 = vmatprep.subr.mxu0 0.0
      %2303 = vmatpush1.msra.mxu0 0.0
      %2304 = vmatprep.subr.mxu0 0.0
      %2305 = vmatpush1.msra.mxu0 0.0
      %2306 = vmatprep.subr.mxu0 0.0
      %2307 = vmatpush1.msra.mxu0 0.0
      %2308 = vmatprep.subr.mxu0 0.0
      %2309 = vmatpush1.msra.mxu0 0.0
      %2310 = vmatprep.subr.mxu0 0.0
      %2311 = vmatpush1.msra.mxu0 0.0
      %2312 = vmatprep.subr.mxu0 0.0
      %2313 = vmatpush1.msra.mxu0 0.0
      %2314 = vmatprep.subr.mxu0 0.0
      %2315 = vmatpush1.msra.mxu0 0.0
      %2316 = vmatprep.subr.mxu0 0.0
      %2317 = vmatpush1.msra.mxu0 0.0
      %2318 = vmatprep.mubr.f32.mxu0 0.0
      %2319 = vmatmul.mubr.f32.gmra.mrb[0].mxu0 %v2250
      %v2320 = vpop.f32.mrb[0].mxu0
      %v2321 = vadd.f32 0.0, %v2320
      %v2322 = vpop.f32.mrb[0].mxu0
      %2323 = vdwg.mxu0
      %v2324 = vld [vmem:[%s2156 + $0x8] sm:$0xff]
      %v2326 = vsel %vm665, %v2321, 0
      %2328 = vmatprep.subr.mxu0 0.0
      %2329 = vmatpush1.msra.mxu0 %v2324
      %2330 = vmatprep.subr.mxu0 0.0
      %2331 = vmatpush1.msra.mxu0 0.0
      %2332 = vmatprep.subr.mxu0 0.0
      %2333 = vmatpush1.msra.mxu0 0.0
      %2334 = vmatprep.subr.mxu0 0.0
      %2335 = vmatpush1.msra.mxu0 0.0
      %2336 = vmatprep.subr.mxu0 0.0
      %2337 = vmatpush1.msra.mxu0 0.0
      %2338 = vmatprep.subr.mxu0 0.0
      %2339 = vmatpush1.msra.mxu0 0.0
      %2340 = vmatprep.subr.mxu0 0.0
      %2341 = vmatpush1.msra.mxu0 0.0
      %2342 = vmatprep.subr.mxu0 0.0
      %2343 = vmatpush1.msra.mxu0 0.0
      %2344 = vmatprep.subr.mxu0 0.0
      %2345 = vmatpush1.msra.mxu0 0.0
      %2346 = vmatprep.subr.mxu0 0.0
      %2347 = vmatpush1.msra.mxu0 0.0
      %2348 = vmatprep.subr.mxu0 0.0
      %2349 = vmatpush1.msra.mxu0 0.0
      %2350 = vmatprep.subr.mxu0 0.0
      %2351 = vmatpush1.msra.mxu0 0.0
      %2352 = vmatprep.subr.mxu0 0.0
      %2353 = vmatpush1.msra.mxu0 0.0
      %2354 = vmatprep.subr.mxu0 0.0
      %2355 = vmatpush1.msra.mxu0 0.0
      %2356 = vmatprep.subr.mxu0 0.0
      %2357 = vmatpush1.msra.mxu0 0.0
      %2358 = vmatprep.subr.mxu0 0.0
      %2359 = vmatpush1.msra.mxu0 0.0
      %2360 = vmatprep.subr.mxu0 0.0
      %2361 = vmatpush1.msra.mxu0 0.0
      %2362 = vmatprep.subr.mxu0 0.0
      %2363 = vmatpush1.msra.mxu0 0.0
      %2364 = vmatprep.subr.mxu0 0.0
      %2365 = vmatpush1.msra.mxu0 0.0
      %2366 = vmatprep.subr.mxu0 0.0
      %2367 = vmatpush1.msra.mxu0 0.0
      %2368 = vmatprep.subr.mxu0 0.0
      %2369 = vmatpush1.msra.mxu0 0.0
      %2370 = vmatprep.subr.mxu0 0.0
      %2371 = vmatpush1.msra.mxu0 0.0
      %2372 = vmatprep.subr.mxu0 0.0
      %2373 = vmatpush1.msra.mxu0 0.0
      %2374 = vmatprep.subr.mxu0 0.0
      %2375 = vmatpush1.msra.mxu0 0.0
      %2376 = vmatprep.subr.mxu0 0.0
      %2377 = vmatpush1.msra.mxu0 0.0
      %2378 = vmatprep.subr.mxu0 0.0
      %2379 = vmatpush1.msra.mxu0 0.0
      %2380 = vmatprep.subr.mxu0 0.0
      %2381 = vmatpush1.msra.mxu0 0.0
      %2382 = vmatprep.subr.mxu0 0.0
      %2383 = vmatpush1.msra.mxu0 0.0
      %2384 = vmatprep.subr.mxu0 0.0
      %2385 = vmatpush1.msra.mxu0 0.0
      %2386 = vmatprep.subr.mxu0 0.0
      %2387 = vmatpush1.msra.mxu0 0.0
      %2388 = vmatprep.subr.mxu0 0.0
      %2389 = vmatpush1.msra.mxu0 0.0
      %2390 = vmatprep.subr.mxu0 0.0
      %2391 = vmatpush1.msra.mxu0 0.0
      %2392 = vmatprep.mubr.f32.mxu0 0.0
      %2393 = vmatmul.mubr.f32.gmra.mrb[0].mxu0 %v2326
      %v2394 = vpop.f32.mrb[0].mxu0
      %v2395 = vadd.f32 0.0, %v2394
      %v2396 = vpop.f32.mrb[0].mxu0
      %2397 = vdwg.mxu0
      %v2399 = vsel %vm665, %v2153, 0
      %2401 = vmatprep.subr.mxu0 0.0
      %2402 = vmatpush1.msra.mxu0 %v2157
      %2403 = vmatprep.subr.mxu0 0.0
      %2404 = vmatpush1.msra.mxu0 0.0
      %2405 = vmatprep.subr.mxu0 0.0
      %2406 = vmatpush1.msra.mxu0 0.0
      %2407 = vmatprep.subr.mxu0 0.0
      %2408 = vmatpush1.msra.mxu0 0.0
      %2409 = vmatprep.subr.mxu0 0.0
      %2410 = vmatpush1.msra.mxu0 0.0
      %2411 = vmatprep.subr.mxu0 0.0
      %2412 = vmatpush1.msra.mxu0 0.0
      %2413 = vmatprep.subr.mxu0 0.0
      %2414 = vmatpush1.msra.mxu0 0.0
      %2415 = vmatprep.subr.mxu0 0.0
      %2416 = vmatpush1.msra.mxu0 0.0
      %2417 = vmatprep.subr.mxu0 0.0
      %2418 = vmatpush1.msra.mxu0 0.0
      %2419 = vmatprep.subr.mxu0 0.0
      %2420 = vmatpush1.msra.mxu0 0.0
      %2421 = vmatprep.subr.mxu0 0.0
      %2422 = vmatpush1.msra.mxu0 0.0
      %2423 = vmatprep.subr.mxu0 0.0
      %2424 = vmatpush1.msra.mxu0 0.0
      %2425 = vmatprep.subr.mxu0 0.0
      %2426 = vmatpush1.msra.mxu0 0.0
      %2427 = vmatprep.subr.mxu0 0.0
      %2428 = vmatpush1.msra.mxu0 0.0
      %2429 = vmatprep.subr.mxu0 0.0
      %2430 = vmatpush1.msra.mxu0 0.0
      %2431 = vmatprep.subr.mxu0 0.0
      %2432 = vmatpush1.msra.mxu0 0.0
      %2433 = vmatprep.subr.mxu0 0.0
      %2434 = vmatpush1.msra.mxu0 0.0
      %2435 = vmatprep.subr.mxu0 0.0
      %2436 = vmatpush1.msra.mxu0 0.0
      %2437 = vmatprep.subr.mxu0 0.0
      %2438 = vmatpush1.msra.mxu0 0.0
      %2439 = vmatprep.subr.mxu0 0.0
      %2440 = vmatpush1.msra.mxu0 0.0
      %2441 = vmatprep.subr.mxu0 0.0
      %2442 = vmatpush1.msra.mxu0 0.0
      %2443 = vmatprep.subr.mxu0 0.0
      %2444 = vmatpush1.msra.mxu0 0.0
      %2445 = vmatprep.subr.mxu0 0.0
      %2446 = vmatpush1.msra.mxu0 0.0
      %2447 = vmatprep.subr.mxu0 0.0
      %2448 = vmatpush1.msra.mxu0 0.0
      %2449 = vmatprep.subr.mxu0 0.0
      %2450 = vmatpush1.msra.mxu0 0.0
      %2451 = vmatprep.subr.mxu0 0.0
      %2452 = vmatpush1.msra.mxu0 0.0
      %2453 = vmatprep.subr.mxu0 0.0
      %2454 = vmatpush1.msra.mxu0 0.0
      %2455 = vmatprep.subr.mxu0 0.0
      %2456 = vmatpush1.msra.mxu0 0.0
      %2457 = vmatprep.subr.mxu0 0.0
      %2458 = vmatpush1.msra.mxu0 0.0
      %2459 = vmatprep.subr.mxu0 0.0
      %2460 = vmatpush1.msra.mxu0 0.0
      %2461 = vmatprep.subr.mxu0 0.0
      %2462 = vmatpush1.msra.mxu0 0.0
      %2463 = vmatprep.subr.mxu0 0.0
      %2464 = vmatpush1.msra.mxu0 0.0
      %2465 = vmatprep.mubr.f32.mxu0 0.0
      %2466 = vmatmul.mubr.f32.gmra.mrb[0].mxu0 %v2399
      %v2467 = vpop.f32.mrb[0].mxu0
      %v2468 = vadd.f32 %v2395, %v2467
      %v2469 = vpop.f32.mrb[0].mxu0
      %2470 = vdwg.mxu0
      %2471 = vrot.lane.b32.xlu0 %v1989, 112
      %v2472 = vpop.permute.xlu0 %2471
      %2473 = vrot.lane.b32.xlu0 %v1986, 80
      %v2474 = vpop.permute.xlu0 %2473
      %v2475 = vsel %vm665, %v2472, 0
      %v2477 = vsel %vm665, %v2474, 0
      %2479 = vmatprep.subr.mxu0 0.0
      %2480 = vmatpush1.xpose.msra.mxu0 %v2477
      %2481 = vmatprep.subr.mxu0 0.0
      %2482 = vmatpush1.xpose.msra.mxu0 0.0
      %2483 = vmatprep.subr.mxu0 0.0
      %2484 = vmatpush1.xpose.msra.mxu0 0.0
      %2485 = vmatprep.subr.mxu0 0.0
      %2486 = vmatpush1.xpose.msra.mxu0 0.0
      %2487 = vmatprep.subr.mxu0 0.0
      %2488 = vmatpush1.xpose.msra.mxu0 0.0
      %2489 = vmatprep.subr.mxu0 0.0
      %2490 = vmatpush1.xpose.msra.mxu0 0.0
      %2491 = vmatprep.subr.mxu0 0.0
      %2492 = vmatpush1.xpose.msra.mxu0 0.0
      %2493 = vmatprep.subr.mxu0 0.0
      %2494 = vmatpush1.xpose.msra.mxu0 0.0
      %2495 = vmatprep.subr.mxu0 0.0
      %2496 = vmatpush1.xpose.msra.mxu0 0.0
      %2497 = vmatprep.subr.mxu0 0.0
      %2498 = vmatpush1.xpose.msra.mxu0 0.0
      %2499 = vmatprep.subr.mxu0 0.0
      %2500 = vmatpush1.xpose.msra.mxu0 0.0
      %2501 = vmatprep.subr.mxu0 0.0
      %2502 = vmatpush1.xpose.msra.mxu0 0.0
      %2503 = vmatprep.subr.mxu0 0.0
      %2504 = vmatpush1.xpose.msra.mxu0 0.0
      %2505 = vmatprep.subr.mxu0 0.0
      %2506 = vmatpush1.xpose.msra.mxu0 0.0
      %2507 = vmatprep.subr.mxu0 0.0
      %2508 = vmatpush1.xpose.msra.mxu0 0.0
      %2509 = vmatprep.subr.mxu0 0.0
      %2510 = vmatpush1.xpose.msra.mxu0 0.0
      %2511 = vmatprep.subr.mxu0 0.0
      %2512 = vmatpush1.xpose.msra.mxu0 0.0
      %2513 = vmatprep.subr.mxu0 0.0
      %2514 = vmatpush1.xpose.msra.mxu0 0.0
      %2515 = vmatprep.subr.mxu0 0.0
      %2516 = vmatpush1.xpose.msra.mxu0 0.0
      %2517 = vmatprep.subr.mxu0 0.0
      %2518 = vmatpush1.xpose.msra.mxu0 0.0
      %2519 = vmatprep.subr.mxu0 0.0
      %2520 = vmatpush1.xpose.msra.mxu0 0.0
      %2521 = vmatprep.subr.mxu0 0.0
      %2522 = vmatpush1.xpose.msra.mxu0 0.0
      %2523 = vmatprep.subr.mxu0 0.0
      %2524 = vmatpush1.xpose.msra.mxu0 0.0
      %2525 = vmatprep.subr.mxu0 0.0
      %2526 = vmatpush1.xpose.msra.mxu0 0.0
      %2527 = vmatprep.subr.mxu0 0.0
      %2528 = vmatpush1.xpose.msra.mxu0 0.0
      %2529 = vmatprep.subr.mxu0 0.0
      %2530 = vmatpush1.xpose.msra.mxu0 0.0
      %2531 = vmatprep.subr.mxu0 0.0
      %2532 = vmatpush1.xpose.msra.mxu0 0.0
      %2533 = vmatprep.subr.mxu0 0.0
      %2534 = vmatpush1.xpose.msra.mxu0 0.0
      %2535 = vmatprep.subr.mxu0 0.0
      %2536 = vmatpush1.xpose.msra.mxu0 0.0
      %2537 = vmatprep.subr.mxu0 0.0
      %2538 = vmatpush1.xpose.msra.mxu0 0.0
      %2539 = vmatprep.subr.mxu0 0.0
      %2540 = vmatpush1.xpose.msra.mxu0 0.0
      %2541 = vmatprep.subr.mxu0 0.0
      %2542 = vmatpush1.xpose.msra.mxu0 0.0
      %2543 = vmatprep.mubr.f32.mxu0 0.0
      %2544 = vmatmul.mubr.f32.gmra.mrb[0].mxu0 %v2475
      %v2545 = vpop.f32.mrb[0].mxu0
      %v2546 = vadd.f32 0.0, %v2545
      %v2547 = vpop.f32.mrb[0].mxu0
      %2548 = vdwg.mxu0
      %v2549 = vsel %vm741, %v2546, -inf
      %2550 = vmax.xlane.f32.xlu0 %v2549
      %v2551 = vpop.xlane.xlu0 %2550
      %v2552 = vsub.f32 %v2546, %v2551
      %v2553 = vmul.f32 %v2552, 1.442695
      %v2554 = vpow.pop %v2553
      %v2555 = vsel %vm741, %v2554, 0.0
      %2556 = vadd.xlane.f32.xlu0 %v2555
      %v2557 = vpop.xlane.xlu0 %2556
      %v2558 = vrcp.pop %v2557
      %v2559 = vmul.f32 %v2554, %v2558
      %2560 = vrot.lane.b32.xlu0 %v1986, 48
      %v2561 = vpop.permute.xlu0 %2560
      %v2563 = vsel %vm755, %v2559, 0
      %v2565 = vsel %vm759, %v2561, 0
      %2567 = vmatprep.subr.mxu0 0.0
      %2568 = vmatpush1.msra.mxu0 %v2565
      %2569 = vmatprep.subr.mxu0 0.0
      %2570 = vmatpush1.msra.mxu0 0.0
      %2571 = vmatprep.subr.mxu0 0.0
      %2572 = vmatpush1.msra.mxu0 0.0
      %2573 = vmatprep.subr.mxu0 0.0
      %2574 = vmatpush1.msra.mxu0 0.0
      %2575 = vmatprep.subr.mxu0 0.0
      %2576 = vmatpush1.msra.mxu0 0.0
      %2577 = vmatprep.subr.mxu0 0.0
      %2578 = vmatpush1.msra.mxu0 0.0
      %2579 = vmatprep.subr.mxu0 0.0
      %2580 = vmatpush1.msra.mxu0 0.0
      %2581 = vmatprep.subr.mxu0 0.0
      %2582 = vmatpush1.msra.mxu0 0.0
      %2583 = vmatprep.subr.mxu0 0.0
      %2584 = vmatpush1.msra.mxu0 0.0
      %2585 = vmatprep.subr.mxu0 0.0
      %2586 = vmatpush1.msra.mxu0 0.0
      %2587 = vmatprep.subr.mxu0 0.0
      %2588 = vmatpush1.msra.mxu0 0.0
      %2589 = vmatprep.subr.mxu0 0.0
      %2590 = vmatpush1.msra.mxu0 0.0
      %2591 = vmatprep.subr.mxu0 0.0
      %2592 = vmatpush1.msra.mxu0 0.0
      %2593 = vmatprep.subr.mxu0 0.0
      %2594 = vmatpush1.msra.mxu0 0.0
      %2595 = vmatprep.subr.mxu0 0.0
      %2596 = vmatpush1.msra.mxu0 0.0
      %2597 = vmatprep.subr.mxu0 0.0
      %2598 = vmatpush1.msra.mxu0 0.0
      %2599 = vmatprep.subr.mxu0 0.0
      %2600 = vmatpush1.msra.mxu0 0.0
      %2601 = vmatprep.subr.mxu0 0.0
      %2602 = vmatpush1.msra.mxu0 0.0
      %2603 = vmatprep.subr.mxu0 0.0
      %2604 = vmatpush1.msra.mxu0 0.0
      %2605 = vmatprep.subr.mxu0 0.0
      %2606 = vmatpush1.msra.mxu0 0.0
      %2607 = vmatprep.subr.mxu0 0.0
      %2608 = vmatpush1.msra.mxu0 0.0
      %2609 = vmatprep.subr.mxu0 0.0
      %2610 = vmatpush1.msra.mxu0 0.0
      %2611 = vmatprep.subr.mxu0 0.0
      %2612 = vmatpush1.msra.mxu0 0.0
      %2613 = vmatprep.subr.mxu0 0.0
      %2614 = vmatpush1.msra.mxu0 0.0
      %2615 = vmatprep.subr.mxu0 0.0
      %2616 = vmatpush1.msra.mxu0 0.0
      %2617 = vmatprep.subr.mxu0 0.0
      %2618 = vmatpush1.msra.mxu0 0.0
      %2619 = vmatprep.subr.mxu0 0.0
      %2620 = vmatpush1.msra.mxu0 0.0
      %2621 = vmatprep.subr.mxu0 0.0
      %2622 = vmatpush1.msra.mxu0 0.0
      %2623 = vmatprep.subr.mxu0 0.0
      %2624 = vmatpush1.msra.mxu0 0.0
      %2625 = vmatprep.subr.mxu0 0.0
      %2626 = vmatpush1.msra.mxu0 0.0
      %2627 = vmatprep.subr.mxu0 0.0
      %2628 = vmatpush1.msra.mxu0 0.0
      %2629 = vmatprep.subr.mxu0 0.0
      %2630 = vmatpush1.msra.mxu0 0.0
      %2631 = vmatprep.mubr.f32.mxu0 0.0
      %2632 = vmatmul.mubr.f32.gmra.mrb[0].mxu0 %v2563
      %v2633 = vpop.f32.mrb[0].mxu0
      %v2634 = vadd.f32 0.0, %v2633
      %v2635 = vpop.f32.mrb[0].mxu0
      %2636 = vdwg.mxu0
      %v2637 = vld [vmem:[%s2156 + $0x10] sm:$0xff]
      %v2639 = vsel %vm665, %v2634, 0
      %2641 = vmatprep.subr.mxu0 0.0
      %2642 = vmatpush1.msra.mxu0 %v2637
      %2643 = vmatprep.subr.mxu0 0.0
      %2644 = vmatpush1.msra.mxu0 0.0
      %2645 = vmatprep.subr.mxu0 0.0
      %2646 = vmatpush1.msra.mxu0 0.0
      %2647 = vmatprep.subr.mxu0 0.0
      %2648 = vmatpush1.msra.mxu0 0.0
      %2649 = vmatprep.subr.mxu0 0.0
      %2650 = vmatpush1.msra.mxu0 0.0
      %2651 = vmatprep.subr.mxu0 0.0
      %2652 = vmatpush1.msra.mxu0 0.0
      %2653 = vmatprep.subr.mxu0 0.0
      %2654 = vmatpush1.msra.mxu0 0.0
      %2655 = vmatprep.subr.mxu0 0.0
      %2656 = vmatpush1.msra.mxu0 0.0
      %2657 = vmatprep.subr.mxu0 0.0
      %2658 = vmatpush1.msra.mxu0 0.0
      %2659 = vmatprep.subr.mxu0 0.0
      %2660 = vmatpush1.msra.mxu0 0.0
      %2661 = vmatprep.subr.mxu0 0.0
      %2662 = vmatpush1.msra.mxu0 0.0
      %2663 = vmatprep.subr.mxu0 0.0
      %2664 = vmatpush1.msra.mxu0 0.0
      %2665 = vmatprep.subr.mxu0 0.0
      %2666 = vmatpush1.msra.mxu0 0.0
      %2667 = vmatprep.subr.mxu0 0.0
      %2668 = vmatpush1.msra.mxu0 0.0
      %2669 = vmatprep.subr.mxu0 0.0
      %2670 = vmatpush1.msra.mxu0 0.0
      %2671 = vmatprep.subr.mxu0 0.0
      %2672 = vmatpush1.msra.mxu0 0.0
      %2673 = vmatprep.subr.mxu0 0.0
      %2674 = vmatpush1.msra.mxu0 0.0
      %2675 = vmatprep.subr.mxu0 0.0
      %2676 = vmatpush1.msra.mxu0 0.0
      %2677 = vmatprep.subr.mxu0 0.0
      %2678 = vmatpush1.msra.mxu0 0.0
      %2679 = vmatprep.subr.mxu0 0.0
      %2680 = vmatpush1.msra.mxu0 0.0
      %2681 = vmatprep.subr.mxu0 0.0
      %2682 = vmatpush1.msra.mxu0 0.0
      %2683 = vmatprep.subr.mxu0 0.0
      %2684 = vmatpush1.msra.mxu0 0.0
      %2685 = vmatprep.subr.mxu0 0.0
      %2686 = vmatpush1.msra.mxu0 0.0
      %2687 = vmatprep.subr.mxu0 0.0
      %2688 = vmatpush1.msra.mxu0 0.0
      %2689 = vmatprep.subr.mxu0 0.0
      %2690 = vmatpush1.msra.mxu0 0.0
      %2691 = vmatprep.subr.mxu0 0.0
      %2692 = vmatpush1.msra.mxu0 0.0
      %2693 = vmatprep.subr.mxu0 0.0
      %2694 = vmatpush1.msra.mxu0 0.0
      %2695 = vmatprep.subr.mxu0 0.0
      %2696 = vmatpush1.msra.mxu0 0.0
      %2697 = vmatprep.subr.mxu0 0.0
      %2698 = vmatpush1.msra.mxu0 0.0
      %2699 = vmatprep.subr.mxu0 0.0
      %2700 = vmatpush1.msra.mxu0 0.0
      %2701 = vmatprep.subr.mxu0 0.0
      %2702 = vmatpush1.msra.mxu0 0.0
      %2703 = vmatprep.subr.mxu0 0.0
      %2704 = vmatpush1.msra.mxu0 0.0
      %2705 = vmatprep.mubr.f32.mxu0 0.0
      %2706 = vmatmul.mubr.f32.gmra.mrb[0].mxu0 %v2639
      %v2707 = vpop.f32.mrb[0].mxu0
      %v2708 = vadd.f32 0.0, %v2707
      %v2709 = vpop.f32.mrb[0].mxu0
      %2710 = vdwg.mxu0
      %v2711 = vadd.f32 %v2468, %v2708
      %2712 = vrot.lane.b32.xlu0 %v1989, 104
      %v2713 = vpop.permute.xlu0 %2712
      %2714 = vrot.lane.b32.xlu0 %v1986, 72
      %v2715 = vpop.permute.xlu0 %2714
      %v2716 = vsel %vm665, %v2713, 0
      %v2718 = vsel %vm665, %v2715, 0
      %2720 = vmatprep.subr.mxu0 0.0
      %2721 = vmatpush1.xpose.msra.mxu0 %v2718
      %2722 = vmatprep.subr.mxu0 0.0
      %2723 = vmatpush1.xpose.msra.mxu0 0.0
      %2724 = vmatprep.subr.mxu0 0.0
      %2725 = vmatpush1.xpose.msra.mxu0 0.0
      %2726 = vmatprep.subr.mxu0 0.0
      %2727 = vmatpush1.xpose.msra.mxu0 0.0
      %2728 = vmatprep.subr.mxu0 0.0
      %2729 = vmatpush1.xpose.msra.mxu0 0.0
      %2730 = vmatprep.subr.mxu0 0.0
      %2731 = vmatpush1.xpose.msra.mxu0 0.0
      %2732 = vmatprep.subr.mxu0 0.0
      %2733 = vmatpush1.xpose.msra.mxu0 0.0
      %2734 = vmatprep.subr.mxu0 0.0
      %2735 = vmatpush1.xpose.msra.mxu0 0.0
      %2736 = vmatprep.subr.mxu0 0.0
      %2737 = vmatpush1.xpose.msra.mxu0 0.0
      %2738 = vmatprep.subr.mxu0 0.0
      %2739 = vmatpush1.xpose.msra.mxu0 0.0
      %2740 = vmatprep.subr.mxu0 0.0
      %2741 = vmatpush1.xpose.msra.mxu0 0.0
      %2742 = vmatprep.subr.mxu0 0.0
      %2743 = vmatpush1.xpose.msra.mxu0 0.0
      %2744 = vmatprep.subr.mxu0 0.0
      %2745 = vmatpush1.xpose.msra.mxu0 0.0
      %2746 = vmatprep.subr.mxu0 0.0
      %2747 = vmatpush1.xpose.msra.mxu0 0.0
      %2748 = vmatprep.subr.mxu0 0.0
      %2749 = vmatpush1.xpose.msra.mxu0 0.0
      %2750 = vmatprep.subr.mxu0 0.0
      %2751 = vmatpush1.xpose.msra.mxu0 0.0
      %2752 = vmatprep.subr.mxu0 0.0
      %2753 = vmatpush1.xpose.msra.mxu0 0.0
      %2754 = vmatprep.subr.mxu0 0.0
      %2755 = vmatpush1.xpose.msra.mxu0 0.0
      %2756 = vmatprep.subr.mxu0 0.0
      %2757 = vmatpush1.xpose.msra.mxu0 0.0
      %2758 = vmatprep.subr.mxu0 0.0
      %2759 = vmatpush1.xpose.msra.mxu0 0.0
      %2760 = vmatprep.subr.mxu0 0.0
      %2761 = vmatpush1.xpose.msra.mxu0 0.0
      %2762 = vmatprep.subr.mxu0 0.0
      %2763 = vmatpush1.xpose.msra.mxu0 0.0
      %2764 = vmatprep.subr.mxu0 0.0
      %2765 = vmatpush1.xpose.msra.mxu0 0.0
      %2766 = vmatprep.subr.mxu0 0.0
      %2767 = vmatpush1.xpose.msra.mxu0 0.0
      %2768 = vmatprep.subr.mxu0 0.0
      %2769 = vmatpush1.xpose.msra.mxu0 0.0
      %2770 = vmatprep.subr.mxu0 0.0
      %2771 = vmatpush1.xpose.msra.mxu0 0.0
      %2772 = vmatprep.subr.mxu0 0.0
      %2773 = vmatpush1.xpose.msra.mxu0 0.0
      %2774 = vmatprep.subr.mxu0 0.0
      %2775 = vmatpush1.xpose.msra.mxu0 0.0
      %2776 = vmatprep.subr.mxu0 0.0
      %2777 = vmatpush1.xpose.msra.mxu0 0.0
      %2778 = vmatprep.subr.mxu0 0.0
      %2779 = vmatpush1.xpose.msra.mxu0 0.0
      %2780 = vmatprep.subr.mxu0 0.0
      %2781 = vmatpush1.xpose.msra.mxu0 0.0
      %2782 = vmatprep.subr.mxu0 0.0
      %2783 = vmatpush1.xpose.msra.mxu0 0.0
      %2784 = vmatprep.mubr.f32.mxu0 0.0
      %2785 = vmatmul.mubr.f32.gmra.mrb[0].mxu0 %v2716
      %v2786 = vpop.f32.mrb[0].mxu0
      %v2787 = vadd.f32 0.0, %v2786
      %v2788 = vpop.f32.mrb[0].mxu0
      %2789 = vdwg.mxu0
      %v2790 = vsel %vm741, %v2787, -inf
      %2791 = vmax.xlane.f32.xlu0 %v2790
      %v2792 = vpop.xlane.xlu0 %2791
      %v2793 = vsub.f32 %v2787, %v2792
      %v2794 = vmul.f32 %v2793, 1.442695
      %v2795 = vpow.pop %v2794
      %v2796 = vsel %vm741, %v2795, 0.0
      %2797 = vadd.xlane.f32.xlu0 %v2796
      %v2798 = vpop.xlane.xlu0 %2797
      %v2799 = vrcp.pop %v2798
      %v2800 = vmul.f32 %v2795, %v2799
      %2801 = vrot.lane.b32.xlu0 %v1986, 40
      %v2802 = vpop.permute.xlu0 %2801
      %v2804 = vsel %vm755, %v2800, 0
      %v2806 = vsel %vm759, %v2802, 0
      %2808 = vmatprep.subr.mxu0 0.0
      %2809 = vmatpush1.msra.mxu0 %v2806
      %2810 = vmatprep.subr.mxu0 0.0
      %2811 = vmatpush1.msra.mxu0 0.0
      %2812 = vmatprep.subr.mxu0 0.0
      %2813 = vmatpush1.msra.mxu0 0.0
      %2814 = vmatprep.subr.mxu0 0.0
      %2815 = vmatpush1.msra.mxu0 0.0
      %2816 = vmatprep.subr.mxu0 0.0
      %2817 = vmatpush1.msra.mxu0 0.0
      %2818 = vmatprep.subr.mxu0 0.0
      %2819 = vmatpush1.msra.mxu0 0.0
      %2820 = vmatprep.subr.mxu0 0.0
      %2821 = vmatpush1.msra.mxu0 0.0
      %2822 = vmatprep.subr.mxu0 0.0
      %2823 = vmatpush1.msra.mxu0 0.0
      %2824 = vmatprep.subr.mxu0 0.0
      %2825 = vmatpush1.msra.mxu0 0.0
      %2826 = vmatprep.subr.mxu0 0.0
      %2827 = vmatpush1.msra.mxu0 0.0
      %2828 = vmatprep.subr.mxu0 0.0
      %2829 = vmatpush1.msra.mxu0 0.0
      %2830 = vmatprep.subr.mxu0 0.0
      %2831 = vmatpush1.msra.mxu0 0.0
      %2832 = vmatprep.subr.mxu0 0.0
      %2833 = vmatpush1.msra.mxu0 0.0
      %2834 = vmatprep.subr.mxu0 0.0
      %2835 = vmatpush1.msra.mxu0 0.0
      %2836 = vmatprep.subr.mxu0 0.0
      %2837 = vmatpush1.msra.mxu0 0.0
      %2838 = vmatprep.subr.mxu0 0.0
      %2839 = vmatpush1.msra.mxu0 0.0
      %2840 = vmatprep.subr.mxu0 0.0
      %2841 = vmatpush1.msra.mxu0 0.0
      %2842 = vmatprep.subr.mxu0 0.0
      %2843 = vmatpush1.msra.mxu0 0.0
      %2844 = vmatprep.subr.mxu0 0.0
      %2845 = vmatpush1.msra.mxu0 0.0
      %2846 = vmatprep.subr.mxu0 0.0
      %2847 = vmatpush1.msra.mxu0 0.0
      %2848 = vmatprep.subr.mxu0 0.0
      %2849 = vmatpush1.msra.mxu0 0.0
      %2850 = vmatprep.subr.mxu0 0.0
      %2851 = vmatpush1.msra.mxu0 0.0
      %2852 = vmatprep.subr.mxu0 0.0
      %2853 = vmatpush1.msra.mxu0 0.0
      %2854 = vmatprep.subr.mxu0 0.0
      %2855 = vmatpush1.msra.mxu0 0.0
      %2856 = vmatprep.subr.mxu0 0.0
      %2857 = vmatpush1.msra.mxu0 0.0
      %2858 = vmatprep.subr.mxu0 0.0
      %2859 = vmatpush1.msra.mxu0 0.0
      %2860 = vmatprep.subr.mxu0 0.0
      %2861 = vmatpush1.msra.mxu0 0.0
      %2862 = vmatprep.subr.mxu0 0.0
      %2863 = vmatpush1.msra.mxu0 0.0
      %2864 = vmatprep.subr.mxu0 0.0
      %2865 = vmatpush1.msra.mxu0 0.0
      %2866 = vmatprep.subr.mxu0 0.0
      %2867 = vmatpush1.msra.mxu0 0.0
      %2868 = vmatprep.subr.mxu0 0.0
      %2869 = vmatpush1.msra.mxu0 0.0
      %2870 = vmatprep.subr.mxu0 0.0
      %2871 = vmatpush1.msra.mxu0 0.0
      %2872 = vmatprep.mubr.f32.mxu0 0.0
      %2873 = vmatmul.mubr.f32.gmra.mrb[0].mxu0 %v2804
      %v2874 = vpop.f32.mrb[0].mxu0
      %v2875 = vadd.f32 0.0, %v2874
      %v2876 = vpop.f32.mrb[0].mxu0
      %2877 = vdwg.mxu0
      %v2878 = vld [vmem:[%s2156 + $0x18] sm:$0xff]
      %v2880 = vsel %vm665, %v2875, 0
      %2882 = vmatprep.subr.mxu0 0.0
      %2883 = vmatpush1.msra.mxu0 %v2878
      %2884 = vmatprep.subr.mxu0 0.0
      %2885 = vmatpush1.msra.mxu0 0.0
      %2886 = vmatprep.subr.mxu0 0.0
      %2887 = vmatpush1.msra.mxu0 0.0
      %2888 = vmatprep.subr.mxu0 0.0
      %2889 = vmatpush1.msra.mxu0 0.0
      %2890 = vmatprep.subr.mxu0 0.0
      %2891 = vmatpush1.msra.mxu0 0.0
      %2892 = vmatprep.subr.mxu0 0.0
      %2893 = vmatpush1.msra.mxu0 0.0
      %2894 = vmatprep.subr.mxu0 0.0
      %2895 = vmatpush1.msra.mxu0 0.0
      %2896 = vmatprep.subr.mxu0 0.0
      %2897 = vmatpush1.msra.mxu0 0.0
      %2898 = vmatprep.subr.mxu0 0.0
      %2899 = vmatpush1.msra.mxu0 0.0
      %2900 = vmatprep.subr.mxu0 0.0
      %2901 = vmatpush1.msra.mxu0 0.0
      %2902 = vmatprep.subr.mxu0 0.0
      %2903 = vmatpush1.msra.mxu0 0.0
      %2904 = vmatprep.subr.mxu0 0.0
      %2905 = vmatpush1.msra.mxu0 0.0
      %2906 = vmatprep.subr.mxu0 0.0
      %2907 = vmatpush1.msra.mxu0 0.0
      %2908 = vmatprep.subr.mxu0 0.0
      %2909 = vmatpush1.msra.mxu0 0.0
      %2910 = vmatprep.subr.mxu0 0.0
      %2911 = vmatpush1.msra.mxu0 0.0
      %2912 = vmatprep.subr.mxu0 0.0
      %2913 = vmatpush1.msra.mxu0 0.0
      %2914 = vmatprep.subr.mxu0 0.0
      %2915 = vmatpush1.msra.mxu0 0.0
      %2916 = vmatprep.subr.mxu0 0.0
      %2917 = vmatpush1.msra.mxu0 0.0
      %2918 = vmatprep.subr.mxu0 0.0
      %2919 = vmatpush1.msra.mxu0 0.0
      %2920 = vmatprep.subr.mxu0 0.0
      %2921 = vmatpush1.msra.mxu0 0.0
      %2922 = vmatprep.subr.mxu0 0.0
      %2923 = vmatpush1.msra.mxu0 0.0
      %2924 = vmatprep.subr.mxu0 0.0
      %2925 = vmatpush1.msra.mxu0 0.0
      %2926 = vmatprep.subr.mxu0 0.0
      %2927 = vmatpush1.msra.mxu0 0.0
      %2928 = vmatprep.subr.mxu0 0.0
      %2929 = vmatpush1.msra.mxu0 0.0
      %2930 = vmatprep.subr.mxu0 0.0
      %2931 = vmatpush1.msra.mxu0 0.0
      %2932 = vmatprep.subr.mxu0 0.0
      %2933 = vmatpush1.msra.mxu0 0.0
      %2934 = vmatprep.subr.mxu0 0.0
      %2935 = vmatpush1.msra.mxu0 0.0
      %2936 = vmatprep.subr.mxu0 0.0
      %2937 = vmatpush1.msra.mxu0 0.0
      %2938 = vmatprep.subr.mxu0 0.0
      %2939 = vmatpush1.msra.mxu0 0.0
      %2940 = vmatprep.subr.mxu0 0.0
      %2941 = vmatpush1.msra.mxu0 0.0
      %2942 = vmatprep.subr.mxu0 0.0
      %2943 = vmatpush1.msra.mxu0 0.0
      %2944 = vmatprep.subr.mxu0 0.0
      %2945 = vmatpush1.msra.mxu0 0.0
      %2946 = vmatprep.mubr.f32.mxu0 0.0
      %2947 = vmatmul.mubr.f32.gmra.mrb[0].mxu0 %v2880
      %v2948 = vpop.f32.mrb[0].mxu0
      %v2949 = vadd.f32 0.0, %v2948
      %v2950 = vpop.f32.mrb[0].mxu0
      %2951 = vdwg.mxu0
      %v2952 = vadd.f32 %v2711, %v2949
      %v2953 = vadd.f32 %v1871, %v2952
      %s2954 = scalar_lea.vmem %s6, 1
      %v2955 = vld [vmem:[%s2954] sm:$0x1]
      %v2957 = vlaneseq
      %v2958 = vshrl.u32 %v2957, 7
      %v2959 = vsub.s32 0, %v2958
      %v2960 = vrot.slane %v2955, %v2959
      %v2962 = vadd.f32 %v2953, %v2960
      %s2963 = scalar_lea.vmem %s7, 1
      %v2964 = vld [vmem:[%s2963] sm:$0x1]
      %s2965 = scalar_lea.vmem %s8, 1
      %v2966 = vld [vmem:[%s2965] sm:$0x1]
      %v2967 = vsel %vm547, %v2962, 0.0
      %2968 = vadd.xlane.f32.xlu0 %v2967
      %v2969 = vpop.xlane.xlu0 %2968
      %v2970 = vmul.f32 %v2969, %v551
      %v2971 = vsub.f32 %v2962, %v2970
      %v2972 = vmul.f32 %v2971, %v2971
      %v2973 = vsel %vm547, %v2972, 0.0
      %2974 = vadd.xlane.f32.xlu0 %v2973
      %v2975 = vpop.xlane.xlu0 %2974
      %v2976 = vmul.f32 %v2975, %v551
      %v2977 = vadd.f32 %v2976, 1e-05
      %v2978 = vrsqrt.pop %v2977
      %v2979 = vmul.f32 %v2971, %v2978
      %v2981 = vlaneseq
      %v2982 = vshrl.u32 %v2981, 7
      %v2983 = vsub.s32 0, %v2982
      %v2984 = vrot.slane %v2964, %v2983
      %v2986 = vmul.f32 %v2979, %v2984
      %v2988 = vlaneseq
      %v2989 = vshrl.u32 %v2988, 7
      %v2990 = vsub.s32 0, %v2989
      %v2991 = vrot.slane %v2966, %v2990
      %v2993 = vadd.f32 %v2986, %v2991
      %s2994 = scalar_lea.vmem %s9, 32
      %v2995 = vld [vmem:[%s2994] sm:$0xff]
      %v2996 = vld [vmem:[%s2994 + $0x8] sm:$0xff]
      %v2997 = vld [vmem:[%s2994 + $0x10] sm:$0xff]
      %v2998 = vld [vmem:[%s2994 + $0x18] sm:$0xff]
      %s2999 = scalar_lea.vmem %s10, 1
      %v3000 = vld [vmem:[%s2999] sm:$0x1]
      %v3002 = vlaneseq
      %v3003 = vshrl.u32 %v3002, 7
      %v3004 = vsub.s32 0, %v3003
      %v3005 = vrot.slane %v3000, %v3004
      %v3008 = vsel %vm587, %v2993, 0
      %3010 = vmatprep.subr.mxu0 0.0
      %3011 = vmatpush1.msra.mxu0 %v2995
      %3012 = vmatprep.subr.mxu0 0.0
      %3013 = vmatpush1.msra.mxu0 %v2996
      %3014 = vmatprep.subr.mxu0 0.0
      %3015 = vmatpush1.msra.mxu0 %v2997
      %3016 = vmatprep.subr.mxu0 0.0
      %3017 = vmatpush1.msra.mxu0 %v2998
      %3018 = vmatprep.subr.mxu0 0.0
      %3019 = vmatpush1.msra.mxu0 0.0
      %3020 = vmatprep.subr.mxu0 0.0
      %3021 = vmatpush1.msra.mxu0 0.0
      %3022 = vmatprep.subr.mxu0 0.0
      %3023 = vmatpush1.msra.mxu0 0.0
      %3024 = vmatprep.subr.mxu0 0.0
      %3025 = vmatpush1.msra.mxu0 0.0
      %3026 = vmatprep.subr.mxu0 0.0
      %3027 = vmatpush1.msra.mxu0 0.0
      %3028 = vmatprep.subr.mxu0 0.0
      %3029 = vmatpush1.msra.mxu0 0.0
      %3030 = vmatprep.subr.mxu0 0.0
      %3031 = vmatpush1.msra.mxu0 0.0
      %3032 = vmatprep.subr.mxu0 0.0
      %3033 = vmatpush1.msra.mxu0 0.0
      %3034 = vmatprep.subr.mxu0 0.0
      %3035 = vmatpush1.msra.mxu0 0.0
      %3036 = vmatprep.subr.mxu0 0.0
      %3037 = vmatpush1.msra.mxu0 0.0
      %3038 = vmatprep.subr.mxu0 0.0
      %3039 = vmatpush1.msra.mxu0 0.0
      %3040 = vmatprep.subr.mxu0 0.0
      %3041 = vmatpush1.msra.mxu0 0.0
      %3042 = vmatprep.subr.mxu0 0.0
      %3043 = vmatpush1.msra.mxu0 0.0
      %3044 = vmatprep.subr.mxu0 0.0
      %3045 = vmatpush1.msra.mxu0 0.0
      %3046 = vmatprep.subr.mxu0 0.0
      %3047 = vmatpush1.msra.mxu0 0.0
      %3048 = vmatprep.subr.mxu0 0.0
      %3049 = vmatpush1.msra.mxu0 0.0
      %3050 = vmatprep.subr.mxu0 0.0
      %3051 = vmatpush1.msra.mxu0 0.0
      %3052 = vmatprep.subr.mxu0 0.0
      %3053 = vmatpush1.msra.mxu0 0.0
      %3054 = vmatprep.subr.mxu0 0.0
      %3055 = vmatpush1.msra.mxu0 0.0
      %3056 = vmatprep.subr.mxu0 0.0
      %3057 = vmatpush1.msra.mxu0 0.0
      %3058 = vmatprep.subr.mxu0 0.0
      %3059 = vmatpush1.msra.mxu0 0.0
      %3060 = vmatprep.subr.mxu0 0.0
      %3061 = vmatpush1.msra.mxu0 0.0
      %3062 = vmatprep.subr.mxu0 0.0
      %3063 = vmatpush1.msra.mxu0 0.0
      %3064 = vmatprep.subr.mxu0 0.0
      %3065 = vmatpush1.msra.mxu0 0.0
      %3066 = vmatprep.subr.mxu0 0.0
      %3067 = vmatpush1.msra.mxu0 0.0
      %3068 = vmatprep.subr.mxu0 0.0
      %3069 = vmatpush1.msra.mxu0 0.0
      %3070 = vmatprep.subr.mxu0 0.0
      %3071 = vmatpush1.msra.mxu0 0.0
      %3072 = vmatprep.subr.mxu0 0.0
      %3073 = vmatpush1.msra.mxu0 0.0
      %3074 = vmatprep.mubr.f32.mxu0 0.0
      %3075 = vmatmul.mubr.f32.gmra.mrb[0].mxu0 %v3008
      %v3076 = vpop.f32.mrb[0].mxu0
      %v3077 = vadd.f32 %v3005, %v3076
      %v3078 = vpop.f32.mrb[0].mxu0
      %3079 = vdwg.mxu0
      %v3080 = vmul.f32 %v3077, 0.5
      %v3081 = vmul.f32 %v3077, 0.70710677
      %vm3082 = vcmp.ge.f32.partialorder %v3081, 0.0
      %v3083 = vsel %vm3082, 1.0, -1.0
      %v3084 = vand.u32 2147483647, %v3081
      %v3085 = vmul.f32 %v3084, 0.3275911
      %v3086 = vadd.f32 %v3085, 1.0
      %v3087 = vrcp.pop %v3086
      %v3088 = vmul.f32 1.0, %v3087
      %v3089 = vmul.f32 %v3088, 1.0614054
      %v3090 = vadd.f32 %v3089, -1.4531521
      %v3091 = vmul.f32 %v3090, %v3088
      %v3092 = vadd.f32 %v3091, 1.4214138
      %v3093 = vmul.f32 %v3092, %v3088
      %v3094 = vadd.f32 %v3093, -0.28449672
      %v3095 = vmul.f32 %v3094, %v3088
      %v3096 = vadd.f32 %v3095, 0.2548296
      %v3097 = vmul.f32 %v3096, %v3088
      %v3098 = vsub.f32 0.0, %v3084
      %v3099 = vmul.f32 %v3098, %v3084
      %v3100 = vmul.f32 %v3099, 1.442695
      %v3101 = vpow.pop %v3100
      %v3102 = vmul.f32 %v3097, %v3101
      %v3103 = vsub.f32 1.0, %v3102
      %v3104 = vmul.f32 %v3083, %v3103
      %v3105 = vadd.f32 %v3104, 1.0
      %v3106 = vmul.f32 %v3080, %v3105
      %s3107 = scalar_lea.vmem %s11, 128
      %v3108 = vld [vmem:[%s3107] sm:$0xff]
      %v3109 = vld [vmem:[%s3107 + $0x8] sm:$0xff]
      %v3110 = vld [vmem:[%s3107 + $0x10] sm:$0xff]
      %v3111 = vld [vmem:[%s3107 + $0x18] sm:$0xff]
      %v3112 = vld [vmem:[%s3107 + $0x20] sm:$0xff]
      %v3113 = vld [vmem:[%s3107 + $0x28] sm:$0xff]
      %v3114 = vld [vmem:[%s3107 + $0x30] sm:$0xff]
      %v3115 = vld [vmem:[%s3107 + $0x38] sm:$0xff]
      %v3116 = vld [vmem:[%s3107 + $0x40] sm:$0xff]
      %v3117 = vld [vmem:[%s3107 + $0x48] sm:$0xff]
      %v3118 = vld [vmem:[%s3107 + $0x50] sm:$0xff]
      %v3119 = vld [vmem:[%s3107 + $0x58] sm:$0xff]
      %v3120 = vld [vmem:[%s3107 + $0x60] sm:$0xff]
      %v3121 = vld [vmem:[%s3107 + $0x68] sm:$0xff]
      %v3122 = vld [vmem:[%s3107 + $0x70] sm:$0xff]
      %v3123 = vld [vmem:[%s3107 + $0x78] sm:$0xff]
      %3124 = vmatprep.subr.mxu0 0.0
      %3125 = vmatpush1.msra.mxu0 %v3108
      %3126 = vmatprep.subr.mxu0 0.0
      %3127 = vmatpush1.msra.mxu0 %v3109
      %3128 = vmatprep.subr.mxu0 0.0
      %3129 = vmatpush1.msra.mxu0 %v3110
      %3130 = vmatprep.subr.mxu0 0.0
      %3131 = vmatpush1.msra.mxu0 %v3111
      %3132 = vmatprep.subr.mxu0 0.0
      %3133 = vmatpush1.msra.mxu0 %v3112
      %3134 = vmatprep.subr.mxu0 0.0
      %3135 = vmatpush1.msra.mxu0 %v3113
      %3136 = vmatprep.subr.mxu0 0.0
      %3137 = vmatpush1.msra.mxu0 %v3114
      %3138 = vmatprep.subr.mxu0 0.0
      %3139 = vmatpush1.msra.mxu0 %v3115
      %3140 = vmatprep.subr.mxu0 0.0
      %3141 = vmatpush1.msra.mxu0 %v3116
      %3142 = vmatprep.subr.mxu0 0.0
      %3143 = vmatpush1.msra.mxu0 %v3117
      %3144 = vmatprep.subr.mxu0 0.0
      %3145 = vmatpush1.msra.mxu0 %v3118
      %3146 = vmatprep.subr.mxu0 0.0
      %3147 = vmatpush1.msra.mxu0 %v3119
      %3148 = vmatprep.subr.mxu0 0.0
      %3149 = vmatpush1.msra.mxu0 %v3120
      %3150 = vmatprep.subr.mxu0 0.0
      %3151 = vmatpush1.msra.mxu0 %v3121
      %3152 = vmatprep.subr.mxu0 0.0
      %3153 = vmatpush1.msra.mxu0 %v3122
      %3154 = vmatprep.subr.mxu0 0.0
      %3155 = vmatpush1.msra.mxu0 %v3123
      %3156 = vmatprep.subr.mxu0 0.0
      %3157 = vmatpush1.msra.mxu0 0.0
      %3158 = vmatprep.subr.mxu0 0.0
      %3159 = vmatpush1.msra.mxu0 0.0
      %3160 = vmatprep.subr.mxu0 0.0
      %3161 = vmatpush1.msra.mxu0 0.0
      %3162 = vmatprep.subr.mxu0 0.0
      %3163 = vmatpush1.msra.mxu0 0.0
      %3164 = vmatprep.subr.mxu0 0.0
      %3165 = vmatpush1.msra.mxu0 0.0
      %3166 = vmatprep.subr.mxu0 0.0
      %3167 = vmatpush1.msra.mxu0 0.0
      %3168 = vmatprep.subr.mxu0 0.0
      %3169 = vmatpush1.msra.mxu0 0.0
      %3170 = vmatprep.subr.mxu0 0.0
      %3171 = vmatpush1.msra.mxu0 0.0
      %3172 = vmatprep.subr.mxu0 0.0
      %3173 = vmatpush1.msra.mxu0 0.0
      %3174 = vmatprep.subr.mxu0 0.0
      %3175 = vmatpush1.msra.mxu0 0.0
      %3176 = vmatprep.subr.mxu0 0.0
      %3177 = vmatpush1.msra.mxu0 0.0
      %3178 = vmatprep.subr.mxu0 0.0
      %3179 = vmatpush1.msra.mxu0 0.0
      %3180 = vmatprep.subr.mxu0 0.0
      %3181 = vmatpush1.msra.mxu0 0.0
      %3182 = vmatprep.subr.mxu0 0.0
      %3183 = vmatpush1.msra.mxu0 0.0
      %3184 = vmatprep.subr.mxu0 0.0
      %3185 = vmatpush1.msra.mxu0 0.0
      %3186 = vmatprep.subr.mxu0 0.0
      %3187 = vmatpush1.msra.mxu0 0.0
      %3188 = vmatprep.mubr.f32.mxu0 0.0
      %3189 = vmatmul.mubr.f32.gmra.mrb[0].mxu0 %v3106
      %v3190 = vpop.f32.mrb[0].mxu0
      %v3191 = vadd.f32 0.0, %v3190
      %v3192 = vpop.f32.mrb[0].mxu0
      %3193 = vdwg.mxu0
      %v3194 = vadd.f32 %v2962, %v3191
      %s3195 = scalar_lea.vmem %s12, 1
      %v3196 = vld [vmem:[%s3195] sm:$0x1]
      %v3198 = vlaneseq
      %v3199 = vshrl.u32 %v3198, 7
      %v3200 = vsub.s32 0, %v3199
      %v3201 = vrot.slane %v3196, %v3200
      %v3203 = vadd.f32 %v3194, %v3201
      %v3204 = vld [vmem:[%s13] sm:$0x1]
      %v3205 = vld [vmem:[%s14] sm:$0x1]
      %v3206 = vsel %vm547, %v3203, 0.0
      %3207 = vadd.xlane.f32.xlu0 %v3206
      %v3208 = vpop.xlane.xlu0 %3207
      %v3209 = vmul.f32 %v3208, %v551
      %v3210 = vsub.f32 %v3203, %v3209
      %v3211 = vmul.f32 %v3210, %v3210
      %v3212 = vsel %vm547, %v3211, 0.0
      %3213 = vadd.xlane.f32.xlu0 %v3212
      %v3214 = vpop.xlane.xlu0 %3213
      %v3215 = vmul.f32 %v3214, %v551
      %v3216 = vadd.f32 %v3215, 1e-05
      %v3217 = vrsqrt.pop %v3216
      %v3218 = vmul.f32 %v3210, %v3217
      %v3220 = vlaneseq
      %v3221 = vshrl.u32 %v3220, 7
      %v3222 = vsub.s32 0, %v3221
      %v3223 = vrot.slane %v3204, %v3222
      %v3225 = vmul.f32 %v3218, %v3223
      %v3227 = vlaneseq
      %v3228 = vshrl.u32 %v3227, 7
      %v3229 = vsub.s32 0, %v3228
      %v3230 = vrot.slane %v3205, %v3229
      %v3232 = vadd.f32 %v3225, %v3230
      %v3233 = vld [vmem:[%s15] sm:$0xff]
      %v3234 = vld [vmem:[%s15 + $0x8] sm:$0xff]
      %v3235 = vld [vmem:[%s15 + $0x10] sm:$0xff]
      %v3236 = vld [vmem:[%s15 + $0x18] sm:$0xff]
      %v3237 = vld [vmem:[%s16] sm:$0x1]
      %v3239 = vlaneseq
      %v3240 = vshrl.u32 %v3239, 7
      %v3241 = vsub.s32 0, %v3240
      %v3242 = vrot.slane %v3237, %v3241
      %v3245 = vsel %vm587, %v3232, 0
      %3247 = vmatprep.subr.mxu0 0.0
      %3248 = vmatpush1.msra.mxu0 %v3233
      %3249 = vmatprep.subr.mxu0 0.0
      %3250 = vmatpush1.msra.mxu0 %v3234
      %3251 = vmatprep.subr.mxu0 0.0
      %3252 = vmatpush1.msra.mxu0 %v3235
      %3253 = vmatprep.subr.mxu0 0.0
      %3254 = vmatpush1.msra.mxu0 %v3236
      %3255 = vmatprep.subr.mxu0 0.0
      %3256 = vmatpush1.msra.mxu0 0.0
      %3257 = vmatprep.subr.mxu0 0.0
      %3258 = vmatpush1.msra.mxu0 0.0
      %3259 = vmatprep.subr.mxu0 0.0
      %3260 = vmatpush1.msra.mxu0 0.0
      %3261 = vmatprep.subr.mxu0 0.0
      %3262 = vmatpush1.msra.mxu0 0.0
      %3263 = vmatprep.subr.mxu0 0.0
      %3264 = vmatpush1.msra.mxu0 0.0
      %3265 = vmatprep.subr.mxu0 0.0
      %3266 = vmatpush1.msra.mxu0 0.0
      %3267 = vmatprep.subr.mxu0 0.0
      %3268 = vmatpush1.msra.mxu0 0.0
      %3269 = vmatprep.subr.mxu0 0.0
      %3270 = vmatpush1.msra.mxu0 0.0
      %3271 = vmatprep.subr.mxu0 0.0
      %3272 = vmatpush1.msra.mxu0 0.0
      %3273 = vmatprep.subr.mxu0 0.0
      %3274 = vmatpush1.msra.mxu0 0.0
      %3275 = vmatprep.subr.mxu0 0.0
      %3276 = vmatpush1.msra.mxu0 0.0
      %3277 = vmatprep.subr.mxu0 0.0
      %3278 = vmatpush1.msra.mxu0 0.0
      %3279 = vmatprep.subr.mxu0 0.0
      %3280 = vmatpush1.msra.mxu0 0.0
      %3281 = vmatprep.subr.mxu0 0.0
      %3282 = vmatpush1.msra.mxu0 0.0
      %3283 = vmatprep.subr.mxu0 0.0
      %3284 = vmatpush1.msra.mxu0 0.0
      %3285 = vmatprep.subr.mxu0 0.0
      %3286 = vmatpush1.msra.mxu0 0.0
      %3287 = vmatprep.subr.mxu0 0.0
      %3288 = vmatpush1.msra.mxu0 0.0
      %3289 = vmatprep.subr.mxu0 0.0
      %3290 = vmatpush1.msra.mxu0 0.0
      %3291 = vmatprep.subr.mxu0 0.0
      %3292 = vmatpush1.msra.mxu0 0.0
      %3293 = vmatprep.subr.mxu0 0.0
      %3294 = vmatpush1.msra.mxu0 0.0
      %3295 = vmatprep.subr.mxu0 0.0
      %3296 = vmatpush1.msra.mxu0 0.0
      %3297 = vmatprep.subr.mxu0 0.0
      %3298 = vmatpush1.msra.mxu0 0.0
      %3299 = vmatprep.subr.mxu0 0.0
      %3300 = vmatpush1.msra.mxu0 0.0
      %3301 = vmatprep.subr.mxu0 0.0
      %3302 = vmatpush1.msra.mxu0 0.0
      %3303 = vmatprep.subr.mxu0 0.0
      %3304 = vmatpush1.msra.mxu0 0.0
      %3305 = vmatprep.subr.mxu0 0.0
      %3306 = vmatpush1.msra.mxu0 0.0
      %3307 = vmatprep.subr.mxu0 0.0
      %3308 = vmatpush1.msra.mxu0 0.0
      %3309 = vmatprep.subr.mxu0 0.0
      %3310 = vmatpush1.msra.mxu0 0.0
      %3311 = vmatprep.mubr.f32.mxu0 0.0
      %3312 = vmatmul.mubr.f32.gmra.mrb[0].mxu0 %v3245
      %v3313 = vpop.f32.mrb[0].mxu0
      %v3314 = vadd.f32 %v3242, %v3313
      %v3315 = vpop.f32.mrb[0].mxu0
      %3316 = vdwg.mxu0
      %3317 = vst.msk [vmem:[%s543] sm:$0x1f] %vm547, %v3314
      %p3318 = scmp.lt.s32.totalorder %s28, 1
      %s3319 = scalar_select %p3318, %s28, 1
      %s3320 = smul.addr %s3319, 8
      %s3321 = scalar_lea.vmem %s17, %s3320
      // Predicated region
      $region89: #{mae_forward.5} parent=87 // pred_check
        %p3322 = pneg %p408
      $region90: #{mae_forward.5} parent=87 // pred_check_branch
        %3324 = sbr.rel (%p3322) target = $region92
      $region91: #{mae_forward.5} parent=87 // pred_region
        _
      $region92: #{mae_forward.5} parent=87 // pred_fallthru
        _
    $region88: #{mae_forward.5} parent=5 // pred_fallthru
      _
    %p3325 = scmp.le.s32.totalorder 2, %s23
    // Predicated region
    $region93: #{mae_forward.5} parent=5 // pred_check
      %p3326 = pneg %p3325
    $region94: #{mae_forward.5} parent=5 // pred_check_branch
      %3328 = sbr.rel (%p3326) target = $region96
    $region95: #{mae_forward.5} parent=5 // pred_region
      %s3329 = ssub.s32 %s23, 2
      // Predicated region
      $region97: #{mae_forward.5} parent=95 // pred_check
        %p3330 = pneg %p414
      $region98: #{mae_forward.5} parent=95 // pred_check_branch
        %3332 = sbr.rel (%p3330) target = $region100
      $region99: #{mae_forward.5} parent=95 // pred_region
        %p3333 = scmp.lt.s32.totalorder %s29, 1
        %s3334 = scalar_select %p3333, %s29, 1
        %s3335 = smul.addr %s3334, 8
        %s3336 = scalar_lea.vmem %s17, %s3335
      $region100: #{mae_forward.5} parent=95 // pred_fallthru
        _
    $region96: #{mae_forward.5} parent=5 // pred_fallthru
      _
  $region6: #{mae_forward.5} parent=0 // loop_footer
    %s27 = sadd.s32 1, %s23
  $region7: #{mae_forward.5} parent=0 // loop_footer_branch
    %22 = sbr.rel target = $region3
  $region8: #{mae_forward.5} parent=0 // loop_exit
    _

// kernel: mae_forward.6
$region0: #{mae_forward.6}
  #allocation0 [shape = 'u32[]', space=smem, size = 0x4, offset = 0x4, fixed_abs, tag = 'smem constant byte address 0x4 - core index']
  #allocation1 [shape = 'u32[144,128]{1,0:T(1,128)}', space=vmem, size = 0x12000, scoped, tag = 'internal scratch']
  %s0 = inlined_call_operand.vmem [shape: f32[2,17,32], index: 0, kind: input, shape index: {}]
  %s1 = inlined_call_operand.vmem [shape: f32[1,1,32], index: 1, kind: input, shape index: {}]
  %s2 = inlined_call_operand.vmem [shape: f32[1,1,32], index: 2, kind: input, shape index: {}]
  %s3 = inlined_call_operand.vmem [shape: f32[1,32,96], index: 3, kind: input, shape index: {}]
  %s4 = inlined_call_operand.vmem [shape: f32[1,1,96], index: 4, kind: input, shape index: {}]
  %s5 = inlined_call_operand.vmem [shape: f32[1,32,32], index: 5, kind: input, shape index: {}]
  %s6 = inlined_call_operand.vmem [shape: f32[1,1,32], index: 6, kind: input, shape index: {}]
  %s7 = inlined_call_operand.vmem [shape: f32[1,1,32], index: 7, kind: input, shape index: {}]
  %s8 = inlined_call_operand.vmem [shape: f32[1,1,32], index: 8, kind: input, shape index: {}]
  %s9 = inlined_call_operand.vmem [shape: f32[1,32,128], index: 9, kind: input, shape index: {}]
  %s10 = inlined_call_operand.vmem [shape: f32[1,1,128], index: 10, kind: input, shape index: {}]
  %s11 = inlined_call_operand.vmem [shape: f32[1,128,32], index: 11, kind: input, shape index: {}]
  %s12 = inlined_call_operand.vmem [shape: f32[1,1,32], index: 12, kind: input, shape index: {}]
  %s13 = inlined_call_operand.vmem [shape: f32[1,32], index: 13, kind: input, shape index: {}]
  %s14 = inlined_call_operand.vmem [shape: f32[1,32], index: 14, kind: input, shape index: {}]
  %s15 = inlined_call_operand.vmem [shape: f32[32,48], index: 15, kind: input, shape index: {}]
  %s16 = inlined_call_operand.vmem [shape: f32[1,48], index: 16, kind: input, shape index: {}]
  %s17 = inlined_call_operand.vmem [shape: f32[2,17,48], index: 17, kind: output, shape index: {}]
  %s18 = sld [smem:[#allocation0]]
  $region101: #{mae_forward.6} parent=0
    _
  %s20 = ssub.s32 1, %s18
  %s21 = scalar_select 0, %s20, %s18
  loop: start=0, step=1, limit=4
  $region2: #{mae_forward.6} parent=0 // loop_pre_header
    _
  $region3: #{mae_forward.6} parent=0 // loop_header
    %s23 = sphi 0, %s27
    %p24 = scmp.ge.s32.totalorder %s23, 4
    %s33 = sphi 0, %s35
    %s36 = sphi 0, %s33
    %s37 = sphi 0, %s36
    %s53 = sphi 0, %s37
    %s57 = sphi 0, %s57
    %s59 = sphi 0, %s57
    %s60 = sphi 0, %s59
    %s74 = sphi 0, %s60
    %s78 = sphi 0, %s78
    %s80 = sphi 0, %s78
    %s81 = sphi 0, %s80
    %s95 = sphi 0, %s81
    %s99 = sphi 0, %s99
    %s101 = sphi 0, %s99
    %s102 = sphi 0, %s101
    %s116 = sphi 0, %s102
    %s120 = sphi 0, %s120
    %s122 = sphi 0, %s120
    %s123 = sphi 0, %s122
    %s137 = sphi 0, %s123
    %s141 = sphi 0, %s141
    %s143 = sphi 0, %s141
    %s144 = sphi 0, %s143
    %s158 = sphi 0, %s144
    %s162 = sphi 0, %s162
    %s164 = sphi 0, %s162
    %s165 = sphi 0, %s164
    %s179 = sphi 0, %s165
    %s183 = sphi 0, %s183
    %s185 = sphi 0, %s183
    %s186 = sphi 0, %s185
    %s200 = sphi 0, %s186
    %s204 = sphi 0, %s204
    %s206 = sphi 0, %s204
    %s207 = sphi 0, %s206
    %s221 = sphi 0, %s207
    %s225 = sphi 0, %s225
    %s227 = sphi 0, %s225
    %s228 = sphi 0, %s227
    %s242 = sphi 0, %s228
    %s246 = sphi 0, %s246
    %s248 = sphi 0, %s246
    %s249 = sphi 0, %s248
    %s263 = sphi 0, %s249
    %s267 = sphi 0, %s267
    %s269 = sphi 0, %s267
    %s270 = sphi 0, %s269
    %s284 = sphi 0, %s270
    %s288 = sphi 0, %s288
    %s290 = sphi 0, %s288
    %s291 = sphi 0, %s290
    %s305 = sphi 0, %s291
    %s309 = sphi 0, %s309
    %s311 = sphi 0, %s309
    %s312 = sphi 0, %s311
    %s326 = sphi 0, %s312
    %s330 = sphi 0, %s330
    %s332 = sphi 0, %s330
    %s333 = sphi 0, %s332
    %s347 = sphi 0, %s333
    %s351 = sphi 0, %s351
    %s353 = sphi 0, %s351
    %s354 = sphi 0, %s353
    %s368 = sphi 0, %s354
    %s372 = sphi 0, %s372
    %s374 = sphi 0, %s372
    %s375 = sphi 0, %s374
    %s389 = sphi 0, %s375
    %s395 = sphi 0, %s397
    %s398 = sphi 0, %s395
    %s399 = sphi 0, %s398
    %s415 = sphi 0, %s399
  $region4: #{mae_forward.6} parent=0 // loop_header_branch
    %26 = sbr.rel (%p24) target = $region8
  $region5: #{mae_forward.6} parent=0 // loop_body
    %s28 = ssub.s32 %s23, 1
    %s29 = ssub.s32 %s23, 2
    %s30 = sadd.s32 %s23, 1
    %s31 = ssub.s32 %s23, %s30
    %p32 = scmp.eq.s32.totalorder %s31, 0
    %s34 = sadd.s32 %s33, 1
    %s35 = scalar_select %p32, %s33, %s34
    %p38 = pneg %p32
    %p39 = scmp.eq.s32.totalorder %s23, 1
    %p40 = por %p38, %p39
    %p41 = scmp.ne.s32.totalorder %s33, %s36
    %p42 = scmp.eq.s32.totalorder %s23, 0
    %p43 = por %p41, %p42
    %p44 = scmp.ne.s32.totalorder %s33, %s36
    %p45 = scmp.eq.s32.totalorder %s28, 1
    %p46 = por %p44, %p45
    %p47 = scmp.ne.s32.totalorder %s36, %s37
    %p48 = scmp.eq.s32.totalorder %s28, 0
    %p49 = por %p47, %p48
    %p50 = scmp.ne.s32.totalorder %s36, %s37
    %p51 = scmp.eq.s32.totalorder %s29, 1
    %p52 = por %p50, %p51
    %p54 = scmp.ne.s32.totalorder %s37, %s53
    %p55 = scmp.eq.s32.totalorder %s29, 0
    %p56 = por %p54, %p55
    %s58 = sadd.s32 %s57, 1
    %p61 = scmp.eq.s32.totalorder %s23, 1
    %p62 = scmp.ne.s32.totalorder %s57, %s59
    %p63 = scmp.eq.s32.totalorder %s23, 0
    %p64 = por %p62, %p63
    %p65 = scmp.ne.s32.totalorder %s57, %s59
    %p66 = scmp.eq.s32.totalorder %s28, 1
    %p67 = por %p65, %p66
    %p68 = scmp.ne.s32.totalorder %s59, %s60
    %p69 = scmp.eq.s32.totalorder %s28, 0
    %p70 = por %p68, %p69
    %p71 = scmp.ne.s32.totalorder %s59, %s60
    %p72 = scmp.eq.s32.totalorder %s29, 1
    %p73 = por %p71, %p72
    %p75 = scmp.ne.s32.totalorder %s60, %s74
    %p76 = scmp.eq.s32.totalorder %s29, 0
    %p77 = por %p75, %p76
    %s79 = sadd.s32 %s78, 1
    %p82 = scmp.eq.s32.totalorder %s23, 1
    %p83 = scmp.ne.s32.totalorder %s78, %s80
    %p84 = scmp.eq.s32.totalorder %s23, 0
    %p85 = por %p83, %p84
    %p86 = scmp.ne.s32.totalorder %s78, %s80
    %p87 = scmp.eq.s32.totalorder %s28, 1
    %p88 = por %p86, %p87
    %p89 = scmp.ne.s32.totalorder %s80, %s81
    %p90 = scmp.eq.s32.totalorder %s28, 0
    %p91 = por %p89, %p90
    %p92 = scmp.ne.s32.totalorder %s80, %s81
    %p93 = scmp.eq.s32.totalorder %s29, 1
    %p94 = por %p92, %p93
    %p96 = scmp.ne.s32.totalorder %s81, %s95
    %p97 = scmp.eq.s32.totalorder %s29, 0
    %p98 = por %p96, %p97
    %s100 = sadd.s32 %s99, 1
    %p103 = scmp.eq.s32.totalorder %s23, 1
    %p104 = scmp.ne.s32.totalorder %s99, %s101
    %p105 = scmp.eq.s32.totalorder %s23, 0
    %p106 = por %p104, %p105
    %p107 = scmp.ne.s32.totalorder %s99, %s101
    %p108 = scmp.eq.s32.totalorder %s28, 1
    %p109 = por %p107, %p108
    %p110 = scmp.ne.s32.totalorder %s101, %s102
    %p111 = scmp.eq.s32.totalorder %s28, 0
    %p112 = por %p110, %p111
    %p113 = scmp.ne.s32.totalorder %s101, %s102
    %p114 = scmp.eq.s32.totalorder %s29, 1
    %p115 = por %p113, %p114
    %p117 = scmp.ne.s32.totalorder %s102, %s116
    %p118 = scmp.eq.s32.totalorder %s29, 0
    %p119 = por %p117, %p118
    %s121 = sadd.s32 %s120, 1
    %p124 = scmp.eq.s32.totalorder %s23, 1
    %p125 = scmp.ne.s32.totalorder %s120, %s122
    %p126 = scmp.eq.s32.totalorder %s23, 0
    %p127 = por %p125, %p126
    %p128 = scmp.ne.s32.totalorder %s120, %s122
    %p129 = scmp.eq.s32.totalorder %s28, 1
    %p130 = por %p128, %p129
    %p131 = scmp.ne.s32.totalorder %s122, %s123
    %p132 = scmp.eq.s32.totalorder %s28, 0
    %p133 = por %p131, %p132
    %p134 = scmp.ne.s32.totalorder %s122, %s123
    %p135 = scmp.eq.s32.totalorder %s29, 1
    %p136 = por %p134, %p135
    %p138 = scmp.ne.s32.totalorder %s123, %s137
    %p139 = scmp.eq.s32.totalorder %s29, 0
    %p140 = por %p138, %p139
    %s142 = sadd.s32 %s141, 1
    %p145 = scmp.eq.s32.totalorder %s23, 1
    %p146 = scmp.ne.s32.totalorder %s141, %s143
    %p147 = scmp.eq.s32.totalorder %s23, 0
    %p148 = por %p146, %p147
    %p149 = scmp.ne.s32.totalorder %s141, %s143
    %p150 = scmp.eq.s32.totalorder %s28, 1
    %p151 = por %p149, %p150
    %p152 = scmp.ne.s32.totalorder %s143, %s144
    %p153 = scmp.eq.s32.totalorder %s28, 0
    %p154 = por %p152, %p153
    %p155 = scmp.ne.s32.totalorder %s143, %s144
    %p156 = scmp.eq.s32.totalorder %s29, 1
    %p157 = por %p155, %p156
    %p159 = scmp.ne.s32.totalorder %s144, %s158
    %p160 = scmp.eq.s32.totalorder %s29, 0
    %p161 = por %p159, %p160
    %s163 = sadd.s32 %s162, 1
    %p166 = scmp.eq.s32.totalorder %s23, 1
    %p167 = scmp.ne.s32.totalorder %s162, %s164
    %p168 = scmp.eq.s32.totalorder %s23, 0
    %p169 = por %p167, %p168
    %p170 = scmp.ne.s32.totalorder %s162, %s164
    %p171 = scmp.eq.s32.totalorder %s28, 1
    %p172 = por %p170, %p171
    %p173 = scmp.ne.s32.totalorder %s164, %s165
    %p174 = scmp.eq.s32.totalorder %s28, 0
    %p175 = por %p173, %p174
    %p176 = scmp.ne.s32.totalorder %s164, %s165
    %p177 = scmp.eq.s32.totalorder %s29, 1
    %p178 = por %p176, %p177
    %p180 = scmp.ne.s32.totalorder %s165, %s179
    %p181 = scmp.eq.s32.totalorder %s29, 0
    %p182 = por %p180, %p181
    %s184 = sadd.s32 %s183, 1
    %p187 = scmp.eq.s32.totalorder %s23, 1
    %p188 = scmp.ne.s32.totalorder %s183, %s185
    %p189 = scmp.eq.s32.totalorder %s23, 0
    %p190 = por %p188, %p189
    %p191 = scmp.ne.s32.totalorder %s183, %s185
    %p192 = scmp.eq.s32.totalorder %s28, 1
    %p193 = por %p191, %p192
    %p194 = scmp.ne.s32.totalorder %s185, %s186
    %p195 = scmp.eq.s32.totalorder %s28, 0
    %p196 = por %p194, %p195
    %p197 = scmp.ne.s32.totalorder %s185, %s186
    %p198 = scmp.eq.s32.totalorder %s29, 1
    %p199 = por %p197, %p198
    %p201 = scmp.ne.s32.totalorder %s186, %s200
    %p202 = scmp.eq.s32.totalorder %s29, 0
    %p203 = por %p201, %p202
    %s205 = sadd.s32 %s204, 1
    %p208 = scmp.eq.s32.totalorder %s23, 1
    %p209 = scmp.ne.s32.totalorder %s204, %s206
    %p210 = scmp.eq.s32.totalorder %s23, 0
    %p211 = por %p209, %p210
    %p212 = scmp.ne.s32.totalorder %s204, %s206
    %p213 = scmp.eq.s32.totalorder %s28, 1
    %p214 = por %p212, %p213
    %p215 = scmp.ne.s32.totalorder %s206, %s207
    %p216 = scmp.eq.s32.totalorder %s28, 0
    %p217 = por %p215, %p216
    %p218 = scmp.ne.s32.totalorder %s206, %s207
    %p219 = scmp.eq.s32.totalorder %s29, 1
    %p220 = por %p218, %p219
    %p222 = scmp.ne.s32.totalorder %s207, %s221
    %p223 = scmp.eq.s32.totalorder %s29, 0
    %p224 = por %p222, %p223
    %s226 = sadd.s32 %s225, 1
    %p229 = scmp.eq.s32.totalorder %s23, 1
    %p230 = scmp.ne.s32.totalorder %s225, %s227
    %p231 = scmp.eq.s32.totalorder %s23, 0
    %p232 = por %p230, %p231
    %p233 = scmp.ne.s32.totalorder %s225, %s227
    %p234 = scmp.eq.s32.totalorder %s28, 1
    %p235 = por %p233, %p234
    %p236 = scmp.ne.s32.totalorder %s227, %s228
    %p237 = scmp.eq.s32.totalorder %s28, 0
    %p238 = por %p236, %p237
    %p239 = scmp.ne.s32.totalorder %s227, %s228
    %p240 = scmp.eq.s32.totalorder %s29, 1
    %p241 = por %p239, %p240
    %p243 = scmp.ne.s32.totalorder %s228, %s242
    %p244 = scmp.eq.s32.totalorder %s29, 0
    %p245 = por %p243, %p244
    %s247 = sadd.s32 %s246, 1
    %p250 = scmp.eq.s32.totalorder %s23, 1
    %p251 = scmp.ne.s32.totalorder %s246, %s248
    %p252 = scmp.eq.s32.totalorder %s23, 0
    %p253 = por %p251, %p252
    %p254 = scmp.ne.s32.totalorder %s246, %s248
    %p255 = scmp.eq.s32.totalorder %s28, 1
    %p256 = por %p254, %p255
    %p257 = scmp.ne.s32.totalorder %s248, %s249
    %p258 = scmp.eq.s32.totalorder %s28, 0
    %p259 = por %p257, %p258
    %p260 = scmp.ne.s32.totalorder %s248, %s249
    %p261 = scmp.eq.s32.totalorder %s29, 1
    %p262 = por %p260, %p261
    %p264 = scmp.ne.s32.totalorder %s249, %s263
    %p265 = scmp.eq.s32.totalorder %s29, 0
    %p266 = por %p264, %p265
    %s268 = sadd.s32 %s267, 1
    %p271 = scmp.eq.s32.totalorder %s23, 1
    %p272 = scmp.ne.s32.totalorder %s267, %s269
    %p273 = scmp.eq.s32.totalorder %s23, 0
    %p274 = por %p272, %p273
    %p275 = scmp.ne.s32.totalorder %s267, %s269
    %p276 = scmp.eq.s32.totalorder %s28, 1
    %p277 = por %p275, %p276
    %p278 = scmp.ne.s32.totalorder %s269, %s270
    %p279 = scmp.eq.s32.totalorder %s28, 0
    %p280 = por %p278, %p279
    %p281 = scmp.ne.s32.totalorder %s269, %s270
    %p282 = scmp.eq.s32.totalorder %s29, 1
    %p283 = por %p281, %p282
    %p285 = scmp.ne.s32.totalorder %s270, %s284
    %p286 = scmp.eq.s32.totalorder %s29, 0
    %p287 = por %p285, %p286
    %s289 = sadd.s32 %s288, 1
    %p292 = scmp.eq.s32.totalorder %s23, 1
    %p293 = scmp.ne.s32.totalorder %s288, %s290
    %p294 = scmp.eq.s32.totalorder %s23, 0
    %p295 = por %p293, %p294
    %p296 = scmp.ne.s32.totalorder %s288, %s290
    %p297 = scmp.eq.s32.totalorder %s28, 1
    %p298 = por %p296, %p297
    %p299 = scmp.ne.s32.totalorder %s290, %s291
    %p300 = scmp.eq.s32.totalorder %s28, 0
    %p301 = por %p299, %p300
    %p302 = scmp.ne.s32.totalorder %s290, %s291
    %p303 = scmp.eq.s32.totalorder %s29, 1
    %p304 = por %p302, %p303
    %p306 = scmp.ne.s32.totalorder %s291, %s305
    %p307 = scmp.eq.s32.totalorder %s29, 0
    %p308 = por %p306, %p307
    %s310 = sadd.s32 %s309, 1
    %p313 = scmp.eq.s32.totalorder %s23, 1
    %p314 = scmp.ne.s32.totalorder %s309, %s311
    %p315 = scmp.eq.s32.totalorder %s23, 0
    %p316 = por %p314, %p315
    %p317 = scmp.ne.s32.totalorder %s309, %s311
    %p318 = scmp.eq.s32.totalorder %s28, 1
    %p319 = por %p317, %p318
    %p320 = scmp.ne.s32.totalorder %s311, %s312
    %p321 = scmp.eq.s32.totalorder %s28, 0
    %p322 = por %p320, %p321
    %p323 = scmp.ne.s32.totalorder %s311, %s312
    %p324 = scmp.eq.s32.totalorder %s29, 1
    %p325 = por %p323, %p324
    %p327 = scmp.ne.s32.totalorder %s312, %s326
    %p328 = scmp.eq.s32.totalorder %s29, 0
    %p329 = por %p327, %p328
    %s331 = sadd.s32 %s330, 1
    %p334 = scmp.eq.s32.totalorder %s23, 1
    %p335 = scmp.ne.s32.totalorder %s330, %s332
    %p336 = scmp.eq.s32.totalorder %s23, 0
    %p337 = por %p335, %p336
    %p338 = scmp.ne.s32.totalorder %s330, %s332
    %p339 = scmp.eq.s32.totalorder %s28, 1
    %p340 = por %p338, %p339
    %p341 = scmp.ne.s32.totalorder %s332, %s333
    %p342 = scmp.eq.s32.totalorder %s28, 0
    %p343 = por %p341, %p342
    %p344 = scmp.ne.s32.totalorder %s332, %s333
    %p345 = scmp.eq.s32.totalorder %s29, 1
    %p346 = por %p344, %p345
    %p348 = scmp.ne.s32.totalorder %s333, %s347
    %p349 = scmp.eq.s32.totalorder %s29, 0
    %p350 = por %p348, %p349
    %s352 = sadd.s32 %s351, 1
    %p355 = scmp.eq.s32.totalorder %s23, 1
    %p356 = scmp.ne.s32.totalorder %s351, %s353
    %p357 = scmp.eq.s32.totalorder %s23, 0
    %p358 = por %p356, %p357
    %p359 = scmp.ne.s32.totalorder %s351, %s353
    %p360 = scmp.eq.s32.totalorder %s28, 1
    %p361 = por %p359, %p360
    %p362 = scmp.ne.s32.totalorder %s353, %s354
    %p363 = scmp.eq.s32.totalorder %s28, 0
    %p364 = por %p362, %p363
    %p365 = scmp.ne.s32.totalorder %s353, %s354
    %p366 = scmp.eq.s32.totalorder %s29, 1
    %p367 = por %p365, %p366
    %p369 = scmp.ne.s32.totalorder %s354, %s368
    %p370 = scmp.eq.s32.totalorder %s29, 0
    %p371 = por %p369, %p370
    %s373 = sadd.s32 %s372, 1
    %p376 = scmp.eq.s32.totalorder %s23, 1
    %p377 = scmp.ne.s32.totalorder %s372, %s374
    %p378 = scmp.eq.s32.totalorder %s23, 0
    %p379 = por %p377, %p378
    %p380 = scmp.ne.s32.totalorder %s372, %s374
    %p381 = scmp.eq.s32.totalorder %s28, 1
    %p382 = por %p380, %p381
    %p383 = scmp.ne.s32.totalorder %s374, %s375
    %p384 = scmp.eq.s32.totalorder %s28, 0
    %p385 = por %p383, %p384
    %p386 = scmp.ne.s32.totalorder %s374, %s375
    %p387 = scmp.eq.s32.totalorder %s29, 1
    %p388 = por %p386, %p387
    %p390 = scmp.ne.s32.totalorder %s375, %s389
    %p391 = scmp.eq.s32.totalorder %s29, 0
    %p392 = por %p390, %p391
    %s393 = ssub.s32 %s23, %s30
    %p394 = scmp.eq.s32.totalorder %s393, 0
    %s396 = sadd.s32 %s395, 1
    %s397 = scalar_select %p394, %s395, %s396
    %p400 = pneg %p394
    %p401 = scmp.eq.s32.totalorder %s23, 1
    %p402 = por %p400, %p401
    %p403 = scmp.ne.s32.totalorder %s395, %s398
    %p404 = scmp.eq.s32.totalorder %s23, 0
    %p405 = por %p403, %p404
    %p406 = scmp.ne.s32.totalorder %s395, %s398
    %p407 = scmp.eq.s32.totalorder %s28, 1
    %p408 = por %p406, %p407
    %p409 = scmp.ne.s32.totalorder %s398, %s399
    %p410 = scmp.eq.s32.totalorder %s28, 0
    %p411 = por %p409, %p410
    %p412 = scmp.ne.s32.totalorder %s398, %s399
    %p413 = scmp.eq.s32.totalorder %s29, 1
    %p414 = por %p412, %p413
    %p416 = scmp.ne.s32.totalorder %s399, %s415
    %p417 = scmp.eq.s32.totalorder %s29, 0
    %p418 = por %p416, %p417
    %p419 = scmp.le.s32.totalorder 1, %s23
    %p420 = scmp.lt.s32.totalorder %s23, 3
    %p421 = pnand %p419, %p420
    %p422 = pneg %p421
    // Predicated region
    $region9: #{mae_forward.6} parent=5 // pred_check
      _
    $region10: #{mae_forward.6} parent=5 // pred_check_branch
      %424 = sbr.rel (%p421) target = $region12
    $region11: #{mae_forward.6} parent=5 // pred_region
      %s425 = ssub.s32 %s23, 1
      // Predicated region
      $region13: #{mae_forward.6} parent=11 // pred_check
        %p426 = pneg %p70
      $region14: #{mae_forward.6} parent=11 // pred_check_branch
        %428 = sbr.rel (%p426) target = $region16
      $region15: #{mae_forward.6} parent=11 // pred_region
        _
      $region16: #{mae_forward.6} parent=11 // pred_fallthru
        _
      // Predicated region
      $region17: #{mae_forward.6} parent=11 // pred_check
        %p429 = pneg %p91
      $region18: #{mae_forward.6} parent=11 // pred_check_branch
        %431 = sbr.rel (%p429) target = $region20
      $region19: #{mae_forward.6} parent=11 // pred_region
        _
      $region20: #{mae_forward.6} parent=11 // pred_fallthru
        _
      // Predicated region
      $region21: #{mae_forward.6} parent=11 // pred_check
        %p432 = pneg %p112
      $region22: #{mae_forward.6} parent=11 // pred_check_branch
        %434 = sbr.rel (%p432) target = $region24
      $region23: #{mae_forward.6} parent=11 // pred_region
        _
      $region24: #{mae_forward.6} parent=11 // pred_fallthru
        _
      // Predicated region
      $region25: #{mae_forward.6} parent=11 // pred_check
        %p435 = pneg %p133
      $region26: #{mae_forward.6} parent=11 // pred_check_branch
        %437 = sbr.rel (%p435) target = $region28
      $region27: #{mae_forward.6} parent=11 // pred_region
        _
      $region28: #{mae_forward.6} parent=11 // pred_fallthru
        _
      // Predicated region
      $region29: #{mae_forward.6} parent=11 // pred_check
        %p438 = pneg %p154
      $region30: #{mae_forward.6} parent=11 // pred_check_branch
        %440 = sbr.rel (%p438) target = $region32
      $region31: #{mae_forward.6} parent=11 // pred_region
        _
      $region32: #{mae_forward.6} parent=11 // pred_fallthru
        _
      // Predicated region
      $region33: #{mae_forward.6} parent=11 // pred_check
        %p441 = pneg %p175
      $region34: #{mae_forward.6} parent=11 // pred_check_branch
        %443 = sbr.rel (%p441) target = $region36
      $region35: #{mae_forward.6} parent=11 // pred_region
        _
      $region36: #{mae_forward.6} parent=11 // pred_fallthru
        _
      // Predicated region
      $region37: #{mae_forward.6} parent=11 // pred_check
        %p444 = pneg %p196
      $region38: #{mae_forward.6} parent=11 // pred_check_branch
        %446 = sbr.rel (%p444) target = $region40
      $region39: #{mae_forward.6} parent=11 // pred_region
        _
      $region40: #{mae_forward.6} parent=11 // pred_fallthru
        _
      // Predicated region
      $region41: #{mae_forward.6} parent=11 // pred_check
        %p447 = pneg %p217
      $region42: #{mae_forward.6} parent=11 // pred_check_branch
        %449 = sbr.rel (%p447) target = $region44
      $region43: #{mae_forward.6} parent=11 // pred_region
        _
      $region44: #{mae_forward.6} parent=11 // pred_fallthru
        _
      // Predicated region
      $region45: #{mae_forward.6} parent=11 // pred_check
        %p450 = pneg %p238
      $region46: #{mae_forward.6} parent=11 // pred_check_branch
        %452 = sbr.rel (%p450) target = $region48
      $region47: #{mae_forward.6} parent=11 // pred_region
        _
      $region48: #{mae_forward.6} parent=11 // pred_fallthru
        _
      // Predicated region
      $region49: #{mae_forward.6} parent=11 // pred_check
        %p453 = pneg %p259
      $region50: #{mae_forward.6} parent=11 // pred_check_branch
        %455 = sbr.rel (%p453) target = $region52
      $region51: #{mae_forward.6} parent=11 // pred_region
        _
      $region52: #{mae_forward.6} parent=11 // pred_fallthru
        _
      // Predicated region
      $region53: #{mae_forward.6} parent=11 // pred_check
        %p456 = pneg %p280
      $region54: #{mae_forward.6} parent=11 // pred_check_branch
        %458 = sbr.rel (%p456) target = $region56
      $region55: #{mae_forward.6} parent=11 // pred_region
        _
      $region56: #{mae_forward.6} parent=11 // pred_fallthru
        _
      // Predicated region
      $region57: #{mae_forward.6} parent=11 // pred_check
        %p459 = pneg %p301
      $region58: #{mae_forward.6} parent=11 // pred_check_branch
        %461 = sbr.rel (%p459) target = $region60
      $region59: #{mae_forward.6} parent=11 // pred_region
        _
      $region60: #{mae_forward.6} parent=11 // pred_fallthru
        _
      // Predicated region
      $region61: #{mae_forward.6} parent=11 // pred_check
        %p462 = pneg %p322
      $region62: #{mae_forward.6} parent=11 // pred_check_branch
        %464 = sbr.rel (%p462) target = $region64
      $region63: #{mae_forward.6} parent=11 // pred_region
        _
      $region64: #{mae_forward.6} parent=11 // pred_fallthru
        _
      // Predicated region
      $region65: #{mae_forward.6} parent=11 // pred_check
        %p465 = pneg %p343
      $region66: #{mae_forward.6} parent=11 // pred_check_branch
        %467 = sbr.rel (%p465) target = $region68
      $region67: #{mae_forward.6} parent=11 // pred_region
        _
      $region68: #{mae_forward.6} parent=11 // pred_fallthru
        _
      // Predicated region
      $region69: #{mae_forward.6} parent=11 // pred_check
        %p468 = pneg %p364
      $region70: #{mae_forward.6} parent=11 // pred_check_branch
        %470 = sbr.rel (%p468) target = $region72
      $region71: #{mae_forward.6} parent=11 // pred_region
        _
      $region72: #{mae_forward.6} parent=11 // pred_fallthru
        _
      // Predicated region
      $region73: #{mae_forward.6} parent=11 // pred_check
        %p471 = pneg %p385
      $region74: #{mae_forward.6} parent=11 // pred_check_branch
        %473 = sbr.rel (%p471) target = $region76
      $region75: #{mae_forward.6} parent=11 // pred_region
        _
      $region76: #{mae_forward.6} parent=11 // pred_fallthru
        _
    $region12: #{mae_forward.6} parent=5 // pred_fallthru
      _
    %p474 = scmp.lt.s32.totalorder %s23, 2
    // Predicated region
    $region77: #{mae_forward.6} parent=5 // pred_check
      %p475 = pneg %p474
    $region78: #{mae_forward.6} parent=5 // pred_check_branch
      %477 = sbr.rel (%p475) target = $region80
    $region79: #{mae_forward.6} parent=5 // pred_region
      // Predicated region
      $region81: #{mae_forward.6} parent=79 // pred_check
        %p478 = pneg %p43
      $region82: #{mae_forward.6} parent=79 // pred_check_branch
        %480 = sbr.rel (%p478) target = $region84
      $region83: #{mae_forward.6} parent=79 // pred_region
        %p481 = scmp.lt.s32.totalorder %s23, 1
        %s482 = scalar_select %p481, %s23, 1
        %s483 = smul.addr %s482, 3
        %s484 = smul.addr %s483, 8
        %s485 = scalar_lea.vmem %s0, %s484
      $region84: #{mae_forward.6} parent=79 // pred_fallthru
        _
    $region80: #{mae_forward.6} parent=5 // pred_fallthru
      _
    %p486 = scmp.le.s32.totalorder 1, %s23
    %p487 = scmp.lt.s32.totalorder %s23, 3
    %p488 = pnand %p486, %p487
    %p489 = pneg %p488
    // Predicated region
    $region85: #{mae_forward.6} parent=5 // pred_check
      _
    $region86: #{mae_forward.6} parent=5 // pred_check_branch
      %491 = sbr.rel (%p488) target = $region88
    $region87: #{mae_forward.6} parent=5 // pred_region
      %s492 = ssub.s32 %s23, 1
      %p493 = scmp.lt.s32.totalorder %s28, 1
      %s494 = scalar_select %p493, %s28, 1
      %s495 = smul.addr %s494, 3
      %s496 = smul.addr %s495, 8
      %s497 = scalar_lea.vmem %s0, %s496
      %p498 = pneg %p49
      %p499 = pneg %p46
      %p500 = pneg %p70
      %p501 = pneg %p67
      %p502 = pneg %p91
      %p503 = pneg %p88
      %p504 = pneg %p112
      %p505 = pneg %p109
      %p506 = pneg %p133
      %p507 = pneg %p130
      %p508 = pneg %p154
      %p509 = pneg %p151
      %p510 = pneg %p175
      %p511 = pneg %p172
      %p512 = pneg %p196
      %p513 = pneg %p193
      %p514 = pneg %p217
      %p515 = pneg %p214
      %p516 = pneg %p238
      %p517 = pneg %p235
      %p518 = pneg %p259
      %p519 = pneg %p256
      %p520 = pneg %p280
      %p521 = pneg %p277
      %p522 = pneg %p301
      %p523 = pneg %p298
      %p524 = pneg %p322
      %p525 = pneg %p319
      %p526 = pneg %p343
      %p527 = pneg %p340
      %p528 = pneg %p364
      %p529 = pneg %p361
      %p530 = pneg %p385
      %p531 = pneg %p382
      %p532 = pneg %p411
      %p533 = pneg %p408
      %p534 = scmp.lt.s32.totalorder %s28, 1
      %s535 = scalar_select %p534, %s28, 1
      %s536 = smul.addr %s535, 3
      %s537 = smul.addr %s536, 8
      %s538 = scalar_lea.vmem %s17, %s537
      %p539 = scmp.lt.s32.totalorder %s28, 1
      %s540 = scalar_select %p539, %s28, 1
      %s541 = smul.addr %s540, 3
      %s542 = smul.addr %s541, 8
      %s543 = scalar_lea.vmem %s0, %s542
      %p544 = scmp.lt.s32.totalorder %s28, 1
      %s545 = scalar_select %p544, %s28, 1
      %s546 = smul.addr %s545, 3
      %s547 = smul.addr %s546, 8
      %s548 = scalar_lea.vmem %s17, %s547
      %v549 = vld [vmem:[%s543] sm:$0xff]
      %v550 = vld [vmem:[%s543 + $0x8] sm:$0xff]
      %v551 = vld [vmem:[%s543 + $0x10] sm:$0x1]
      %v552 = vld [vmem:[%s1] sm:$0x1]
      %v553 = vld [vmem:[%s2] sm:$0x1]
      %vm554 = vcmask 261120
      %v555 = vsel %vm554, %v549, 0.0
      %556 = vadd.xlane.f32.xlu0 %v555
      %v557 = vpop.xlane.xlu0 %556
      %v558 = vsel %vm554, %v550, 0.0
      %559 = vadd.xlane.f32.xlu0 %v558
      %v560 = vpop.xlane.xlu0 %559
      %vm561 = vcmask 253952
      %v562 = vsel %vm561, %v551, 0.0
      %563 = vadd.xlane.f32.xlu0 %v562
      %v564 = vpop.xlane.xlu0 %563
      %v565 = vrcp.pop 32.0
      %v566 = vmul.f32 %v557, %v565
      %v567 = vmul.f32 %v560, %v565
      %v568 = vmul.f32 %v564, %v565
      %v569 = vsub.f32 %v549, %v566
      %v570 = vsub.f32 %v550, %v567
      %v571 = vsub.f32 %v551, %v568
      %v572 = vmul.f32 %v569, %v569
      %v573 = vmul.f32 %v570, %v570
      %v574 = vmul.f32 %v571, %v571
      %v575 = vsel %vm554, %v572, 0.0
      %576 = vadd.xlane.f32.xlu0 %v575
      %v577 = vpop.xlane.xlu0 %576
      %v578 = vsel %vm554, %v573, 0.0
      %579 = vadd.xlane.f32.xlu0 %v578
      %v580 = vpop.xlane.xlu0 %579
      %v581 = vsel %vm561, %v574, 0.0
      %582 = vadd.xlane.f32.xlu0 %v581
      %v583 = vpop.xlane.xlu0 %582
      %v584 = vmul.f32 %v577, %v565
      %v585 = vmul.f32 %v580, %v565
      %v586 = vmul.f32 %v583, %v565
      %v587 = vadd.f32 %v584, 1e-05
      %v588 = vadd.f32 %v585, 1e-05
      %v589 = vadd.f32 %v586, 1e-05
      %v590 = vrsqrt.pop %v587
      %v591 = vrsqrt.pop %v588
      %v592 = vrsqrt.pop %v589
      %v593 = vmul.f32 %v569, %v590
      %v594 = vmul.f32 %v570, %v591
      %v595 = vmul.f32 %v571, %v592
      %v597 = vlaneseq
      %v598 = vshrl.u32 %v597, 7
      %v599 = vsub.s32 0, %v598
      %v600 = vrot.slane %v552, %v599
      %v602 = vmul.f32 %v593, %v600
      %v603 = vmul.f32 %v594, %v600
      %v604 = vmul.f32 %v595, %v600
      %v606 = vlaneseq
      %v607 = vshrl.u32 %v606, 7
      %v608 = vsub.s32 0, %v607
      %v609 = vrot.slane %v553, %v608
      %v611 = vadd.f32 %v602, %v609
      %v612 = vadd.f32 %v603, %v609
      %v613 = vadd.f32 %v604, %v609
      %v614 = vld [vmem:[%s3] sm:$0xff]
      %v615 = vld [vmem:[%s3 + $0x8] sm:$0xff]
      %v616 = vld [vmem:[%s3 + $0x10] sm:$0xff]
      %v617 = vld [vmem:[%s3 + $0x18] sm:$0xff]
      %v618 = vld [vmem:[%s4] sm:$0x1]
      %v620 = vlaneseq
      %v621 = vshrl.u32 %v620, 7
      %v622 = vsub.s32 0, %v621
      %v623 = vrot.slane %v618, %v622
      %v626 = vsel %vm554, %v611, 0
      %v629 = vsel %vm554, %v612, 0
      %v632 = vsel %vm554, %v613, 0
      %634 = vmatprep.subr.mxu0 0.0
      %635 = vmatpush1.msra.mxu0 %v614
      %636 = vmatprep.subr.mxu0 0.0
      %637 = vmatpush1.msra.mxu0 %v615
      %638 = vmatprep.subr.mxu0 0.0
      %639 = vmatpush1.msra.mxu0 %v616
      %640 = vmatprep.subr.mxu0 0.0
      %641 = vmatpush1.msra.mxu0 %v617
      %642 = vmatprep.subr.mxu0 0.0
      %643 = vmatpush1.msra.mxu0 0.0
      %644 = vmatprep.subr.mxu0 0.0
      %645 = vmatpush1.msra.mxu0 0.0
      %646 = vmatprep.subr.mxu0 0.0
      %647 = vmatpush1.msra.mxu0 0.0
      %648 = vmatprep.subr.mxu0 0.0
      %649 = vmatpush1.msra.mxu0 0.0
      %650 = vmatprep.subr.mxu0 0.0
      %651 = vmatpush1.msra.mxu0 0.0
      %652 = vmatprep.subr.mxu0 0.0
      %653 = vmatpush1.msra.mxu0 0.0
      %654 = vmatprep.subr.mxu0 0.0
      %655 = vmatpush1.msra.mxu0 0.0
      %656 = vmatprep.subr.mxu0 0.0
      %657 = vmatpush1.msra.mxu0 0.0
      %658 = vmatprep.subr.mxu0 0.0
      %659 = vmatpush1.msra.mxu0 0.0
      %660 = vmatprep.subr.mxu0 0.0
      %661 = vmatpush1.msra.mxu0 0.0
      %662 = vmatprep.subr.mxu0 0.0
      %663 = vmatpush1.msra.mxu0 0.0
      %664 = vmatprep.subr.mxu0 0.0
      %665 = vmatpush1.msra.mxu0 0.0
      %666 = vmatprep.subr.mxu0 0.0
      %667 = vmatpush1.msra.mxu0 0.0
      %668 = vmatprep.subr.mxu0 0.0
      %669 = vmatpush1.msra.mxu0 0.0
      %670 = vmatprep.subr.mxu0 0.0
      %671 = vmatpush1.msra.mxu0 0.0
      %672 = vmatprep.subr.mxu0 0.0
      %673 = vmatpush1.msra.mxu0 0.0
      %674 = vmatprep.subr.mxu0 0.0
      %675 = vmatpush1.msra.mxu0 0.0
      %676 = vmatprep.subr.mxu0 0.0
      %677 = vmatpush1.msra.mxu0 0.0
      %678 = vmatprep.subr.mxu0 0.0
      %679 = vmatpush1.msra.mxu0 0.0
      %680 = vmatprep.subr.mxu0 0.0
      %681 = vmatpush1.msra.mxu0 0.0
      %682 = vmatprep.subr.mxu0 0.0
      %683 = vmatpush1.msra.mxu0 0.0
      %684 = vmatprep.subr.mxu0 0.0
      %685 = vmatpush1.msra.mxu0 0.0
      %686 = vmatprep.subr.mxu0 0.0
      %687 = vmatpush1.msra.mxu0 0.0
      %688 = vmatprep.subr.mxu0 0.0
      %689 = vmatpush1.msra.mxu0 0.0
      %690 = vmatprep.subr.mxu0 0.0
      %691 = vmatpush1.msra.mxu0 0.0
      %692 = vmatprep.subr.mxu0 0.0
      %693 = vmatpush1.msra.mxu0 0.0
      %694 = vmatprep.subr.mxu0 0.0
      %695 = vmatpush1.msra.mxu0 0.0
      %696 = vmatprep.subr.mxu0 0.0
      %697 = vmatpush1.msra.mxu0 0.0
      %698 = vmatprep.mubr.f32.mxu0 0.0
      %699 = vmatmul.mubr.f32.gmra.mrb[0].mxu0 %v626
      %v700 = vpop.f32.mrb[0].mxu0
      %v701 = vadd.f32 %v623, %v700
      %v702 = vpop.f32.mrb[0].mxu0
      %703 = vmatprep.mubr.f32.mxu0 0.0
      %704 = vmatmul.mubr.f32.gmra.mrb[0].mxu0 %v629
      %v705 = vpop.f32.mrb[0].mxu0
      %v706 = vadd.f32 %v623, %v705
      %v707 = vpop.f32.mrb[0].mxu0
      %708 = vmatprep.mubr.f32.mxu0 0.0
      %709 = vmatmul.mubr.f32.gmra.mrb[0].mxu0 %v632
      %v710 = vpop.f32.mrb[0].mxu0
      %v711 = vadd.f32 %v623, %v710
      %v712 = vpop.f32.mrb[0].mxu0
      %713 = vdwg.mxu0
      %v714 = vmul.f32 %v701, 0.35355338
      %v715 = vmul.f32 %v706, 0.35355338
      %v716 = vmul.f32 %v711, 0.35355338
      %720 = vrot.lane.b32.xlu0 %v701, 96
      %v721 = vpop.permute.xlu0 %720
      %722 = vrot.lane.b32.xlu0 %v706, 96
      %v723 = vpop.permute.xlu0 %722
      %724 = vrot.lane.b32.xlu0 %v711, 96
      %v725 = vpop.permute.xlu0 %724
      %vm726 = vcmask 64512
      %v728 = vsel %vm726, %v714, 0
      %v731 = vsel %vm726, %v715, 0
      %v734 = vsel %vm726, %v716, 0
      %v736 = vsel %vm726, %v721, 0
      %v738 = vsel %vm726, %v723, 0
      %v740 = vsel %vm726, %v725, 0
      %742 = vmatprep.subr.mxu0 0.0
      %743 = vmatpush1.xpose.msra.mxu0 %v736
      %744 = vmatprep.subr.mxu0 0.0
      %745 = vmatpush1.xpose.msra.mxu0 %v738
      %746 = vmatprep.subr.mxu0 0.0
      %747 = vmatpush1.xpose.msra.mxu0 %v740
      %748 = vmatprep.subr.mxu0 0.0
      %749 = vmatpush1.xpose.msra.mxu0 0.0
      %750 = vmatprep.subr.mxu0 0.0
      %751 = vmatpush1.xpose.msra.mxu0 0.0
      %752 = vmatprep.subr.mxu0 0.0
      %753 = vmatpush1.xpose.msra.mxu0 0.0
      %754 = vmatprep.subr.mxu0 0.0
      %755 = vmatpush1.xpose.msra.mxu0 0.0
      %756 = vmatprep.subr.mxu0 0.0
      %757 = vmatpush1.xpose.msra.mxu0 0.0
      %758 = vmatprep.subr.mxu0 0.0
      %759 = vmatpush1.xpose.msra.mxu0 0.0
      %760 = vmatprep.subr.mxu0 0.0
      %761 = vmatpush1.xpose.msra.mxu0 0.0
      %762 = vmatprep.subr.mxu0 0.0
      %763 = vmatpush1.xpose.msra.mxu0 0.0
      %764 = vmatprep.subr.mxu0 0.0
      %765 = vmatpush1.xpose.msra.mxu0 0.0
      %766 = vmatprep.subr.mxu0 0.0
      %767 = vmatpush1.xpose.msra.mxu0 0.0
      %768 = vmatprep.subr.mxu0 0.0
      %769 = vmatpush1.xpose.msra.mxu0 0.0
      %770 = vmatprep.subr.mxu0 0.0
      %771 = vmatpush1.xpose.msra.mxu0 0.0
      %772 = vmatprep.subr.mxu0 0.0
      %773 = vmatpush1.xpose.msra.mxu0 0.0
      %774 = vmatprep.subr.mxu0 0.0
      %775 = vmatpush1.xpose.msra.mxu0 0.0
      %776 = vmatprep.subr.mxu0 0.0
      %777 = vmatpush1.xpose.msra.mxu0 0.0
      %778 = vmatprep.subr.mxu0 0.0
      %779 = vmatpush1.xpose.msra.mxu0 0.0
      %780 = vmatprep.subr.mxu0 0.0
      %781 = vmatpush1.xpose.msra.mxu0 0.0
      %782 = vmatprep.subr.mxu0 0.0
      %783 = vmatpush1.xpose.msra.mxu0 0.0
      %784 = vmatprep.subr.mxu0 0.0
      %785 = vmatpush1.xpose.msra.mxu0 0.0
      %786 = vmatprep.subr.mxu0 0.0
      %787 = vmatpush1.xpose.msra.mxu0 0.0
      %788 = vmatprep.subr.mxu0 0.0
      %789 = vmatpush1.xpose.msra.mxu0 0.0
      %790 = vmatprep.subr.mxu0 0.0
      %791 = vmatpush1.xpose.msra.mxu0 0.0
      %792 = vmatprep.subr.mxu0 0.0
      %793 = vmatpush1.xpose.msra.mxu0 0.0
      %794 = vmatprep.subr.mxu0 0.0
      %795 = vmatpush1.xpose.msra.mxu0 0.0
      %796 = vmatprep.subr.mxu0 0.0
      %797 = vmatpush1.xpose.msra.mxu0 0.0
      %798 = vmatprep.subr.mxu0 0.0
      %799 = vmatpush1.xpose.msra.mxu0 0.0
      %800 = vmatprep.subr.mxu0 0.0
      %801 = vmatpush1.xpose.msra.mxu0 0.0
      %802 = vmatprep.subr.mxu0 0.0
      %803 = vmatpush1.xpose.msra.mxu0 0.0
      %804 = vmatprep.subr.mxu0 0.0
      %805 = vmatpush1.xpose.msra.mxu0 0.0
      %806 = vmatprep.mubr.f32.mxu0 0.0
      %807 = vmatmul.mubr.f32.gmra.mrb[0].mxu0 %v728
      %v808 = vpop.f32.mrb[0].mxu0
      %v809 = vadd.f32 0.0, %v808
      %v810 = vpop.f32.mrb[0].mxu0
      %811 = vmatprep.mubr.f32.mxu0 0.0
      %812 = vmatmul.mubr.f32.gmra.mrb[0].mxu0 %v731
      %v813 = vpop.f32.mrb[0].mxu0
      %v814 = vadd.f32 0.0, %v813
      %v815 = vpop.f32.mrb[0].mxu0
      %816 = vmatprep.mubr.f32.mxu0 0.0
      %817 = vmatmul.mubr.f32.gmra.mrb[0].mxu0 %v734
      %v818 = vpop.f32.mrb[0].mxu0
      %v819 = vadd.f32 0.0, %v818
      %v820 = vpop.f32.mrb[0].mxu0
      %821 = vdwg.mxu0
      %vm822 = vcmask 138240
      %v823 = vsel %vm822, %v809, -inf
      %824 = vmax.xlane.f32.xlu0 %v823
      %v825 = vpop.xlane.xlu0 %824
      %v826 = vsel %vm822, %v814, -inf
      %827 = vmax.xlane.f32.xlu0 %v826
      %v828 = vpop.xlane.xlu0 %827
      %vm829 = vcmask 131072
      %v830 = vsel %vm829, %v819, -inf
      %831 = vmax.xlane.f32.xlu0 %v830
      %v832 = vpop.xlane.xlu0 %831
      %v833 = vsub.f32 %v809, %v825
      %v834 = vsub.f32 %v814, %v828
      %v835 = vsub.f32 %v819, %v832
      %v836 = vmul.f32 %v833, 1.442695
      %v837 = vpow.pop %v836
      %v838 = vmul.f32 %v834, 1.442695
      %v839 = vpow.pop %v838
      %v840 = vmul.f32 %v835, 1.442695
      %v841 = vpow.pop %v840
      %v842 = vsel %vm822, %v837, 0.0
      %843 = vadd.xlane.f32.xlu0 %v842
      %v844 = vpop.xlane.xlu0 %843
      %v845 = vsel %vm822, %v839, 0.0
      %846 = vadd.xlane.f32.xlu0 %v845
      %v847 = vpop.xlane.xlu0 %846
      %v848 = vsel %vm829, %v841, 0.0
      %849 = vadd.xlane.f32.xlu0 %v848
      %v850 = vpop.xlane.xlu0 %849
      %v851 = vrcp.pop %v844
      %v852 = vrcp.pop %v847
      %v853 = vrcp.pop %v850
      %v854 = vmul.f32 %v837, %v851
      %v855 = vmul.f32 %v839, %v852
      %v856 = vmul.f32 %v841, %v853
      %857 = vrot.lane.b32.xlu0 %v701, 64
      %v858 = vpop.permute.xlu0 %857
      %859 = vrot.lane.b32.xlu0 %v706, 64
      %v860 = vpop.permute.xlu0 %859
      %861 = vrot.lane.b32.xlu0 %v711, 64
      %v862 = vpop.permute.xlu0 %861
      %v866 = vsel %vm822, %v854, 0
      %v869 = vsel %vm822, %v855, 0
      %v872 = vsel %vm822, %v856, 0
      %vm874 = vcmask 1040384
      %v875 = vsel %vm874, %v862, 0
      %877 = vmatprep.subr.mxu0 0.0
      %878 = vmatpush1.msra.mxu0 %v858
      %879 = vmatprep.subr.mxu0 0.0
      %880 = vmatpush1.msra.mxu0 %v860
      %881 = vmatprep.subr.mxu0 0.0
      %882 = vmatpush1.msra.mxu0 %v875
      %883 = vmatprep.subr.mxu0 0.0
      %884 = vmatpush1.msra.mxu0 0.0
      %885 = vmatprep.subr.mxu0 0.0
      %886 = vmatpush1.msra.mxu0 0.0
      %887 = vmatprep.subr.mxu0 0.0
      %888 = vmatpush1.msra.mxu0 0.0
      %889 = vmatprep.subr.mxu0 0.0
      %890 = vmatpush1.msra.mxu0 0.0
      %891 = vmatprep.subr.mxu0 0.0
      %892 = vmatpush1.msra.mxu0 0.0
      %893 = vmatprep.subr.mxu0 0.0
      %894 = vmatpush1.msra.mxu0 0.0
      %895 = vmatprep.subr.mxu0 0.0
      %896 = vmatpush1.msra.mxu0 0.0
      %897 = vmatprep.subr.mxu0 0.0
      %898 = vmatpush1.msra.mxu0 0.0
      %899 = vmatprep.subr.mxu0 0.0
      %900 = vmatpush1.msra.mxu0 0.0
      %901 = vmatprep.subr.mxu0 0.0
      %902 = vmatpush1.msra.mxu0 0.0
      %903 = vmatprep.subr.mxu0 0.0
      %904 = vmatpush1.msra.mxu0 0.0
      %905 = vmatprep.subr.mxu0 0.0
      %906 = vmatpush1.msra.mxu0 0.0
      %907 = vmatprep.subr.mxu0 0.0
      %908 = vmatpush1.msra.mxu0 0.0
      %909 = vmatprep.subr.mxu0 0.0
      %910 = vmatpush1.msra.mxu0 0.0
      %911 = vmatprep.subr.mxu0 0.0
      %912 = vmatpush1.msra.mxu0 0.0
      %913 = vmatprep.subr.mxu0 0.0
      %914 = vmatpush1.msra.mxu0 0.0
      %915 = vmatprep.subr.mxu0 0.0
      %916 = vmatpush1.msra.mxu0 0.0
      %917 = vmatprep.subr.mxu0 0.0
      %918 = vmatpush1.msra.mxu0 0.0
      %919 = vmatprep.subr.mxu0 0.0
      %920 = vmatpush1.msra.mxu0 0.0
      %921 = vmatprep.subr.mxu0 0.0
      %922 = vmatpush1.msra.mxu0 0.0
      %923 = vmatprep.subr.mxu0 0.0
      %924 = vmatpush1.msra.mxu0 0.0
      %925 = vmatprep.subr.mxu0 0.0
      %926 = vmatpush1.msra.mxu0 0.0
      %927 = vmatprep.subr.mxu0 0.0
      %928 = vmatpush1.msra.mxu0 0.0
      %929 = vmatprep.subr.mxu0 0.0
      %930 = vmatpush1.msra.mxu0 0.0
      %931 = vmatprep.subr.mxu0 0.0
      %932 = vmatpush1.msra.mxu0 0.0
      %933 = vmatprep.subr.mxu0 0.0
      %934 = vmatpush1.msra.mxu0 0.0
      %935 = vmatprep.subr.mxu0 0.0
      %936 = vmatpush1.msra.mxu0 0.0
      %937 = vmatprep.subr.mxu0 0.0
      %938 = vmatpush1.msra.mxu0 0.0
      %939 = vmatprep.subr.mxu0 0.0
      %940 = vmatpush1.msra.mxu0 0.0
      %941 = vmatprep.mubr.f32.mxu0 0.0
      %942 = vmatmul.mubr.f32.gmra.mrb[0].mxu0 %v866
      %v943 = vpop.f32.mrb[0].mxu0
      %v944 = vadd.f32 0.0, %v943
      %v945 = vpop.f32.mrb[0].mxu0
      %946 = vmatprep.mubr.f32.mxu0 0.0
      %947 = vmatmul.mubr.f32.gmra.mrb[0].mxu0 %v869
      %v948 = vpop.f32.mrb[0].mxu0
      %v949 = vadd.f32 0.0, %v948
      %v950 = vpop.f32.mrb[0].mxu0
      %951 = vmatprep.mubr.f32.mxu0 0.0
      %952 = vmatmul.mubr.f32.gmra.mrb[0].mxu0 %v872
      %v953 = vpop.f32.mrb[0].mxu0
      %v954 = vadd.f32 0.0, %v953
      %v955 = vpop.f32.mrb[0].mxu0
      %956 = vdwg.mxu0
      %v957 = vld [vmem:[%s5] sm:$0xff]
      %958 = vrot.lane.b32.xlu0 %v714, 120
      %v959 = vpop.permute.xlu0 %958
      %960 = vrot.lane.b32.xlu0 %v715, 120
      %v961 = vpop.permute.xlu0 %960
      %962 = vrot.lane.b32.xlu0 %v716, 120
      %v963 = vpop.permute.xlu0 %962
      %964 = vrot.lane.b32.xlu0 %v701, 88
      %v965 = vpop.permute.xlu0 %964
      %966 = vrot.lane.b32.xlu0 %v706, 88
      %v967 = vpop.permute.xlu0 %966
      %968 = vrot.lane.b32.xlu0 %v711, 88
      %v969 = vpop.permute.xlu0 %968
      %v970 = vsel %vm726, %v959, 0
      %v972 = vsel %vm726, %v961, 0
      %v974 = vsel %vm726, %v963, 0
      %v976 = vsel %vm726, %v965, 0
      %v978 = vsel %vm726, %v967, 0
      %v980 = vsel %vm726, %v969, 0
      %982 = vmatprep.subr.mxu0 0.0
      %983 = vmatpush1.xpose.msra.mxu0 %v976
      %984 = vmatprep.subr.mxu0 0.0
      %985 = vmatpush1.xpose.msra.mxu0 %v978
      %986 = vmatprep.subr.mxu0 0.0
      %987 = vmatpush1.xpose.msra.mxu0 %v980
      %988 = vmatprep.subr.mxu0 0.0
      %989 = vmatpush1.xpose.msra.mxu0 0.0
      %990 = vmatprep.subr.mxu0 0.0
      %991 = vmatpush1.xpose.msra.mxu0 0.0
      %992 = vmatprep.subr.mxu0 0.0
      %993 = vmatpush1.xpose.msra.mxu0 0.0
      %994 = vmatprep.subr.mxu0 0.0
      %995 = vmatpush1.xpose.msra.mxu0 0.0
      %996 = vmatprep.subr.mxu0 0.0
      %997 = vmatpush1.xpose.msra.mxu0 0.0
      %998 = vmatprep.subr.mxu0 0.0
      %999 = vmatpush1.xpose.msra.mxu0 0.0
      %1000 = vmatprep.subr.mxu0 0.0
      %1001 = vmatpush1.xpose.msra.mxu0 0.0
      %1002 = vmatprep.subr.mxu0 0.0
      %1003 = vmatpush1.xpose.msra.mxu0 0.0
      %1004 = vmatprep.subr.mxu0 0.0
      %1005 = vmatpush1.xpose.msra.mxu0 0.0
      %1006 = vmatprep.subr.mxu0 0.0
      %1007 = vmatpush1.xpose.msra.mxu0 0.0
      %1008 = vmatprep.subr.mxu0 0.0
      %1009 = vmatpush1.xpose.msra.mxu0 0.0
      %1010 = vmatprep.subr.mxu0 0.0
      %1011 = vmatpush1.xpose.msra.mxu0 0.0
      %1012 = vmatprep.subr.mxu0 0.0
      %1013 = vmatpush1.xpose.msra.mxu0 0.0
      %1014 = vmatprep.subr.mxu0 0.0
      %1015 = vmatpush1.xpose.msra.mxu0 0.0
      %1016 = vmatprep.subr.mxu0 0.0
      %1017 = vmatpush1.xpose.msra.mxu0 0.0
      %1018 = vmatprep.subr.mxu0 0.0
      %1019 = vmatpush1.xpose.msra.mxu0 0.0
      %1020 = vmatprep.subr.mxu0 0.0
      %1021 = vmatpush1.xpose.msra.mxu0 0.0
      %1022 = vmatprep.subr.mxu0 0.0
      %1023 = vmatpush1.xpose.msra.mxu0 0.0
      %1024 = vmatprep.subr.mxu0 0.0
      %1025 = vmatpush1.xpose.msra.mxu0 0.0
      %1026 = vmatprep.subr.mxu0 0.0
      %1027 = vmatpush1.xpose.msra.mxu0 0.0
      %1028 = vmatprep.subr.mxu0 0.0
      %1029 = vmatpush1.xpose.msra.mxu0 0.0
      %1030 = vmatprep.subr.mxu0 0.0
      %1031 = vmatpush1.xpose.msra.mxu0 0.0
      %1032 = vmatprep.subr.mxu0 0.0
      %1033 = vmatpush1.xpose.msra.mxu0 0.0
      %1034 = vmatprep.subr.mxu0 0.0
      %1035 = vmatpush1.xpose.msra.mxu0 0.0
      %1036 = vmatprep.subr.mxu0 0.0
      %1037 = vmatpush1.xpose.msra.mxu0 0.0
      %1038 = vmatprep.subr.mxu0 0.0
      %1039 = vmatpush1.xpose.msra.mxu0 0.0
      %1040 = vmatprep.subr.mxu0 0.0
      %1041 = vmatpush1.xpose.msra.mxu0 0.0
      %1042 = vmatprep.subr.mxu0 0.0
      %1043 = vmatpush1.xpose.msra.mxu0 0.0
      %1044 = vmatprep.subr.mxu0 0.0
      %1045 = vmatpush1.xpose.msra.mxu0 0.0
      %1046 = vmatprep.mubr.f32.mxu0 0.0
      %1047 = vmatmul.mubr.f32.gmra.mrb[0].mxu0 %v970
      %v1048 = vpop.f32.mrb[0].mxu0
      %v1049 = vadd.f32 0.0, %v1048
      %v1050 = vpop.f32.mrb[0].mxu0
      %1051 = vmatprep.mubr.f32.mxu0 0.0
      %1052 = vmatmul.mubr.f32.gmra.mrb[0].mxu0 %v972
      %v1053 = vpop.f32.mrb[0].mxu0
      %v1054 = vadd.f32 0.0, %v1053
      %v1055 = vpop.f32.mrb[0].mxu0
      %1056 = vmatprep.mubr.f32.mxu0 0.0
      %1057 = vmatmul.mubr.f32.gmra.mrb[0].mxu0 %v974
      %v1058 = vpop.f32.mrb[0].mxu0
      %v1059 = vadd.f32 0.0, %v1058
      %v1060 = vpop.f32.mrb[0].mxu0
      %1061 = vdwg.mxu0
      %v1062 = vsel %vm822, %v1049, -inf
      %1063 = vmax.xlane.f32.xlu0 %v1062
      %v1064 = vpop.xlane.xlu0 %1063
      %v1065 = vsel %vm822, %v1054, -inf
      %1066 = vmax.xlane.f32.xlu0 %v1065
      %v1067 = vpop.xlane.xlu0 %1066
      %v1068 = vsel %vm829, %v1059, -inf
      %1069 = vmax.xlane.f32.xlu0 %v1068
      %v1070 = vpop.xlane.xlu0 %1069
      %v1071 = vsub.f32 %v1049, %v1064
      %v1072 = vsub.f32 %v1054, %v1067
      %v1073 = vsub.f32 %v1059, %v1070
      %v1074 = vmul.f32 %v1071, 1.442695
      %v1075 = vpow.pop %v1074
      %v1076 = vmul.f32 %v1072, 1.442695
      %v1077 = vpow.pop %v1076
      %v1078 = vmul.f32 %v1073, 1.442695
      %v1079 = vpow.pop %v1078
      %v1080 = vsel %vm822, %v1075, 0.0
      %1081 = vadd.xlane.f32.xlu0 %v1080
      %v1082 = vpop.xlane.xlu0 %1081
      %v1083 = vsel %vm822, %v1077, 0.0
      %1084 = vadd.xlane.f32.xlu0 %v1083
      %v1085 = vpop.xlane.xlu0 %1084
      %v1086 = vsel %vm829, %v1079, 0.0
      %1087 = vadd.xlane.f32.xlu0 %v1086
      %v1088 = vpop.xlane.xlu0 %1087
      %v1089 = vrcp.pop %v1082
      %v1090 = vrcp.pop %v1085
      %v1091 = vrcp.pop %v1088
      %v1092 = vmul.f32 %v1075, %v1089
      %v1093 = vmul.f32 %v1077, %v1090
      %v1094 = vmul.f32 %v1079, %v1091
      %1095 = vrot.lane.b32.xlu0 %v701, 56
      %v1096 = vpop.permute.xlu0 %1095
      %1097 = vrot.lane.b32.xlu0 %v706, 56
      %v1098 = vpop.permute.xlu0 %1097
      %1099 = vrot.lane.b32.xlu0 %v711, 56
      %v1100 = vpop.permute.xlu0 %1099
      %v1104 = vsel %vm822, %v1092, 0
      %v1107 = vsel %vm822, %v1093, 0
      %v1110 = vsel %vm822, %v1094, 0
      %v1112 = vsel %vm874, %v1100, 0
      %1114 = vmatprep.subr.mxu0 0.0
      %1115 = vmatpush1.msra.mxu0 %v1096
      %1116 = vmatprep.subr.mxu0 0.0
      %1117 = vmatpush1.msra.mxu0 %v1098
      %1118 = vmatprep.subr.mxu0 0.0
      %1119 = vmatpush1.msra.mxu0 %v1112
      %1120 = vmatprep.subr.mxu0 0.0
      %1121 = vmatpush1.msra.mxu0 0.0
      %1122 = vmatprep.subr.mxu0 0.0
      %1123 = vmatpush1.msra.mxu0 0.0
      %1124 = vmatprep.subr.mxu0 0.0
      %1125 = vmatpush1.msra.mxu0 0.0
      %1126 = vmatprep.subr.mxu0 0.0
      %1127 = vmatpush1.msra.mxu0 0.0
      %1128 = vmatprep.subr.mxu0 0.0
      %1129 = vmatpush1.msra.mxu0 0.0
      %1130 = vmatprep.subr.mxu0 0.0
      %1131 = vmatpush1.msra.mxu0 0.0
      %1132 = vmatprep.subr.mxu0 0.0
      %1133 = vmatpush1.msra.mxu0 0.0
      %1134 = vmatprep.subr.mxu0 0.0
      %1135 = vmatpush1.msra.mxu0 0.0
      %1136 = vmatprep.subr.mxu0 0.0
      %1137 = vmatpush1.msra.mxu0 0.0
      %1138 = vmatprep.subr.mxu0 0.0
      %1139 = vmatpush1.msra.mxu0 0.0
      %1140 = vmatprep.subr.mxu0 0.0
      %1141 = vmatpush1.msra.mxu0 0.0
      %1142 = vmatprep.subr.mxu0 0.0
      %1143 = vmatpush1.msra.mxu0 0.0
      %1144 = vmatprep.subr.mxu0 0.0
      %1145 = vmatpush1.msra.mxu0 0.0
      %1146 = vmatprep.subr.mxu0 0.0
      %1147 = vmatpush1.msra.mxu0 0.0
      %1148 = vmatprep.subr.mxu0 0.0
      %1149 = vmatpush1.msra.mxu0 0.0
      %1150 = vmatprep.subr.mxu0 0.0
      %1151 = vmatpush1.msra.mxu0 0.0
      %1152 = vmatprep.subr.mxu0 0.0
      %1153 = vmatpush1.msra.mxu0 0.0
      %1154 = vmatprep.subr.mxu0 0.0
      %1155 = vmatpush1.msra.mxu0 0.0
      %1156 = vmatprep.subr.mxu0 0.0
      %1157 = vmatpush1.msra.mxu0 0.0
      %1158 = vmatprep.subr.mxu0 0.0
      %1159 = vmatpush1.msra.mxu0 0.0
      %1160 = vmatprep.subr.mxu0 0.0
      %1161 = vmatpush1.msra.mxu0 0.0
      %1162 = vmatprep.subr.mxu0 0.0
      %1163 = vmatpush1.msra.mxu0 0.0
      %1164 = vmatprep.subr.mxu0 0.0
      %1165 = vmatpush1.msra.mxu0 0.0
      %1166 = vmatprep.subr.mxu0 0.0
      %1167 = vmatpush1.msra.mxu0 0.0
      %1168 = vmatprep.subr.mxu0 0.0
      %1169 = vmatpush1.msra.mxu0 0.0
      %1170 = vmatprep.subr.mxu0 0.0
      %1171 = vmatpush1.msra.mxu0 0.0
      %1172 = vmatprep.subr.mxu0 0.0
      %1173 = vmatpush1.msra.mxu0 0.0
      %1174 = vmatprep.subr.mxu0 0.0
      %1175 = vmatpush1.msra.mxu0 0.0
      %1176 = vmatprep.subr.mxu0 0.0
      %1177 = vmatpush1.msra.mxu0 0.0
      %1178 = vmatprep.mubr.f32.mxu0 0.0
      %1179 = vmatmul.mubr.f32.gmra.mrb[0].mxu0 %v1104
      %v1180 = vpop.f32.mrb[0].mxu0
      %v1181 = vadd.f32 0.0, %v1180
      %v1182 = vpop.f32.mrb[0].mxu0
      %1183 = vmatprep.mubr.f32.mxu0 0.0
      %1184 = vmatmul.mubr.f32.gmra.mrb[0].mxu0 %v1107
      %v1185 = vpop.f32.mrb[0].mxu0
      %v1186 = vadd.f32 0.0, %v1185
      %v1187 = vpop.f32.mrb[0].mxu0
      %1188 = vmatprep.mubr.f32.mxu0 0.0
      %1189 = vmatmul.mubr.f32.gmra.mrb[0].mxu0 %v1110
      %v1190 = vpop.f32.mrb[0].mxu0
      %v1191 = vadd.f32 0.0, %v1190
      %v1192 = vpop.f32.mrb[0].mxu0
      %1193 = vdwg.mxu0
      %v1194 = vld [vmem:[%s5 + $0x8] sm:$0xff]
      %v1196 = vsel %vm726, %v1181, 0
      %v1199 = vsel %vm726, %v1186, 0
      %v1202 = vsel %vm726, %v1191, 0
      %1204 = vmatprep.subr.mxu0 0.0
      %1205 = vmatpush1.msra.mxu0 %v1194
      %1206 = vmatprep.subr.mxu0 0.0
      %1207 = vmatpush1.msra.mxu0 0.0
      %1208 = vmatprep.subr.mxu0 0.0
      %1209 = vmatpush1.msra.mxu0 0.0
      %1210 = vmatprep.subr.mxu0 0.0
      %1211 = vmatpush1.msra.mxu0 0.0
      %1212 = vmatprep.subr.mxu0 0.0
      %1213 = vmatpush1.msra.mxu0 0.0
      %1214 = vmatprep.subr.mxu0 0.0
      %1215 = vmatpush1.msra.mxu0 0.0
      %1216 = vmatprep.subr.mxu0 0.0
      %1217 = vmatpush1.msra.mxu0 0.0
      %1218 = vmatprep.subr.mxu0 0.0
      %1219 = vmatpush1.msra.mxu0 0.0
      %1220 = vmatprep.subr.mxu0 0.0
      %1221 = vmatpush1.msra.mxu0 0.0
      %1222 = vmatprep.subr.mxu0 0.0
      %1223 = vmatpush1.msra.mxu0 0.0
      %1224 = vmatprep.subr.mxu0 0.0
      %1225 = vmatpush1.msra.mxu0 0.0
      %1226 = vmatprep.subr.mxu0 0.0
      %1227 = vmatpush1.msra.mxu0 0.0
      %1228 = vmatprep.subr.mxu0 0.0
      %1229 = vmatpush1.msra.mxu0 0.0
      %1230 = vmatprep.subr.mxu0 0.0
      %1231 = vmatpush1.msra.mxu0 0.0
      %1232 = vmatprep.subr.mxu0 0.0
      %1233 = vmatpush1.msra.mxu0 0.0
      %1234 = vmatprep.subr.mxu0 0.0
      %1235 = vmatpush1.msra.mxu0 0.0
      %1236 = vmatprep.subr.mxu0 0.0
      %1237 = vmatpush1.msra.mxu0 0.0
      %1238 = vmatprep.subr.mxu0 0.0
      %1239 = vmatpush1.msra.mxu0 0.0
      %1240 = vmatprep.subr.mxu0 0.0
      %1241 = vmatpush1.msra.mxu0 0.0
      %1242 = vmatprep.subr.mxu0 0.0
      %1243 = vmatpush1.msra.mxu0 0.0
      %1244 = vmatprep.subr.mxu0 0.0
      %1245 = vmatpush1.msra.mxu0 0.0
      %1246 = vmatprep.subr.mxu0 0.0
      %1247 = vmatpush1.msra.mxu0 0.0
      %1248 = vmatprep.subr.mxu0 0.0
      %1249 = vmatpush1.msra.mxu0 0.0
      %1250 = vmatprep.subr.mxu0 0.0
      %1251 = vmatpush1.msra.mxu0 0.0
      %1252 = vmatprep.subr.mxu0 0.0
      %1253 = vmatpush1.msra.mxu0 0.0
      %1254 = vmatprep.subr.mxu0 0.0
      %1255 = vmatpush1.msra.mxu0 0.0
      %1256 = vmatprep.subr.mxu0 0.0
      %1257 = vmatpush1.msra.mxu0 0.0
      %1258 = vmatprep.subr.mxu0 0.0
      %1259 = vmatpush1.msra.mxu0 0.0
      %1260 = vmatprep.subr.mxu0 0.0
      %1261 = vmatpush1.msra.mxu0 0.0
      %1262 = vmatprep.subr.mxu0 0.0
      %1263 = vmatpush1.msra.mxu0 0.0
      %1264 = vmatprep.subr.mxu0 0.0
      %1265 = vmatpush1.msra.mxu0 0.0
      %1266 = vmatprep.subr.mxu0 0.0
      %1267 = vmatpush1.msra.mxu0 0.0
      %1268 = vmatprep.mubr.f32.mxu0 0.0
      %1269 = vmatmul.mubr.f32.gmra.mrb[0].mxu0 %v1196
      %v1270 = vpop.f32.mrb[0].mxu0
      %v1271 = vadd.f32 0.0, %v1270
      %v1272 = vpop.f32.mrb[0].mxu0
      %1273 = vmatprep.mubr.f32.mxu0 0.0
      %1274 = vmatmul.mubr.f32.gmra.mrb[0].mxu0 %v1199
      %v1275 = vpop.f32.mrb[0].mxu0
      %v1276 = vadd.f32 0.0, %v1275
      %v1277 = vpop.f32.mrb[0].mxu0
      %1278 = vmatprep.mubr.f32.mxu0 0.0
      %1279 = vmatmul.mubr.f32.gmra.mrb[0].mxu0 %v1202
      %v1280 = vpop.f32.mrb[0].mxu0
      %v1281 = vadd.f32 0.0, %v1280
      %v1282 = vpop.f32.mrb[0].mxu0
      %1283 = vdwg.mxu0
      %v1285 = vsel %vm726, %v944, 0
      %v1288 = vsel %vm726, %v949, 0
      %v1291 = vsel %vm726, %v954, 0
      %1293 = vmatprep.subr.mxu0 0.0
      %1294 = vmatpush1.msra.mxu0 %v957
      %1295 = vmatprep.subr.mxu0 0.0
      %1296 = vmatpush1.msra.mxu0 0.0
      %1297 = vmatprep.subr.mxu0 0.0
      %1298 = vmatpush1.msra.mxu0 0.0
      %1299 = vmatprep.subr.mxu0 0.0
      %1300 = vmatpush1.msra.mxu0 0.0
      %1301 = vmatprep.subr.mxu0 0.0
      %1302 = vmatpush1.msra.mxu0 0.0
      %1303 = vmatprep.subr.mxu0 0.0
      %1304 = vmatpush1.msra.mxu0 0.0
      %1305 = vmatprep.subr.mxu0 0.0
      %1306 = vmatpush1.msra.mxu0 0.0
      %1307 = vmatprep.subr.mxu0 0.0
      %1308 = vmatpush1.msra.mxu0 0.0
      %1309 = vmatprep.subr.mxu0 0.0
      %1310 = vmatpush1.msra.mxu0 0.0
      %1311 = vmatprep.subr.mxu0 0.0
      %1312 = vmatpush1.msra.mxu0 0.0
      %1313 = vmatprep.subr.mxu0 0.0
      %1314 = vmatpush1.msra.mxu0 0.0
      %1315 = vmatprep.subr.mxu0 0.0
      %1316 = vmatpush1.msra.mxu0 0.0
      %1317 = vmatprep.subr.mxu0 0.0
      %1318 = vmatpush1.msra.mxu0 0.0
      %1319 = vmatprep.subr.mxu0 0.0
      %1320 = vmatpush1.msra.mxu0 0.0
      %1321 = vmatprep.subr.mxu0 0.0
      %1322 = vmatpush1.msra.mxu0 0.0
      %1323 = vmatprep.subr.mxu0 0.0
      %1324 = vmatpush1.msra.mxu0 0.0
      %1325 = vmatprep.subr.mxu0 0.0
      %1326 = vmatpush1.msra.mxu0 0.0
      %1327 = vmatprep.subr.mxu0 0.0
      %1328 = vmatpush1.msra.mxu0 0.0
      %1329 = vmatprep.subr.mxu0 0.0
      %1330 = vmatpush1.msra.mxu0 0.0
      %1331 = vmatprep.subr.mxu0 0.0
      %1332 = vmatpush1.msra.mxu0 0.0
      %1333 = vmatprep.subr.mxu0 0.0
      %1334 = vmatpush1.msra.mxu0 0.0
      %1335 = vmatprep.subr.mxu0 0.0
      %1336 = vmatpush1.msra.mxu0 0.0
      %1337 = vmatprep.subr.mxu0 0.0
      %1338 = vmatpush1.msra.mxu0 0.0
      %1339 = vmatprep.subr.mxu0 0.0
      %1340 = vmatpush1.msra.mxu0 0.0
      %1341 = vmatprep.subr.mxu0 0.0
      %1342 = vmatpush1.msra.mxu0 0.0
      %1343 = vmatprep.subr.mxu0 0.0
      %1344 = vmatpush1.msra.mxu0 0.0
      %1345 = vmatprep.subr.mxu0 0.0
      %1346 = vmatpush1.msra.mxu0 0.0
      %1347 = vmatprep.subr.mxu0 0.0
      %1348 = vmatpush1.msra.mxu0 0.0
      %1349 = vmatprep.subr.mxu0 0.0
      %1350 = vmatpush1.msra.mxu0 0.0
      %1351 = vmatprep.subr.mxu0 0.0
      %1352 = vmatpush1.msra.mxu0 0.0
      %1353 = vmatprep.subr.mxu0 0.0
      %1354 = vmatpush1.msra.mxu0 0.0
      %1355 = vmatprep.subr.mxu0 0.0
      %1356 = vmatpush1.msra.mxu0 0.0
      %1357 = vmatprep.mubr.f32.mxu0 0.0
      %1358 = vmatmul.mubr.f32.gmra.mrb[0].mxu0 %v1285
      %v1359 = vpop.f32.mrb[0].mxu0
      %v1360 = vadd.f32 %v1271, %v1359
      %v1361 = vpop.f32.mrb[0].mxu0
      %1362 = vmatprep.mubr.f32.mxu0 0.0
      %1363 = vmatmul.mubr.f32.gmra.mrb[0].mxu0 %v1288
      %v1364 = vpop.f32.mrb[0].mxu0
      %v1365 = vadd.f32 %v1276, %v1364
      %v1366 = vpop.f32.mrb[0].mxu0
      %1367 = vmatprep.mubr.f32.mxu0 0.0
      %1368 = vmatmul.mubr.f32.gmra.mrb[0].mxu0 %v1291
      %v1369 = vpop.f32.mrb[0].mxu0
      %v1370 = vadd.f32 %v1281, %v1369
      %v1371 = vpop.f32.mrb[0].mxu0
      %1372 = vdwg.mxu0
      %1373 = vrot.lane.b32.xlu0 %v714, 112
      %v1374 = vpop.permute.xlu0 %1373
      %1375 = vrot.lane.b32.xlu0 %v715, 112
      %v1376 = vpop.permute.xlu0 %1375
      %1377 = vrot.lane.b32.xlu0 %v716, 112
      %v1378 = vpop.permute.xlu0 %1377
      %1379 = vrot.lane.b32.xlu0 %v701, 80
      %v1380 = vpop.permute.xlu0 %1379
      %1381 = vrot.lane.b32.xlu0 %v706, 80
      %v1382 = vpop.permute.xlu0 %1381
      %1383 = vrot.lane.b32.xlu0 %v711, 80
      %v1384 = vpop.permute.xlu0 %1383
      %v1385 = vsel %vm726, %v1374, 0
      %v1387 = vsel %vm726, %v1376, 0
      %v1389 = vsel %vm726, %v1378, 0
      %v1391 = vsel %vm726, %v1380, 0
      %v1393 = vsel %vm726, %v1382, 0
      %v1395 = vsel %vm726, %v1384, 0
      %1397 = vmatprep.subr.mxu0 0.0
      %1398 = vmatpush1.xpose.msra.mxu0 %v1391
      %1399 = vmatprep.subr.mxu0 0.0
      %1400 = vmatpush1.xpose.msra.mxu0 %v1393
      %1401 = vmatprep.subr.mxu0 0.0
      %1402 = vmatpush1.xpose.msra.mxu0 %v1395
      %1403 = vmatprep.subr.mxu0 0.0
      %1404 = vmatpush1.xpose.msra.mxu0 0.0
      %1405 = vmatprep.subr.mxu0 0.0
      %1406 = vmatpush1.xpose.msra.mxu0 0.0
      %1407 = vmatprep.subr.mxu0 0.0
      %1408 = vmatpush1.xpose.msra.mxu0 0.0
      %1409 = vmatprep.subr.mxu0 0.0
      %1410 = vmatpush1.xpose.msra.mxu0 0.0
      %1411 = vmatprep.subr.mxu0 0.0
      %1412 = vmatpush1.xpose.msra.mxu0 0.0
      %1413 = vmatprep.subr.mxu0 0.0
      %1414 = vmatpush1.xpose.msra.mxu0 0.0
      %1415 = vmatprep.subr.mxu0 0.0
      %1416 = vmatpush1.xpose.msra.mxu0 0.0
      %1417 = vmatprep.subr.mxu0 0.0
      %1418 = vmatpush1.xpose.msra.mxu0 0.0
      %1419 = vmatprep.subr.mxu0 0.0
      %1420 = vmatpush1.xpose.msra.mxu0 0.0
      %1421 = vmatprep.subr.mxu0 0.0
      %1422 = vmatpush1.xpose.msra.mxu0 0.0
      %1423 = vmatprep.subr.mxu0 0.0
      %1424 = vmatpush1.xpose.msra.mxu0 0.0
      %1425 = vmatprep.subr.mxu0 0.0
      %1426 = vmatpush1.xpose.msra.mxu0 0.0
      %1427 = vmatprep.subr.mxu0 0.0
      %1428 = vmatpush1.xpose.msra.mxu0 0.0
      %1429 = vmatprep.subr.mxu0 0.0
      %1430 = vmatpush1.xpose.msra.mxu0 0.0
      %1431 = vmatprep.subr.mxu0 0.0
      %1432 = vmatpush1.xpose.msra.mxu0 0.0
      %1433 = vmatprep.subr.mxu0 0.0
      %1434 = vmatpush1.xpose.msra.mxu0 0.0
      %1435 = vmatprep.subr.mxu0 0.0
      %1436 = vmatpush1.xpose.msra.mxu0 0.0
      %1437 = vmatprep.subr.mxu0 0.0
      %1438 = vmatpush1.xpose.msra.mxu0 0.0
      %1439 = vmatprep.subr.mxu0 0.0
      %1440 = vmatpush1.xpose.msra.mxu0 0.0
      %1441 = vmatprep.subr.mxu0 0.0
      %1442 = vmatpush1.xpose.msra.mxu0 0.0
      %1443 = vmatprep.subr.mxu0 0.0
      %1444 = vmatpush1.xpose.msra.mxu0 0.0
      %1445 = vmatprep.subr.mxu0 0.0
      %1446 = vmatpush1.xpose.msra.mxu0 0.0
      %1447 = vmatprep.subr.mxu0 0.0
      %1448 = vmatpush1.xpose.msra.mxu0 0.0
      %1449 = vmatprep.subr.mxu0 0.0
      %1450 = vmatpush1.xpose.msra.mxu0 0.0
      %1451 = vmatprep.subr.mxu0 0.0
      %1452 = vmatpush1.xpose.msra.mxu0 0.0
      %1453 = vmatprep.subr.mxu0 0.0
      %1454 = vmatpush1.xpose.msra.mxu0 0.0
      %1455 = vmatprep.subr.mxu0 0.0
      %1456 = vmatpush1.xpose.msra.mxu0 0.0
      %1457 = vmatprep.subr.mxu0 0.0
      %1458 = vmatpush1.xpose.msra.mxu0 0.0
      %1459 = vmatprep.subr.mxu0 0.0
      %1460 = vmatpush1.xpose.msra.mxu0 0.0
      %1461 = vmatprep.mubr.f32.mxu0 0.0
      %1462 = vmatmul.mubr.f32.gmra.mrb[0].mxu0 %v1385
      %v1463 = vpop.f32.mrb[0].mxu0
      %v1464 = vadd.f32 0.0, %v1463
      %v1465 = vpop.f32.mrb[0].mxu0
      %1466 = vmatprep.mubr.f32.mxu0 0.0
      %1467 = vmatmul.mubr.f32.gmra.mrb[0].mxu0 %v1387
      %v1468 = vpop.f32.mrb[0].mxu0
      %v1469 = vadd.f32 0.0, %v1468
      %v1470 = vpop.f32.mrb[0].mxu0
      %1471 = vmatprep.mubr.f32.mxu0 0.0
      %1472 = vmatmul.mubr.f32.gmra.mrb[0].mxu0 %v1389
      %v1473 = vpop.f32.mrb[0].mxu0
      %v1474 = vadd.f32 0.0, %v1473
      %v1475 = vpop.f32.mrb[0].mxu0
      %1476 = vdwg.mxu0
      %v1477 = vsel %vm822, %v1464, -inf
      %1478 = vmax.xlane.f32.xlu0 %v1477
      %v1479 = vpop.xlane.xlu0 %1478
      %v1480 = vsel %vm822, %v1469, -inf
      %1481 = vmax.xlane.f32.xlu0 %v1480
      %v1482 = vpop.xlane.xlu0 %1481
      %v1483 = vsel %vm829, %v1474, -inf
      %1484 = vmax.xlane.f32.xlu0 %v1483
      %v1485 = vpop.xlane.xlu0 %1484
      %v1486 = vsub.f32 %v1464, %v1479
      %v1487 = vsub.f32 %v1469, %v1482
      %v1488 = vsub.f32 %v1474, %v1485
      %v1489 = vmul.f32 %v1486, 1.442695
      %v1490 = vpow.pop %v1489
      %v1491 = vmul.f32 %v1487, 1.442695
      %v1492 = vpow.pop %v1491
      %v1493 = vmul.f32 %v1488, 1.442695
      %v1494 = vpow.pop %v1493
      %v1495 = vsel %vm822, %v1490, 0.0
      %1496 = vadd.xlane.f32.xlu0 %v1495
      %v1497 = vpop.xlane.xlu0 %1496
      %v1498 = vsel %vm822, %v1492, 0.0
      %1499 = vadd.xlane.f32.xlu0 %v1498
      %v1500 = vpop.xlane.xlu0 %1499
      %v1501 = vsel %vm829, %v1494, 0.0
      %1502 = vadd.xlane.f32.xlu0 %v1501
      %v1503 = vpop.xlane.xlu0 %1502
      %v1504 = vrcp.pop %v1497
      %v1505 = vrcp.pop %v1500
      %v1506 = vrcp.pop %v1503
      %v1507 = vmul.f32 %v1490, %v1504
      %v1508 = vmul.f32 %v1492, %v1505
      %v1509 = vmul.f32 %v1494, %v1506
      %1510 = vrot.lane.b32.xlu0 %v701, 48
      %v1511 = vpop.permute.xlu0 %1510
      %1512 = vrot.lane.b32.xlu0 %v706, 48
      %v1513 = vpop.permute.xlu0 %1512
      %1514 = vrot.lane.b32.xlu0 %v711, 48
      %v1515 = vpop.permute.xlu0 %1514
      %v1519 = vsel %vm822, %v1507, 0
      %v1522 = vsel %vm822, %v1508, 0
      %v1525 = vsel %vm822, %v1509, 0
      %v1527 = vsel %vm874, %v1515, 0
      %1529 = vmatprep.subr.mxu0 0.0
      %1530 = vmatpush1.msra.mxu0 %v1511
      %1531 = vmatprep.subr.mxu0 0.0
      %1532 = vmatpush1.msra.mxu0 %v1513
      %1533 = vmatprep.subr.mxu0 0.0
      %1534 = vmatpush1.msra.mxu0 %v1527
      %1535 = vmatprep.subr.mxu0 0.0
      %1536 = vmatpush1.msra.mxu0 0.0
      %1537 = vmatprep.subr.mxu0 0.0
      %1538 = vmatpush1.msra.mxu0 0.0
      %1539 = vmatprep.subr.mxu0 0.0
      %1540 = vmatpush1.msra.mxu0 0.0
      %1541 = vmatprep.subr.mxu0 0.0
      %1542 = vmatpush1.msra.mxu0 0.0
      %1543 = vmatprep.subr.mxu0 0.0
      %1544 = vmatpush1.msra.mxu0 0.0
      %1545 = vmatprep.subr.mxu0 0.0
      %1546 = vmatpush1.msra.mxu0 0.0
      %1547 = vmatprep.subr.mxu0 0.0
      %1548 = vmatpush1.msra.mxu0 0.0
      %1549 = vmatprep.subr.mxu0 0.0
      %1550 = vmatpush1.msra.mxu0 0.0
      %1551 = vmatprep.subr.mxu0 0.0
      %1552 = vmatpush1.msra.mxu0 0.0
      %1553 = vmatprep.subr.mxu0 0.0
      %1554 = vmatpush1.msra.mxu0 0.0
      %1555 = vmatprep.subr.mxu0 0.0
      %1556 = vmatpush1.msra.mxu0 0.0
      %1557 = vmatprep.subr.mxu0 0.0
      %1558 = vmatpush1.msra.mxu0 0.0
      %1559 = vmatprep.subr.mxu0 0.0
      %1560 = vmatpush1.msra.mxu0 0.0
      %1561 = vmatprep.subr.mxu0 0.0
      %1562 = vmatpush1.msra.mxu0 0.0
      %1563 = vmatprep.subr.mxu0 0.0
      %1564 = vmatpush1.msra.mxu0 0.0
      %1565 = vmatprep.subr.mxu0 0.0
      %1566 = vmatpush1.msra.mxu0 0.0
      %1567 = vmatprep.subr.mxu0 0.0
      %1568 = vmatpush1.msra.mxu0 0.0
      %1569 = vmatprep.subr.mxu0 0.0
      %1570 = vmatpush1.msra.mxu0 0.0
      %1571 = vmatprep.subr.mxu0 0.0
      %1572 = vmatpush1.msra.mxu0 0.0
      %1573 = vmatprep.subr.mxu0 0.0
      %1574 = vmatpush1.msra.mxu0 0.0
      %1575 = vmatprep.subr.mxu0 0.0
      %1576 = vmatpush1.msra.mxu0 0.0
      %1577 = vmatprep.subr.mxu0 0.0
      %1578 = vmatpush1.msra.mxu0 0.0
      %1579 = vmatprep.subr.mxu0 0.0
      %1580 = vmatpush1.msra.mxu0 0.0
      %1581 = vmatprep.subr.mxu0 0.0
      %1582 = vmatpush1.msra.mxu0 0.0
      %1583 = vmatprep.subr.mxu0 0.0
      %1584 = vmatpush1.msra.mxu0 0.0
      %1585 = vmatprep.subr.mxu0 0.0
      %1586 = vmatpush1.msra.mxu0 0.0
      %1587 = vmatprep.subr.mxu0 0.0
      %1588 = vmatpush1.msra.mxu0 0.0
      %1589 = vmatprep.subr.mxu0 0.0
      %1590 = vmatpush1.msra.mxu0 0.0
      %1591 = vmatprep.subr.mxu0 0.0
      %1592 = vmatpush1.msra.mxu0 0.0
      %1593 = vmatprep.mubr.f32.mxu0 0.0
      %1594 = vmatmul.mubr.f32.gmra.mrb[0].mxu0 %v1519
      %v1595 = vpop.f32.mrb[0].mxu0
      %v1596 = vadd.f32 0.0, %v1595
      %v1597 = vpop.f32.mrb[0].mxu0
      %1598 = vmatprep.mubr.f32.mxu0 0.0
      %1599 = vmatmul.mubr.f32.gmra.mrb[0].mxu0 %v1522
      %v1600 = vpop.f32.mrb[0].mxu0
      %v1601 = vadd.f32 0.0, %v1600
      %v1602 = vpop.f32.mrb[0].mxu0
      %1603 = vmatprep.mubr.f32.mxu0 0.0
      %1604 = vmatmul.mubr.f32.gmra.mrb[0].mxu0 %v1525
      %v1605 = vpop.f32.mrb[0].mxu0
      %v1606 = vadd.f32 0.0, %v1605
      %v1607 = vpop.f32.mrb[0].mxu0
      %1608 = vdwg.mxu0
      %v1609 = vld [vmem:[%s5 + $0x10] sm:$0xff]
      %v1611 = vsel %vm726, %v1596, 0
      %v1614 = vsel %vm726, %v1601, 0
      %v1617 = vsel %vm726, %v1606, 0
      %1619 = vmatprep.subr.mxu0 0.0
      %1620 = vmatpush1.msra.mxu0 %v1609
      %1621 = vmatprep.subr.mxu0 0.0
      %1622 = vmatpush1.msra.mxu0 0.0
      %1623 = vmatprep.subr.mxu0 0.0
      %1624 = vmatpush1.msra.mxu0 0.0
      %1625 = vmatprep.subr.mxu0 0.0
      %1626 = vmatpush1.msra.mxu0 0.0
      %1627 = vmatprep.subr.mxu0 0.0
      %1628 = vmatpush1.msra.mxu0 0.0
      %1629 = vmatprep.subr.mxu0 0.0
      %1630 = vmatpush1.msra.mxu0 0.0
      %1631 = vmatprep.subr.mxu0 0.0
      %1632 = vmatpush1.msra.mxu0 0.0
      %1633 = vmatprep.subr.mxu0 0.0
      %1634 = vmatpush1.msra.mxu0 0.0
      %1635 = vmatprep.subr.mxu0 0.0
      %1636 = vmatpush1.msra.mxu0 0.0
      %1637 = vmatprep.subr.mxu0 0.0
      %1638 = vmatpush1.msra.mxu0 0.0
      %1639 = vmatprep.subr.mxu0 0.0
      %1640 = vmatpush1.msra.mxu0 0.0
      %1641 = vmatprep.subr.mxu0 0.0
      %1642 = vmatpush1.msra.mxu0 0.0
      %1643 = vmatprep.subr.mxu0 0.0
      %1644 = vmatpush1.msra.mxu0 0.0
      %1645 = vmatprep.subr.mxu0 0.0
      %1646 = vmatpush1.msra.mxu0 0.0
      %1647 = vmatprep.subr.mxu0 0.0
      %1648 = vmatpush1.msra.mxu0 0.0
      %1649 = vmatprep.subr.mxu0 0.0
      %1650 = vmatpush1.msra.mxu0 0.0
      %1651 = vmatprep.subr.mxu0 0.0
      %1652 = vmatpush1.msra.mxu0 0.0
      %1653 = vmatprep.subr.mxu0 0.0
      %1654 = vmatpush1.msra.mxu0 0.0
      %1655 = vmatprep.subr.mxu0 0.0
      %1656 = vmatpush1.msra.mxu0 0.0
      %1657 = vmatprep.subr.mxu0 0.0
      %1658 = vmatpush1.msra.mxu0 0.0
      %1659 = vmatprep.subr.mxu0 0.0
      %1660 = vmatpush1.msra.mxu0 0.0
      %1661 = vmatprep.subr.mxu0 0.0
      %1662 = vmatpush1.msra.mxu0 0.0
      %1663 = vmatprep.subr.mxu0 0.0
      %1664 = vmatpush1.msra.mxu0 0.0
      %1665 = vmatprep.subr.mxu0 0.0
      %1666 = vmatpush1.msra.mxu0 0.0
      %1667 = vmatprep.subr.mxu0 0.0
      %1668 = vmatpush1.msra.mxu0 0.0
      %1669 = vmatprep.subr.mxu0 0.0
      %1670 = vmatpush1.msra.mxu0 0.0
      %1671 = vmatprep.subr.mxu0 0.0
      %1672 = vmatpush1.msra.mxu0 0.0
      %1673 = vmatprep.subr.mxu0 0.0
      %1674 = vmatpush1.msra.mxu0 0.0
      %1675 = vmatprep.subr.mxu0 0.0
      %1676 = vmatpush1.msra.mxu0 0.0
      %1677 = vmatprep.subr.mxu0 0.0
      %1678 = vmatpush1.msra.mxu0 0.0
      %1679 = vmatprep.subr.mxu0 0.0
      %1680 = vmatpush1.msra.mxu0 0.0
      %1681 = vmatprep.subr.mxu0 0.0
      %1682 = vmatpush1.msra.mxu0 0.0
      %1683 = vmatprep.mubr.f32.mxu0 0.0
      %1684 = vmatmul.mubr.f32.gmra.mrb[0].mxu0 %v1611
      %v1685 = vpop.f32.mrb[0].mxu0
      %v1686 = vadd.f32 0.0, %v1685
      %v1687 = vpop.f32.mrb[0].mxu0
      %1688 = vmatprep.mubr.f32.mxu0 0.0
      %1689 = vmatmul.mubr.f32.gmra.mrb[0].mxu0 %v1614
      %v1690 = vpop.f32.mrb[0].mxu0
      %v1691 = vadd.f32 0.0, %v1690
      %v1692 = vpop.f32.mrb[0].mxu0
      %1693 = vmatprep.mubr.f32.mxu0 0.0
      %1694 = vmatmul.mubr.f32.gmra.mrb[0].mxu0 %v1617
      %v1695 = vpop.f32.mrb[0].mxu0
      %v1696 = vadd.f32 0.0, %v1695
      %v1697 = vpop.f32.mrb[0].mxu0
      %1698 = vdwg.mxu0
      %v1699 = vadd.f32 %v1360, %v1686
      %v1700 = vadd.f32 %v1365, %v1691
      %v1701 = vadd.f32 %v1370, %v1696
      %1702 = vrot.lane.b32.xlu0 %v714, 104
      %v1703 = vpop.permute.xlu0 %1702
      %1704 = vrot.lane.b32.xlu0 %v715, 104
      %v1705 = vpop.permute.xlu0 %1704
      %1706 = vrot.lane.b32.xlu0 %v716, 104
      %v1707 = vpop.permute.xlu0 %1706
      %1708 = vrot.lane.b32.xlu0 %v701, 72
      %v1709 = vpop.permute.xlu0 %1708
      %1710 = vrot.lane.b32.xlu0 %v706, 72
      %v1711 = vpop.permute.xlu0 %1710
      %1712 = vrot.lane.b32.xlu0 %v711, 72
      %v1713 = vpop.permute.xlu0 %1712
      %v1714 = vsel %vm726, %v1703, 0
      %v1716 = vsel %vm726, %v1705, 0
      %v1718 = vsel %vm726, %v1707, 0
      %v1720 = vsel %vm726, %v1709, 0
      %v1722 = vsel %vm726, %v1711, 0
      %v1724 = vsel %vm726, %v1713, 0
      %1726 = vmatprep.subr.mxu0 0.0
      %1727 = vmatpush1.xpose.msra.mxu0 %v1720
      %1728 = vmatprep.subr.mxu0 0.0
      %1729 = vmatpush1.xpose.msra.mxu0 %v1722
      %1730 = vmatprep.subr.mxu0 0.0
      %1731 = vmatpush1.xpose.msra.mxu0 %v1724
      %1732 = vmatprep.subr.mxu0 0.0
      %1733 = vmatpush1.xpose.msra.mxu0 0.0
      %1734 = vmatprep.subr.mxu0 0.0
      %1735 = vmatpush1.xpose.msra.mxu0 0.0
      %1736 = vmatprep.subr.mxu0 0.0
      %1737 = vmatpush1.xpose.msra.mxu0 0.0
      %1738 = vmatprep.subr.mxu0 0.0
      %1739 = vmatpush1.xpose.msra.mxu0 0.0
      %1740 = vmatprep.subr.mxu0 0.0
      %1741 = vmatpush1.xpose.msra.mxu0 0.0
      %1742 = vmatprep.subr.mxu0 0.0
      %1743 = vmatpush1.xpose.msra.mxu0 0.0
      %1744 = vmatprep.subr.mxu0 0.0
      %1745 = vmatpush1.xpose.msra.mxu0 0.0
      %1746 = vmatprep.subr.mxu0 0.0
      %1747 = vmatpush1.xpose.msra.mxu0 0.0
      %1748 = vmatprep.subr.mxu0 0.0
      %1749 = vmatpush1.xpose.msra.mxu0 0.0
      %1750 = vmatprep.subr.mxu0 0.0
      %1751 = vmatpush1.xpose.msra.mxu0 0.0
      %1752 = vmatprep.subr.mxu0 0.0
      %1753 = vmatpush1.xpose.msra.mxu0 0.0
      %1754 = vmatprep.subr.mxu0 0.0
      %1755 = vmatpush1.xpose.msra.mxu0 0.0
      %1756 = vmatprep.subr.mxu0 0.0
      %1757 = vmatpush1.xpose.msra.mxu0 0.0
      %1758 = vmatprep.subr.mxu0 0.0
      %1759 = vmatpush1.xpose.msra.mxu0 0.0
      %1760 = vmatprep.subr.mxu0 0.0
      %1761 = vmatpush1.xpose.msra.mxu0 0.0
      %1762 = vmatprep.subr.mxu0 0.0
      %1763 = vmatpush1.xpose.msra.mxu0 0.0
      %1764 = vmatprep.subr.mxu0 0.0
      %1765 = vmatpush1.xpose.msra.mxu0 0.0
      %1766 = vmatprep.subr.mxu0 0.0
      %1767 = vmatpush1.xpose.msra.mxu0 0.0
      %1768 = vmatprep.subr.mxu0 0.0
      %1769 = vmatpush1.xpose.msra.mxu0 0.0
      %1770 = vmatprep.subr.mxu0 0.0
      %1771 = vmatpush1.xpose.msra.mxu0 0.0
      %1772 = vmatprep.subr.mxu0 0.0
      %1773 = vmatpush1.xpose.msra.mxu0 0.0
      %1774 = vmatprep.subr.mxu0 0.0
      %1775 = vmatpush1.xpose.msra.mxu0 0.0
      %1776 = vmatprep.subr.mxu0 0.0
      %1777 = vmatpush1.xpose.msra.mxu0 0.0
      %1778 = vmatprep.subr.mxu0 0.0
      %1779 = vmatpush1.xpose.msra.mxu0 0.0
      %1780 = vmatprep.subr.mxu0 0.0
      %1781 = vmatpush1.xpose.msra.mxu0 0.0
      %1782 = vmatprep.subr.mxu0 0.0
      %1783 = vmatpush1.xpose.msra.mxu0 0.0
      %1784 = vmatprep.subr.mxu0 0.0
      %1785 = vmatpush1.xpose.msra.mxu0 0.0
      %1786 = vmatprep.subr.mxu0 0.0
      %1787 = vmatpush1.xpose.msra.mxu0 0.0
      %1788 = vmatprep.subr.mxu0 0.0
      %1789 = vmatpush1.xpose.msra.mxu0 0.0
      %1790 = vmatprep.mubr.f32.mxu0 0.0
      %1791 = vmatmul.mubr.f32.gmra.mrb[0].mxu0 %v1714
      %v1792 = vpop.f32.mrb[0].mxu0
      %v1793 = vadd.f32 0.0, %v1792
      %v1794 = vpop.f32.mrb[0].mxu0
      %1795 = vmatprep.mubr.f32.mxu0 0.0
      %1796 = vmatmul.mubr.f32.gmra.mrb[0].mxu0 %v1716
      %v1797 = vpop.f32.mrb[0].mxu0
      %v1798 = vadd.f32 0.0, %v1797
      %v1799 = vpop.f32.mrb[0].mxu0
      %1800 = vmatprep.mubr.f32.mxu0 0.0
      %1801 = vmatmul.mubr.f32.gmra.mrb[0].mxu0 %v1718
      %v1802 = vpop.f32.mrb[0].mxu0
      %v1803 = vadd.f32 0.0, %v1802
      %v1804 = vpop.f32.mrb[0].mxu0
      %1805 = vdwg.mxu0
      %v1806 = vsel %vm822, %v1793, -inf
      %1807 = vmax.xlane.f32.xlu0 %v1806
      %v1808 = vpop.xlane.xlu0 %1807
      %v1809 = vsel %vm822, %v1798, -inf
      %1810 = vmax.xlane.f32.xlu0 %v1809
      %v1811 = vpop.xlane.xlu0 %1810
      %v1812 = vsel %vm829, %v1803, -inf
      %1813 = vmax.xlane.f32.xlu0 %v1812
      %v1814 = vpop.xlane.xlu0 %1813
      %v1815 = vsub.f32 %v1793, %v1808
      %v1816 = vsub.f32 %v1798, %v1811
      %v1817 = vsub.f32 %v1803, %v1814
      %v1818 = vmul.f32 %v1815, 1.442695
      %v1819 = vpow.pop %v1818
      %v1820 = vmul.f32 %v1816, 1.442695
      %v1821 = vpow.pop %v1820
      %v1822 = vmul.f32 %v1817, 1.442695
      %v1823 = vpow.pop %v1822
      %v1824 = vsel %vm822, %v1819, 0.0
      %1825 = vadd.xlane.f32.xlu0 %v1824
      %v1826 = vpop.xlane.xlu0 %1825
      %v1827 = vsel %vm822, %v1821, 0.0
      %1828 = vadd.xlane.f32.xlu0 %v1827
      %v1829 = vpop.xlane.xlu0 %1828
      %v1830 = vsel %vm829, %v1823, 0.0
      %1831 = vadd.xlane.f32.xlu0 %v1830
      %v1832 = vpop.xlane.xlu0 %1831
      %v1833 = vrcp.pop %v1826
      %v1834 = vrcp.pop %v1829
      %v1835 = vrcp.pop %v1832
      %v1836 = vmul.f32 %v1819, %v1833
      %v1837 = vmul.f32 %v1821, %v1834
      %v1838 = vmul.f32 %v1823, %v1835
      %1839 = vrot.lane.b32.xlu0 %v701, 40
      %v1840 = vpop.permute.xlu0 %1839
      %1841 = vrot.lane.b32.xlu0 %v706, 40
      %v1842 = vpop.permute.xlu0 %1841
      %1843 = vrot.lane.b32.xlu0 %v711, 40
      %v1844 = vpop.permute.xlu0 %1843
      %v1848 = vsel %vm822, %v1836, 0
      %v1851 = vsel %vm822, %v1837, 0
      %v1854 = vsel %vm822, %v1838, 0
      %v1856 = vsel %vm874, %v1844, 0
      %1858 = vmatprep.subr.mxu0 0.0
      %1859 = vmatpush1.msra.mxu0 %v1840
      %1860 = vmatprep.subr.mxu0 0.0
      %1861 = vmatpush1.msra.mxu0 %v1842
      %1862 = vmatprep.subr.mxu0 0.0
      %1863 = vmatpush1.msra.mxu0 %v1856
      %1864 = vmatprep.subr.mxu0 0.0
      %1865 = vmatpush1.msra.mxu0 0.0
      %1866 = vmatprep.subr.mxu0 0.0
      %1867 = vmatpush1.msra.mxu0 0.0
      %1868 = vmatprep.subr.mxu0 0.0
      %1869 = vmatpush1.msra.mxu0 0.0
      %1870 = vmatprep.subr.mxu0 0.0
      %1871 = vmatpush1.msra.mxu0 0.0
      %1872 = vmatprep.subr.mxu0 0.0
      %1873 = vmatpush1.msra.mxu0 0.0
      %1874 = vmatprep.subr.mxu0 0.0
      %1875 = vmatpush1.msra.mxu0 0.0
      %1876 = vmatprep.subr.mxu0 0.0
      %1877 = vmatpush1.msra.mxu0 0.0
      %1878 = vmatprep.subr.mxu0 0.0
      %1879 = vmatpush1.msra.mxu0 0.0
      %1880 = vmatprep.subr.mxu0 0.0
      %1881 = vmatpush1.msra.mxu0 0.0
      %1882 = vmatprep.subr.mxu0 0.0
      %1883 = vmatpush1.msra.mxu0 0.0
      %1884 = vmatprep.subr.mxu0 0.0
      %1885 = vmatpush1.msra.mxu0 0.0
      %1886 = vmatprep.subr.mxu0 0.0
      %1887 = vmatpush1.msra.mxu0 0.0
      %1888 = vmatprep.subr.mxu0 0.0
      %1889 = vmatpush1.msra.mxu0 0.0
      %1890 = vmatprep.subr.mxu0 0.0
      %1891 = vmatpush1.msra.mxu0 0.0
      %1892 = vmatprep.subr.mxu0 0.0
      %1893 = vmatpush1.msra.mxu0 0.0
      %1894 = vmatprep.subr.mxu0 0.0
      %1895 = vmatpush1.msra.mxu0 0.0
      %1896 = vmatprep.subr.mxu0 0.0
      %1897 = vmatpush1.msra.mxu0 0.0
      %1898 = vmatprep.subr.mxu0 0.0
      %1899 = vmatpush1.msra.mxu0 0.0
      %1900 = vmatprep.subr.mxu0 0.0
      %1901 = vmatpush1.msra.mxu0 0.0
      %1902 = vmatprep.subr.mxu0 0.0
      %1903 = vmatpush1.msra.mxu0 0.0
      %1904 = vmatprep.subr.mxu0 0.0
      %1905 = vmatpush1.msra.mxu0 0.0
      %1906 = vmatprep.subr.mxu0 0.0
      %1907 = vmatpush1.msra.mxu0 0.0
      %1908 = vmatprep.subr.mxu0 0.0
      %1909 = vmatpush1.msra.mxu0 0.0
      %1910 = vmatprep.subr.mxu0 0.0
      %1911 = vmatpush1.msra.mxu0 0.0
      %1912 = vmatprep.subr.mxu0 0.0
      %1913 = vmatpush1.msra.mxu0 0.0
      %1914 = vmatprep.subr.mxu0 0.0
      %1915 = vmatpush1.msra.mxu0 0.0
      %1916 = vmatprep.subr.mxu0 0.0
      %1917 = vmatpush1.msra.mxu0 0.0
      %1918 = vmatprep.subr.mxu0 0.0
      %1919 = vmatpush1.msra.mxu0 0.0
      %1920 = vmatprep.subr.mxu0 0.0
      %1921 = vmatpush1.msra.mxu0 0.0
      %1922 = vmatprep.mubr.f32.mxu0 0.0
      %1923 = vmatmul.mubr.f32.gmra.mrb[0].mxu0 %v1848
      %v1924 = vpop.f32.mrb[0].mxu0
      %v1925 = vadd.f32 0.0, %v1924
      %v1926 = vpop.f32.mrb[0].mxu0
      %1927 = vmatprep.mubr.f32.mxu0 0.0
      %1928 = vmatmul.mubr.f32.gmra.mrb[0].mxu0 %v1851
      %v1929 = vpop.f32.mrb[0].mxu0
      %v1930 = vadd.f32 0.0, %v1929
      %v1931 = vpop.f32.mrb[0].mxu0
      %1932 = vmatprep.mubr.f32.mxu0 0.0
      %1933 = vmatmul.mubr.f32.gmra.mrb[0].mxu0 %v1854
      %v1934 = vpop.f32.mrb[0].mxu0
      %v1935 = vadd.f32 0.0, %v1934
      %v1936 = vpop.f32.mrb[0].mxu0
      %1937 = vdwg.mxu0
      %v1938 = vld [vmem:[%s5 + $0x18] sm:$0xff]
      %v1940 = vsel %vm726, %v1925, 0
      %v1943 = vsel %vm726, %v1930, 0
      %v1946 = vsel %vm726, %v1935, 0
      %1948 = vmatprep.subr.mxu0 0.0
      %1949 = vmatpush1.msra.mxu0 %v1938
      %1950 = vmatprep.subr.mxu0 0.0
      %1951 = vmatpush1.msra.mxu0 0.0
      %1952 = vmatprep.subr.mxu0 0.0
      %1953 = vmatpush1.msra.mxu0 0.0
      %1954 = vmatprep.subr.mxu0 0.0
      %1955 = vmatpush1.msra.mxu0 0.0
      %1956 = vmatprep.subr.mxu0 0.0
      %1957 = vmatpush1.msra.mxu0 0.0
      %1958 = vmatprep.subr.mxu0 0.0
      %1959 = vmatpush1.msra.mxu0 0.0
      %1960 = vmatprep.subr.mxu0 0.0
      %1961 = vmatpush1.msra.mxu0 0.0
      %1962 = vmatprep.subr.mxu0 0.0
      %1963 = vmatpush1.msra.mxu0 0.0
      %1964 = vmatprep.subr.mxu0 0.0
      %1965 = vmatpush1.msra.mxu0 0.0
      %1966 = vmatprep.subr.mxu0 0.0
      %1967 = vmatpush1.msra.mxu0 0.0
      %1968 = vmatprep.subr.mxu0 0.0
      %1969 = vmatpush1.msra.mxu0 0.0
      %1970 = vmatprep.subr.mxu0 0.0
      %1971 = vmatpush1.msra.mxu0 0.0
      %1972 = vmatprep.subr.mxu0 0.0
      %1973 = vmatpush1.msra.mxu0 0.0
      %1974 = vmatprep.subr.mxu0 0.0
      %1975 = vmatpush1.msra.mxu0 0.0
      %1976 = vmatprep.subr.mxu0 0.0
      %1977 = vmatpush1.msra.mxu0 0.0
      %1978 = vmatprep.subr.mxu0 0.0
      %1979 = vmatpush1.msra.mxu0 0.0
      %1980 = vmatprep.subr.mxu0 0.0
      %1981 = vmatpush1.msra.mxu0 0.0
      %1982 = vmatprep.subr.mxu0 0.0
      %1983 = vmatpush1.msra.mxu0 0.0
      %1984 = vmatprep.subr.mxu0 0.0
      %1985 = vmatpush1.msra.mxu0 0.0
      %1986 = vmatprep.subr.mxu0 0.0
      %1987 = vmatpush1.msra.mxu0 0.0
      %1988 = vmatprep.subr.mxu0 0.0
      %1989 = vmatpush1.msra.mxu0 0.0
      %1990 = vmatprep.subr.mxu0 0.0
      %1991 = vmatpush1.msra.mxu0 0.0
      %1992 = vmatprep.subr.mxu0 0.0
      %1993 = vmatpush1.msra.mxu0 0.0
      %1994 = vmatprep.subr.mxu0 0.0
      %1995 = vmatpush1.msra.mxu0 0.0
      %1996 = vmatprep.subr.mxu0 0.0
      %1997 = vmatpush1.msra.mxu0 0.0
      %1998 = vmatprep.subr.mxu0 0.0
      %1999 = vmatpush1.msra.mxu0 0.0
      %2000 = vmatprep.subr.mxu0 0.0
      %2001 = vmatpush1.msra.mxu0 0.0
      %2002 = vmatprep.subr.mxu0 0.0
      %2003 = vmatpush1.msra.mxu0 0.0
      %2004 = vmatprep.subr.mxu0 0.0
      %2005 = vmatpush1.msra.mxu0 0.0
      %2006 = vmatprep.subr.mxu0 0.0
      %2007 = vmatpush1.msra.mxu0 0.0
      %2008 = vmatprep.subr.mxu0 0.0
      %2009 = vmatpush1.msra.mxu0 0.0
      %2010 = vmatprep.subr.mxu0 0.0
      %2011 = vmatpush1.msra.mxu0 0.0
      %2012 = vmatprep.mubr.f32.mxu0 0.0
      %2013 = vmatmul.mubr.f32.gmra.mrb[0].mxu0 %v1940
      %v2014 = vpop.f32.mrb[0].mxu0
      %v2015 = vadd.f32 0.0, %v2014
      %v2016 = vpop.f32.mrb[0].mxu0
      %2017 = vmatprep.mubr.f32.mxu0 0.0
      %2018 = vmatmul.mubr.f32.gmra.mrb[0].mxu0 %v1943
      %v2019 = vpop.f32.mrb[0].mxu0
      %v2020 = vadd.f32 0.0, %v2019
      %v2021 = vpop.f32.mrb[0].mxu0
      %2022 = vmatprep.mubr.f32.mxu0 0.0
      %2023 = vmatmul.mubr.f32.gmra.mrb[0].mxu0 %v1946
      %v2024 = vpop.f32.mrb[0].mxu0
      %v2025 = vadd.f32 0.0, %v2024
      %v2026 = vpop.f32.mrb[0].mxu0
      %2027 = vdwg.mxu0
      %v2028 = vadd.f32 %v1699, %v2015
      %v2029 = vadd.f32 %v1700, %v2020
      %v2030 = vadd.f32 %v1701, %v2025
      %v2031 = vadd.f32 %v549, %v2028
      %v2032 = vadd.f32 %v550, %v2029
      %v2033 = vadd.f32 %v551, %v2030
      %v2034 = vld [vmem:[%s6] sm:$0x1]
      %v2036 = vlaneseq
      %v2037 = vshrl.u32 %v2036, 7
      %v2038 = vsub.s32 0, %v2037
      %v2039 = vrot.slane %v2034, %v2038
      %v2041 = vadd.f32 %v2031, %v2039
      %v2042 = vadd.f32 %v2032, %v2039
      %v2043 = vadd.f32 %v2033, %v2039
      %v2044 = vld [vmem:[%s7] sm:$0x1]
      %v2045 = vld [vmem:[%s8] sm:$0x1]
      %v2046 = vsel %vm554, %v2041, 0.0
      %2047 = vadd.xlane.f32.xlu0 %v2046
      %v2048 = vpop.xlane.xlu0 %2047
      %v2049 = vsel %vm554, %v2042, 0.0
      %2050 = vadd.xlane.f32.xlu0 %v2049
      %v2051 = vpop.xlane.xlu0 %2050
      %v2052 = vsel %vm561, %v2043, 0.0
      %2053 = vadd.xlane.f32.xlu0 %v2052
      %v2054 = vpop.xlane.xlu0 %2053
      %v2055 = vmul.f32 %v2048, %v565
      %v2056 = vmul.f32 %v2051, %v565
      %v2057 = vmul.f32 %v2054, %v565
      %v2058 = vsub.f32 %v2041, %v2055
      %v2059 = vsub.f32 %v2042, %v2056
      %v2060 = vsub.f32 %v2043, %v2057
      %v2061 = vmul.f32 %v2058, %v2058
      %v2062 = vmul.f32 %v2059, %v2059
      %v2063 = vmul.f32 %v2060, %v2060
      %v2064 = vsel %vm554, %v2061, 0.0
      %2065 = vadd.xlane.f32.xlu0 %v2064
      %v2066 = vpop.xlane.xlu0 %2065
      %v2067 = vsel %vm554, %v2062, 0.0
      %2068 = vadd.xlane.f32.xlu0 %v2067
      %v2069 = vpop.xlane.xlu0 %2068
      %v2070 = vsel %vm561, %v2063, 0.0
      %2071 = vadd.xlane.f32.xlu0 %v2070
      %v2072 = vpop.xlane.xlu0 %2071
      %v2073 = vmul.f32 %v2066, %v565
      %v2074 = vmul.f32 %v2069, %v565
      %v2075 = vmul.f32 %v2072, %v565
      %v2076 = vadd.f32 %v2073, 1e-05
      %v2077 = vadd.f32 %v2074, 1e-05
      %v2078 = vadd.f32 %v2075, 1e-05
      %v2079 = vrsqrt.pop %v2076
      %v2080 = vrsqrt.pop %v2077
      %v2081 = vrsqrt.pop %v2078
      %v2082 = vmul.f32 %v2058, %v2079
      %v2083 = vmul.f32 %v2059, %v2080
      %v2084 = vmul.f32 %v2060, %v2081
      %v2086 = vlaneseq
      %v2087 = vshrl.u32 %v2086, 7
      %v2088 = vsub.s32 0, %v2087
      %v2089 = vrot.slane %v2044, %v2088
      %v2091 = vmul.f32 %v2082, %v2089
      %v2092 = vmul.f32 %v2083, %v2089
      %v2093 = vmul.f32 %v2084, %v2089
      %v2095 = vlaneseq
      %v2096 = vshrl.u32 %v2095, 7
      %v2097 = vsub.s32 0, %v2096
      %v2098 = vrot.slane %v2045, %v2097
      %v2100 = vadd.f32 %v2091, %v2098
      %v2101 = vadd.f32 %v2092, %v2098
      %v2102 = vadd.f32 %v2093, %v2098
      %v2103 = vld [vmem:[%s9] sm:$0xff]
      %v2104 = vld [vmem:[%s9 + $0x8] sm:$0xff]
      %v2105 = vld [vmem:[%s9 + $0x10] sm:$0xff]
      %v2106 = vld [vmem:[%s9 + $0x18] sm:$0xff]
      %v2107 = vld [vmem:[%s10] sm:$0x1]
      %v2109 = vlaneseq
      %v2110 = vshrl.u32 %v2109, 7
      %v2111 = vsub.s32 0, %v2110
      %v2112 = vrot.slane %v2107, %v2111
      %v2115 = vsel %vm554, %v2100, 0
      %v2118 = vsel %vm554, %v2101, 0
      %v2121 = vsel %vm554, %v2102, 0
      %2123 = vmatprep.subr.mxu0 0.0
      %2124 = vmatpush1.msra.mxu0 %v2103
      %2125 = vmatprep.subr.mxu0 0.0
      %2126 = vmatpush1.msra.mxu0 %v2104
      %2127 = vmatprep.subr.mxu0 0.0
      %2128 = vmatpush1.msra.mxu0 %v2105
      %2129 = vmatprep.subr.mxu0 0.0
      %2130 = vmatpush1.msra.mxu0 %v2106
      %2131 = vmatprep.subr.mxu0 0.0
      %2132 = vmatpush1.msra.mxu0 0.0
      %2133 = vmatprep.subr.mxu0 0.0
      %2134 = vmatpush1.msra.mxu0 0.0
      %2135 = vmatprep.subr.mxu0 0.0
      %2136 = vmatpush1.msra.mxu0 0.0
      %2137 = vmatprep.subr.mxu0 0.0
      %2138 = vmatpush1.msra.mxu0 0.0
      %2139 = vmatprep.subr.mxu0 0.0
      %2140 = vmatpush1.msra.mxu0 0.0
      %2141 = vmatprep.subr.mxu0 0.0
      %2142 = vmatpush1.msra.mxu0 0.0
      %2143 = vmatprep.subr.mxu0 0.0
      %2144 = vmatpush1.msra.mxu0 0.0
      %2145 = vmatprep.subr.mxu0 0.0
      %2146 = vmatpush1.msra.mxu0 0.0
      %2147 = vmatprep.subr.mxu0 0.0
      %2148 = vmatpush1.msra.mxu0 0.0
      %2149 = vmatprep.subr.mxu0 0.0
      %2150 = vmatpush1.msra.mxu0 0.0
      %2151 = vmatprep.subr.mxu0 0.0
      %2152 = vmatpush1.msra.mxu0 0.0
      %2153 = vmatprep.subr.mxu0 0.0
      %2154 = vmatpush1.msra.mxu0 0.0
      %2155 = vmatprep.subr.mxu0 0.0
      %2156 = vmatpush1.msra.mxu0 0.0
      %2157 = vmatprep.subr.mxu0 0.0
      %2158 = vmatpush1.msra.mxu0 0.0
      %2159 = vmatprep.subr.mxu0 0.0
      %2160 = vmatpush1.msra.mxu0 0.0
      %2161 = vmatprep.subr.mxu0 0.0
      %2162 = vmatpush1.msra.mxu0 0.0
      %2163 = vmatprep.subr.mxu0 0.0
      %2164 = vmatpush1.msra.mxu0 0.0
      %2165 = vmatprep.subr.mxu0 0.0
      %2166 = vmatpush1.msra.mxu0 0.0
      %2167 = vmatprep.subr.mxu0 0.0
      %2168 = vmatpush1.msra.mxu0 0.0
      %2169 = vmatprep.subr.mxu0 0.0
      %2170 = vmatpush1.msra.mxu0 0.0
      %2171 = vmatprep.subr.mxu0 0.0
      %2172 = vmatpush1.msra.mxu0 0.0
      %2173 = vmatprep.subr.mxu0 0.0
      %2174 = vmatpush1.msra.mxu0 0.0
      %2175 = vmatprep.subr.mxu0 0.0
      %2176 = vmatpush1.msra.mxu0 0.0
      %2177 = vmatprep.subr.mxu0 0.0
      %2178 = vmatpush1.msra.mxu0 0.0
      %2179 = vmatprep.subr.mxu0 0.0
      %2180 = vmatpush1.msra.mxu0 0.0
      %2181 = vmatprep.subr.mxu0 0.0
      %2182 = vmatpush1.msra.mxu0 0.0
      %2183 = vmatprep.subr.mxu0 0.0
      %2184 = vmatpush1.msra.mxu0 0.0
      %2185 = vmatprep.subr.mxu0 0.0
      %2186 = vmatpush1.msra.mxu0 0.0
      %2187 = vmatprep.mubr.f32.mxu0 0.0
      %2188 = vmatmul.mubr.f32.gmra.mrb[0].mxu0 %v2115
      %v2189 = vpop.f32.mrb[0].mxu0
      %v2190 = vadd.f32 %v2112, %v2189
      %v2191 = vpop.f32.mrb[0].mxu0
      %2192 = vmatprep.mubr.f32.mxu0 0.0
      %2193 = vmatmul.mubr.f32.gmra.mrb[0].mxu0 %v2118
      %v2194 = vpop.f32.mrb[0].mxu0
      %v2195 = vadd.f32 %v2112, %v2194
      %v2196 = vpop.f32.mrb[0].mxu0
      %2197 = vmatprep.mubr.f32.mxu0 0.0
      %2198 = vmatmul.mubr.f32.gmra.mrb[0].mxu0 %v2121
      %v2199 = vpop.f32.mrb[0].mxu0
      %v2200 = vadd.f32 %v2112, %v2199
      %v2201 = vpop.f32.mrb[0].mxu0
      %2202 = vdwg.mxu0
      %v2203 = vmul.f32 %v2190, 0.5
      %v2204 = vmul.f32 %v2195, 0.5
      %v2205 = vmul.f32 %v2200, 0.5
      %v2206 = vmul.f32 %v2190, 0.70710677
      %v2207 = vmul.f32 %v2195, 0.70710677
      %v2208 = vmul.f32 %v2200, 0.70710677
      %vm2209 = vcmp.ge.f32.partialorder %v2206, 0.0
      %vm2210 = vcmp.ge.f32.partialorder %v2207, 0.0
      %vm2211 = vcmp.ge.f32.partialorder %v2208, 0.0
      %v2212 = vsel %vm2209, 1.0, -1.0
      %v2213 = vsel %vm2210, 1.0, -1.0
      %v2214 = vsel %vm2211, 1.0, -1.0
      %v2215 = vand.u32 2147483647, %v2206
      %v2216 = vand.u32 2147483647, %v2207
      %v2217 = vand.u32 2147483647, %v2208
      %v2218 = vmul.f32 %v2215, 0.3275911
      %v2219 = vmul.f32 %v2216, 0.3275911
      %v2220 = vmul.f32 %v2217, 0.3275911
      %v2221 = vadd.f32 %v2218, 1.0
      %v2222 = vadd.f32 %v2219, 1.0
      %v2223 = vadd.f32 %v2220, 1.0
      %v2224 = vrcp.pop %v2221
      %v2225 = vmul.f32 1.0, %v2224
      %v2226 = vrcp.pop %v2222
      %v2227 = vmul.f32 1.0, %v2226
      %v2228 = vrcp.pop %v2223
      %v2229 = vmul.f32 1.0, %v2228
      %v2230 = vmul.f32 %v2225, 1.0614054
      %v2231 = vmul.f32 %v2227, 1.0614054
      %v2232 = vmul.f32 %v2229, 1.0614054
      %v2233 = vadd.f32 %v2230, -1.4531521
      %v2234 = vadd.f32 %v2231, -1.4531521
      %v2235 = vadd.f32 %v2232, -1.4531521
      %v2236 = vmul.f32 %v2233, %v2225
      %v2237 = vmul.f32 %v2234, %v2227
      %v2238 = vmul.f32 %v2235, %v2229
      %v2239 = vadd.f32 %v2236, 1.4214138
      %v2240 = vadd.f32 %v2237, 1.4214138
      %v2241 = vadd.f32 %v2238, 1.4214138
      %v2242 = vmul.f32 %v2239, %v2225
      %v2243 = vmul.f32 %v2240, %v2227
      %v2244 = vmul.f32 %v2241, %v2229
      %v2245 = vadd.f32 %v2242, -0.28449672
      %v2246 = vadd.f32 %v2243, -0.28449672
      %v2247 = vadd.f32 %v2244, -0.28449672
      %v2248 = vmul.f32 %v2245, %v2225
      %v2249 = vmul.f32 %v2246, %v2227
      %v2250 = vmul.f32 %v2247, %v2229
      %v2251 = vadd.f32 %v2248, 0.2548296
      %v2252 = vadd.f32 %v2249, 0.2548296
      %v2253 = vadd.f32 %v2250, 0.2548296
      %v2254 = vmul.f32 %v2251, %v2225
      %v2255 = vmul.f32 %v2252, %v2227
      %v2256 = vmul.f32 %v2253, %v2229
      %v2257 = vsub.f32 0.0, %v2215
      %v2258 = vsub.f32 0.0, %v2216
      %v2259 = vsub.f32 0.0, %v2217
      %v2260 = vmul.f32 %v2257, %v2215
      %v2261 = vmul.f32 %v2258, %v2216
      %v2262 = vmul.f32 %v2259, %v2217
      %v2263 = vmul.f32 %v2260, 1.442695
      %v2264 = vpow.pop %v2263
      %v2265 = vmul.f32 %v2261, 1.442695
      %v2266 = vpow.pop %v2265
      %v2267 = vmul.f32 %v2262, 1.442695
      %v2268 = vpow.pop %v2267
      %v2269 = vmul.f32 %v2254, %v2264
      %v2270 = vmul.f32 %v2255, %v2266
      %v2271 = vmul.f32 %v2256, %v2268
      %v2272 = vsub.f32 1.0, %v2269
      %v2273 = vsub.f32 1.0, %v2270
      %v2274 = vsub.f32 1.0, %v2271
      %v2275 = vmul.f32 %v2212, %v2272
      %v2276 = vmul.f32 %v2213, %v2273
      %v2277 = vmul.f32 %v2214, %v2274
      %v2278 = vadd.f32 %v2275, 1.0
      %v2279 = vadd.f32 %v2276, 1.0
      %v2280 = vadd.f32 %v2277, 1.0
      %v2281 = vmul.f32 %v2203, %v2278
      %v2282 = vmul.f32 %v2204, %v2279
      %v2283 = vmul.f32 %v2205, %v2280
      %v2284 = vld [vmem:[%s11] sm:$0xff]
      %v2285 = vld [vmem:[%s11 + $0x8] sm:$0xff]
      %v2286 = vld [vmem:[%s11 + $0x10] sm:$0xff]
      %v2287 = vld [vmem:[%s11 + $0x18] sm:$0xff]
      %v2288 = vld [vmem:[%s11 + $0x20] sm:$0xff]
      %v2289 = vld [vmem:[%s11 + $0x28] sm:$0xff]
      %v2290 = vld [vmem:[%s11 + $0x30] sm:$0xff]
      %v2291 = vld [vmem:[%s11 + $0x38] sm:$0xff]
      %v2292 = vld [vmem:[%s11 + $0x40] sm:$0xff]
      %v2293 = vld [vmem:[%s11 + $0x48] sm:$0xff]
      %v2294 = vld [vmem:[%s11 + $0x50] sm:$0xff]
      %v2295 = vld [vmem:[%s11 + $0x58] sm:$0xff]
      %v2296 = vld [vmem:[%s11 + $0x60] sm:$0xff]
      %v2297 = vld [vmem:[%s11 + $0x68] sm:$0xff]
      %v2298 = vld [vmem:[%s11 + $0x70] sm:$0xff]
      %v2299 = vld [vmem:[%s11 + $0x78] sm:$0xff]
      %2300 = vmatprep.subr.mxu0 0.0
      %2301 = vmatpush1.msra.mxu0 %v2284
      %2302 = vmatprep.subr.mxu0 0.0
      %2303 = vmatpush1.msra.mxu0 %v2285
      %2304 = vmatprep.subr.mxu0 0.0
      %2305 = vmatpush1.msra.mxu0 %v2286
      %2306 = vmatprep.subr.mxu0 0.0
      %2307 = vmatpush1.msra.mxu0 %v2287
      %2308 = vmatprep.subr.mxu0 0.0
      %2309 = vmatpush1.msra.mxu0 %v2288
      %2310 = vmatprep.subr.mxu0 0.0
      %2311 = vmatpush1.msra.mxu0 %v2289
      %2312 = vmatprep.subr.mxu0 0.0
      %2313 = vmatpush1.msra.mxu0 %v2290
      %2314 = vmatprep.subr.mxu0 0.0
      %2315 = vmatpush1.msra.mxu0 %v2291
      %2316 = vmatprep.subr.mxu0 0.0
      %2317 = vmatpush1.msra.mxu0 %v2292
      %2318 = vmatprep.subr.mxu0 0.0
      %2319 = vmatpush1.msra.mxu0 %v2293
      %2320 = vmatprep.subr.mxu0 0.0
      %2321 = vmatpush1.msra.mxu0 %v2294
      %2322 = vmatprep.subr.mxu0 0.0
      %2323 = vmatpush1.msra.mxu0 %v2295
      %2324 = vmatprep.subr.mxu0 0.0
      %2325 = vmatpush1.msra.mxu0 %v2296
      %2326 = vmatprep.subr.mxu0 0.0
      %2327 = vmatpush1.msra.mxu0 %v2297
      %2328 = vmatprep.subr.mxu0 0.0
      %2329 = vmatpush1.msra.mxu0 %v2298
      %2330 = vmatprep.subr.mxu0 0.0
      %2331 = vmatpush1.msra.mxu0 %v2299
      %2332 = vmatprep.subr.mxu0 0.0
      %2333 = vmatpush1.msra.mxu0 0.0
      %2334 = vmatprep.subr.mxu0 0.0
      %2335 = vmatpush1.msra.mxu0 0.0
      %2336 = vmatprep.subr.mxu0 0.0
      %2337 = vmatpush1.msra.mxu0 0.0
      %2338 = vmatprep.subr.mxu0 0.0
      %2339 = vmatpush1.msra.mxu0 0.0
      %2340 = vmatprep.subr.mxu0 0.0
      %2341 = vmatpush1.msra.mxu0 0.0
      %2342 = vmatprep.subr.mxu0 0.0
      %2343 = vmatpush1.msra.mxu0 0.0
      %2344 = vmatprep.subr.mxu0 0.0
      %2345 = vmatpush1.msra.mxu0 0.0
      %2346 = vmatprep.subr.mxu0 0.0
      %2347 = vmatpush1.msra.mxu0 0.0
      %2348 = vmatprep.subr.mxu0 0.0
      %2349 = vmatpush1.msra.mxu0 0.0
      %2350 = vmatprep.subr.mxu0 0.0
      %2351 = vmatpush1.msra.mxu0 0.0
      %2352 = vmatprep.subr.mxu0 0.0
      %2353 = vmatpush1.msra.mxu0 0.0
      %2354 = vmatprep.subr.mxu0 0.0
      %2355 = vmatpush1.msra.mxu0 0.0
      %2356 = vmatprep.subr.mxu0 0.0
      %2357 = vmatpush1.msra.mxu0 0.0
      %2358 = vmatprep.subr.mxu0 0.0
      %2359 = vmatpush1.msra.mxu0 0.0
      %2360 = vmatprep.subr.mxu0 0.0
      %2361 = vmatpush1.msra.mxu0 0.0
      %2362 = vmatprep.subr.mxu0 0.0
      %2363 = vmatpush1.msra.mxu0 0.0
      %2364 = vmatprep.mubr.f32.mxu0 0.0
      %2365 = vmatmul.mubr.f32.gmra.mrb[0].mxu0 %v2281
      %v2366 = vpop.f32.mrb[0].mxu0
      %v2367 = vadd.f32 0.0, %v2366
      %v2368 = vpop.f32.mrb[0].mxu0
      %2369 = vmatprep.mubr.f32.mxu0 0.0
      %2370 = vmatmul.mubr.f32.gmra.mrb[0].mxu0 %v2282
      %v2371 = vpop.f32.mrb[0].mxu0
      %v2372 = vadd.f32 0.0, %v2371
      %v2373 = vpop.f32.mrb[0].mxu0
      %2374 = vmatprep.mubr.f32.mxu0 0.0
      %2375 = vmatmul.mubr.f32.gmra.mrb[0].mxu0 %v2283
      %v2376 = vpop.f32.mrb[0].mxu0
      %v2377 = vadd.f32 0.0, %v2376
      %v2378 = vpop.f32.mrb[0].mxu0
      %2379 = vdwg.mxu0
      %v2380 = vadd.f32 %v2041, %v2367
      %v2381 = vadd.f32 %v2042, %v2372
      %v2382 = vadd.f32 %v2043, %v2377
      %v2383 = vld [vmem:[%s12] sm:$0x1]
      %v2385 = vlaneseq
      %v2386 = vshrl.u32 %v2385, 7
      %v2387 = vsub.s32 0, %v2386
      %v2388 = vrot.slane %v2383, %v2387
      %v2390 = vadd.f32 %v2380, %v2388
      %v2391 = vadd.f32 %v2381, %v2388
      %v2392 = vadd.f32 %v2382, %v2388
      %v2393 = vld [vmem:[%s13] sm:$0x1]
      %v2394 = vld [vmem:[%s14] sm:$0x1]
      %v2395 = vsel %vm554, %v2390, 0.0
      %2396 = vadd.xlane.f32.xlu0 %v2395
      %v2397 = vpop.xlane.xlu0 %2396
      %v2398 = vsel %vm554, %v2391, 0.0
      %2399 = vadd.xlane.f32.xlu0 %v2398
      %v2400 = vpop.xlane.xlu0 %2399
      %v2401 = vsel %vm561, %v2392, 0.0
      %2402 = vadd.xlane.f32.xlu0 %v2401
      %v2403 = vpop.xlane.xlu0 %2402
      %v2404 = vmul.f32 %v2397, %v565
      %v2405 = vmul.f32 %v2400, %v565
      %v2406 = vmul.f32 %v2403, %v565
      %v2407 = vsub.f32 %v2390, %v2404
      %v2408 = vsub.f32 %v2391, %v2405
      %v2409 = vsub.f32 %v2392, %v2406
      %v2410 = vmul.f32 %v2407, %v2407
      %v2411 = vmul.f32 %v2408, %v2408
      %v2412 = vmul.f32 %v2409, %v2409
      %v2413 = vsel %vm554, %v2410, 0.0
      %2414 = vadd.xlane.f32.xlu0 %v2413
      %v2415 = vpop.xlane.xlu0 %2414
      %v2416 = vsel %vm554, %v2411, 0.0
      %2417 = vadd.xlane.f32.xlu0 %v2416
      %v2418 = vpop.xlane.xlu0 %2417
      %v2419 = vsel %vm561, %v2412, 0.0
      %2420 = vadd.xlane.f32.xlu0 %v2419
      %v2421 = vpop.xlane.xlu0 %2420
      %v2422 = vmul.f32 %v2415, %v565
      %v2423 = vmul.f32 %v2418, %v565
      %v2424 = vmul.f32 %v2421, %v565
      %v2425 = vadd.f32 %v2422, 1e-05
      %v2426 = vadd.f32 %v2423, 1e-05
      %v2427 = vadd.f32 %v2424, 1e-05
      %v2428 = vrsqrt.pop %v2425
      %v2429 = vrsqrt.pop %v2426
      %v2430 = vrsqrt.pop %v2427
      %v2431 = vmul.f32 %v2407, %v2428
      %v2432 = vmul.f32 %v2408, %v2429
      %v2433 = vmul.f32 %v2409, %v2430
      %v2435 = vlaneseq
      %v2436 = vshrl.u32 %v2435, 7
      %v2437 = vsub.s32 0, %v2436
      %v2438 = vrot.slane %v2393, %v2437
      %v2440 = vmul.f32 %v2431, %v2438
      %v2441 = vmul.f32 %v2432, %v2438
      %v2442 = vmul.f32 %v2433, %v2438
      %v2444 = vlaneseq
      %v2445 = vshrl.u32 %v2444, 7
      %v2446 = vsub.s32 0, %v2445
      %v2447 = vrot.slane %v2394, %v2446
      %v2449 = vadd.f32 %v2440, %v2447
      %v2450 = vadd.f32 %v2441, %v2447
      %v2451 = vadd.f32 %v2442, %v2447
      %v2452 = vld [vmem:[%s15] sm:$0xff]
      %v2453 = vld [vmem:[%s15 + $0x8] sm:$0xff]
      %v2454 = vld [vmem:[%s15 + $0x10] sm:$0xff]
      %v2455 = vld [vmem:[%s15 + $0x18] sm:$0xff]
      %v2456 = vld [vmem:[%s16] sm:$0x1]
      %v2458 = vlaneseq
      %v2459 = vshrl.u32 %v2458, 7
      %v2460 = vsub.s32 0, %v2459
      %v2461 = vrot.slane %v2456, %v2460
      %v2464 = vsel %vm554, %v2449, 0
      %v2467 = vsel %vm554, %v2450, 0
      %v2470 = vsel %vm554, %v2451, 0
      %2472 = vmatprep.subr.mxu0 0.0
      %2473 = vmatpush1.msra.mxu0 %v2452
      %2474 = vmatprep.subr.mxu0 0.0
      %2475 = vmatpush1.msra.mxu0 %v2453
      %2476 = vmatprep.subr.mxu0 0.0
      %2477 = vmatpush1.msra.mxu0 %v2454
      %2478 = vmatprep.subr.mxu0 0.0
      %2479 = vmatpush1.msra.mxu0 %v2455
      %2480 = vmatprep.subr.mxu0 0.0
      %2481 = vmatpush1.msra.mxu0 0.0
      %2482 = vmatprep.subr.mxu0 0.0
      %2483 = vmatpush1.msra.mxu0 0.0
      %2484 = vmatprep.subr.mxu0 0.0
      %2485 = vmatpush1.msra.mxu0 0.0
      %2486 = vmatprep.subr.mxu0 0.0
      %2487 = vmatpush1.msra.mxu0 0.0
      %2488 = vmatprep.subr.mxu0 0.0
      %2489 = vmatpush1.msra.mxu0 0.0
      %2490 = vmatprep.subr.mxu0 0.0
      %2491 = vmatpush1.msra.mxu0 0.0
      %2492 = vmatprep.subr.mxu0 0.0
      %2493 = vmatpush1.msra.mxu0 0.0
      %2494 = vmatprep.subr.mxu0 0.0
      %2495 = vmatpush1.msra.mxu0 0.0
      %2496 = vmatprep.subr.mxu0 0.0
      %2497 = vmatpush1.msra.mxu0 0.0
      %2498 = vmatprep.subr.mxu0 0.0
      %2499 = vmatpush1.msra.mxu0 0.0
      %2500 = vmatprep.subr.mxu0 0.0
      %2501 = vmatpush1.msra.mxu0 0.0
      %2502 = vmatprep.subr.mxu0 0.0
      %2503 = vmatpush1.msra.mxu0 0.0
      %2504 = vmatprep.subr.mxu0 0.0
      %2505 = vmatpush1.msra.mxu0 0.0
      %2506 = vmatprep.subr.mxu0 0.0
      %2507 = vmatpush1.msra.mxu0 0.0
      %2508 = vmatprep.subr.mxu0 0.0
      %2509 = vmatpush1.msra.mxu0 0.0
      %2510 = vmatprep.subr.mxu0 0.0
      %2511 = vmatpush1.msra.mxu0 0.0
      %2512 = vmatprep.subr.mxu0 0.0
      %2513 = vmatpush1.msra.mxu0 0.0
      %2514 = vmatprep.subr.mxu0 0.0
      %2515 = vmatpush1.msra.mxu0 0.0
      %2516 = vmatprep.subr.mxu0 0.0
      %2517 = vmatpush1.msra.mxu0 0.0
      %2518 = vmatprep.subr.mxu0 0.0
      %2519 = vmatpush1.msra.mxu0 0.0
      %2520 = vmatprep.subr.mxu0 0.0
      %2521 = vmatpush1.msra.mxu0 0.0
      %2522 = vmatprep.subr.mxu0 0.0
      %2523 = vmatpush1.msra.mxu0 0.0
      %2524 = vmatprep.subr.mxu0 0.0
      %2525 = vmatpush1.msra.mxu0 0.0
      %2526 = vmatprep.subr.mxu0 0.0
      %2527 = vmatpush1.msra.mxu0 0.0
      %2528 = vmatprep.subr.mxu0 0.0
      %2529 = vmatpush1.msra.mxu0 0.0
      %2530 = vmatprep.subr.mxu0 0.0
      %2531 = vmatpush1.msra.mxu0 0.0
      %2532 = vmatprep.subr.mxu0 0.0
      %2533 = vmatpush1.msra.mxu0 0.0
      %2534 = vmatprep.subr.mxu0 0.0
      %2535 = vmatpush1.msra.mxu0 0.0
      %2536 = vmatprep.mubr.f32.mxu0 0.0
      %2537 = vmatmul.mubr.f32.gmra.mrb[0].mxu0 %v2464
      %v2538 = vpop.f32.mrb[0].mxu0
      %v2539 = vadd.f32 %v2461, %v2538
      %v2540 = vpop.f32.mrb[0].mxu0
      %2541 = vmatprep.mubr.f32.mxu0 0.0
      %2542 = vmatmul.mubr.f32.gmra.mrb[0].mxu0 %v2467
      %v2543 = vpop.f32.mrb[0].mxu0
      %v2544 = vadd.f32 %v2461, %v2543
      %v2545 = vpop.f32.mrb[0].mxu0
      %2546 = vmatprep.mubr.f32.mxu0 0.0
      %2547 = vmatmul.mubr.f32.gmra.mrb[0].mxu0 %v2470
      %v2548 = vpop.f32.mrb[0].mxu0
      %v2549 = vadd.f32 %v2461, %v2548
      %v2550 = vpop.f32.mrb[0].mxu0
      %2551 = vdwg.mxu0
      %vm2552 = vcmask 392192
      %2553 = vst.msk [vmem:[%s548] sm:$0xff] %vm2552, %v2539
      %2554 = vst.msk [vmem:[%s548 + $0x8] sm:$0xff] %vm2552, %v2544
      %vm2555 = vcmask 385024
      %2556 = vst.msk [vmem:[%s548 + $0x10] sm:$0x1] %vm2555, %v2549
      %p2557 = scmp.lt.s32.totalorder %s28, 1
      %s2558 = scalar_select %p2557, %s28, 1
      %s2559 = smul.addr %s2558, 3
      %s2560 = smul.addr %s2559, 8
      %s2561 = scalar_lea.vmem %s17, %s2560
      // Predicated region
      $region89: #{mae_forward.6} parent=87 // pred_check
        %p2562 = pneg %p408
      $region90: #{mae_forward.6} parent=87 // pred_check_branch
        %2564 = sbr.rel (%p2562) target = $region92
      $region91: #{mae_forward.6} parent=87 // pred_region
        _
      $region92: #{mae_forward.6} parent=87 // pred_fallthru
        _
    $region88: #{mae_forward.6} parent=5 // pred_fallthru
      _
    %p2565 = scmp.le.s32.totalorder 2, %s23
    // Predicated region
    $region93: #{mae_forward.6} parent=5 // pred_check
      %p2566 = pneg %p2565
    $region94: #{mae_forward.6} parent=5 // pred_check_branch
      %2568 = sbr.rel (%p2566) target = $region96
    $region95: #{mae_forward.6} parent=5 // pred_region
      %s2569 = ssub.s32 %s23, 2
      // Predicated region
      $region97: #{mae_forward.6} parent=95 // pred_check
        %p2570 = pneg %p414
      $region98: #{mae_forward.6} parent=95 // pred_check_branch
        %2572 = sbr.rel (%p2570) target = $region100
      $region99: #{mae_forward.6} parent=95 // pred_region
        %p2573 = scmp.lt.s32.totalorder %s29, 1
        %s2574 = scalar_select %p2573, %s29, 1
        %s2575 = smul.addr %s2574, 3
        %s2576 = smul.addr %s2575, 8
        %s2577 = scalar_lea.vmem %s17, %s2576
      $region100: #{mae_forward.6} parent=95 // pred_fallthru
        _
    $region96: #{mae_forward.6} parent=5 // pred_fallthru
      _
  $region6: #{mae_forward.6} parent=0 // loop_footer
    %s27 = sadd.s32 1, %s23
  $region7: #{mae_forward.6} parent=0 // loop_footer_branch
    %22 = sbr.rel target = $region3
  $region8: #{mae_forward.6} parent=0 // loop_exit
    _

// kernel: mae_forward.7
$region0: #{mae_forward.7}
  #allocation0 [shape = 'u32[]', space=smem, size = 0x4, offset = 0x4, fixed_abs, tag = 'smem constant byte address 0x4 - core index']
  #allocation1 [shape = 'u32[144,128]{1,0:T(1,128)}', space=vmem, size = 0x12000, scoped, tag = 'internal scratch']
  %s0 = inlined_call_operand.vmem [shape: f32[32,48], index: 0, kind: input, shape index: {}]
  %s1 = inlined_call_operand.vmem [shape: f32[32,48], index: 1, kind: input, shape index: {}]
  %s2 = inlined_call_operand.vmem [shape: f32[32,1], index: 2, kind: input, shape index: {}]
  %s3 = inlined_call_operand.hbm [shape: f32[1,1], index: 3, kind: output, shape index: {}]
  %s4 = sld [smem:[#allocation0]]
  $region22: #{mae_forward.7} parent=0
    _
  %s6 = ssub.s32 1, %s4
  %s7 = scalar_select 0, %s6, %s4
  $region1: #{mae_forward.7} parent=0
    #allocation2 [shape = 'u8[512]{0}', space=smem, size = 0x200, scoped, tag = 'output window, operand 0, single buffered']
    #allocation3 [shape = 's32[1]{0}', space=sflag, size = 0x4, scoped, tag = 'scoped memory for mae_forward.7']
    %8 = vsyncpa [#allocation3], 0
    // Predicated region
    $region2: #{mae_forward.7} parent=1 // pred_check
      _
    $region3: #{mae_forward.7} parent=1 // pred_check_branch
      %10 = sbr.rel (0) target = $region5
    $region4: #{mae_forward.7} parent=1 // pred_region
      _
    $region5: #{mae_forward.7} parent=1 // pred_fallthru
      _
    // Predicated region
    $region6: #{mae_forward.7} parent=1 // pred_check
      _
    $region7: #{mae_forward.7} parent=1 // pred_check_branch
      %12 = sbr.rel (0) target = $region9
    $region8: #{mae_forward.7} parent=1 // pred_region
      _
    $region9: #{mae_forward.7} parent=1 // pred_fallthru
      _
    // Predicated region
    $region10: #{mae_forward.7} parent=1 // pred_check
      _
    $region11: #{mae_forward.7} parent=1 // pred_check_branch
      %14 = sbr.rel (0) target = $region13
    $region12: #{mae_forward.7} parent=1 // pred_region
      _
    $region13: #{mae_forward.7} parent=1 // pred_fallthru
      _
    %v15 = vld [vmem:[%s0] sm:$0xff]
    %v16 = vld [vmem:[%s0 + $0x8] sm:$0xff]
    %v17 = vld [vmem:[%s0 + $0x10] sm:$0xff]
    %v18 = vld [vmem:[%s0 + $0x18] sm:$0xff]
    %v19 = vld [vmem:[%s1] sm:$0xff]
    %v20 = vld [vmem:[%s1 + $0x8] sm:$0xff]
    %v21 = vld [vmem:[%s1 + $0x10] sm:$0xff]
    %v22 = vld [vmem:[%s1 + $0x18] sm:$0xff]
    %v23 = vsub.f32 %v15, %v19
    %v24 = vsub.f32 %v16, %v20
    %v25 = vsub.f32 %v17, %v21
    %v26 = vsub.f32 %v18, %v22
    %v27 = vmul.f32 %v23, %v23
    %v28 = vmul.f32 %v24, %v24
    %v29 = vmul.f32 %v25, %v25
    %v30 = vmul.f32 %v26, %v26
    %vm31 = vcmask 392192
    %v32 = vsel %vm31, %v27, 0.0
    %33 = vadd.xlane.f32.xlu0 %v32
    %v34 = vpop.xlane.xlu0 %33
    %v35 = vsel %vm31, %v28, 0.0
    %36 = vadd.xlane.f32.xlu0 %v35
    %v37 = vpop.xlane.xlu0 %36
    %v38 = vsel %vm31, %v29, 0.0
    %39 = vadd.xlane.f32.xlu0 %v38
    %v40 = vpop.xlane.xlu0 %39
    %v41 = vsel %vm31, %v30, 0.0
    %42 = vadd.xlane.f32.xlu0 %v41
    %v43 = vpop.xlane.xlu0 %42
    %v44 = vmul.f32 %v34, 0.020833334
    %v45 = vmul.f32 %v37, 0.020833334
    %v46 = vmul.f32 %v40, 0.020833334
    %v47 = vmul.f32 %v43, 0.020833334
    %v48 = vld [vmem:[%s2] sm:$0xff]
    %v49 = vld [vmem:[%s2 + $0x8] sm:$0xff]
    %v50 = vld [vmem:[%s2 + $0x10] sm:$0xff]
    %v51 = vld [vmem:[%s2 + $0x18] sm:$0xff]
    %v52 = vmul.f32 %v44, %v48
    %v53 = vmul.f32 %v45, %v49
    %v54 = vmul.f32 %v46, %v50
    %v55 = vmul.f32 %v47, %v51
    %vm56 = vcmask 7168
    %v57 = vsel %vm56, %v52, 0.0
    %v58 = vsel %vm56, %v53, 0.0
    %v59 = vadd.f32 %v57, %v58
    %v60 = vsel %vm56, %v54, 0.0
    %v61 = vadd.f32 %v59, %v60
    %v62 = vsel %vm56, %v55, 0.0
    %v63 = vadd.f32 %v61, %v62
    %64 = vadd.xlane.f32.xlu0 %v63
    %v65 = vpop.xlane.xlu0 %64
    %v66 = vrot.slane %v65, 4
    %v67 = vadd.f32 %v65, %v66
    %v68 = vrot.slane %v67, 2
    %v69 = vadd.f32 %v67, %v68
    %v70 = vrot.slane %v69, 1
    %v71 = vadd.f32 %v69, %v70
    %s72 = vtos %v71
    %v73 = vsel %vm56, %v48, 0.0
    %v74 = vsel %vm56, %v49, 0.0
    %v75 = vadd.f32 %v73, %v74
    %v76 = vsel %vm56, %v50, 0.0
    %v77 = vadd.f32 %v75, %v76
    %v78 = vsel %vm56, %v51, 0.0
    %v79 = vadd.f32 %v77, %v78
    %80 = vadd.xlane.f32.xlu0 %v79
    %v81 = vpop.xlane.xlu0 %80
    %v82 = vrot.slane %v81, 4
    %v83 = vadd.f32 %v81, %v82
    %v84 = vrot.slane %v83, 2
    %v85 = vadd.f32 %v83, %v84
    %v86 = vrot.slane %v85, 1
    %v87 = vadd.f32 %v85, %v86
    %s88 = vtos %v87
    %v89 = vstv %s88
    %v90 = vrcp.pop %v89
    %s91 = vtos %v90
    %s92 = smul.f32 %s72, %s91
    %s93 = scalar_lea.smem [#allocation2], 0
    %94 = sst [smem:[%s93]] %s92
    // Predicated region
    $region14: #{mae_forward.7} parent=1 // pred_check
      _
    $region15: #{mae_forward.7} parent=1 // pred_check_branch
      %96 = sbr.rel (0) target = $region17
    $region16: #{mae_forward.7} parent=1 // pred_region
      %s98 = ssub.s32 16, 16
      %99 = vsyncadd [#allocation3], %s98
      %102 = dma.smem_to_hbm [#allocation2], 16, %s3, [#allocation3]
    $region17: #{mae_forward.7} parent=1 // pred_fallthru
      _
    // Predicated region
    $region18: #{mae_forward.7} parent=1 // pred_check
      _
    $region19: #{mae_forward.7} parent=1 // pred_check_branch
      %104 = sbr.rel (0) target = $region21
    $region20: #{mae_forward.7} parent=1 // pred_region
      %105 = dma.done [#allocation3], 16
    $region21: #{mae_forward.7} parent=1 // pred_fallthru
      _
    %106 = sfence
    %107 = vsyncpa [#allocation3], 1

</llo_original>
